<compile_context>
chip_gen: v6e
topology: v6e:2x2x1
jax: 0.10.0
libtpu: 0.0.40
codegen_flags: <defaults>
</compile_context>

<pallas_src>
import functools

import jax
import jax.numpy as jnp
from jax import lax
from jax.experimental import pallas as pl
from jax.experimental.pallas import tpu as pltpu


# ----------------------------------------------------------------------------
# Fused conv1 + BN + act + conv2 + BN + act + maxpool kernel
# ----------------------------------------------------------------------------
def _conv9(load_slab, w_ref, L, Wp):
    """3x3 conv as 9 MXU dots on the flattened-spatial layout."""
    acc = None
    for ky in range(3):
        for kx in range(3):
            off = ky * Wp + kx
            slab = load_slab(off)                          # (L, Cin) bf16
            d = jnp.dot(slab, w_ref[ky * 3 + kx],          # (Cin, Cout) bf16
                        preferred_element_type=jnp.float32)
            acc = d if acc is None else acc + d
    return acc                                             # (L, Cout) f32


def _bn_act(acc, s_ref, b_ref, slope):
    y = acc * s_ref[...] + b_ref[...]                      # (1,Cout) broadcast
    return jnp.where(y >= 0, y, slope * y)                 # LeakyReLU (f32)


def _unet_block_kernel(w1_ref, s1_ref, b1_ref, w2_ref, s2_ref, b2_ref,
                       mask_ref, x_ref, o2_ref, op_ref, h1_scr,
                       *, H, W, slope):
    # w*_ref   : VMEM (9, Cin, Cout) bf16       -- conv taps, MXU operands
    # s*_/b*_  : VMEM (1, Cout) f32             -- folded BN scale / shift
    # mask_ref : VMEM (L, 1) f32                -- 1.0 on real columns, 0.0 on
    #                                              the wrap-around halo columns
    # x_ref    : VMEM (1, Lp, Cin) bf16         -- padded, NHWC-flattened input
    # o2_ref   : VMEM (1, L, Cout) f32          -- conv2 output (wide rows)
    # op_ref   : VMEM (1, H//2, W, Cout) f32    -- row-pooled output
    # h1_scr   : VMEM (Lp, Cout) f32            -- padded conv2 input scratch
    Wp = W + 2
    L = H * Wp

    # ---- conv1 + BN1 + LeakyReLU ------------------------------------------
    acc1 = _conv9(lambda off: x_ref[0, pl.ds(off, L), :], w1_ref, L, Wp)
    y1 = _bn_act(acc1, s1_ref, b1_ref, slope)

    # Place h1 into a zeroed, padded scratch so conv2 sees its 1-pixel halo;
    # the wrap-around garbage columns are zeroed by the mask.
    h1_scr[...] = jnp.zeros_like(h1_scr)
    h1_scr[pl.ds(W + 3, L), :] = y1 * mask_ref[...]

    # ---- conv2 + BN2 + LeakyReLU ------------------------------------------
    acc2 = _conv9(lambda off: h1_scr[pl.ds(off, L), :].astype(jnp.bfloat16),
                  w2_ref, L, Wp)
    y2 = _bn_act(acc2, s2_ref, b2_ref, slope)
    o2_ref[0] = y2.astype(o2_ref.dtype)

    # ---- fused MaxPool2d(2, 2) --------------------------------------------
    # Read conv2 back from the VMEM-resident output ref; compact rows (2i,
    # 2i+1) here, the wrapper drops the odd output columns.
    @pl.loop(0, H // 2)
    def _(i):
        base = 2 * i * Wp
        r00 = o2_ref[0, pl.ds(base, W), :]
        r01 = o2_ref[0, pl.ds(base + 1, W), :]
        r10 = o2_ref[0, pl.ds(base + Wp, W), :]
        r11 = o2_ref[0, pl.ds(base + Wp + 1, W), :]
        m = jnp.maximum(jnp.maximum(r00, r01), jnp.maximum(r10, r11))
        op_ref[0, i] = m.astype(op_ref.dtype)


def unet_block_fused(x, params, *, slope=0.01):
    """x: (B, Cin, H, W) f32 -> (h2 (B,Cout,H,W) f32, pooled (B,Cout,H/2,W/2) f32)."""
    B, cin, H, W = x.shape
    cout = params["w1"].shape[0]
    # TODO(synk): odd H/W would need PyTorch floor-mode pool cropping.
    assert H % 2 == 0 and W % 2 == 0
    Wp = W + 2
    L = H * Wp
    Lp = (H + 3) * Wp

    # NHWC + halo (1 top / 2 bottom rows, 1 left / 1 right cols), spatial dims
    # flattened into the sublane axis, bf16 activations feeding the MXU.
    x_flat = jnp.pad(jnp.transpose(x, (0, 2, 3, 1)),
                     ((0, 0), (1, 2), (1, 1), (0, 0)))
    x_flat = x_flat.reshape(B, Lp, cin).astype(jnp.bfloat16)

    # Conv weights as 9 (Cin, Cout) taps, bf16, VMEM-resident.
    w1 = jnp.transpose(params["w1"], (2, 3, 1, 0)).reshape(9, cin, cout)
    w2 = jnp.transpose(params["w2"], (2, 3, 1, 0)).reshape(9, cout, cout)
    w1 = w1.astype(jnp.bfloat16)
    w2 = w2.astype(jnp.bfloat16)
    s1 = params["scale1"].reshape(1, cout).astype(jnp.float32)
    b1 = params["shift1"].reshape(1, cout).astype(jnp.float32)
    s2 = params["scale2"].reshape(1, cout).astype(jnp.float32)
    b2 = params["shift2"].reshape(1, cout).astype(jnp.float32)

    # Valid-column mask for the flattened-spatial conv (columns >= W of each
    # padded row are wrap-around garbage and must not feed conv2's halo).
    mask = (jnp.arange(L, dtype=jnp.int32) % Wp < W)
    mask = mask.astype(jnp.float32).reshape(L, 1)

    kernel = functools.partial(_unet_block_kernel, H=H, W=W, slope=slope)
    flops = 2 * B * H * W * 9 * (cin * cout + cout * cout)
    bytes_accessed = (x_flat.size * 2 + (w1.size + w2.size) * 2
                      + (B * L * cout + B * (H // 2) * W * cout) * 4)

    h2_wide, pool_wide = pl.pallas_call(
        kernel,
        out_shape=(
            jax.ShapeDtypeStruct((B, L, cout), jnp.float32),
            jax.ShapeDtypeStruct((B, H // 2, W, cout), jnp.float32),
        ),
        grid=(B,),
        in_specs=[
            pl.BlockSpec((9, cin, cout), lambda b: (0, 0, 0)),     # w1
            pl.BlockSpec((1, cout), lambda b: (0, 0)),             # scale1
            pl.BlockSpec((1, cout), lambda b: (0, 0)),             # shift1
            pl.BlockSpec((9, cout, cout), lambda b: (0, 0, 0)),    # w2
            pl.BlockSpec((1, cout), lambda b: (0, 0)),             # scale2
            pl.BlockSpec((1, cout), lambda b: (0, 0)),             # shift2
            pl.BlockSpec((L, 1), lambda b: (0, 0)),                # mask
            pl.BlockSpec((1, Lp, cin), lambda b: (b, 0, 0)),       # x
        ],
        out_specs=(
            pl.BlockSpec((1, L, cout), lambda b: (b, 0, 0)),
            pl.BlockSpec((1, H // 2, W, cout), lambda b: (b, 0, 0, 0)),
        ),
        scratch_shapes=[pltpu.VMEM((Lp, cout), jnp.float32)],
        compiler_params=pltpu.CompilerParams(
            dimension_semantics=("parallel",)),
        cost_estimate=pl.CostEstimate(flops=flops, transcendentals=0,
                                      bytes_accessed=bytes_accessed),
    )(w1, s1, b1, w2, s2, b2, mask, x_flat)

    # Drop the halo / odd pooled columns (pure layout glue) and go back NCHW.
    h2 = jnp.transpose(h2_wide.reshape(B, H, Wp, cout)[:, :, :W, :],
                       (0, 3, 1, 2))
    pooled = jnp.transpose(pool_wide[:, :, 0::2, :], (0, 3, 1, 2))
    return h2, pooled


# ----------------------------------------------------------------------------
# UNetBlock.forward  (dim=2, resample='down')
# ----------------------------------------------------------------------------
def unet_block_forward(x, params, *, slope=0.01):
    # TODO(synk): only the dim=2 / resample='down' configuration is
    #             implemented (no DeconvolutionLayer 'up' path, no dim=3).
    x_shape = x.shape
    if len(x_shape) == 5:                      # dim == 2 with 5-D input (2.5D)
        N, C, D, H, W = x_shape
        x2 = jnp.transpose(x, (0, 2, 1, 3, 4)).reshape(N * D, C, H, W)
    else:
        x2 = x

    h2, pooled = unet_block_fused(x2, params, slope=slope)

    if len(x_shape) == 5:
        out = jnp.transpose(h2.reshape(N, D, *h2.shape[1:]), (0, 2, 1, 3, 4))
        res = jnp.transpose(pooled.reshape(N, D, *pooled.shape[1:]),
                            (0, 2, 1, 3, 4))
    else:
        out, res = h2, pooled
    return out, res


# ----------------------------------------------------------------------------
# Pure-JAX reference (correctness check only; mirrors the bf16 rounding that
# the kernel applies to the MXU operands so tolerances can stay tight-ish)
# ----------------------------------------------------------------------------
def _bf16_round(a):
    return a.astype(jnp.bfloat16).astype(jnp.float32)


def _conv_bn_act_ref(x, w, b, gamma, beta, mean, var, slope, eps=1e-5):
    y = lax.conv_general_dilated(
        x, w, window_strides=(1, 1), padding=((1, 1), (1, 1)),
        dimension_numbers=("NCHW", "OIHW", "NCHW"),
        precision=lax.Precision.HIGHEST)
    y = y + b[None, :, None, None]
    y = ((y - mean[None, :, None, None])
         / jnp.sqrt(var[None, :, None, None] + eps)
         * gamma[None, :, None, None] + beta[None, :, None, None])
    return jnp.where(y >= 0, y, slope * y)


def _unet_block_ref(x, raw, slope=0.01):
    N, C, D, H, W = x.shape
    x2 = jnp.transpose(x, (0, 2, 1, 3, 4)).reshape(N * D, C, H, W)
    h1 = _conv_bn_act_ref(_bf16_round(x2), _bf16_round(raw["w1"]), raw["b1"],
                          raw["g1"], raw["be1"], raw["m1"], raw["v1"], slope)
    h2 = _conv_bn_act_ref(_bf16_round(h1), _bf16_round(raw["w2"]), raw["b2"],
                          raw["g2"], raw["be2"], raw["m2"], raw["v2"], slope)
    pooled = lax.reduce_window(h2, -jnp.inf, lax.max,
                               (1, 1, 2, 2), (1, 1, 2, 2), "VALID")
    out = jnp.transpose(h2.reshape(N, D, *h2.shape[1:]), (0, 2, 1, 3, 4))
    res = jnp.transpose(pooled.reshape(N, D, *pooled.shape[1:]),
                        (0, 2, 1, 3, 4))
    return out, res


def _fold_bn(b, gamma, beta, mean, var, eps=1e-5):
    scale = gamma / jnp.sqrt(var + eps)
    shift = beta + (b - mean) * scale
    return scale, shift


if __name__ == "__main__":
    key = jax.random.PRNGKey(0)
    ks = jax.random.split(key, 16)

    # Small shapes: 5-D input exercises the 2.5D (dim=2) path of UNetBlock.
    N, C_in, D, H, W = 2, 4, 4, 16, 16
    C_out = 8
    x = jax.random.normal(ks[0], (N, C_in, D, H, W), jnp.float32)

    # Deterministic synthetic parameters (ConvolutionLayer 1 & 2).
    raw = dict(
        w1=jax.random.normal(ks[1], (C_out, C_in, 3, 3), jnp.float32) * 0.2,
        b1=jax.random.normal(ks[2], (C_out,), jnp.float32) * 0.1,
        g1=1.0 + 0.1 * jax.random.normal(ks[3], (C_out,), jnp.float32),
        be1=0.1 * jax.random.normal(ks[4], (C_out,), jnp.float32),
        m1=0.1 * jax.random.normal(ks[5], (C_out,), jnp.float32),
        v1=jax.random.uniform(ks[6], (C_out,), jnp.float32, 0.5, 1.5),
        w2=jax.random.normal(ks[7], (C_out, C_out, 3, 3), jnp.float32) * 0.2,
        b2=jax.random.normal(ks[8], (C_out,), jnp.float32) * 0.1,
        g2=1.0 + 0.1 * jax.random.normal(ks[9], (C_out,), jnp.float32),
        be2=0.1 * jax.random.normal(ks[10], (C_out,), jnp.float32),
        m2=0.1 * jax.random.normal(ks[11], (C_out,), jnp.float32),
        v2=jax.random.uniform(ks[12], (C_out,), jnp.float32, 0.5, 1.5),
    )
    # TODO(synk): BatchNorm is applied in eval mode (running stats); training-
    # mode batch statistics are not reproduced here.
    s1, sh1 = _fold_bn(raw["b1"], raw["g1"], raw["be1"], raw["m1"], raw["v1"])
    s2, sh2 = _fold_bn(raw["b2"], raw["g2"], raw["be2"], raw["m2"], raw["v2"])
    params = dict(w1=raw["w1"], scale1=s1, shift1=sh1,
                  w2=raw["w2"], scale2=s2, shift2=sh2)

    out, res = jax.jit(unet_block_forward)(x, params)
    out = jax.block_until_ready(out)
    res = jax.block_until_ready(res)

    out_ref, res_ref = _unet_block_ref(x, raw)
    assert out.shape == (N, C_out, D, H, W), out.shape
    assert res.shape == (N, C_out, D, H // 2, W // 2), res.shape
    # bf16 MXU operands (kernel) vs bf16-rounded f32 reference: differences are
    # dominated by rare one-ULP bf16 double-rounding of the h1 intermediate.
    assert jnp.allclose(out, out_ref, rtol=1e-2, atol=1e-2)
    assert jnp.allclose(res, res_ref, rtol=1e-2, atol=1e-2)

    print("KERNEL_OK")
</pallas_src>

<mosaic_0001>
module attributes {stable_mosaic.version = 11 : i64} {
  func.func @_unet_block_kernel(%arg0: i32, %arg1: memref<9x4x8xbf16, #tpu.memory_space<vmem>>, %arg2: memref<1x8xf32, #tpu.memory_space<vmem>>, %arg3: memref<1x8xf32, #tpu.memory_space<vmem>>, %arg4: memref<9x8x8xbf16, #tpu.memory_space<vmem>>, %arg5: memref<1x8xf32, #tpu.memory_space<vmem>>, %arg6: memref<1x8xf32, #tpu.memory_space<vmem>>, %arg7: memref<288x1xf32, #tpu.memory_space<vmem>>, %arg8: memref<1x342x4xbf16, #tpu.memory_space<vmem>>, %arg9: memref<1x288x8xf32, #tpu.memory_space<vmem>>, %arg10: memref<1x8x16x8xf32, #tpu.memory_space<vmem>>, %arg11: memref<342x8xf32, #tpu.memory_space<vmem>>) attributes {dimension_semantics = [#tpu.dimension_semantics<parallel>], iteration_bounds = array<i64: 8>, scalar_prefetch = 0 : i64, scratch_operands = 1 : i64, tpu.core_type = #tpu.core_type<tc>, window_params = [{pipeline_mode = #tpu.pipeline_mode<synchronous>, transform_indices = @transform_0, window_bounds = array<i64: 9, 4, 8>}, {pipeline_mode = #tpu.pipeline_mode<synchronous>, transform_indices = @transform_1, window_bounds = array<i64: 1, 8>}, {pipeline_mode = #tpu.pipeline_mode<synchronous>, transform_indices = @transform_2, window_bounds = array<i64: 1, 8>}, {pipeline_mode = #tpu.pipeline_mode<synchronous>, transform_indices = @transform_3, window_bounds = array<i64: 9, 8, 8>}, {pipeline_mode = #tpu.pipeline_mode<synchronous>, transform_indices = @transform_4, window_bounds = array<i64: 1, 8>}, {pipeline_mode = #tpu.pipeline_mode<synchronous>, transform_indices = @transform_5, window_bounds = array<i64: 1, 8>}, {pipeline_mode = #tpu.pipeline_mode<synchronous>, transform_indices = @transform_6, window_bounds = array<i64: 288, 1>}, {transform_indices = @transform_7, window_bounds = array<i64: 1, 342, 4>}, {transform_indices = @transform_8, window_bounds = array<i64: 1, 288, 8>}, {transform_indices = @transform_9, window_bounds = array<i64: 1, 8, 16, 8>}]} {
    %c0 = arith.constant 0 : index
    %c0_0 = arith.constant 0 : index
    %c0_1 = arith.constant 0 : index
    %0 = vector.load %arg8[%c0, %c0_0, %c0_1] : memref<1x342x4xbf16, #tpu.memory_space<vmem>>, vector<1x288x4xbf16>
    %1 = vector.shape_cast %0 : vector<1x288x4xbf16> to vector<288x4xbf16>
    %c0_2 = arith.constant 0 : index
    %c0_3 = arith.constant 0 : index
    %c0_4 = arith.constant 0 : index
    %2 = vector.load %arg1[%c0_2, %c0_3, %c0_4] : memref<9x4x8xbf16, #tpu.memory_space<vmem>>, vector<1x4x8xbf16>
    %3 = vector.shape_cast %2 : vector<1x4x8xbf16> to vector<4x8xbf16>
    %cst = arith.constant dense<0.000000e+00> : vector<288x8xf32>
    %4 = tpu.matmul %1, %3, %cst {dimension_numbers = #tpu.dot_dimension_numbers<[1], [0], [0], [1], [0, 0, 1, 1], [], []>} : vector<288x4xbf16>, vector<4x8xbf16>, vector<288x8xf32> -> vector<288x8xf32>
    %c0_5 = arith.constant 0 : index
    %c1 = arith.constant 1 : index
    %c0_6 = arith.constant 0 : index
    %5 = vector.load %arg8[%c0_5, %c1, %c0_6] : memref<1x342x4xbf16, #tpu.memory_space<vmem>>, vector<1x288x4xbf16>
    %6 = vector.shape_cast %5 : vector<1x288x4xbf16> to vector<288x4xbf16>
    %c1_7 = arith.constant 1 : index
    %c0_8 = arith.constant 0 : index
    %c0_9 = arith.constant 0 : index
    %7 = vector.load %arg1[%c1_7, %c0_8, %c0_9] : memref<9x4x8xbf16, #tpu.memory_space<vmem>>, vector<1x4x8xbf16>
    %8 = vector.shape_cast %7 : vector<1x4x8xbf16> to vector<4x8xbf16>
    %cst_10 = arith.constant dense<0.000000e+00> : vector<288x8xf32>
    %9 = tpu.matmul %6, %8, %cst_10 {dimension_numbers = #tpu.dot_dimension_numbers<[1], [0], [0], [1], [0, 0, 1, 1], [], []>} : vector<288x4xbf16>, vector<4x8xbf16>, vector<288x8xf32> -> vector<288x8xf32>
    %10 = arith.addf %4, %9 : vector<288x8xf32>
    %c0_11 = arith.constant 0 : index
    %c2 = arith.constant 2 : index
    %c0_12 = arith.constant 0 : index
    %11 = vector.load %arg8[%c0_11, %c2, %c0_12] : memref<1x342x4xbf16, #tpu.memory_space<vmem>>, vector<1x288x4xbf16>
    %12 = vector.shape_cast %11 : vector<1x288x4xbf16> to vector<288x4xbf16>
    %c2_13 = arith.constant 2 : index
    %c0_14 = arith.constant 0 : index
    %c0_15 = arith.constant 0 : index
    %13 = vector.load %arg1[%c2_13, %c0_14, %c0_15] : memref<9x4x8xbf16, #tpu.memory_space<vmem>>, vector<1x4x8xbf16>
    %14 = vector.shape_cast %13 : vector<1x4x8xbf16> to vector<4x8xbf16>
    %cst_16 = arith.constant dense<0.000000e+00> : vector<288x8xf32>
    %15 = tpu.matmul %12, %14, %cst_16 {dimension_numbers = #tpu.dot_dimension_numbers<[1], [0], [0], [1], [0, 0, 1, 1], [], []>} : vector<288x4xbf16>, vector<4x8xbf16>, vector<288x8xf32> -> vector<288x8xf32>
    %16 = arith.addf %10, %15 : vector<288x8xf32>
    %c0_17 = arith.constant 0 : index
    %c18 = arith.constant 18 : index
    %c0_18 = arith.constant 0 : index
    %17 = vector.load %arg8[%c0_17, %c18, %c0_18] : memref<1x342x4xbf16, #tpu.memory_space<vmem>>, vector<1x288x4xbf16>
    %18 = vector.shape_cast %17 : vector<1x288x4xbf16> to vector<288x4xbf16>
    %c3 = arith.constant 3 : index
    %c0_19 = arith.constant 0 : index
    %c0_20 = arith.constant 0 : index
    %19 = vector.load %arg1[%c3, %c0_19, %c0_20] : memref<9x4x8xbf16, #tpu.memory_space<vmem>>, vector<1x4x8xbf16>
    %20 = vector.shape_cast %19 : vector<1x4x8xbf16> to vector<4x8xbf16>
    %cst_21 = arith.constant dense<0.000000e+00> : vector<288x8xf32>
    %21 = tpu.matmul %18, %20, %cst_21 {dimension_numbers = #tpu.dot_dimension_numbers<[1], [0], [0], [1], [0, 0, 1, 1], [], []>} : vector<288x4xbf16>, vector<4x8xbf16>, vector<288x8xf32> -> vector<288x8xf32>
    %22 = arith.addf %16, %21 : vector<288x8xf32>
    %c0_22 = arith.constant 0 : index
    %c19 = arith.constant 19 : index
    %c0_23 = arith.constant 0 : index
    %23 = vector.load %arg8[%c0_22, %c19, %c0_23] : memref<1x342x4xbf16, #tpu.memory_space<vmem>>, vector<1x288x4xbf16>
    %24 = vector.shape_cast %23 : vector<1x288x4xbf16> to vector<288x4xbf16>
    %c4 = arith.constant 4 : index
    %c0_24 = arith.constant 0 : index
    %c0_25 = arith.constant 0 : index
    %25 = vector.load %arg1[%c4, %c0_24, %c0_25] : memref<9x4x8xbf16, #tpu.memory_space<vmem>>, vector<1x4x8xbf16>
    %26 = vector.shape_cast %25 : vector<1x4x8xbf16> to vector<4x8xbf16>
    %cst_26 = arith.constant dense<0.000000e+00> : vector<288x8xf32>
    %27 = tpu.matmul %24, %26, %cst_26 {dimension_numbers = #tpu.dot_dimension_numbers<[1], [0], [0], [1], [0, 0, 1, 1], [], []>} : vector<288x4xbf16>, vector<4x8xbf16>, vector<288x8xf32> -> vector<288x8xf32>
    %28 = arith.addf %22, %27 : vector<288x8xf32>
    %c0_27 = arith.constant 0 : index
    %c20 = arith.constant 20 : index
    %c0_28 = arith.constant 0 : index
    %29 = vector.load %arg8[%c0_27, %c20, %c0_28] : memref<1x342x4xbf16, #tpu.memory_space<vmem>>, vector<1x288x4xbf16>
    %30 = vector.shape_cast %29 : vector<1x288x4xbf16> to vector<288x4xbf16>
    %c5 = arith.constant 5 : index
    %c0_29 = arith.constant 0 : index
    %c0_30 = arith.constant 0 : index
    %31 = vector.load %arg1[%c5, %c0_29, %c0_30] : memref<9x4x8xbf16, #tpu.memory_space<vmem>>, vector<1x4x8xbf16>
    %32 = vector.shape_cast %31 : vector<1x4x8xbf16> to vector<4x8xbf16>
    %cst_31 = arith.constant dense<0.000000e+00> : vector<288x8xf32>
    %33 = tpu.matmul %30, %32, %cst_31 {dimension_numbers = #tpu.dot_dimension_numbers<[1], [0], [0], [1], [0, 0, 1, 1], [], []>} : vector<288x4xbf16>, vector<4x8xbf16>, vector<288x8xf32> -> vector<288x8xf32>
    %34 = arith.addf %28, %33 : vector<288x8xf32>
    %c0_32 = arith.constant 0 : index
    %c36 = arith.constant 36 : index
    %c0_33 = arith.constant 0 : index
    %35 = vector.load %arg8[%c0_32, %c36, %c0_33] : memref<1x342x4xbf16, #tpu.memory_space<vmem>>, vector<1x288x4xbf16>
    %36 = vector.shape_cast %35 : vector<1x288x4xbf16> to vector<288x4xbf16>
    %c6 = arith.constant 6 : index
    %c0_34 = arith.constant 0 : index
    %c0_35 = arith.constant 0 : index
    %37 = vector.load %arg1[%c6, %c0_34, %c0_35] : memref<9x4x8xbf16, #tpu.memory_space<vmem>>, vector<1x4x8xbf16>
    %38 = vector.shape_cast %37 : vector<1x4x8xbf16> to vector<4x8xbf16>
    %cst_36 = arith.constant dense<0.000000e+00> : vector<288x8xf32>
    %39 = tpu.matmul %36, %38, %cst_36 {dimension_numbers = #tpu.dot_dimension_numbers<[1], [0], [0], [1], [0, 0, 1, 1], [], []>} : vector<288x4xbf16>, vector<4x8xbf16>, vector<288x8xf32> -> vector<288x8xf32>
    %40 = arith.addf %34, %39 : vector<288x8xf32>
    %c0_37 = arith.constant 0 : index
    %c37 = arith.constant 37 : index
    %c0_38 = arith.constant 0 : index
    %41 = vector.load %arg8[%c0_37, %c37, %c0_38] : memref<1x342x4xbf16, #tpu.memory_space<vmem>>, vector<1x288x4xbf16>
    %42 = vector.shape_cast %41 : vector<1x288x4xbf16> to vector<288x4xbf16>
    %c7 = arith.constant 7 : index
    %c0_39 = arith.constant 0 : index
    %c0_40 = arith.constant 0 : index
    %43 = vector.load %arg1[%c7, %c0_39, %c0_40] : memref<9x4x8xbf16, #tpu.memory_space<vmem>>, vector<1x4x8xbf16>
    %44 = vector.shape_cast %43 : vector<1x4x8xbf16> to vector<4x8xbf16>
    %cst_41 = arith.constant dense<0.000000e+00> : vector<288x8xf32>
    %45 = tpu.matmul %42, %44, %cst_41 {dimension_numbers = #tpu.dot_dimension_numbers<[1], [0], [0], [1], [0, 0, 1, 1], [], []>} : vector<288x4xbf16>, vector<4x8xbf16>, vector<288x8xf32> -> vector<288x8xf32>
    %46 = arith.addf %40, %45 : vector<288x8xf32>
    %c0_42 = arith.constant 0 : index
    %c38 = arith.constant 38 : index
    %c0_43 = arith.constant 0 : index
    %47 = vector.load %arg8[%c0_42, %c38, %c0_43] : memref<1x342x4xbf16, #tpu.memory_space<vmem>>, vector<1x288x4xbf16>
    %48 = vector.shape_cast %47 : vector<1x288x4xbf16> to vector<288x4xbf16>
    %c8 = arith.constant 8 : index
    %c0_44 = arith.constant 0 : index
    %c0_45 = arith.constant 0 : index
    %49 = vector.load %arg1[%c8, %c0_44, %c0_45] : memref<9x4x8xbf16, #tpu.memory_space<vmem>>, vector<1x4x8xbf16>
    %50 = vector.shape_cast %49 : vector<1x4x8xbf16> to vector<4x8xbf16>
    %cst_46 = arith.constant dense<0.000000e+00> : vector<288x8xf32>
    %51 = tpu.matmul %48, %50, %cst_46 {dimension_numbers = #tpu.dot_dimension_numbers<[1], [0], [0], [1], [0, 0, 1, 1], [], []>} : vector<288x4xbf16>, vector<4x8xbf16>, vector<288x8xf32> -> vector<288x8xf32>
    %52 = arith.addf %46, %51 : vector<288x8xf32>
    %c0_47 = arith.constant 0 : index
    %c0_48 = arith.constant 0 : index
    %53 = vector.load %arg2[%c0_47, %c0_48] : memref<1x8xf32, #tpu.memory_space<vmem>>, vector<1x8xf32>
    %54 = vector.broadcast %53 : vector<1x8xf32> to vector<288x8xf32>
    %55 = arith.mulf %52, %54 : vector<288x8xf32>
    %c0_49 = arith.constant 0 : index
    %c0_50 = arith.constant 0 : index
    %56 = vector.load %arg3[%c0_49, %c0_50] : memref<1x8xf32, #tpu.memory_space<vmem>>, vector<1x8xf32>
    %57 = vector.broadcast %56 : vector<1x8xf32> to vector<288x8xf32>
    %58 = arith.addf %55, %57 : vector<288x8xf32>
    %cst_51 = arith.constant 0.000000e+00 : f32
    %59 = vector.broadcast %cst_51 : f32 to vector<288x8xf32>
    %60 = arith.cmpf oge, %58, %59 : vector<288x8xf32>
    %cst_52 = arith.constant 0.00999999977 : f32
    %61 = vector.broadcast %cst_52 : f32 to vector<288x8xf32>
    %62 = arith.mulf %61, %58 : vector<288x8xf32>
    %63 = arith.select %60, %58, %62 : vector<288x8xi1>, vector<288x8xf32>
    %cst_53 = arith.constant 0.000000e+00 : f32
    %64 = vector.broadcast %cst_53 : f32 to vector<342x8xf32>
    %c0_54 = arith.constant 0 : index
    %c0_55 = arith.constant 0 : index
    %65 = vector.load %arg11[%c0_54, %c0_55] : memref<342x8xf32, #tpu.memory_space<vmem>>, vector<342x8xf32>
    tpu.vector_store %arg11[%c0_54, %c0_55], %64 {strides = array<i32>} : memref<342x8xf32, #tpu.memory_space<vmem>>, vector<342x8xf32>,
    %c0_56 = arith.constant 0 : index
    %c0_57 = arith.constant 0 : index
    %66 = vector.load %arg7[%c0_56, %c0_57] : memref<288x1xf32, #tpu.memory_space<vmem>>, vector<288x1xf32>
    %67 = vector.broadcast %66 : vector<288x1xf32> to vector<288x8xf32>
    %68 = arith.mulf %63, %67 : vector<288x8xf32>
    %c19_58 = arith.constant 19 : index
    %c0_59 = arith.constant 0 : index
    %69 = vector.load %arg11[%c19_58, %c0_59] : memref<342x8xf32, #tpu.memory_space<vmem>>, vector<288x8xf32>
    tpu.vector_store %arg11[%c19_58, %c0_59], %68 {strides = array<i32>} : memref<342x8xf32, #tpu.memory_space<vmem>>, vector<288x8xf32>,
    %c0_60 = arith.constant 0 : index
    %c0_61 = arith.constant 0 : index
    %70 = vector.load %arg11[%c0_60, %c0_61] : memref<342x8xf32, #tpu.memory_space<vmem>>, vector<288x8xf32>
    %71 = arith.truncf %70 : vector<288x8xf32> to vector<288x8xbf16>
    %c0_62 = arith.constant 0 : index
    %c0_63 = arith.constant 0 : index
    %c0_64 = arith.constant 0 : index
    %72 = vector.load %arg4[%c0_62, %c0_63, %c0_64] : memref<9x8x8xbf16, #tpu.memory_space<vmem>>, vector<1x8x8xbf16>
    %73 = vector.shape_cast %72 : vector<1x8x8xbf16> to vector<8x8xbf16>
    %cst_65 = arith.constant dense<0.000000e+00> : vector<288x8xf32>
    %74 = tpu.matmul %71, %73, %cst_65 {dimension_numbers = #tpu.dot_dimension_numbers<[1], [0], [0], [1], [0, 0, 1, 1], [], []>} : vector<288x8xbf16>, vector<8x8xbf16>, vector<288x8xf32> -> vector<288x8xf32>
    %c1_66 = arith.constant 1 : index
    %c0_67 = arith.constant 0 : index
    %75 = vector.load %arg11[%c1_66, %c0_67] : memref<342x8xf32, #tpu.memory_space<vmem>>, vector<288x8xf32>
    %76 = arith.truncf %75 : vector<288x8xf32> to vector<288x8xbf16>
    %c1_68 = arith.constant 1 : index
    %c0_69 = arith.constant 0 : index
    %c0_70 = arith.constant 0 : index
    %77 = vector.load %arg4[%c1_68, %c0_69, %c0_70] : memref<9x8x8xbf16, #tpu.memory_space<vmem>>, vector<1x8x8xbf16>
    %78 = vector.shape_cast %77 : vector<1x8x8xbf16> to vector<8x8xbf16>
    %cst_71 = arith.constant dense<0.000000e+00> : vector<288x8xf32>
    %79 = tpu.matmul %76, %78, %cst_71 {dimension_numbers = #tpu.dot_dimension_numbers<[1], [0], [0], [1], [0, 0, 1, 1], [], []>} : vector<288x8xbf16>, vector<8x8xbf16>, vector<288x8xf32> -> vector<288x8xf32>
    %80 = arith.addf %74, %79 : vector<288x8xf32>
    %c2_72 = arith.constant 2 : index
    %c0_73 = arith.constant 0 : index
    %81 = vector.load %arg11[%c2_72, %c0_73] : memref<342x8xf32, #tpu.memory_space<vmem>>, vector<288x8xf32>
    %82 = arith.truncf %81 : vector<288x8xf32> to vector<288x8xbf16>
    %c2_74 = arith.constant 2 : index
    %c0_75 = arith.constant 0 : index
    %c0_76 = arith.constant 0 : index
    %83 = vector.load %arg4[%c2_74, %c0_75, %c0_76] : memref<9x8x8xbf16, #tpu.memory_space<vmem>>, vector<1x8x8xbf16>
    %84 = vector.shape_cast %83 : vector<1x8x8xbf16> to vector<8x8xbf16>
    %cst_77 = arith.constant dense<0.000000e+00> : vector<288x8xf32>
    %85 = tpu.matmul %82, %84, %cst_77 {dimension_numbers = #tpu.dot_dimension_numbers<[1], [0], [0], [1], [0, 0, 1, 1], [], []>} : vector<288x8xbf16>, vector<8x8xbf16>, vector<288x8xf32> -> vector<288x8xf32>
    %86 = arith.addf %80, %85 : vector<288x8xf32>
    %c18_78 = arith.constant 18 : index
    %c0_79 = arith.constant 0 : index
    %87 = vector.load %arg11[%c18_78, %c0_79] : memref<342x8xf32, #tpu.memory_space<vmem>>, vector<288x8xf32>
    %88 = arith.truncf %87 : vector<288x8xf32> to vector<288x8xbf16>
    %c3_80 = arith.constant 3 : index
    %c0_81 = arith.constant 0 : index
    %c0_82 = arith.constant 0 : index
    %89 = vector.load %arg4[%c3_80, %c0_81, %c0_82] : memref<9x8x8xbf16, #tpu.memory_space<vmem>>, vector<1x8x8xbf16>
    %90 = vector.shape_cast %89 : vector<1x8x8xbf16> to vector<8x8xbf16>
    %cst_83 = arith.constant dense<0.000000e+00> : vector<288x8xf32>
    %91 = tpu.matmul %88, %90, %cst_83 {dimension_numbers = #tpu.dot_dimension_numbers<[1], [0], [0], [1], [0, 0, 1, 1], [], []>} : vector<288x8xbf16>, vector<8x8xbf16>, vector<288x8xf32> -> vector<288x8xf32>
    %92 = arith.addf %86, %91 : vector<288x8xf32>
    %c19_84 = arith.constant 19 : index
    %c0_85 = arith.constant 0 : index
    %93 = vector.load %arg11[%c19_84, %c0_85] : memref<342x8xf32, #tpu.memory_space<vmem>>, vector<288x8xf32>
    %94 = arith.truncf %93 : vector<288x8xf32> to vector<288x8xbf16>
    %c4_86 = arith.constant 4 : index
    %c0_87 = arith.constant 0 : index
    %c0_88 = arith.constant 0 : index
    %95 = vector.load %arg4[%c4_86, %c0_87, %c0_88] : memref<9x8x8xbf16, #tpu.memory_space<vmem>>, vector<1x8x8xbf16>
    %96 = vector.shape_cast %95 : vector<1x8x8xbf16> to vector<8x8xbf16>
    %cst_89 = arith.constant dense<0.000000e+00> : vector<288x8xf32>
    %97 = tpu.matmul %94, %96, %cst_89 {dimension_numbers = #tpu.dot_dimension_numbers<[1], [0], [0], [1], [0, 0, 1, 1], [], []>} : vector<288x8xbf16>, vector<8x8xbf16>, vector<288x8xf32> -> vector<288x8xf32>
    %98 = arith.addf %92, %97 : vector<288x8xf32>
    %c20_90 = arith.constant 20 : index
    %c0_91 = arith.constant 0 : index
    %99 = vector.load %arg11[%c20_90, %c0_91] : memref<342x8xf32, #tpu.memory_space<vmem>>, vector<288x8xf32>
    %100 = arith.truncf %99 : vector<288x8xf32> to vector<288x8xbf16>
    %c5_92 = arith.constant 5 : index
    %c0_93 = arith.constant 0 : index
    %c0_94 = arith.constant 0 : index
    %101 = vector.load %arg4[%c5_92, %c0_93, %c0_94] : memref<9x8x8xbf16, #tpu.memory_space<vmem>>, vector<1x8x8xbf16>
    %102 = vector.shape_cast %101 : vector<1x8x8xbf16> to vector<8x8xbf16>
    %cst_95 = arith.constant dense<0.000000e+00> : vector<288x8xf32>
    %103 = tpu.matmul %100, %102, %cst_95 {dimension_numbers = #tpu.dot_dimension_numbers<[1], [0], [0], [1], [0, 0, 1, 1], [], []>} : vector<288x8xbf16>, vector<8x8xbf16>, vector<288x8xf32> -> vector<288x8xf32>
    %104 = arith.addf %98, %103 : vector<288x8xf32>
    %c36_96 = arith.constant 36 : index
    %c0_97 = arith.constant 0 : index
    %105 = vector.load %arg11[%c36_96, %c0_97] : memref<342x8xf32, #tpu.memory_space<vmem>>, vector<288x8xf32>
    %106 = arith.truncf %105 : vector<288x8xf32> to vector<288x8xbf16>
    %c6_98 = arith.constant 6 : index
    %c0_99 = arith.constant 0 : index
    %c0_100 = arith.constant 0 : index
    %107 = vector.load %arg4[%c6_98, %c0_99, %c0_100] : memref<9x8x8xbf16, #tpu.memory_space<vmem>>, vector<1x8x8xbf16>
    %108 = vector.shape_cast %107 : vector<1x8x8xbf16> to vector<8x8xbf16>
    %cst_101 = arith.constant dense<0.000000e+00> : vector<288x8xf32>
    %109 = tpu.matmul %106, %108, %cst_101 {dimension_numbers = #tpu.dot_dimension_numbers<[1], [0], [0], [1], [0, 0, 1, 1], [], []>} : vector<288x8xbf16>, vector<8x8xbf16>, vector<288x8xf32> -> vector<288x8xf32>
    %110 = arith.addf %104, %109 : vector<288x8xf32>
    %c37_102 = arith.constant 37 : index
    %c0_103 = arith.constant 0 : index
    %111 = vector.load %arg11[%c37_102, %c0_103] : memref<342x8xf32, #tpu.memory_space<vmem>>, vector<288x8xf32>
    %112 = arith.truncf %111 : vector<288x8xf32> to vector<288x8xbf16>
    %c7_104 = arith.constant 7 : index
    %c0_105 = arith.constant 0 : index
    %c0_106 = arith.constant 0 : index
    %113 = vector.load %arg4[%c7_104, %c0_105, %c0_106] : memref<9x8x8xbf16, #tpu.memory_space<vmem>>, vector<1x8x8xbf16>
    %114 = vector.shape_cast %113 : vector<1x8x8xbf16> to vector<8x8xbf16>
    %cst_107 = arith.constant dense<0.000000e+00> : vector<288x8xf32>
    %115 = tpu.matmul %112, %114, %cst_107 {dimension_numbers = #tpu.dot_dimension_numbers<[1], [0], [0], [1], [0, 0, 1, 1], [], []>} : vector<288x8xbf16>, vector<8x8xbf16>, vector<288x8xf32> -> vector<288x8xf32>
    %116 = arith.addf %110, %115 : vector<288x8xf32>
    %c38_108 = arith.constant 38 : index
    %c0_109 = arith.constant 0 : index
    %117 = vector.load %arg11[%c38_108, %c0_109] : memref<342x8xf32, #tpu.memory_space<vmem>>, vector<288x8xf32>
    %118 = arith.truncf %117 : vector<288x8xf32> to vector<288x8xbf16>
    %c8_110 = arith.constant 8 : index
    %c0_111 = arith.constant 0 : index
    %c0_112 = arith.constant 0 : index
    %119 = vector.load %arg4[%c8_110, %c0_111, %c0_112] : memref<9x8x8xbf16, #tpu.memory_space<vmem>>, vector<1x8x8xbf16>
    %120 = vector.shape_cast %119 : vector<1x8x8xbf16> to vector<8x8xbf16>
    %cst_113 = arith.constant dense<0.000000e+00> : vector<288x8xf32>
    %121 = tpu.matmul %118, %120, %cst_113 {dimension_numbers = #tpu.dot_dimension_numbers<[1], [0], [0], [1], [0, 0, 1, 1], [], []>} : vector<288x8xbf16>, vector<8x8xbf16>, vector<288x8xf32> -> vector<288x8xf32>
    %122 = arith.addf %116, %121 : vector<288x8xf32>
    %c0_114 = arith.constant 0 : index
    %c0_115 = arith.constant 0 : index
    %123 = vector.load %arg5[%c0_114, %c0_115] : memref<1x8xf32, #tpu.memory_space<vmem>>, vector<1x8xf32>
    %124 = vector.broadcast %123 : vector<1x8xf32> to vector<288x8xf32>
    %125 = arith.mulf %122, %124 : vector<288x8xf32>
    %c0_116 = arith.constant 0 : index
    %c0_117 = arith.constant 0 : index
    %126 = vector.load %arg6[%c0_116, %c0_117] : memref<1x8xf32, #tpu.memory_space<vmem>>, vector<1x8xf32>
    %127 = vector.broadcast %126 : vector<1x8xf32> to vector<288x8xf32>
    %128 = arith.addf %125, %127 : vector<288x8xf32>
    %cst_118 = arith.constant 0.000000e+00 : f32
    %129 = vector.broadcast %cst_118 : f32 to vector<288x8xf32>
    %130 = arith.cmpf oge, %128, %129 : vector<288x8xf32>
    %cst_119 = arith.constant 0.00999999977 : f32
    %131 = vector.broadcast %cst_119 : f32 to vector<288x8xf32>
    %132 = arith.mulf %131, %128 : vector<288x8xf32>
    %133 = arith.select %130, %128, %132 : vector<288x8xi1>, vector<288x8xf32>
    %c0_120 = arith.constant 0 : index
    %c0_121 = arith.constant 0 : index
    %c0_122 = arith.constant 0 : index
    %134 = vector.load %arg9[%c0_120, %c0_121, %c0_122] : memref<1x288x8xf32, #tpu.memory_space<vmem>>, vector<1x288x8xf32>
    %135 = vector.shape_cast %134 : vector<1x288x8xf32> to vector<288x8xf32>
    %136 = vector.shape_cast %133 : vector<288x8xf32> to vector<1x288x8xf32>
    tpu.vector_store %arg9[%c0_120, %c0_121, %c0_122], %136 {strides = array<i32>} : memref<1x288x8xf32, #tpu.memory_space<vmem>>, vector<1x288x8xf32>,
    %c0_i32 = arith.constant 0 : i32
    %c8_i32 = arith.constant 8 : i32
    %137 = arith.addi %c0_i32, %c8_i32 : i32
    %c1_i32 = arith.constant 1 : i32
    scf.for %arg12 = %c0_i32 to %137 step %c1_i32  : i32 {
      %c1_i32_124 = arith.constant 1 : i32
      %138 = arith.muli %arg12, %c1_i32_124 : i32
      %c0_i32_125 = arith.constant 0 : i32
      %139 = arith.addi %c0_i32_125, %138 : i32
      %c2_i32 = arith.constant 2 : i32
      %140 = arith.muli %c2_i32, %139 : i32
      %c18_i32 = arith.constant 18 : i32
      %141 = arith.muli %140, %c18_i32 : i32
      %c0_126 = arith.constant 0 : index
      %142 = arith.index_cast %141 : i32 to index
      %c0_127 = arith.constant 0 : index
      %143 = vector.load %arg9[%c0_126, %142, %c0_127] : memref<1x288x8xf32, #tpu.memory_space<vmem>>, vector<1x16x8xf32>
      %144 = vector.shape_cast %143 : vector<1x16x8xf32> to vector<16x8xf32>
      %c1_i32_128 = arith.constant 1 : i32
      %145 = arith.addi %141, %c1_i32_128 : i32
      %c0_129 = arith.constant 0 : index
      %146 = arith.index_cast %145 : i32 to index
      %c0_130 = arith.constant 0 : index
      %147 = vector.load %arg9[%c0_129, %146, %c0_130] : memref<1x288x8xf32, #tpu.memory_space<vmem>>, vector<1x16x8xf32>
      %148 = vector.shape_cast %147 : vector<1x16x8xf32> to vector<16x8xf32>
      %c18_i32_131 = arith.constant 18 : i32
      %149 = arith.addi %141, %c18_i32_131 : i32
      %c0_132 = arith.constant 0 : index
      %150 = arith.index_cast %149 : i32 to index
      %c0_133 = arith.constant 0 : index
      %151 = vector.load %arg9[%c0_132, %150, %c0_133] : memref<1x288x8xf32, #tpu.memory_space<vmem>>, vector<1x16x8xf32>
      %152 = vector.shape_cast %151 : vector<1x16x8xf32> to vector<16x8xf32>
      %c18_i32_134 = arith.constant 18 : i32
      %153 = arith.addi %141, %c18_i32_134 : i32
      %c1_i32_135 = arith.constant 1 : i32
      %154 = arith.addi %153, %c1_i32_135 : i32
      %c0_136 = arith.constant 0 : index
      %155 = arith.index_cast %154 : i32 to index
      %c0_137 = arith.constant 0 : index
      %156 = vector.load %arg9[%c0_136, %155, %c0_137] : memref<1x288x8xf32, #tpu.memory_space<vmem>>, vector<1x16x8xf32>
      %157 = vector.shape_cast %156 : vector<1x16x8xf32> to vector<16x8xf32>
      %158 = arith.maximumf %144, %148 : vector<16x8xf32>
      %159 = arith.maximumf %152, %157 : vector<16x8xf32>
      %160 = arith.maximumf %158, %159 : vector<16x8xf32>
      %c0_138 = arith.constant 0 : index
      %161 = arith.index_cast %139 : i32 to index
      %c0_139 = arith.constant 0 : index
      %c0_140 = arith.constant 0 : index
      %162 = vector.load %arg10[%c0_138, %161, %c0_139, %c0_140] : memref<1x8x16x8xf32, #tpu.memory_space<vmem>>, vector<1x1x16x8xf32>
      %163 = vector.shape_cast %162 : vector<1x1x16x8xf32> to vector<16x8xf32>
      %164 = vector.shape_cast %160 : vector<16x8xf32> to vector<1x1x16x8xf32>
      tpu.vector_store %arg10[%c0_138, %161, %c0_139, %c0_140], %164 {strides = array<i32>} : memref<1x8x16x8xf32, #tpu.memory_space<vmem>>, vector<1x1x16x8xf32>,
    }
    %c8_i32_123 = arith.constant 8 : i32
    return
  }
  func.func @transform_0(%arg0: i32) -> (i32, i32, i32) {
    %c0_i32 = arith.constant 0 : i32
    %c0_i32_0 = arith.constant 0 : i32
    %c0_i32_1 = arith.constant 0 : i32
    %c0_i32_2 = arith.constant 0 : i32
    return %c0_i32, %c0_i32_0, %c0_i32_1 : i32, i32, i32
  }
  func.func @transform_1(%arg0: i32) -> (i32, i32) {
    %c0_i32 = arith.constant 0 : i32
    %c0_i32_0 = arith.constant 0 : i32
    %c0_i32_1 = arith.constant 0 : i32
    return %c0_i32, %c0_i32_0 : i32, i32
  }
  func.func @transform_2(%arg0: i32) -> (i32, i32) {
    %c0_i32 = arith.constant 0 : i32
    %c0_i32_0 = arith.constant 0 : i32
    %c0_i32_1 = arith.constant 0 : i32
    return %c0_i32, %c0_i32_0 : i32, i32
  }
  func.func @transform_3(%arg0: i32) -> (i32, i32, i32) {
    %c0_i32 = arith.constant 0 : i32
    %c0_i32_0 = arith.constant 0 : i32
    %c0_i32_1 = arith.constant 0 : i32
    %c0_i32_2 = arith.constant 0 : i32
    return %c0_i32, %c0_i32_0, %c0_i32_1 : i32, i32, i32
  }
  func.func @transform_4(%arg0: i32) -> (i32, i32) {
    %c0_i32 = arith.constant 0 : i32
    %c0_i32_0 = arith.constant 0 : i32
    %c0_i32_1 = arith.constant 0 : i32
    return %c0_i32, %c0_i32_0 : i32, i32
  }
  func.func @transform_5(%arg0: i32) -> (i32, i32) {
    %c0_i32 = arith.constant 0 : i32
    %c0_i32_0 = arith.constant 0 : i32
    %c0_i32_1 = arith.constant 0 : i32
    return %c0_i32, %c0_i32_0 : i32, i32
  }
  func.func @transform_6(%arg0: i32) -> (i32, i32) {
    %c0_i32 = arith.constant 0 : i32
    %c0_i32_0 = arith.constant 0 : i32
    %c0_i32_1 = arith.constant 0 : i32
    return %c0_i32, %c0_i32_0 : i32, i32
  }
  func.func @transform_7(%arg0: i32) -> (i32, i32, i32) {
    %c0_i32 = arith.constant 0 : i32
    %c0_i32_0 = arith.constant 0 : i32
    %c0_i32_1 = arith.constant 0 : i32
    return %arg0, %c0_i32, %c0_i32_0 : i32, i32, i32
  }
  func.func @transform_8(%arg0: i32) -> (i32, i32, i32) {
    %c0_i32 = arith.constant 0 : i32
    %c0_i32_0 = arith.constant 0 : i32
    %c0_i32_1 = arith.constant 0 : i32
    return %arg0, %c0_i32, %c0_i32_0 : i32, i32, i32
  }
  func.func @transform_9(%arg0: i32) -> (i32, i32, i32, i32) {
    %c0_i32 = arith.constant 0 : i32
    %c0_i32_0 = arith.constant 0 : i32
    %c0_i32_1 = arith.constant 0 : i32
    %c0_i32_2 = arith.constant 0 : i32
    return %arg0, %c0_i32, %c0_i32_0, %c0_i32_1 : i32, i32, i32, i32
  }
}

</mosaic_0001>

<llo_original>
// kernel: unet_block_forward.1
$region0: #{unet_block_forward.1}
  #allocation0 [shape = 'u32[]', space=smem, size = 0x4, offset = 0x4, fixed_abs, tag = 'smem constant byte address 0x4 - core index']
  #allocation1 [shape = 'u32[144,128]{1,0:T(1,128)}', space=vmem, size = 0x12000, scoped, tag = 'internal scratch']
  #allocation2 [shape = 'f32[342,8]{1,0:T(8,128)}', space=vmem, size = 0x2b000, scoped, tag = 'scratch operand']
  %s0 = inlined_call_operand.vmem [shape: bf16[9,4,8], index: 0, kind: input, shape index: {}]
  %s1 = inlined_call_operand.vmem [shape: f32[1,8], index: 1, kind: input, shape index: {}]
  %s2 = inlined_call_operand.vmem [shape: f32[1,8], index: 2, kind: input, shape index: {}]
  %s3 = inlined_call_operand.vmem [shape: bf16[9,8,8], index: 3, kind: input, shape index: {}]
  %s4 = inlined_call_operand.vmem [shape: f32[1,8], index: 4, kind: input, shape index: {}]
  %s5 = inlined_call_operand.vmem [shape: f32[1,8], index: 5, kind: input, shape index: {}]
  %s6 = inlined_call_operand.vmem [shape: f32[288,1], index: 6, kind: input, shape index: {}]
  %s7 = inlined_call_operand.vmem [shape: bf16[8,342,4], index: 7, kind: input, shape index: {}]
  %s8 = inlined_call_operand.vmem [shape: f32[8,288,8], index: 8, kind: output, shape index: {0}]
  %s9 = inlined_call_operand.vmem [shape: f32[8,8,16,8], index: 9, kind: output, shape index: {1}]
  %10 = xla_tuple %s8, %s9
  %s11 = sld [smem:[#allocation0]]
  $region80: #{unet_block_forward.1} parent=0
    _
  %s13 = ssub.s32 1, %s11
  %s14 = scalar_select 0, %s13, %s11
  loop: start=0, step=1, limit=10
  $region2: #{unet_block_forward.1} parent=0 // loop_pre_header
    _
  $region3: #{unet_block_forward.1} parent=0 // loop_header
    %s16 = sphi 0, %s20
    %p17 = scmp.ge.s32.totalorder %s16, 10
    %s24 = sphi 0, %s24
    %s26 = sphi 0, %s24
    %s27 = sphi 0, %s26
    %s41 = sphi 0, %s27
    %s45 = sphi 0, %s45
    %s47 = sphi 0, %s45
    %s48 = sphi 0, %s47
    %s62 = sphi 0, %s48
    %s66 = sphi 0, %s66
    %s68 = sphi 0, %s66
    %s69 = sphi 0, %s68
    %s83 = sphi 0, %s69
    %s87 = sphi 0, %s87
    %s89 = sphi 0, %s87
    %s90 = sphi 0, %s89
    %s104 = sphi 0, %s90
    %s108 = sphi 0, %s108
    %s110 = sphi 0, %s108
    %s111 = sphi 0, %s110
    %s125 = sphi 0, %s111
    %s129 = sphi 0, %s129
    %s131 = sphi 0, %s129
    %s132 = sphi 0, %s131
    %s146 = sphi 0, %s132
    %s150 = sphi 0, %s150
    %s152 = sphi 0, %s150
    %s153 = sphi 0, %s152
    %s167 = sphi 0, %s153
    %s173 = sphi 0, %s175
    %s176 = sphi 0, %s173
    %s177 = sphi 0, %s176
    %s193 = sphi 0, %s177
    %s199 = sphi 0, %s201
    %s202 = sphi 0, %s199
    %s203 = sphi 0, %s202
    %s219 = sphi 0, %s203
    %s225 = sphi 0, %s227
    %s228 = sphi 0, %s225
    %s229 = sphi 0, %s228
    %s245 = sphi 0, %s229
  $region4: #{unet_block_forward.1} parent=0 // loop_header_branch
    %19 = sbr.rel (%p17) target = $region8
  $region5: #{unet_block_forward.1} parent=0 // loop_body
    %s21 = ssub.s32 %s16, 1
    %s22 = ssub.s32 %s16, 2
    %s23 = sadd.s32 %s16, 1
    %s25 = sadd.s32 %s24, 1
    %p28 = scmp.eq.s32.totalorder %s16, 7
    %p29 = scmp.ne.s32.totalorder %s24, %s26
    %p30 = scmp.eq.s32.totalorder %s16, 0
    %p31 = por %p29, %p30
    %p32 = scmp.ne.s32.totalorder %s24, %s26
    %p33 = scmp.eq.s32.totalorder %s21, 7
    %p34 = por %p32, %p33
    %p35 = scmp.ne.s32.totalorder %s26, %s27
    %p36 = scmp.eq.s32.totalorder %s21, 0
    %p37 = por %p35, %p36
    %p38 = scmp.ne.s32.totalorder %s26, %s27
    %p39 = scmp.eq.s32.totalorder %s22, 7
    %p40 = por %p38, %p39
    %p42 = scmp.ne.s32.totalorder %s27, %s41
    %p43 = scmp.eq.s32.totalorder %s22, 0
    %p44 = por %p42, %p43
    %s46 = sadd.s32 %s45, 1
    %p49 = scmp.eq.s32.totalorder %s16, 7
    %p50 = scmp.ne.s32.totalorder %s45, %s47
    %p51 = scmp.eq.s32.totalorder %s16, 0
    %p52 = por %p50, %p51
    %p53 = scmp.ne.s32.totalorder %s45, %s47
    %p54 = scmp.eq.s32.totalorder %s21, 7
    %p55 = por %p53, %p54
    %p56 = scmp.ne.s32.totalorder %s47, %s48
    %p57 = scmp.eq.s32.totalorder %s21, 0
    %p58 = por %p56, %p57
    %p59 = scmp.ne.s32.totalorder %s47, %s48
    %p60 = scmp.eq.s32.totalorder %s22, 7
    %p61 = por %p59, %p60
    %p63 = scmp.ne.s32.totalorder %s48, %s62
    %p64 = scmp.eq.s32.totalorder %s22, 0
    %p65 = por %p63, %p64
    %s67 = sadd.s32 %s66, 1
    %p70 = scmp.eq.s32.totalorder %s16, 7
    %p71 = scmp.ne.s32.totalorder %s66, %s68
    %p72 = scmp.eq.s32.totalorder %s16, 0
    %p73 = por %p71, %p72
    %p74 = scmp.ne.s32.totalorder %s66, %s68
    %p75 = scmp.eq.s32.totalorder %s21, 7
    %p76 = por %p74, %p75
    %p77 = scmp.ne.s32.totalorder %s68, %s69
    %p78 = scmp.eq.s32.totalorder %s21, 0
    %p79 = por %p77, %p78
    %p80 = scmp.ne.s32.totalorder %s68, %s69
    %p81 = scmp.eq.s32.totalorder %s22, 7
    %p82 = por %p80, %p81
    %p84 = scmp.ne.s32.totalorder %s69, %s83
    %p85 = scmp.eq.s32.totalorder %s22, 0
    %p86 = por %p84, %p85
    %s88 = sadd.s32 %s87, 1
    %p91 = scmp.eq.s32.totalorder %s16, 7
    %p92 = scmp.ne.s32.totalorder %s87, %s89
    %p93 = scmp.eq.s32.totalorder %s16, 0
    %p94 = por %p92, %p93
    %p95 = scmp.ne.s32.totalorder %s87, %s89
    %p96 = scmp.eq.s32.totalorder %s21, 7
    %p97 = por %p95, %p96
    %p98 = scmp.ne.s32.totalorder %s89, %s90
    %p99 = scmp.eq.s32.totalorder %s21, 0
    %p100 = por %p98, %p99
    %p101 = scmp.ne.s32.totalorder %s89, %s90
    %p102 = scmp.eq.s32.totalorder %s22, 7
    %p103 = por %p101, %p102
    %p105 = scmp.ne.s32.totalorder %s90, %s104
    %p106 = scmp.eq.s32.totalorder %s22, 0
    %p107 = por %p105, %p106
    %s109 = sadd.s32 %s108, 1
    %p112 = scmp.eq.s32.totalorder %s16, 7
    %p113 = scmp.ne.s32.totalorder %s108, %s110
    %p114 = scmp.eq.s32.totalorder %s16, 0
    %p115 = por %p113, %p114
    %p116 = scmp.ne.s32.totalorder %s108, %s110
    %p117 = scmp.eq.s32.totalorder %s21, 7
    %p118 = por %p116, %p117
    %p119 = scmp.ne.s32.totalorder %s110, %s111
    %p120 = scmp.eq.s32.totalorder %s21, 0
    %p121 = por %p119, %p120
    %p122 = scmp.ne.s32.totalorder %s110, %s111
    %p123 = scmp.eq.s32.totalorder %s22, 7
    %p124 = por %p122, %p123
    %p126 = scmp.ne.s32.totalorder %s111, %s125
    %p127 = scmp.eq.s32.totalorder %s22, 0
    %p128 = por %p126, %p127
    %s130 = sadd.s32 %s129, 1
    %p133 = scmp.eq.s32.totalorder %s16, 7
    %p134 = scmp.ne.s32.totalorder %s129, %s131
    %p135 = scmp.eq.s32.totalorder %s16, 0
    %p136 = por %p134, %p135
    %p137 = scmp.ne.s32.totalorder %s129, %s131
    %p138 = scmp.eq.s32.totalorder %s21, 7
    %p139 = por %p137, %p138
    %p140 = scmp.ne.s32.totalorder %s131, %s132
    %p141 = scmp.eq.s32.totalorder %s21, 0
    %p142 = por %p140, %p141
    %p143 = scmp.ne.s32.totalorder %s131, %s132
    %p144 = scmp.eq.s32.totalorder %s22, 7
    %p145 = por %p143, %p144
    %p147 = scmp.ne.s32.totalorder %s132, %s146
    %p148 = scmp.eq.s32.totalorder %s22, 0
    %p149 = por %p147, %p148
    %s151 = sadd.s32 %s150, 1
    %p154 = scmp.eq.s32.totalorder %s16, 7
    %p155 = scmp.ne.s32.totalorder %s150, %s152
    %p156 = scmp.eq.s32.totalorder %s16, 0
    %p157 = por %p155, %p156
    %p158 = scmp.ne.s32.totalorder %s150, %s152
    %p159 = scmp.eq.s32.totalorder %s21, 7
    %p160 = por %p158, %p159
    %p161 = scmp.ne.s32.totalorder %s152, %s153
    %p162 = scmp.eq.s32.totalorder %s21, 0
    %p163 = por %p161, %p162
    %p164 = scmp.ne.s32.totalorder %s152, %s153
    %p165 = scmp.eq.s32.totalorder %s22, 7
    %p166 = por %p164, %p165
    %p168 = scmp.ne.s32.totalorder %s153, %s167
    %p169 = scmp.eq.s32.totalorder %s22, 0
    %p170 = por %p168, %p169
    %s171 = ssub.s32 %s16, %s23
    %p172 = scmp.eq.s32.totalorder %s171, 0
    %s174 = sadd.s32 %s173, 1
    %s175 = scalar_select %p172, %s173, %s174
    %p178 = pneg %p172
    %p179 = scmp.eq.s32.totalorder %s16, 7
    %p180 = por %p178, %p179
    %p181 = scmp.ne.s32.totalorder %s173, %s176
    %p182 = scmp.eq.s32.totalorder %s16, 0
    %p183 = por %p181, %p182
    %p184 = scmp.ne.s32.totalorder %s173, %s176
    %p185 = scmp.eq.s32.totalorder %s21, 7
    %p186 = por %p184, %p185
    %p187 = scmp.ne.s32.totalorder %s176, %s177
    %p188 = scmp.eq.s32.totalorder %s21, 0
    %p189 = por %p187, %p188
    %p190 = scmp.ne.s32.totalorder %s176, %s177
    %p191 = scmp.eq.s32.totalorder %s22, 7
    %p192 = por %p190, %p191
    %p194 = scmp.ne.s32.totalorder %s177, %s193
    %p195 = scmp.eq.s32.totalorder %s22, 0
    %p196 = por %p194, %p195
    %s197 = ssub.s32 %s16, %s23
    %p198 = scmp.eq.s32.totalorder %s197, 0
    %s200 = sadd.s32 %s199, 1
    %s201 = scalar_select %p198, %s199, %s200
    %p204 = pneg %p198
    %p205 = scmp.eq.s32.totalorder %s16, 7
    %p206 = por %p204, %p205
    %p207 = scmp.ne.s32.totalorder %s199, %s202
    %p208 = scmp.eq.s32.totalorder %s16, 0
    %p209 = por %p207, %p208
    %p210 = scmp.ne.s32.totalorder %s199, %s202
    %p211 = scmp.eq.s32.totalorder %s21, 7
    %p212 = por %p210, %p211
    %p213 = scmp.ne.s32.totalorder %s202, %s203
    %p214 = scmp.eq.s32.totalorder %s21, 0
    %p215 = por %p213, %p214
    %p216 = scmp.ne.s32.totalorder %s202, %s203
    %p217 = scmp.eq.s32.totalorder %s22, 7
    %p218 = por %p216, %p217
    %p220 = scmp.ne.s32.totalorder %s203, %s219
    %p221 = scmp.eq.s32.totalorder %s22, 0
    %p222 = por %p220, %p221
    %s223 = ssub.s32 %s16, %s23
    %p224 = scmp.eq.s32.totalorder %s223, 0
    %s226 = sadd.s32 %s225, 1
    %s227 = scalar_select %p224, %s225, %s226
    %p230 = pneg %p224
    %p231 = scmp.eq.s32.totalorder %s16, 7
    %p232 = por %p230, %p231
    %p233 = scmp.ne.s32.totalorder %s225, %s228
    %p234 = scmp.eq.s32.totalorder %s16, 0
    %p235 = por %p233, %p234
    %p236 = scmp.ne.s32.totalorder %s225, %s228
    %p237 = scmp.eq.s32.totalorder %s21, 7
    %p238 = por %p236, %p237
    %p239 = scmp.ne.s32.totalorder %s228, %s229
    %p240 = scmp.eq.s32.totalorder %s21, 0
    %p241 = por %p239, %p240
    %p242 = scmp.ne.s32.totalorder %s228, %s229
    %p243 = scmp.eq.s32.totalorder %s22, 7
    %p244 = por %p242, %p243
    %p246 = scmp.ne.s32.totalorder %s229, %s245
    %p247 = scmp.eq.s32.totalorder %s22, 0
    %p248 = por %p246, %p247
    %p249 = scmp.le.s32.totalorder 1, %s16
    %p250 = scmp.lt.s32.totalorder %s16, 9
    %p251 = pnand %p249, %p250
    %p252 = pneg %p251
    // Predicated region
    $region9: #{unet_block_forward.1} parent=5 // pred_check
      _
    $region10: #{unet_block_forward.1} parent=5 // pred_check_branch
      %254 = sbr.rel (%p251) target = $region12
    $region11: #{unet_block_forward.1} parent=5 // pred_region
      %s255 = ssub.s32 %s16, 1
      // Predicated region
      $region13: #{unet_block_forward.1} parent=11 // pred_check
        %p256 = pneg %p37
      $region14: #{unet_block_forward.1} parent=11 // pred_check_branch
        %258 = sbr.rel (%p256) target = $region16
      $region15: #{unet_block_forward.1} parent=11 // pred_region
        _
      $region16: #{unet_block_forward.1} parent=11 // pred_fallthru
        _
      // Predicated region
      $region17: #{unet_block_forward.1} parent=11 // pred_check
        %p259 = pneg %p58
      $region18: #{unet_block_forward.1} parent=11 // pred_check_branch
        %261 = sbr.rel (%p259) target = $region20
      $region19: #{unet_block_forward.1} parent=11 // pred_region
        _
      $region20: #{unet_block_forward.1} parent=11 // pred_fallthru
        _
      // Predicated region
      $region21: #{unet_block_forward.1} parent=11 // pred_check
        %p262 = pneg %p79
      $region22: #{unet_block_forward.1} parent=11 // pred_check_branch
        %264 = sbr.rel (%p262) target = $region24
      $region23: #{unet_block_forward.1} parent=11 // pred_region
        _
      $region24: #{unet_block_forward.1} parent=11 // pred_fallthru
        _
      // Predicated region
      $region25: #{unet_block_forward.1} parent=11 // pred_check
        %p265 = pneg %p100
      $region26: #{unet_block_forward.1} parent=11 // pred_check_branch
        %267 = sbr.rel (%p265) target = $region28
      $region27: #{unet_block_forward.1} parent=11 // pred_region
        _
      $region28: #{unet_block_forward.1} parent=11 // pred_fallthru
        _
      // Predicated region
      $region29: #{unet_block_forward.1} parent=11 // pred_check
        %p268 = pneg %p121
      $region30: #{unet_block_forward.1} parent=11 // pred_check_branch
        %270 = sbr.rel (%p268) target = $region32
      $region31: #{unet_block_forward.1} parent=11 // pred_region
        _
      $region32: #{unet_block_forward.1} parent=11 // pred_fallthru
        _
      // Predicated region
      $region33: #{unet_block_forward.1} parent=11 // pred_check
        %p271 = pneg %p142
      $region34: #{unet_block_forward.1} parent=11 // pred_check_branch
        %273 = sbr.rel (%p271) target = $region36
      $region35: #{unet_block_forward.1} parent=11 // pred_region
        _
      $region36: #{unet_block_forward.1} parent=11 // pred_fallthru
        _
      // Predicated region
      $region37: #{unet_block_forward.1} parent=11 // pred_check
        %p274 = pneg %p163
      $region38: #{unet_block_forward.1} parent=11 // pred_check_branch
        %276 = sbr.rel (%p274) target = $region40
      $region39: #{unet_block_forward.1} parent=11 // pred_region
        _
      $region40: #{unet_block_forward.1} parent=11 // pred_fallthru
        _
    $region12: #{unet_block_forward.1} parent=5 // pred_fallthru
      _
    %p277 = scmp.lt.s32.totalorder %s16, 8
    // Predicated region
    $region41: #{unet_block_forward.1} parent=5 // pred_check
      %p278 = pneg %p277
    $region42: #{unet_block_forward.1} parent=5 // pred_check_branch
      %280 = sbr.rel (%p278) target = $region44
    $region43: #{unet_block_forward.1} parent=5 // pred_region
      // Predicated region
      $region45: #{unet_block_forward.1} parent=43 // pred_check
        %p281 = pneg %p183
      $region46: #{unet_block_forward.1} parent=43 // pred_check_branch
        %283 = sbr.rel (%p281) target = $region48
      $region47: #{unet_block_forward.1} parent=43 // pred_region
        %p284 = scmp.lt.s32.totalorder %s16, 7
        %s285 = scalar_select %p284, %s16, 7
        %s286 = smul.addr %s285, 43
        %s287 = smul.addr %s286, 4
        %s288 = scalar_lea.vmem %s7, %s287
      $region48: #{unet_block_forward.1} parent=43 // pred_fallthru
        _
    $region44: #{unet_block_forward.1} parent=5 // pred_fallthru
      _
    %p289 = scmp.le.s32.totalorder 1, %s16
    %p290 = scmp.lt.s32.totalorder %s16, 9
    %p291 = pnand %p289, %p290
    %p292 = pneg %p291
    // Predicated region
    $region49: #{unet_block_forward.1} parent=5 // pred_check
      _
    $region50: #{unet_block_forward.1} parent=5 // pred_check_branch
      %294 = sbr.rel (%p291) target = $region52
    $region51: #{unet_block_forward.1} parent=5 // pred_region
      %s295 = ssub.s32 %s16, 1
      %p296 = pneg %p37
      %p297 = pneg %p34
      %p298 = pneg %p58
      %p299 = pneg %p55
      %p300 = pneg %p79
      %p301 = pneg %p76
      %p302 = pneg %p100
      %p303 = pneg %p97
      %p304 = pneg %p121
      %p305 = pneg %p118
      %p306 = pneg %p142
      %p307 = pneg %p139
      %p308 = pneg %p163
      %p309 = pneg %p160
      %p310 = scmp.lt.s32.totalorder %s21, 7
      %s311 = scalar_select %p310, %s21, 7
      %s312 = smul.addr %s311, 43
      %s313 = smul.addr %s312, 4
      %s314 = scalar_lea.vmem %s7, %s313
      %p315 = pneg %p189
      %p316 = pneg %p186
      %p317 = pneg %p215
      %p318 = pneg %p212
      %p319 = scmp.lt.s32.totalorder %s21, 7
      %s320 = scalar_select %p319, %s21, 7
      %s321 = smul.addr %s320, 36
      %s322 = smul.addr %s321, 8
      %s323 = scalar_lea.vmem %s8, %s322
      %p324 = pneg %p241
      %p325 = pneg %p238
      %p326 = scmp.lt.s32.totalorder %s21, 7
      %s327 = scalar_select %p326, %s21, 7
      %s328 = smul.addr %s327, 16
      %s329 = smul.addr %s328, 8
      %s330 = scalar_lea.vmem %s9, %s329
      %p331 = scmp.lt.s32.totalorder %s21, 7
      %s332 = scalar_select %p331, %s21, 7
      %s333 = smul.addr %s332, 43
      %s334 = smul.addr %s333, 4
      %s335 = scalar_lea.vmem %s7, %s334
      %p336 = scmp.lt.s32.totalorder %s21, 7
      %s337 = scalar_select %p336, %s21, 7
      %s338 = smul.addr %s337, 36
      %s339 = smul.addr %s338, 8
      %s340 = scalar_lea.vmem %s8, %s339
      %p341 = scmp.lt.s32.totalorder %s21, 7
      %s342 = scalar_select %p341, %s21, 7
      %s343 = smul.addr %s342, 16
      %s344 = smul.addr %s343, 8
      %s345 = scalar_lea.vmem %s9, %s344
      %v347 = vld [vmem:[%s335] sm:$0xf]
      %v348 = vld [vmem:[%s335 + $0x4] sm:$0xf]
      %v349 = vld [vmem:[%s335 + $0x8] sm:$0xf]
      %v350 = vld [vmem:[%s335 + $0xc] sm:$0xf]
      %v351 = vld [vmem:[%s335 + $0x10] sm:$0xf]
      %v352 = vld [vmem:[%s335 + $0x14] sm:$0xf]
      %v353 = vld [vmem:[%s335 + $0x18] sm:$0xf]
      %v354 = vld [vmem:[%s335 + $0x1c] sm:$0xf]
      %v355 = vld [vmem:[%s335 + $0x20] sm:$0xf]
      %v356 = vld [vmem:[%s335 + $0x24] sm:$0xf]
      %v357 = vld [vmem:[%s335 + $0x28] sm:$0xf]
      %v358 = vld [vmem:[%s335 + $0x2c] sm:$0xf]
      %v359 = vld [vmem:[%s335 + $0x30] sm:$0xf]
      %v360 = vld [vmem:[%s335 + $0x34] sm:$0xf]
      %v361 = vld [vmem:[%s335 + $0x38] sm:$0xf]
      %v362 = vld [vmem:[%s335 + $0x3c] sm:$0xf]
      %v363 = vld [vmem:[%s335 + $0x40] sm:$0xf]
      %v364 = vld [vmem:[%s335 + $0x44] sm:$0xf]
      %v365 = vld [vmem:[%s335 + $0x48] sm:$0xf]
      %v366 = vld [vmem:[%s335 + $0x4c] sm:$0xf]
      %v367 = vld [vmem:[%s335 + $0x50] sm:$0xf]
      %v368 = vld [vmem:[%s335 + $0x54] sm:$0xf]
      %v369 = vld [vmem:[%s335 + $0x58] sm:$0xf]
      %v370 = vld [vmem:[%s335 + $0x5c] sm:$0xf]
      %v371 = vld [vmem:[%s335 + $0x60] sm:$0xf]
      %v372 = vld [vmem:[%s335 + $0x64] sm:$0xf]
      %v373 = vld [vmem:[%s335 + $0x68] sm:$0xf]
      %v374 = vld [vmem:[%s335 + $0x6c] sm:$0xf]
      %v375 = vld [vmem:[%s335 + $0x70] sm:$0xf]
      %v376 = vld [vmem:[%s335 + $0x74] sm:$0xf]
      %v377 = vld [vmem:[%s335 + $0x78] sm:$0xf]
      %v378 = vld [vmem:[%s335 + $0x7c] sm:$0xf]
      %v379 = vld [vmem:[%s335 + $0x80] sm:$0xf]
      %v380 = vld [vmem:[%s335 + $0x84] sm:$0xf]
      %v381 = vld [vmem:[%s335 + $0x88] sm:$0xf]
      %v382 = vld [vmem:[%s335 + $0x8c] sm:$0xf]
      %v383 = vld [vmem:[%s0] sm:$0x3]
      %v384 = vld [vmem:[%s335 + $0x90] sm:$0x1]
      %s385 = scalar_lea.vmem %s0, 2
      %v386 = vld [vmem:[%s385] sm:$0x3]
      %v424 = vunpack.c.l.b16 %v347
      %v425 = vunpack.c.l.b16 %v348
      %v426 = vunpack.c.l.b16 %v349
      %v427 = vunpack.c.l.b16 %v350
      %v428 = vunpack.c.l.b16 %v351
      %v429 = vunpack.c.l.b16 %v352
      %v430 = vunpack.c.l.b16 %v353
      %v431 = vunpack.c.l.b16 %v354
      %v432 = vunpack.c.l.b16 %v355
      %v433 = vunpack.c.l.b16 %v356
      %v434 = vunpack.c.l.b16 %v357
      %v435 = vunpack.c.l.b16 %v358
      %v436 = vunpack.c.l.b16 %v359
      %v437 = vunpack.c.l.b16 %v360
      %v438 = vunpack.c.l.b16 %v361
      %v439 = vunpack.c.l.b16 %v362
      %v440 = vunpack.c.l.b16 %v363
      %v441 = vunpack.c.l.b16 %v364
      %v442 = vunpack.c.l.b16 %v365
      %v443 = vunpack.c.l.b16 %v366
      %v444 = vunpack.c.l.b16 %v367
      %v445 = vunpack.c.l.b16 %v368
      %v446 = vunpack.c.l.b16 %v369
      %v447 = vunpack.c.l.b16 %v370
      %v448 = vunpack.c.l.b16 %v371
      %v449 = vunpack.c.l.b16 %v372
      %v450 = vunpack.c.l.b16 %v373
      %v451 = vunpack.c.l.b16 %v374
      %v452 = vunpack.c.l.b16 %v375
      %v453 = vunpack.c.l.b16 %v376
      %v454 = vunpack.c.l.b16 %v377
      %v455 = vunpack.c.l.b16 %v378
      %v456 = vunpack.c.l.b16 %v379
      %v457 = vunpack.c.l.b16 %v380
      %v458 = vunpack.c.l.b16 %v381
      %v459 = vunpack.c.l.b16 %v382
      %v460 = vunpack.c.l.b16 %v384
      %v461 = vpack.c.b16 %v425, %v424
      %v462 = vpack.c.b16 %v427, %v426
      %v463 = vpack.c.b16 %v429, %v428
      %v464 = vpack.c.b16 %v431, %v430
      %v465 = vpack.c.b16 %v433, %v432
      %v466 = vpack.c.b16 %v435, %v434
      %v467 = vpack.c.b16 %v437, %v436
      %v468 = vpack.c.b16 %v439, %v438
      %v469 = vpack.c.b16 %v441, %v440
      %v470 = vpack.c.b16 %v443, %v442
      %v471 = vpack.c.b16 %v445, %v444
      %v472 = vpack.c.b16 %v447, %v446
      %v473 = vpack.c.b16 %v449, %v448
      %v474 = vpack.c.b16 %v451, %v450
      %v475 = vpack.c.b16 %v453, %v452
      %v476 = vpack.c.b16 %v455, %v454
      %v477 = vpack.c.b16 %v457, %v456
      %v478 = vpack.c.b16 %v459, %v458
      %v479 = vpack.c.b16 %v460, %v460
      %vm480 = vsmask.f32 7424
      %v482 = vshrl.u32 %v461, 16
      %v484 = vshll.u32 %v461, 16
      %v486 = vrot.slane %v484, 1
      %v487 = vor.u32 %v482, %v486
      %v489 = vshll.u32 %v462, 16
      %v491 = vrot.slane %v489, 1
      %v492 = vsel %vm480, %v487, %v491
      %v493 = vshrl.u32 %v462, 16
      %v495 = vor.u32 %v493, %v491
      %v497 = vshll.u32 %v463, 16
      %v499 = vrot.slane %v497, 1
      %v500 = vsel %vm480, %v495, %v499
      %v501 = vshrl.u32 %v463, 16
      %v503 = vor.u32 %v501, %v499
      %v505 = vshll.u32 %v464, 16
      %v507 = vrot.slane %v505, 1
      %v508 = vsel %vm480, %v503, %v507
      %v509 = vshrl.u32 %v464, 16
      %v511 = vor.u32 %v509, %v507
      %v513 = vshll.u32 %v465, 16
      %v515 = vrot.slane %v513, 1
      %v516 = vsel %vm480, %v511, %v515
      %v517 = vshrl.u32 %v465, 16
      %v519 = vor.u32 %v517, %v515
      %v521 = vshll.u32 %v466, 16
      %v523 = vrot.slane %v521, 1
      %v524 = vsel %vm480, %v519, %v523
      %v525 = vshrl.u32 %v466, 16
      %v527 = vor.u32 %v525, %v523
      %v529 = vshll.u32 %v467, 16
      %v531 = vrot.slane %v529, 1
      %v532 = vsel %vm480, %v527, %v531
      %v533 = vshrl.u32 %v467, 16
      %v535 = vor.u32 %v533, %v531
      %v537 = vshll.u32 %v468, 16
      %v539 = vrot.slane %v537, 1
      %v540 = vsel %vm480, %v535, %v539
      %v541 = vshrl.u32 %v468, 16
      %v543 = vor.u32 %v541, %v539
      %v545 = vshll.u32 %v469, 16
      %v547 = vrot.slane %v545, 1
      %v548 = vsel %vm480, %v543, %v547
      %v549 = vshrl.u32 %v469, 16
      %v551 = vor.u32 %v549, %v547
      %v553 = vshll.u32 %v470, 16
      %v555 = vrot.slane %v553, 1
      %v556 = vsel %vm480, %v551, %v555
      %v557 = vshrl.u32 %v470, 16
      %v559 = vor.u32 %v557, %v555
      %v561 = vshll.u32 %v471, 16
      %v563 = vrot.slane %v561, 1
      %v564 = vsel %vm480, %v559, %v563
      %v565 = vshrl.u32 %v471, 16
      %v567 = vor.u32 %v565, %v563
      %v569 = vshll.u32 %v472, 16
      %v571 = vrot.slane %v569, 1
      %v572 = vsel %vm480, %v567, %v571
      %v573 = vshrl.u32 %v472, 16
      %v575 = vor.u32 %v573, %v571
      %v577 = vshll.u32 %v473, 16
      %v579 = vrot.slane %v577, 1
      %v580 = vsel %vm480, %v575, %v579
      %v581 = vshrl.u32 %v473, 16
      %v583 = vor.u32 %v581, %v579
      %v585 = vshll.u32 %v474, 16
      %v587 = vrot.slane %v585, 1
      %v588 = vsel %vm480, %v583, %v587
      %v589 = vshrl.u32 %v474, 16
      %v591 = vor.u32 %v589, %v587
      %v593 = vshll.u32 %v475, 16
      %v595 = vrot.slane %v593, 1
      %v596 = vsel %vm480, %v591, %v595
      %v597 = vshrl.u32 %v475, 16
      %v599 = vor.u32 %v597, %v595
      %v601 = vshll.u32 %v476, 16
      %v603 = vrot.slane %v601, 1
      %v604 = vsel %vm480, %v599, %v603
      %v605 = vshrl.u32 %v476, 16
      %v607 = vor.u32 %v605, %v603
      %v609 = vshll.u32 %v477, 16
      %v611 = vrot.slane %v609, 1
      %v612 = vsel %vm480, %v607, %v611
      %v613 = vshrl.u32 %v477, 16
      %v615 = vor.u32 %v613, %v611
      %v617 = vshll.u32 %v478, 16
      %v619 = vrot.slane %v617, 1
      %v620 = vsel %vm480, %v615, %v619
      %v621 = vshrl.u32 %v478, 16
      %v623 = vor.u32 %v621, %v619
      %v625 = vshll.u32 %v479, 16
      %v627 = vrot.slane %v625, 1
      %v628 = vsel %vm480, %v623, %v627
      %vm629 = vcmask 31744
      %v631 = vsel %vm629, %v492, 0
      %v634 = vsel %vm629, %v500, 0
      %v637 = vsel %vm629, %v508, 0
      %v640 = vsel %vm629, %v516, 0
      %v643 = vsel %vm629, %v524, 0
      %v646 = vsel %vm629, %v532, 0
      %v649 = vsel %vm629, %v540, 0
      %v652 = vsel %vm629, %v548, 0
      %v655 = vsel %vm629, %v556, 0
      %v658 = vsel %vm629, %v564, 0
      %v661 = vsel %vm629, %v572, 0
      %v664 = vsel %vm629, %v580, 0
      %v667 = vsel %vm629, %v588, 0
      %v670 = vsel %vm629, %v596, 0
      %v673 = vsel %vm629, %v604, 0
      %v676 = vsel %vm629, %v612, 0
      %v679 = vsel %vm629, %v620, 0
      %v682 = vsel %vm629, %v628, 0
      %vm684 = vcmask 1041408
      %v686 = vsel %vm684, %v386, 0
      %688 = vmatprep.subr.bf16.mxu0 0
      %689 = vmatpush1.bf16.msra.mxu0 0
      %690 = vmatprep.subr.bf16.mxu0 0
      %691 = vmatpush1.bf16.msra.mxu0 0
      %692 = vmatprep.subr.bf16.mxu0 0
      %693 = vmatpush1.bf16.msra.mxu0 0
      %694 = vmatprep.subr.bf16.mxu0 0
      %695 = vmatpush1.bf16.msra.mxu0 0
      %696 = vmatprep.subr.bf16.mxu0 0
      %697 = vmatpush1.bf16.msra.mxu0 0
      %698 = vmatprep.subr.bf16.mxu0 0
      %699 = vmatpush1.bf16.msra.mxu0 0
      %700 = vmatprep.subr.bf16.mxu0 0
      %701 = vmatpush1.bf16.msra.mxu0 0
      %702 = vmatprep.subr.bf16.mxu0 0
      %703 = vmatpush1.bf16.msra.mxu0 %v686
      %704 = vmatprep.subr.bf16.mxu0 0
      %705 = vmatpush2.bf16.msra.mxu0 0
      %706 = vmatprep.subr.bf16.mxu0 0
      %707 = vmatpush2.bf16.msra.mxu0 0
      %708 = vmatprep.subr.bf16.mxu0 0
      %709 = vmatpush2.bf16.msra.mxu0 0
      %710 = vmatprep.subr.bf16.mxu0 0
      %711 = vmatpush2.bf16.msra.mxu0 0
      %712 = vmatprep.subr.bf16.mxu0 0
      %713 = vmatpush2.bf16.msra.mxu0 0
      %714 = vmatprep.subr.bf16.mxu0 0
      %715 = vmatpush2.bf16.msra.mxu0 0
      %716 = vmatprep.subr.bf16.mxu0 0
      %717 = vmatpush2.bf16.msra.mxu0 0
      %718 = vmatprep.subr.bf16.mxu0 0
      %719 = vmatpush2.bf16.msra.mxu0 0
      %720 = vmatprep.mubr.bf16.mxu0 0
      %721 = vmatmul.mubr.bf16.gmra.mxu0 %v631
      %v722 = vpop.f32.mrf.mxu0
      %v723 = vadd.f32 0.0, %v722
      %v724 = vpop.f32.mrf.mxu0
      %v725 = vpop.f32.mrf.mxu0
      %v726 = vadd.f32 0.0, %v725
      %v727 = vpop.f32.mrf.mxu0
      %728 = vmatprep.mubr.bf16.mxu0 0
      %729 = vmatmul.mubr.bf16.gmra.mxu0 %v634
      %v730 = vpop.f32.mrf.mxu0
      %v731 = vadd.f32 0.0, %v730
      %v732 = vpop.f32.mrf.mxu0
      %v733 = vpop.f32.mrf.mxu0
      %v734 = vadd.f32 0.0, %v733
      %v735 = vpop.f32.mrf.mxu0
      %736 = vmatprep.mubr.bf16.mxu0 0
      %737 = vmatmul.mubr.bf16.gmra.mxu0 %v637
      %v738 = vpop.f32.mrf.mxu0
      %v739 = vadd.f32 0.0, %v738
      %v740 = vpop.f32.mrf.mxu0
      %v741 = vpop.f32.mrf.mxu0
      %v742 = vadd.f32 0.0, %v741
      %v743 = vpop.f32.mrf.mxu0
      %744 = vmatprep.mubr.bf16.mxu0 0
      %745 = vmatmul.mubr.bf16.gmra.mxu0 %v640
      %v746 = vpop.f32.mrf.mxu0
      %v747 = vadd.f32 0.0, %v746
      %v748 = vpop.f32.mrf.mxu0
      %v749 = vpop.f32.mrf.mxu0
      %v750 = vadd.f32 0.0, %v749
      %v751 = vpop.f32.mrf.mxu0
      %752 = vmatprep.mubr.bf16.mxu0 0
      %753 = vmatmul.mubr.bf16.gmra.mxu0 %v643
      %v754 = vpop.f32.mrf.mxu0
      %v755 = vadd.f32 0.0, %v754
      %v756 = vpop.f32.mrf.mxu0
      %v757 = vpop.f32.mrf.mxu0
      %v758 = vadd.f32 0.0, %v757
      %v759 = vpop.f32.mrf.mxu0
      %760 = vmatprep.mubr.bf16.mxu0 0
      %761 = vmatmul.mubr.bf16.gmra.mxu0 %v646
      %v762 = vpop.f32.mrf.mxu0
      %v763 = vadd.f32 0.0, %v762
      %v764 = vpop.f32.mrf.mxu0
      %v765 = vpop.f32.mrf.mxu0
      %v766 = vadd.f32 0.0, %v765
      %v767 = vpop.f32.mrf.mxu0
      %768 = vmatprep.mubr.bf16.mxu0 0
      %769 = vmatmul.mubr.bf16.gmra.mxu0 %v649
      %v770 = vpop.f32.mrf.mxu0
      %v771 = vadd.f32 0.0, %v770
      %v772 = vpop.f32.mrf.mxu0
      %v773 = vpop.f32.mrf.mxu0
      %v774 = vadd.f32 0.0, %v773
      %v775 = vpop.f32.mrf.mxu0
      %776 = vmatprep.mubr.bf16.mxu0 0
      %777 = vmatmul.mubr.bf16.gmra.mxu0 %v652
      %v778 = vpop.f32.mrf.mxu0
      %v779 = vadd.f32 0.0, %v778
      %v780 = vpop.f32.mrf.mxu0
      %v781 = vpop.f32.mrf.mxu0
      %v782 = vadd.f32 0.0, %v781
      %v783 = vpop.f32.mrf.mxu0
      %784 = vmatprep.mubr.bf16.mxu0 0
      %785 = vmatmul.mubr.bf16.gmra.mxu0 %v655
      %v786 = vpop.f32.mrf.mxu0
      %v787 = vadd.f32 0.0, %v786
      %v788 = vpop.f32.mrf.mxu0
      %v789 = vpop.f32.mrf.mxu0
      %v790 = vadd.f32 0.0, %v789
      %v791 = vpop.f32.mrf.mxu0
      %792 = vmatprep.mubr.bf16.mxu0 0
      %793 = vmatmul.mubr.bf16.gmra.mxu0 %v658
      %v794 = vpop.f32.mrf.mxu0
      %v795 = vadd.f32 0.0, %v794
      %v796 = vpop.f32.mrf.mxu0
      %v797 = vpop.f32.mrf.mxu0
      %v798 = vadd.f32 0.0, %v797
      %v799 = vpop.f32.mrf.mxu0
      %800 = vmatprep.mubr.bf16.mxu0 0
      %801 = vmatmul.mubr.bf16.gmra.mxu0 %v661
      %v802 = vpop.f32.mrf.mxu0
      %v803 = vadd.f32 0.0, %v802
      %v804 = vpop.f32.mrf.mxu0
      %v805 = vpop.f32.mrf.mxu0
      %v806 = vadd.f32 0.0, %v805
      %v807 = vpop.f32.mrf.mxu0
      %808 = vmatprep.mubr.bf16.mxu0 0
      %809 = vmatmul.mubr.bf16.gmra.mxu0 %v664
      %v810 = vpop.f32.mrf.mxu0
      %v811 = vadd.f32 0.0, %v810
      %v812 = vpop.f32.mrf.mxu0
      %v813 = vpop.f32.mrf.mxu0
      %v814 = vadd.f32 0.0, %v813
      %v815 = vpop.f32.mrf.mxu0
      %816 = vmatprep.mubr.bf16.mxu0 0
      %817 = vmatmul.mubr.bf16.gmra.mxu0 %v667
      %v818 = vpop.f32.mrf.mxu0
      %v819 = vadd.f32 0.0, %v818
      %v820 = vpop.f32.mrf.mxu0
      %v821 = vpop.f32.mrf.mxu0
      %v822 = vadd.f32 0.0, %v821
      %v823 = vpop.f32.mrf.mxu0
      %824 = vmatprep.mubr.bf16.mxu0 0
      %825 = vmatmul.mubr.bf16.gmra.mxu0 %v670
      %v826 = vpop.f32.mrf.mxu0
      %v827 = vadd.f32 0.0, %v826
      %v828 = vpop.f32.mrf.mxu0
      %v829 = vpop.f32.mrf.mxu0
      %v830 = vadd.f32 0.0, %v829
      %v831 = vpop.f32.mrf.mxu0
      %832 = vmatprep.mubr.bf16.mxu0 0
      %833 = vmatmul.mubr.bf16.gmra.mxu0 %v673
      %v834 = vpop.f32.mrf.mxu0
      %v835 = vadd.f32 0.0, %v834
      %v836 = vpop.f32.mrf.mxu0
      %v837 = vpop.f32.mrf.mxu0
      %v838 = vadd.f32 0.0, %v837
      %v839 = vpop.f32.mrf.mxu0
      %840 = vmatprep.mubr.bf16.mxu0 0
      %841 = vmatmul.mubr.bf16.gmra.mxu0 %v676
      %v842 = vpop.f32.mrf.mxu0
      %v843 = vadd.f32 0.0, %v842
      %v844 = vpop.f32.mrf.mxu0
      %v845 = vpop.f32.mrf.mxu0
      %v846 = vadd.f32 0.0, %v845
      %v847 = vpop.f32.mrf.mxu0
      %848 = vmatprep.mubr.bf16.mxu0 0
      %849 = vmatmul.mubr.bf16.gmra.mxu0 %v679
      %v850 = vpop.f32.mrf.mxu0
      %v851 = vadd.f32 0.0, %v850
      %v852 = vpop.f32.mrf.mxu0
      %v853 = vpop.f32.mrf.mxu0
      %v854 = vadd.f32 0.0, %v853
      %v855 = vpop.f32.mrf.mxu0
      %856 = vmatprep.mubr.bf16.mxu0 0
      %857 = vmatmul.mubr.bf16.gmra.mxu0 %v682
      %v858 = vpop.f32.mrf.mxu0
      %v859 = vadd.f32 0.0, %v858
      %v860 = vpop.f32.mrf.mxu0
      %v861 = vpop.f32.mrf.mxu0
      %v862 = vadd.f32 0.0, %v861
      %v863 = vpop.f32.mrf.mxu0
      %864 = vdwg.mxu0
      %v865 = vsel %vm629, %v461, 0
      %v867 = vsel %vm629, %v462, 0
      %v869 = vsel %vm629, %v463, 0
      %v871 = vsel %vm629, %v464, 0
      %v873 = vsel %vm629, %v465, 0
      %v875 = vsel %vm629, %v466, 0
      %v877 = vsel %vm629, %v467, 0
      %v879 = vsel %vm629, %v468, 0
      %v881 = vsel %vm629, %v469, 0
      %v883 = vsel %vm629, %v470, 0
      %v885 = vsel %vm629, %v471, 0
      %v887 = vsel %vm629, %v472, 0
      %v889 = vsel %vm629, %v473, 0
      %v891 = vsel %vm629, %v474, 0
      %v893 = vsel %vm629, %v475, 0
      %v895 = vsel %vm629, %v476, 0
      %v897 = vsel %vm629, %v477, 0
      %v899 = vsel %vm629, %v478, 0
      %v902 = vsel %vm684, %v383, 0
      %904 = vmatprep.subr.bf16.mxu0 0
      %905 = vmatpush1.bf16.msra.mxu0 0
      %906 = vmatprep.subr.bf16.mxu0 0
      %907 = vmatpush1.bf16.msra.mxu0 0
      %908 = vmatprep.subr.bf16.mxu0 0
      %909 = vmatpush1.bf16.msra.mxu0 0
      %910 = vmatprep.subr.bf16.mxu0 0
      %911 = vmatpush1.bf16.msra.mxu0 0
      %912 = vmatprep.subr.bf16.mxu0 0
      %913 = vmatpush1.bf16.msra.mxu0 0
      %914 = vmatprep.subr.bf16.mxu0 0
      %915 = vmatpush1.bf16.msra.mxu0 0
      %916 = vmatprep.subr.bf16.mxu0 0
      %917 = vmatpush1.bf16.msra.mxu0 0
      %918 = vmatprep.subr.bf16.mxu0 0
      %919 = vmatpush1.bf16.msra.mxu0 %v902
      %920 = vmatprep.subr.bf16.mxu0 0
      %921 = vmatpush2.bf16.msra.mxu0 0
      %922 = vmatprep.subr.bf16.mxu0 0
      %923 = vmatpush2.bf16.msra.mxu0 0
      %924 = vmatprep.subr.bf16.mxu0 0
      %925 = vmatpush2.bf16.msra.mxu0 0
      %926 = vmatprep.subr.bf16.mxu0 0
      %927 = vmatpush2.bf16.msra.mxu0 0
      %928 = vmatprep.subr.bf16.mxu0 0
      %929 = vmatpush2.bf16.msra.mxu0 0
      %930 = vmatprep.subr.bf16.mxu0 0
      %931 = vmatpush2.bf16.msra.mxu0 0
      %932 = vmatprep.subr.bf16.mxu0 0
      %933 = vmatpush2.bf16.msra.mxu0 0
      %934 = vmatprep.subr.bf16.mxu0 0
      %935 = vmatpush2.bf16.msra.mxu0 0
      %936 = vmatprep.mubr.bf16.mxu0 0
      %937 = vmatmul.mubr.bf16.gmra.mxu0 %v865
      %v938 = vpop.f32.mrf.mxu0
      %v939 = vadd.f32 %v723, %v938
      %v940 = vpop.f32.mrf.mxu0
      %v941 = vpop.f32.mrf.mxu0
      %v942 = vadd.f32 %v726, %v941
      %v943 = vpop.f32.mrf.mxu0
      %944 = vmatprep.mubr.bf16.mxu0 0
      %945 = vmatmul.mubr.bf16.gmra.mxu0 %v867
      %v946 = vpop.f32.mrf.mxu0
      %v947 = vadd.f32 %v731, %v946
      %v948 = vpop.f32.mrf.mxu0
      %v949 = vpop.f32.mrf.mxu0
      %v950 = vadd.f32 %v734, %v949
      %v951 = vpop.f32.mrf.mxu0
      %952 = vmatprep.mubr.bf16.mxu0 0
      %953 = vmatmul.mubr.bf16.gmra.mxu0 %v869
      %v954 = vpop.f32.mrf.mxu0
      %v955 = vadd.f32 %v739, %v954
      %v956 = vpop.f32.mrf.mxu0
      %v957 = vpop.f32.mrf.mxu0
      %v958 = vadd.f32 %v742, %v957
      %v959 = vpop.f32.mrf.mxu0
      %960 = vmatprep.mubr.bf16.mxu0 0
      %961 = vmatmul.mubr.bf16.gmra.mxu0 %v871
      %v962 = vpop.f32.mrf.mxu0
      %v963 = vadd.f32 %v747, %v962
      %v964 = vpop.f32.mrf.mxu0
      %v965 = vpop.f32.mrf.mxu0
      %v966 = vadd.f32 %v750, %v965
      %v967 = vpop.f32.mrf.mxu0
      %968 = vmatprep.mubr.bf16.mxu0 0
      %969 = vmatmul.mubr.bf16.gmra.mxu0 %v873
      %v970 = vpop.f32.mrf.mxu0
      %v971 = vadd.f32 %v755, %v970
      %v972 = vpop.f32.mrf.mxu0
      %v973 = vpop.f32.mrf.mxu0
      %v974 = vadd.f32 %v758, %v973
      %v975 = vpop.f32.mrf.mxu0
      %976 = vmatprep.mubr.bf16.mxu0 0
      %977 = vmatmul.mubr.bf16.gmra.mxu0 %v875
      %v978 = vpop.f32.mrf.mxu0
      %v979 = vadd.f32 %v763, %v978
      %v980 = vpop.f32.mrf.mxu0
      %v981 = vpop.f32.mrf.mxu0
      %v982 = vadd.f32 %v766, %v981
      %v983 = vpop.f32.mrf.mxu0
      %984 = vmatprep.mubr.bf16.mxu0 0
      %985 = vmatmul.mubr.bf16.gmra.mxu0 %v877
      %v986 = vpop.f32.mrf.mxu0
      %v987 = vadd.f32 %v771, %v986
      %v988 = vpop.f32.mrf.mxu0
      %v989 = vpop.f32.mrf.mxu0
      %v990 = vadd.f32 %v774, %v989
      %v991 = vpop.f32.mrf.mxu0
      %992 = vmatprep.mubr.bf16.mxu0 0
      %993 = vmatmul.mubr.bf16.gmra.mxu0 %v879
      %v994 = vpop.f32.mrf.mxu0
      %v995 = vadd.f32 %v779, %v994
      %v996 = vpop.f32.mrf.mxu0
      %v997 = vpop.f32.mrf.mxu0
      %v998 = vadd.f32 %v782, %v997
      %v999 = vpop.f32.mrf.mxu0
      %1000 = vmatprep.mubr.bf16.mxu0 0
      %1001 = vmatmul.mubr.bf16.gmra.mxu0 %v881
      %v1002 = vpop.f32.mrf.mxu0
      %v1003 = vadd.f32 %v787, %v1002
      %v1004 = vpop.f32.mrf.mxu0
      %v1005 = vpop.f32.mrf.mxu0
      %v1006 = vadd.f32 %v790, %v1005
      %v1007 = vpop.f32.mrf.mxu0
      %1008 = vmatprep.mubr.bf16.mxu0 0
      %1009 = vmatmul.mubr.bf16.gmra.mxu0 %v883
      %v1010 = vpop.f32.mrf.mxu0
      %v1011 = vadd.f32 %v795, %v1010
      %v1012 = vpop.f32.mrf.mxu0
      %v1013 = vpop.f32.mrf.mxu0
      %v1014 = vadd.f32 %v798, %v1013
      %v1015 = vpop.f32.mrf.mxu0
      %1016 = vmatprep.mubr.bf16.mxu0 0
      %1017 = vmatmul.mubr.bf16.gmra.mxu0 %v885
      %v1018 = vpop.f32.mrf.mxu0
      %v1019 = vadd.f32 %v803, %v1018
      %v1020 = vpop.f32.mrf.mxu0
      %v1021 = vpop.f32.mrf.mxu0
      %v1022 = vadd.f32 %v806, %v1021
      %v1023 = vpop.f32.mrf.mxu0
      %1024 = vmatprep.mubr.bf16.mxu0 0
      %1025 = vmatmul.mubr.bf16.gmra.mxu0 %v887
      %v1026 = vpop.f32.mrf.mxu0
      %v1027 = vadd.f32 %v811, %v1026
      %v1028 = vpop.f32.mrf.mxu0
      %v1029 = vpop.f32.mrf.mxu0
      %v1030 = vadd.f32 %v814, %v1029
      %v1031 = vpop.f32.mrf.mxu0
      %1032 = vmatprep.mubr.bf16.mxu0 0
      %1033 = vmatmul.mubr.bf16.gmra.mxu0 %v889
      %v1034 = vpop.f32.mrf.mxu0
      %v1035 = vadd.f32 %v819, %v1034
      %v1036 = vpop.f32.mrf.mxu0
      %v1037 = vpop.f32.mrf.mxu0
      %v1038 = vadd.f32 %v822, %v1037
      %v1039 = vpop.f32.mrf.mxu0
      %1040 = vmatprep.mubr.bf16.mxu0 0
      %1041 = vmatmul.mubr.bf16.gmra.mxu0 %v891
      %v1042 = vpop.f32.mrf.mxu0
      %v1043 = vadd.f32 %v827, %v1042
      %v1044 = vpop.f32.mrf.mxu0
      %v1045 = vpop.f32.mrf.mxu0
      %v1046 = vadd.f32 %v830, %v1045
      %v1047 = vpop.f32.mrf.mxu0
      %1048 = vmatprep.mubr.bf16.mxu0 0
      %1049 = vmatmul.mubr.bf16.gmra.mxu0 %v893
      %v1050 = vpop.f32.mrf.mxu0
      %v1051 = vadd.f32 %v835, %v1050
      %v1052 = vpop.f32.mrf.mxu0
      %v1053 = vpop.f32.mrf.mxu0
      %v1054 = vadd.f32 %v838, %v1053
      %v1055 = vpop.f32.mrf.mxu0
      %1056 = vmatprep.mubr.bf16.mxu0 0
      %1057 = vmatmul.mubr.bf16.gmra.mxu0 %v895
      %v1058 = vpop.f32.mrf.mxu0
      %v1059 = vadd.f32 %v843, %v1058
      %v1060 = vpop.f32.mrf.mxu0
      %v1061 = vpop.f32.mrf.mxu0
      %v1062 = vadd.f32 %v846, %v1061
      %v1063 = vpop.f32.mrf.mxu0
      %1064 = vmatprep.mubr.bf16.mxu0 0
      %1065 = vmatmul.mubr.bf16.gmra.mxu0 %v897
      %v1066 = vpop.f32.mrf.mxu0
      %v1067 = vadd.f32 %v851, %v1066
      %v1068 = vpop.f32.mrf.mxu0
      %v1069 = vpop.f32.mrf.mxu0
      %v1070 = vadd.f32 %v854, %v1069
      %v1071 = vpop.f32.mrf.mxu0
      %1072 = vmatprep.mubr.bf16.mxu0 0
      %1073 = vmatmul.mubr.bf16.gmra.mxu0 %v899
      %v1074 = vpop.f32.mrf.mxu0
      %v1075 = vadd.f32 %v859, %v1074
      %v1076 = vpop.f32.mrf.mxu0
      %v1077 = vpop.f32.mrf.mxu0
      %v1078 = vadd.f32 %v862, %v1077
      %v1079 = vpop.f32.mrf.mxu0
      %1080 = vdwg.mxu0
      %v1081 = vld [vmem:[%s335] sm:$0xe]
      %s1082 = scalar_lea.vmem %s0, 4
      %v1083 = vld [vmem:[%s1082] sm:$0x3]
      %v1085 = vunpack.c.l.b16 %v1081
      %v1086 = vpack.c.b16 %v425, %v1085
      %vm1087 = vcmask 1046528
      %v1088 = vrot.slane %v1086, 1
      %v1089 = vrot.slane %v462, 1
      %v1090 = vsel %vm1087, %v1088, %v1089
      %v1091 = vrot.slane %v463, 1
      %v1092 = vsel %vm1087, %v1089, %v1091
      %v1093 = vrot.slane %v464, 1
      %v1094 = vsel %vm1087, %v1091, %v1093
      %v1095 = vrot.slane %v465, 1
      %v1096 = vsel %vm1087, %v1093, %v1095
      %v1097 = vrot.slane %v466, 1
      %v1098 = vsel %vm1087, %v1095, %v1097
      %v1099 = vrot.slane %v467, 1
      %v1100 = vsel %vm1087, %v1097, %v1099
      %v1101 = vrot.slane %v468, 1
      %v1102 = vsel %vm1087, %v1099, %v1101
      %v1103 = vrot.slane %v469, 1
      %v1104 = vsel %vm1087, %v1101, %v1103
      %v1105 = vrot.slane %v470, 1
      %v1106 = vsel %vm1087, %v1103, %v1105
      %v1107 = vrot.slane %v471, 1
      %v1108 = vsel %vm1087, %v1105, %v1107
      %v1109 = vrot.slane %v472, 1
      %v1110 = vsel %vm1087, %v1107, %v1109
      %v1111 = vrot.slane %v473, 1
      %v1112 = vsel %vm1087, %v1109, %v1111
      %v1113 = vrot.slane %v474, 1
      %v1114 = vsel %vm1087, %v1111, %v1113
      %v1115 = vrot.slane %v475, 1
      %v1116 = vsel %vm1087, %v1113, %v1115
      %v1117 = vrot.slane %v476, 1
      %v1118 = vsel %vm1087, %v1115, %v1117
      %v1119 = vrot.slane %v477, 1
      %v1120 = vsel %vm1087, %v1117, %v1119
      %v1121 = vrot.slane %v478, 1
      %v1122 = vsel %vm1087, %v1119, %v1121
      %v1123 = vrot.slane %v479, 1
      %v1124 = vsel %vm1087, %v1121, %v1123
      %v1126 = vsel %vm629, %v1090, 0
      %v1129 = vsel %vm629, %v1092, 0
      %v1132 = vsel %vm629, %v1094, 0
      %v1135 = vsel %vm629, %v1096, 0
      %v1138 = vsel %vm629, %v1098, 0
      %v1141 = vsel %vm629, %v1100, 0
      %v1144 = vsel %vm629, %v1102, 0
      %v1147 = vsel %vm629, %v1104, 0
      %v1150 = vsel %vm629, %v1106, 0
      %v1153 = vsel %vm629, %v1108, 0
      %v1156 = vsel %vm629, %v1110, 0
      %v1159 = vsel %vm629, %v1112, 0
      %v1162 = vsel %vm629, %v1114, 0
      %v1165 = vsel %vm629, %v1116, 0
      %v1168 = vsel %vm629, %v1118, 0
      %v1171 = vsel %vm629, %v1120, 0
      %v1174 = vsel %vm629, %v1122, 0
      %v1177 = vsel %vm629, %v1124, 0
      %v1180 = vsel %vm684, %v1083, 0
      %1182 = vmatprep.subr.bf16.mxu0 0
      %1183 = vmatpush1.bf16.msra.mxu0 0
      %1184 = vmatprep.subr.bf16.mxu0 0
      %1185 = vmatpush1.bf16.msra.mxu0 0
      %1186 = vmatprep.subr.bf16.mxu0 0
      %1187 = vmatpush1.bf16.msra.mxu0 0
      %1188 = vmatprep.subr.bf16.mxu0 0
      %1189 = vmatpush1.bf16.msra.mxu0 0
      %1190 = vmatprep.subr.bf16.mxu0 0
      %1191 = vmatpush1.bf16.msra.mxu0 0
      %1192 = vmatprep.subr.bf16.mxu0 0
      %1193 = vmatpush1.bf16.msra.mxu0 0
      %1194 = vmatprep.subr.bf16.mxu0 0
      %1195 = vmatpush1.bf16.msra.mxu0 0
      %1196 = vmatprep.subr.bf16.mxu0 0
      %1197 = vmatpush1.bf16.msra.mxu0 %v1180
      %1198 = vmatprep.subr.bf16.mxu0 0
      %1199 = vmatpush2.bf16.msra.mxu0 0
      %1200 = vmatprep.subr.bf16.mxu0 0
      %1201 = vmatpush2.bf16.msra.mxu0 0
      %1202 = vmatprep.subr.bf16.mxu0 0
      %1203 = vmatpush2.bf16.msra.mxu0 0
      %1204 = vmatprep.subr.bf16.mxu0 0
      %1205 = vmatpush2.bf16.msra.mxu0 0
      %1206 = vmatprep.subr.bf16.mxu0 0
      %1207 = vmatpush2.bf16.msra.mxu0 0
      %1208 = vmatprep.subr.bf16.mxu0 0
      %1209 = vmatpush2.bf16.msra.mxu0 0
      %1210 = vmatprep.subr.bf16.mxu0 0
      %1211 = vmatpush2.bf16.msra.mxu0 0
      %1212 = vmatprep.subr.bf16.mxu0 0
      %1213 = vmatpush2.bf16.msra.mxu0 0
      %1214 = vmatprep.mubr.bf16.mxu0 0
      %1215 = vmatmul.mubr.bf16.gmra.mxu0 %v1126
      %v1216 = vpop.f32.mrf.mxu0
      %v1217 = vadd.f32 0.0, %v1216
      %v1218 = vpop.f32.mrf.mxu0
      %v1219 = vpop.f32.mrf.mxu0
      %v1220 = vadd.f32 0.0, %v1219
      %v1221 = vpop.f32.mrf.mxu0
      %1222 = vmatprep.mubr.bf16.mxu0 0
      %1223 = vmatmul.mubr.bf16.gmra.mxu0 %v1129
      %v1224 = vpop.f32.mrf.mxu0
      %v1225 = vadd.f32 0.0, %v1224
      %v1226 = vpop.f32.mrf.mxu0
      %v1227 = vpop.f32.mrf.mxu0
      %v1228 = vadd.f32 0.0, %v1227
      %v1229 = vpop.f32.mrf.mxu0
      %1230 = vmatprep.mubr.bf16.mxu0 0
      %1231 = vmatmul.mubr.bf16.gmra.mxu0 %v1132
      %v1232 = vpop.f32.mrf.mxu0
      %v1233 = vadd.f32 0.0, %v1232
      %v1234 = vpop.f32.mrf.mxu0
      %v1235 = vpop.f32.mrf.mxu0
      %v1236 = vadd.f32 0.0, %v1235
      %v1237 = vpop.f32.mrf.mxu0
      %1238 = vmatprep.mubr.bf16.mxu0 0
      %1239 = vmatmul.mubr.bf16.gmra.mxu0 %v1135
      %v1240 = vpop.f32.mrf.mxu0
      %v1241 = vadd.f32 0.0, %v1240
      %v1242 = vpop.f32.mrf.mxu0
      %v1243 = vpop.f32.mrf.mxu0
      %v1244 = vadd.f32 0.0, %v1243
      %v1245 = vpop.f32.mrf.mxu0
      %1246 = vmatprep.mubr.bf16.mxu0 0
      %1247 = vmatmul.mubr.bf16.gmra.mxu0 %v1138
      %v1248 = vpop.f32.mrf.mxu0
      %v1249 = vadd.f32 0.0, %v1248
      %v1250 = vpop.f32.mrf.mxu0
      %v1251 = vpop.f32.mrf.mxu0
      %v1252 = vadd.f32 0.0, %v1251
      %v1253 = vpop.f32.mrf.mxu0
      %1254 = vmatprep.mubr.bf16.mxu0 0
      %1255 = vmatmul.mubr.bf16.gmra.mxu0 %v1141
      %v1256 = vpop.f32.mrf.mxu0
      %v1257 = vadd.f32 0.0, %v1256
      %v1258 = vpop.f32.mrf.mxu0
      %v1259 = vpop.f32.mrf.mxu0
      %v1260 = vadd.f32 0.0, %v1259
      %v1261 = vpop.f32.mrf.mxu0
      %1262 = vmatprep.mubr.bf16.mxu0 0
      %1263 = vmatmul.mubr.bf16.gmra.mxu0 %v1144
      %v1264 = vpop.f32.mrf.mxu0
      %v1265 = vadd.f32 0.0, %v1264
      %v1266 = vpop.f32.mrf.mxu0
      %v1267 = vpop.f32.mrf.mxu0
      %v1268 = vadd.f32 0.0, %v1267
      %v1269 = vpop.f32.mrf.mxu0
      %1270 = vmatprep.mubr.bf16.mxu0 0
      %1271 = vmatmul.mubr.bf16.gmra.mxu0 %v1147
      %v1272 = vpop.f32.mrf.mxu0
      %v1273 = vadd.f32 0.0, %v1272
      %v1274 = vpop.f32.mrf.mxu0
      %v1275 = vpop.f32.mrf.mxu0
      %v1276 = vadd.f32 0.0, %v1275
      %v1277 = vpop.f32.mrf.mxu0
      %1278 = vmatprep.mubr.bf16.mxu0 0
      %1279 = vmatmul.mubr.bf16.gmra.mxu0 %v1150
      %v1280 = vpop.f32.mrf.mxu0
      %v1281 = vadd.f32 0.0, %v1280
      %v1282 = vpop.f32.mrf.mxu0
      %v1283 = vpop.f32.mrf.mxu0
      %v1284 = vadd.f32 0.0, %v1283
      %v1285 = vpop.f32.mrf.mxu0
      %1286 = vmatprep.mubr.bf16.mxu0 0
      %1287 = vmatmul.mubr.bf16.gmra.mxu0 %v1153
      %v1288 = vpop.f32.mrf.mxu0
      %v1289 = vadd.f32 0.0, %v1288
      %v1290 = vpop.f32.mrf.mxu0
      %v1291 = vpop.f32.mrf.mxu0
      %v1292 = vadd.f32 0.0, %v1291
      %v1293 = vpop.f32.mrf.mxu0
      %1294 = vmatprep.mubr.bf16.mxu0 0
      %1295 = vmatmul.mubr.bf16.gmra.mxu0 %v1156
      %v1296 = vpop.f32.mrf.mxu0
      %v1297 = vadd.f32 0.0, %v1296
      %v1298 = vpop.f32.mrf.mxu0
      %v1299 = vpop.f32.mrf.mxu0
      %v1300 = vadd.f32 0.0, %v1299
      %v1301 = vpop.f32.mrf.mxu0
      %1302 = vmatprep.mubr.bf16.mxu0 0
      %1303 = vmatmul.mubr.bf16.gmra.mxu0 %v1159
      %v1304 = vpop.f32.mrf.mxu0
      %v1305 = vadd.f32 0.0, %v1304
      %v1306 = vpop.f32.mrf.mxu0
      %v1307 = vpop.f32.mrf.mxu0
      %v1308 = vadd.f32 0.0, %v1307
      %v1309 = vpop.f32.mrf.mxu0
      %1310 = vmatprep.mubr.bf16.mxu0 0
      %1311 = vmatmul.mubr.bf16.gmra.mxu0 %v1162
      %v1312 = vpop.f32.mrf.mxu0
      %v1313 = vadd.f32 0.0, %v1312
      %v1314 = vpop.f32.mrf.mxu0
      %v1315 = vpop.f32.mrf.mxu0
      %v1316 = vadd.f32 0.0, %v1315
      %v1317 = vpop.f32.mrf.mxu0
      %1318 = vmatprep.mubr.bf16.mxu0 0
      %1319 = vmatmul.mubr.bf16.gmra.mxu0 %v1165
      %v1320 = vpop.f32.mrf.mxu0
      %v1321 = vadd.f32 0.0, %v1320
      %v1322 = vpop.f32.mrf.mxu0
      %v1323 = vpop.f32.mrf.mxu0
      %v1324 = vadd.f32 0.0, %v1323
      %v1325 = vpop.f32.mrf.mxu0
      %1326 = vmatprep.mubr.bf16.mxu0 0
      %1327 = vmatmul.mubr.bf16.gmra.mxu0 %v1168
      %v1328 = vpop.f32.mrf.mxu0
      %v1329 = vadd.f32 0.0, %v1328
      %v1330 = vpop.f32.mrf.mxu0
      %v1331 = vpop.f32.mrf.mxu0
      %v1332 = vadd.f32 0.0, %v1331
      %v1333 = vpop.f32.mrf.mxu0
      %1334 = vmatprep.mubr.bf16.mxu0 0
      %1335 = vmatmul.mubr.bf16.gmra.mxu0 %v1171
      %v1336 = vpop.f32.mrf.mxu0
      %v1337 = vadd.f32 0.0, %v1336
      %v1338 = vpop.f32.mrf.mxu0
      %v1339 = vpop.f32.mrf.mxu0
      %v1340 = vadd.f32 0.0, %v1339
      %v1341 = vpop.f32.mrf.mxu0
      %1342 = vmatprep.mubr.bf16.mxu0 0
      %1343 = vmatmul.mubr.bf16.gmra.mxu0 %v1174
      %v1344 = vpop.f32.mrf.mxu0
      %v1345 = vadd.f32 0.0, %v1344
      %v1346 = vpop.f32.mrf.mxu0
      %v1347 = vpop.f32.mrf.mxu0
      %v1348 = vadd.f32 0.0, %v1347
      %v1349 = vpop.f32.mrf.mxu0
      %1350 = vmatprep.mubr.bf16.mxu0 0
      %1351 = vmatmul.mubr.bf16.gmra.mxu0 %v1177
      %v1352 = vpop.f32.mrf.mxu0
      %v1353 = vadd.f32 0.0, %v1352
      %v1354 = vpop.f32.mrf.mxu0
      %v1355 = vpop.f32.mrf.mxu0
      %v1356 = vadd.f32 0.0, %v1355
      %v1357 = vpop.f32.mrf.mxu0
      %1358 = vdwg.mxu0
      %v1359 = vadd.f32 %v939, %v1217
      %v1360 = vadd.f32 %v942, %v1220
      %v1361 = vadd.f32 %v947, %v1225
      %v1362 = vadd.f32 %v950, %v1228
      %v1363 = vadd.f32 %v955, %v1233
      %v1364 = vadd.f32 %v958, %v1236
      %v1365 = vadd.f32 %v963, %v1241
      %v1366 = vadd.f32 %v966, %v1244
      %v1367 = vadd.f32 %v971, %v1249
      %v1368 = vadd.f32 %v974, %v1252
      %v1369 = vadd.f32 %v979, %v1257
      %v1370 = vadd.f32 %v982, %v1260
      %v1371 = vadd.f32 %v987, %v1265
      %v1372 = vadd.f32 %v990, %v1268
      %v1373 = vadd.f32 %v995, %v1273
      %v1374 = vadd.f32 %v998, %v1276
      %v1375 = vadd.f32 %v1003, %v1281
      %v1376 = vadd.f32 %v1006, %v1284
      %v1377 = vadd.f32 %v1011, %v1289
      %v1378 = vadd.f32 %v1014, %v1292
      %v1379 = vadd.f32 %v1019, %v1297
      %v1380 = vadd.f32 %v1022, %v1300
      %v1381 = vadd.f32 %v1027, %v1305
      %v1382 = vadd.f32 %v1030, %v1308
      %v1383 = vadd.f32 %v1035, %v1313
      %v1384 = vadd.f32 %v1038, %v1316
      %v1385 = vadd.f32 %v1043, %v1321
      %v1386 = vadd.f32 %v1046, %v1324
      %v1387 = vadd.f32 %v1051, %v1329
      %v1388 = vadd.f32 %v1054, %v1332
      %v1389 = vadd.f32 %v1059, %v1337
      %v1390 = vadd.f32 %v1062, %v1340
      %v1391 = vadd.f32 %v1067, %v1345
      %v1392 = vadd.f32 %v1070, %v1348
      %v1393 = vadd.f32 %v1075, %v1353
      %v1394 = vadd.f32 %v1078, %v1356
      %v1395 = vld [vmem:[%s335 + $0x8] sm:$0xe]
      %v1396 = vld [vmem:[%s335 + $0xc] sm:$0xf]
      %v1397 = vld [vmem:[%s335 + $0x10] sm:$0xf]
      %v1398 = vld [vmem:[%s335 + $0x14] sm:$0xf]
      %v1399 = vld [vmem:[%s335 + $0x18] sm:$0xf]
      %v1400 = vld [vmem:[%s335 + $0x1c] sm:$0xf]
      %v1401 = vld [vmem:[%s335 + $0x20] sm:$0xf]
      %v1402 = vld [vmem:[%s335 + $0x24] sm:$0xf]
      %v1403 = vld [vmem:[%s335 + $0x28] sm:$0xf]
      %v1404 = vld [vmem:[%s335 + $0x2c] sm:$0xf]
      %v1405 = vld [vmem:[%s335 + $0x30] sm:$0xf]
      %v1406 = vld [vmem:[%s335 + $0x34] sm:$0xf]
      %v1407 = vld [vmem:[%s335 + $0x38] sm:$0xf]
      %v1408 = vld [vmem:[%s335 + $0x3c] sm:$0xf]
      %v1409 = vld [vmem:[%s335 + $0x40] sm:$0xf]
      %v1410 = vld [vmem:[%s335 + $0x44] sm:$0xf]
      %v1411 = vld [vmem:[%s335 + $0x48] sm:$0xf]
      %v1412 = vld [vmem:[%s335 + $0x4c] sm:$0xf]
      %v1413 = vld [vmem:[%s335 + $0x50] sm:$0xf]
      %v1414 = vld [vmem:[%s335 + $0x54] sm:$0xf]
      %v1415 = vld [vmem:[%s335 + $0x58] sm:$0xf]
      %v1416 = vld [vmem:[%s335 + $0x5c] sm:$0xf]
      %v1417 = vld [vmem:[%s335 + $0x60] sm:$0xf]
      %v1418 = vld [vmem:[%s335 + $0x64] sm:$0xf]
      %v1419 = vld [vmem:[%s335 + $0x68] sm:$0xf]
      %v1420 = vld [vmem:[%s335 + $0x6c] sm:$0xf]
      %v1421 = vld [vmem:[%s335 + $0x70] sm:$0xf]
      %v1422 = vld [vmem:[%s335 + $0x74] sm:$0xf]
      %v1423 = vld [vmem:[%s335 + $0x78] sm:$0xf]
      %v1424 = vld [vmem:[%s335 + $0x7c] sm:$0xf]
      %v1425 = vld [vmem:[%s335 + $0x80] sm:$0xf]
      %v1426 = vld [vmem:[%s335 + $0x84] sm:$0xf]
      %v1427 = vld [vmem:[%s335 + $0x88] sm:$0xf]
      %v1428 = vld [vmem:[%s335 + $0x8c] sm:$0xf]
      %v1429 = vld [vmem:[%s335 + $0x90] sm:$0xf]
      %v1430 = vld [vmem:[%s335 + $0x94] sm:$0xf]
      %v1431 = vld [vmem:[%s335 + $0x98] sm:$0x1]
      %s1432 = scalar_lea.vmem %s0, 6
      %v1433 = vld [vmem:[%s1432] sm:$0x3]
      %v1471 = vunpack.c.l.b16 %v1395
      %v1472 = vunpack.c.l.b16 %v1396
      %v1473 = vunpack.c.l.b16 %v1397
      %v1474 = vunpack.c.l.b16 %v1398
      %v1475 = vunpack.c.l.b16 %v1399
      %v1476 = vunpack.c.l.b16 %v1400
      %v1477 = vunpack.c.l.b16 %v1401
      %v1478 = vunpack.c.l.b16 %v1402
      %v1479 = vunpack.c.l.b16 %v1403
      %v1480 = vunpack.c.l.b16 %v1404
      %v1481 = vunpack.c.l.b16 %v1405
      %v1482 = vunpack.c.l.b16 %v1406
      %v1483 = vunpack.c.l.b16 %v1407
      %v1484 = vunpack.c.l.b16 %v1408
      %v1485 = vunpack.c.l.b16 %v1409
      %v1486 = vunpack.c.l.b16 %v1410
      %v1487 = vunpack.c.l.b16 %v1411
      %v1488 = vunpack.c.l.b16 %v1412
      %v1489 = vunpack.c.l.b16 %v1413
      %v1490 = vunpack.c.l.b16 %v1414
      %v1491 = vunpack.c.l.b16 %v1415
      %v1492 = vunpack.c.l.b16 %v1416
      %v1493 = vunpack.c.l.b16 %v1417
      %v1494 = vunpack.c.l.b16 %v1418
      %v1495 = vunpack.c.l.b16 %v1419
      %v1496 = vunpack.c.l.b16 %v1420
      %v1497 = vunpack.c.l.b16 %v1421
      %v1498 = vunpack.c.l.b16 %v1422
      %v1499 = vunpack.c.l.b16 %v1423
      %v1500 = vunpack.c.l.b16 %v1424
      %v1501 = vunpack.c.l.b16 %v1425
      %v1502 = vunpack.c.l.b16 %v1426
      %v1503 = vunpack.c.l.b16 %v1427
      %v1504 = vunpack.c.l.b16 %v1428
      %v1505 = vunpack.c.l.b16 %v1429
      %v1506 = vunpack.c.l.b16 %v1430
      %v1507 = vunpack.c.l.b16 %v1431
      %v1508 = vpack.c.b16 %v1472, %v1471
      %v1509 = vpack.c.b16 %v1474, %v1473
      %v1510 = vpack.c.b16 %v1476, %v1475
      %v1511 = vpack.c.b16 %v1478, %v1477
      %v1512 = vpack.c.b16 %v1480, %v1479
      %v1513 = vpack.c.b16 %v1482, %v1481
      %v1514 = vpack.c.b16 %v1484, %v1483
      %v1515 = vpack.c.b16 %v1486, %v1485
      %v1516 = vpack.c.b16 %v1488, %v1487
      %v1517 = vpack.c.b16 %v1490, %v1489
      %v1518 = vpack.c.b16 %v1492, %v1491
      %v1519 = vpack.c.b16 %v1494, %v1493
      %v1520 = vpack.c.b16 %v1496, %v1495
      %v1521 = vpack.c.b16 %v1498, %v1497
      %v1522 = vpack.c.b16 %v1500, %v1499
      %v1523 = vpack.c.b16 %v1502, %v1501
      %v1524 = vpack.c.b16 %v1504, %v1503
      %v1525 = vpack.c.b16 %v1506, %v1505
      %v1526 = vpack.c.b16 %v1507, %v1507
      %v1527 = vrot.slane %v1508, 1
      %v1528 = vrot.slane %v1509, 1
      %v1529 = vsel %vm1087, %v1527, %v1528
      %v1530 = vrot.slane %v1510, 1
      %v1531 = vsel %vm1087, %v1528, %v1530
      %v1532 = vrot.slane %v1511, 1
      %v1533 = vsel %vm1087, %v1530, %v1532
      %v1534 = vrot.slane %v1512, 1
      %v1535 = vsel %vm1087, %v1532, %v1534
      %v1536 = vrot.slane %v1513, 1
      %v1537 = vsel %vm1087, %v1534, %v1536
      %v1538 = vrot.slane %v1514, 1
      %v1539 = vsel %vm1087, %v1536, %v1538
      %v1540 = vrot.slane %v1515, 1
      %v1541 = vsel %vm1087, %v1538, %v1540
      %v1542 = vrot.slane %v1516, 1
      %v1543 = vsel %vm1087, %v1540, %v1542
      %v1544 = vrot.slane %v1517, 1
      %v1545 = vsel %vm1087, %v1542, %v1544
      %v1546 = vrot.slane %v1518, 1
      %v1547 = vsel %vm1087, %v1544, %v1546
      %v1548 = vrot.slane %v1519, 1
      %v1549 = vsel %vm1087, %v1546, %v1548
      %v1550 = vrot.slane %v1520, 1
      %v1551 = vsel %vm1087, %v1548, %v1550
      %v1552 = vrot.slane %v1521, 1
      %v1553 = vsel %vm1087, %v1550, %v1552
      %v1554 = vrot.slane %v1522, 1
      %v1555 = vsel %vm1087, %v1552, %v1554
      %v1556 = vrot.slane %v1523, 1
      %v1557 = vsel %vm1087, %v1554, %v1556
      %v1558 = vrot.slane %v1524, 1
      %v1559 = vsel %vm1087, %v1556, %v1558
      %v1560 = vrot.slane %v1525, 1
      %v1561 = vsel %vm1087, %v1558, %v1560
      %v1562 = vrot.slane %v1526, 1
      %v1563 = vsel %vm1087, %v1560, %v1562
      %v1565 = vsel %vm629, %v1529, 0
      %v1568 = vsel %vm629, %v1531, 0
      %v1571 = vsel %vm629, %v1533, 0
      %v1574 = vsel %vm629, %v1535, 0
      %v1577 = vsel %vm629, %v1537, 0
      %v1580 = vsel %vm629, %v1539, 0
      %v1583 = vsel %vm629, %v1541, 0
      %v1586 = vsel %vm629, %v1543, 0
      %v1589 = vsel %vm629, %v1545, 0
      %v1592 = vsel %vm629, %v1547, 0
      %v1595 = vsel %vm629, %v1549, 0
      %v1598 = vsel %vm629, %v1551, 0
      %v1601 = vsel %vm629, %v1553, 0
      %v1604 = vsel %vm629, %v1555, 0
      %v1607 = vsel %vm629, %v1557, 0
      %v1610 = vsel %vm629, %v1559, 0
      %v1613 = vsel %vm629, %v1561, 0
      %v1616 = vsel %vm629, %v1563, 0
      %v1619 = vsel %vm684, %v1433, 0
      %1621 = vmatprep.subr.bf16.mxu0 0
      %1622 = vmatpush1.bf16.msra.mxu0 0
      %1623 = vmatprep.subr.bf16.mxu0 0
      %1624 = vmatpush1.bf16.msra.mxu0 0
      %1625 = vmatprep.subr.bf16.mxu0 0
      %1626 = vmatpush1.bf16.msra.mxu0 0
      %1627 = vmatprep.subr.bf16.mxu0 0
      %1628 = vmatpush1.bf16.msra.mxu0 0
      %1629 = vmatprep.subr.bf16.mxu0 0
      %1630 = vmatpush1.bf16.msra.mxu0 0
      %1631 = vmatprep.subr.bf16.mxu0 0
      %1632 = vmatpush1.bf16.msra.mxu0 0
      %1633 = vmatprep.subr.bf16.mxu0 0
      %1634 = vmatpush1.bf16.msra.mxu0 0
      %1635 = vmatprep.subr.bf16.mxu0 0
      %1636 = vmatpush1.bf16.msra.mxu0 %v1619
      %1637 = vmatprep.subr.bf16.mxu0 0
      %1638 = vmatpush2.bf16.msra.mxu0 0
      %1639 = vmatprep.subr.bf16.mxu0 0
      %1640 = vmatpush2.bf16.msra.mxu0 0
      %1641 = vmatprep.subr.bf16.mxu0 0
      %1642 = vmatpush2.bf16.msra.mxu0 0
      %1643 = vmatprep.subr.bf16.mxu0 0
      %1644 = vmatpush2.bf16.msra.mxu0 0
      %1645 = vmatprep.subr.bf16.mxu0 0
      %1646 = vmatpush2.bf16.msra.mxu0 0
      %1647 = vmatprep.subr.bf16.mxu0 0
      %1648 = vmatpush2.bf16.msra.mxu0 0
      %1649 = vmatprep.subr.bf16.mxu0 0
      %1650 = vmatpush2.bf16.msra.mxu0 0
      %1651 = vmatprep.subr.bf16.mxu0 0
      %1652 = vmatpush2.bf16.msra.mxu0 0
      %1653 = vmatprep.mubr.bf16.mxu0 0
      %1654 = vmatmul.mubr.bf16.gmra.mxu0 %v1565
      %v1655 = vpop.f32.mrf.mxu0
      %v1656 = vadd.f32 0.0, %v1655
      %v1657 = vpop.f32.mrf.mxu0
      %v1658 = vpop.f32.mrf.mxu0
      %v1659 = vadd.f32 0.0, %v1658
      %v1660 = vpop.f32.mrf.mxu0
      %1661 = vmatprep.mubr.bf16.mxu0 0
      %1662 = vmatmul.mubr.bf16.gmra.mxu0 %v1568
      %v1663 = vpop.f32.mrf.mxu0
      %v1664 = vadd.f32 0.0, %v1663
      %v1665 = vpop.f32.mrf.mxu0
      %v1666 = vpop.f32.mrf.mxu0
      %v1667 = vadd.f32 0.0, %v1666
      %v1668 = vpop.f32.mrf.mxu0
      %1669 = vmatprep.mubr.bf16.mxu0 0
      %1670 = vmatmul.mubr.bf16.gmra.mxu0 %v1571
      %v1671 = vpop.f32.mrf.mxu0
      %v1672 = vadd.f32 0.0, %v1671
      %v1673 = vpop.f32.mrf.mxu0
      %v1674 = vpop.f32.mrf.mxu0
      %v1675 = vadd.f32 0.0, %v1674
      %v1676 = vpop.f32.mrf.mxu0
      %1677 = vmatprep.mubr.bf16.mxu0 0
      %1678 = vmatmul.mubr.bf16.gmra.mxu0 %v1574
      %v1679 = vpop.f32.mrf.mxu0
      %v1680 = vadd.f32 0.0, %v1679
      %v1681 = vpop.f32.mrf.mxu0
      %v1682 = vpop.f32.mrf.mxu0
      %v1683 = vadd.f32 0.0, %v1682
      %v1684 = vpop.f32.mrf.mxu0
      %1685 = vmatprep.mubr.bf16.mxu0 0
      %1686 = vmatmul.mubr.bf16.gmra.mxu0 %v1577
      %v1687 = vpop.f32.mrf.mxu0
      %v1688 = vadd.f32 0.0, %v1687
      %v1689 = vpop.f32.mrf.mxu0
      %v1690 = vpop.f32.mrf.mxu0
      %v1691 = vadd.f32 0.0, %v1690
      %v1692 = vpop.f32.mrf.mxu0
      %1693 = vmatprep.mubr.bf16.mxu0 0
      %1694 = vmatmul.mubr.bf16.gmra.mxu0 %v1580
      %v1695 = vpop.f32.mrf.mxu0
      %v1696 = vadd.f32 0.0, %v1695
      %v1697 = vpop.f32.mrf.mxu0
      %v1698 = vpop.f32.mrf.mxu0
      %v1699 = vadd.f32 0.0, %v1698
      %v1700 = vpop.f32.mrf.mxu0
      %1701 = vmatprep.mubr.bf16.mxu0 0
      %1702 = vmatmul.mubr.bf16.gmra.mxu0 %v1583
      %v1703 = vpop.f32.mrf.mxu0
      %v1704 = vadd.f32 0.0, %v1703
      %v1705 = vpop.f32.mrf.mxu0
      %v1706 = vpop.f32.mrf.mxu0
      %v1707 = vadd.f32 0.0, %v1706
      %v1708 = vpop.f32.mrf.mxu0
      %1709 = vmatprep.mubr.bf16.mxu0 0
      %1710 = vmatmul.mubr.bf16.gmra.mxu0 %v1586
      %v1711 = vpop.f32.mrf.mxu0
      %v1712 = vadd.f32 0.0, %v1711
      %v1713 = vpop.f32.mrf.mxu0
      %v1714 = vpop.f32.mrf.mxu0
      %v1715 = vadd.f32 0.0, %v1714
      %v1716 = vpop.f32.mrf.mxu0
      %1717 = vmatprep.mubr.bf16.mxu0 0
      %1718 = vmatmul.mubr.bf16.gmra.mxu0 %v1589
      %v1719 = vpop.f32.mrf.mxu0
      %v1720 = vadd.f32 0.0, %v1719
      %v1721 = vpop.f32.mrf.mxu0
      %v1722 = vpop.f32.mrf.mxu0
      %v1723 = vadd.f32 0.0, %v1722
      %v1724 = vpop.f32.mrf.mxu0
      %1725 = vmatprep.mubr.bf16.mxu0 0
      %1726 = vmatmul.mubr.bf16.gmra.mxu0 %v1592
      %v1727 = vpop.f32.mrf.mxu0
      %v1728 = vadd.f32 0.0, %v1727
      %v1729 = vpop.f32.mrf.mxu0
      %v1730 = vpop.f32.mrf.mxu0
      %v1731 = vadd.f32 0.0, %v1730
      %v1732 = vpop.f32.mrf.mxu0
      %1733 = vmatprep.mubr.bf16.mxu0 0
      %1734 = vmatmul.mubr.bf16.gmra.mxu0 %v1595
      %v1735 = vpop.f32.mrf.mxu0
      %v1736 = vadd.f32 0.0, %v1735
      %v1737 = vpop.f32.mrf.mxu0
      %v1738 = vpop.f32.mrf.mxu0
      %v1739 = vadd.f32 0.0, %v1738
      %v1740 = vpop.f32.mrf.mxu0
      %1741 = vmatprep.mubr.bf16.mxu0 0
      %1742 = vmatmul.mubr.bf16.gmra.mxu0 %v1598
      %v1743 = vpop.f32.mrf.mxu0
      %v1744 = vadd.f32 0.0, %v1743
      %v1745 = vpop.f32.mrf.mxu0
      %v1746 = vpop.f32.mrf.mxu0
      %v1747 = vadd.f32 0.0, %v1746
      %v1748 = vpop.f32.mrf.mxu0
      %1749 = vmatprep.mubr.bf16.mxu0 0
      %1750 = vmatmul.mubr.bf16.gmra.mxu0 %v1601
      %v1751 = vpop.f32.mrf.mxu0
      %v1752 = vadd.f32 0.0, %v1751
      %v1753 = vpop.f32.mrf.mxu0
      %v1754 = vpop.f32.mrf.mxu0
      %v1755 = vadd.f32 0.0, %v1754
      %v1756 = vpop.f32.mrf.mxu0
      %1757 = vmatprep.mubr.bf16.mxu0 0
      %1758 = vmatmul.mubr.bf16.gmra.mxu0 %v1604
      %v1759 = vpop.f32.mrf.mxu0
      %v1760 = vadd.f32 0.0, %v1759
      %v1761 = vpop.f32.mrf.mxu0
      %v1762 = vpop.f32.mrf.mxu0
      %v1763 = vadd.f32 0.0, %v1762
      %v1764 = vpop.f32.mrf.mxu0
      %1765 = vmatprep.mubr.bf16.mxu0 0
      %1766 = vmatmul.mubr.bf16.gmra.mxu0 %v1607
      %v1767 = vpop.f32.mrf.mxu0
      %v1768 = vadd.f32 0.0, %v1767
      %v1769 = vpop.f32.mrf.mxu0
      %v1770 = vpop.f32.mrf.mxu0
      %v1771 = vadd.f32 0.0, %v1770
      %v1772 = vpop.f32.mrf.mxu0
      %1773 = vmatprep.mubr.bf16.mxu0 0
      %1774 = vmatmul.mubr.bf16.gmra.mxu0 %v1610
      %v1775 = vpop.f32.mrf.mxu0
      %v1776 = vadd.f32 0.0, %v1775
      %v1777 = vpop.f32.mrf.mxu0
      %v1778 = vpop.f32.mrf.mxu0
      %v1779 = vadd.f32 0.0, %v1778
      %v1780 = vpop.f32.mrf.mxu0
      %1781 = vmatprep.mubr.bf16.mxu0 0
      %1782 = vmatmul.mubr.bf16.gmra.mxu0 %v1613
      %v1783 = vpop.f32.mrf.mxu0
      %v1784 = vadd.f32 0.0, %v1783
      %v1785 = vpop.f32.mrf.mxu0
      %v1786 = vpop.f32.mrf.mxu0
      %v1787 = vadd.f32 0.0, %v1786
      %v1788 = vpop.f32.mrf.mxu0
      %1789 = vmatprep.mubr.bf16.mxu0 0
      %1790 = vmatmul.mubr.bf16.gmra.mxu0 %v1616
      %v1791 = vpop.f32.mrf.mxu0
      %v1792 = vadd.f32 0.0, %v1791
      %v1793 = vpop.f32.mrf.mxu0
      %v1794 = vpop.f32.mrf.mxu0
      %v1795 = vadd.f32 0.0, %v1794
      %v1796 = vpop.f32.mrf.mxu0
      %1797 = vdwg.mxu0
      %v1798 = vadd.f32 %v1359, %v1656
      %v1799 = vadd.f32 %v1360, %v1659
      %v1800 = vadd.f32 %v1361, %v1664
      %v1801 = vadd.f32 %v1362, %v1667
      %v1802 = vadd.f32 %v1363, %v1672
      %v1803 = vadd.f32 %v1364, %v1675
      %v1804 = vadd.f32 %v1365, %v1680
      %v1805 = vadd.f32 %v1366, %v1683
      %v1806 = vadd.f32 %v1367, %v1688
      %v1807 = vadd.f32 %v1368, %v1691
      %v1808 = vadd.f32 %v1369, %v1696
      %v1809 = vadd.f32 %v1370, %v1699
      %v1810 = vadd.f32 %v1371, %v1704
      %v1811 = vadd.f32 %v1372, %v1707
      %v1812 = vadd.f32 %v1373, %v1712
      %v1813 = vadd.f32 %v1374, %v1715
      %v1814 = vadd.f32 %v1375, %v1720
      %v1815 = vadd.f32 %v1376, %v1723
      %v1816 = vadd.f32 %v1377, %v1728
      %v1817 = vadd.f32 %v1378, %v1731
      %v1818 = vadd.f32 %v1379, %v1736
      %v1819 = vadd.f32 %v1380, %v1739
      %v1820 = vadd.f32 %v1381, %v1744
      %v1821 = vadd.f32 %v1382, %v1747
      %v1822 = vadd.f32 %v1383, %v1752
      %v1823 = vadd.f32 %v1384, %v1755
      %v1824 = vadd.f32 %v1385, %v1760
      %v1825 = vadd.f32 %v1386, %v1763
      %v1826 = vadd.f32 %v1387, %v1768
      %v1827 = vadd.f32 %v1388, %v1771
      %v1828 = vadd.f32 %v1389, %v1776
      %v1829 = vadd.f32 %v1390, %v1779
      %v1830 = vadd.f32 %v1391, %v1784
      %v1831 = vadd.f32 %v1392, %v1787
      %v1832 = vadd.f32 %v1393, %v1792
      %v1833 = vadd.f32 %v1394, %v1795
      %v1834 = vld [vmem:[%s335 + $0x98] sm:$0x3]
      %s1835 = scalar_lea.vmem %s0, 8
      %v1836 = vld [vmem:[%s1835] sm:$0x3]
      %v1838 = vunpack.c.l.b16 %v1834
      %v1839 = vpack.c.b16 %v1838, %v1838
      %vm1840 = vsmask.f32 6400
      %v1842 = vshrl.u32 %v1508, 16
      %v1844 = vrot.slane %v1842, 1
      %v1845 = vshll.u32 %v1508, 16
      %v1847 = vrot.slane %v1845, 2
      %v1848 = vor.u32 %v1844, %v1847
      %v1850 = vshrl.u32 %v1509, 16
      %v1852 = vrot.slane %v1850, 1
      %v1853 = vshll.u32 %v1509, 16
      %v1855 = vrot.slane %v1853, 2
      %v1856 = vor.u32 %v1852, %v1855
      %v1857 = vsel %vm1840, %v1848, %v1856
      %v1859 = vshrl.u32 %v1510, 16
      %v1861 = vrot.slane %v1859, 1
      %v1862 = vshll.u32 %v1510, 16
      %v1864 = vrot.slane %v1862, 2
      %v1865 = vor.u32 %v1861, %v1864
      %v1866 = vsel %vm1840, %v1856, %v1865
      %v1868 = vshrl.u32 %v1511, 16
      %v1870 = vrot.slane %v1868, 1
      %v1871 = vshll.u32 %v1511, 16
      %v1873 = vrot.slane %v1871, 2
      %v1874 = vor.u32 %v1870, %v1873
      %v1875 = vsel %vm1840, %v1865, %v1874
      %v1877 = vshrl.u32 %v1512, 16
      %v1879 = vrot.slane %v1877, 1
      %v1880 = vshll.u32 %v1512, 16
      %v1882 = vrot.slane %v1880, 2
      %v1883 = vor.u32 %v1879, %v1882
      %v1884 = vsel %vm1840, %v1874, %v1883
      %v1886 = vshrl.u32 %v1513, 16
      %v1888 = vrot.slane %v1886, 1
      %v1889 = vshll.u32 %v1513, 16
      %v1891 = vrot.slane %v1889, 2
      %v1892 = vor.u32 %v1888, %v1891
      %v1893 = vsel %vm1840, %v1883, %v1892
      %v1895 = vshrl.u32 %v1514, 16
      %v1897 = vrot.slane %v1895, 1
      %v1898 = vshll.u32 %v1514, 16
      %v1900 = vrot.slane %v1898, 2
      %v1901 = vor.u32 %v1897, %v1900
      %v1902 = vsel %vm1840, %v1892, %v1901
      %v1904 = vshrl.u32 %v1515, 16
      %v1906 = vrot.slane %v1904, 1
      %v1907 = vshll.u32 %v1515, 16
      %v1909 = vrot.slane %v1907, 2
      %v1910 = vor.u32 %v1906, %v1909
      %v1911 = vsel %vm1840, %v1901, %v1910
      %v1913 = vshrl.u32 %v1516, 16
      %v1915 = vrot.slane %v1913, 1
      %v1916 = vshll.u32 %v1516, 16
      %v1918 = vrot.slane %v1916, 2
      %v1919 = vor.u32 %v1915, %v1918
      %v1920 = vsel %vm1840, %v1910, %v1919
      %v1922 = vshrl.u32 %v1517, 16
      %v1924 = vrot.slane %v1922, 1
      %v1925 = vshll.u32 %v1517, 16
      %v1927 = vrot.slane %v1925, 2
      %v1928 = vor.u32 %v1924, %v1927
      %v1929 = vsel %vm1840, %v1919, %v1928
      %v1931 = vshrl.u32 %v1518, 16
      %v1933 = vrot.slane %v1931, 1
      %v1934 = vshll.u32 %v1518, 16
      %v1936 = vrot.slane %v1934, 2
      %v1937 = vor.u32 %v1933, %v1936
      %v1938 = vsel %vm1840, %v1928, %v1937
      %v1940 = vshrl.u32 %v1519, 16
      %v1942 = vrot.slane %v1940, 1
      %v1943 = vshll.u32 %v1519, 16
      %v1945 = vrot.slane %v1943, 2
      %v1946 = vor.u32 %v1942, %v1945
      %v1947 = vsel %vm1840, %v1937, %v1946
      %v1949 = vshrl.u32 %v1520, 16
      %v1951 = vrot.slane %v1949, 1
      %v1952 = vshll.u32 %v1520, 16
      %v1954 = vrot.slane %v1952, 2
      %v1955 = vor.u32 %v1951, %v1954
      %v1956 = vsel %vm1840, %v1946, %v1955
      %v1958 = vshrl.u32 %v1521, 16
      %v1960 = vrot.slane %v1958, 1
      %v1961 = vshll.u32 %v1521, 16
      %v1963 = vrot.slane %v1961, 2
      %v1964 = vor.u32 %v1960, %v1963
      %v1965 = vsel %vm1840, %v1955, %v1964
      %v1967 = vshrl.u32 %v1522, 16
      %v1969 = vrot.slane %v1967, 1
      %v1970 = vshll.u32 %v1522, 16
      %v1972 = vrot.slane %v1970, 2
      %v1973 = vor.u32 %v1969, %v1972
      %v1974 = vsel %vm1840, %v1964, %v1973
      %v1976 = vshrl.u32 %v1523, 16
      %v1978 = vrot.slane %v1976, 1
      %v1979 = vshll.u32 %v1523, 16
      %v1981 = vrot.slane %v1979, 2
      %v1982 = vor.u32 %v1978, %v1981
      %v1983 = vsel %vm1840, %v1973, %v1982
      %v1985 = vshrl.u32 %v1524, 16
      %v1987 = vrot.slane %v1985, 1
      %v1988 = vshll.u32 %v1524, 16
      %v1990 = vrot.slane %v1988, 2
      %v1991 = vor.u32 %v1987, %v1990
      %v1992 = vsel %vm1840, %v1982, %v1991
      %v1994 = vshrl.u32 %v1525, 16
      %v1996 = vrot.slane %v1994, 1
      %v1997 = vshll.u32 %v1525, 16
      %v1999 = vrot.slane %v1997, 2
      %v2000 = vor.u32 %v1996, %v1999
      %v2001 = vsel %vm1840, %v1991, %v2000
      %v2003 = vshrl.u32 %v1839, 16
      %v2005 = vrot.slane %v2003, 1
      %v2006 = vshll.u32 %v1839, 16
      %v2008 = vrot.slane %v2006, 2
      %v2009 = vor.u32 %v2005, %v2008
      %v2010 = vsel %vm1840, %v2000, %v2009
      %v2012 = vsel %vm629, %v1857, 0
      %v2015 = vsel %vm629, %v1866, 0
      %v2018 = vsel %vm629, %v1875, 0
      %v2021 = vsel %vm629, %v1884, 0
      %v2024 = vsel %vm629, %v1893, 0
      %v2027 = vsel %vm629, %v1902, 0
      %v2030 = vsel %vm629, %v1911, 0
      %v2033 = vsel %vm629, %v1920, 0
      %v2036 = vsel %vm629, %v1929, 0
      %v2039 = vsel %vm629, %v1938, 0
      %v2042 = vsel %vm629, %v1947, 0
      %v2045 = vsel %vm629, %v1956, 0
      %v2048 = vsel %vm629, %v1965, 0
      %v2051 = vsel %vm629, %v1974, 0
      %v2054 = vsel %vm629, %v1983, 0
      %v2057 = vsel %vm629, %v1992, 0
      %v2060 = vsel %vm629, %v2001, 0
      %v2063 = vsel %vm629, %v2010, 0
      %v2066 = vsel %vm684, %v1836, 0
      %2068 = vmatprep.subr.bf16.mxu0 0
      %2069 = vmatpush1.bf16.msra.mxu0 0
      %2070 = vmatprep.subr.bf16.mxu0 0
      %2071 = vmatpush1.bf16.msra.mxu0 0
      %2072 = vmatprep.subr.bf16.mxu0 0
      %2073 = vmatpush1.bf16.msra.mxu0 0
      %2074 = vmatprep.subr.bf16.mxu0 0
      %2075 = vmatpush1.bf16.msra.mxu0 0
      %2076 = vmatprep.subr.bf16.mxu0 0
      %2077 = vmatpush1.bf16.msra.mxu0 0
      %2078 = vmatprep.subr.bf16.mxu0 0
      %2079 = vmatpush1.bf16.msra.mxu0 0
      %2080 = vmatprep.subr.bf16.mxu0 0
      %2081 = vmatpush1.bf16.msra.mxu0 0
      %2082 = vmatprep.subr.bf16.mxu0 0
      %2083 = vmatpush1.bf16.msra.mxu0 %v2066
      %2084 = vmatprep.subr.bf16.mxu0 0
      %2085 = vmatpush2.bf16.msra.mxu0 0
      %2086 = vmatprep.subr.bf16.mxu0 0
      %2087 = vmatpush2.bf16.msra.mxu0 0
      %2088 = vmatprep.subr.bf16.mxu0 0
      %2089 = vmatpush2.bf16.msra.mxu0 0
      %2090 = vmatprep.subr.bf16.mxu0 0
      %2091 = vmatpush2.bf16.msra.mxu0 0
      %2092 = vmatprep.subr.bf16.mxu0 0
      %2093 = vmatpush2.bf16.msra.mxu0 0
      %2094 = vmatprep.subr.bf16.mxu0 0
      %2095 = vmatpush2.bf16.msra.mxu0 0
      %2096 = vmatprep.subr.bf16.mxu0 0
      %2097 = vmatpush2.bf16.msra.mxu0 0
      %2098 = vmatprep.subr.bf16.mxu0 0
      %2099 = vmatpush2.bf16.msra.mxu0 0
      %2100 = vmatprep.mubr.bf16.mxu0 0
      %2101 = vmatmul.mubr.bf16.gmra.mxu0 %v2012
      %v2102 = vpop.f32.mrf.mxu0
      %v2103 = vadd.f32 0.0, %v2102
      %v2104 = vpop.f32.mrf.mxu0
      %v2105 = vpop.f32.mrf.mxu0
      %v2106 = vadd.f32 0.0, %v2105
      %v2107 = vpop.f32.mrf.mxu0
      %2108 = vmatprep.mubr.bf16.mxu0 0
      %2109 = vmatmul.mubr.bf16.gmra.mxu0 %v2015
      %v2110 = vpop.f32.mrf.mxu0
      %v2111 = vadd.f32 0.0, %v2110
      %v2112 = vpop.f32.mrf.mxu0
      %v2113 = vpop.f32.mrf.mxu0
      %v2114 = vadd.f32 0.0, %v2113
      %v2115 = vpop.f32.mrf.mxu0
      %2116 = vmatprep.mubr.bf16.mxu0 0
      %2117 = vmatmul.mubr.bf16.gmra.mxu0 %v2018
      %v2118 = vpop.f32.mrf.mxu0
      %v2119 = vadd.f32 0.0, %v2118
      %v2120 = vpop.f32.mrf.mxu0
      %v2121 = vpop.f32.mrf.mxu0
      %v2122 = vadd.f32 0.0, %v2121
      %v2123 = vpop.f32.mrf.mxu0
      %2124 = vmatprep.mubr.bf16.mxu0 0
      %2125 = vmatmul.mubr.bf16.gmra.mxu0 %v2021
      %v2126 = vpop.f32.mrf.mxu0
      %v2127 = vadd.f32 0.0, %v2126
      %v2128 = vpop.f32.mrf.mxu0
      %v2129 = vpop.f32.mrf.mxu0
      %v2130 = vadd.f32 0.0, %v2129
      %v2131 = vpop.f32.mrf.mxu0
      %2132 = vmatprep.mubr.bf16.mxu0 0
      %2133 = vmatmul.mubr.bf16.gmra.mxu0 %v2024
      %v2134 = vpop.f32.mrf.mxu0
      %v2135 = vadd.f32 0.0, %v2134
      %v2136 = vpop.f32.mrf.mxu0
      %v2137 = vpop.f32.mrf.mxu0
      %v2138 = vadd.f32 0.0, %v2137
      %v2139 = vpop.f32.mrf.mxu0
      %2140 = vmatprep.mubr.bf16.mxu0 0
      %2141 = vmatmul.mubr.bf16.gmra.mxu0 %v2027
      %v2142 = vpop.f32.mrf.mxu0
      %v2143 = vadd.f32 0.0, %v2142
      %v2144 = vpop.f32.mrf.mxu0
      %v2145 = vpop.f32.mrf.mxu0
      %v2146 = vadd.f32 0.0, %v2145
      %v2147 = vpop.f32.mrf.mxu0
      %2148 = vmatprep.mubr.bf16.mxu0 0
      %2149 = vmatmul.mubr.bf16.gmra.mxu0 %v2030
      %v2150 = vpop.f32.mrf.mxu0
      %v2151 = vadd.f32 0.0, %v2150
      %v2152 = vpop.f32.mrf.mxu0
      %v2153 = vpop.f32.mrf.mxu0
      %v2154 = vadd.f32 0.0, %v2153
      %v2155 = vpop.f32.mrf.mxu0
      %2156 = vmatprep.mubr.bf16.mxu0 0
      %2157 = vmatmul.mubr.bf16.gmra.mxu0 %v2033
      %v2158 = vpop.f32.mrf.mxu0
      %v2159 = vadd.f32 0.0, %v2158
      %v2160 = vpop.f32.mrf.mxu0
      %v2161 = vpop.f32.mrf.mxu0
      %v2162 = vadd.f32 0.0, %v2161
      %v2163 = vpop.f32.mrf.mxu0
      %2164 = vmatprep.mubr.bf16.mxu0 0
      %2165 = vmatmul.mubr.bf16.gmra.mxu0 %v2036
      %v2166 = vpop.f32.mrf.mxu0
      %v2167 = vadd.f32 0.0, %v2166
      %v2168 = vpop.f32.mrf.mxu0
      %v2169 = vpop.f32.mrf.mxu0
      %v2170 = vadd.f32 0.0, %v2169
      %v2171 = vpop.f32.mrf.mxu0
      %2172 = vmatprep.mubr.bf16.mxu0 0
      %2173 = vmatmul.mubr.bf16.gmra.mxu0 %v2039
      %v2174 = vpop.f32.mrf.mxu0
      %v2175 = vadd.f32 0.0, %v2174
      %v2176 = vpop.f32.mrf.mxu0
      %v2177 = vpop.f32.mrf.mxu0
      %v2178 = vadd.f32 0.0, %v2177
      %v2179 = vpop.f32.mrf.mxu0
      %2180 = vmatprep.mubr.bf16.mxu0 0
      %2181 = vmatmul.mubr.bf16.gmra.mxu0 %v2042
      %v2182 = vpop.f32.mrf.mxu0
      %v2183 = vadd.f32 0.0, %v2182
      %v2184 = vpop.f32.mrf.mxu0
      %v2185 = vpop.f32.mrf.mxu0
      %v2186 = vadd.f32 0.0, %v2185
      %v2187 = vpop.f32.mrf.mxu0
      %2188 = vmatprep.mubr.bf16.mxu0 0
      %2189 = vmatmul.mubr.bf16.gmra.mxu0 %v2045
      %v2190 = vpop.f32.mrf.mxu0
      %v2191 = vadd.f32 0.0, %v2190
      %v2192 = vpop.f32.mrf.mxu0
      %v2193 = vpop.f32.mrf.mxu0
      %v2194 = vadd.f32 0.0, %v2193
      %v2195 = vpop.f32.mrf.mxu0
      %2196 = vmatprep.mubr.bf16.mxu0 0
      %2197 = vmatmul.mubr.bf16.gmra.mxu0 %v2048
      %v2198 = vpop.f32.mrf.mxu0
      %v2199 = vadd.f32 0.0, %v2198
      %v2200 = vpop.f32.mrf.mxu0
      %v2201 = vpop.f32.mrf.mxu0
      %v2202 = vadd.f32 0.0, %v2201
      %v2203 = vpop.f32.mrf.mxu0
      %2204 = vmatprep.mubr.bf16.mxu0 0
      %2205 = vmatmul.mubr.bf16.gmra.mxu0 %v2051
      %v2206 = vpop.f32.mrf.mxu0
      %v2207 = vadd.f32 0.0, %v2206
      %v2208 = vpop.f32.mrf.mxu0
      %v2209 = vpop.f32.mrf.mxu0
      %v2210 = vadd.f32 0.0, %v2209
      %v2211 = vpop.f32.mrf.mxu0
      %2212 = vmatprep.mubr.bf16.mxu0 0
      %2213 = vmatmul.mubr.bf16.gmra.mxu0 %v2054
      %v2214 = vpop.f32.mrf.mxu0
      %v2215 = vadd.f32 0.0, %v2214
      %v2216 = vpop.f32.mrf.mxu0
      %v2217 = vpop.f32.mrf.mxu0
      %v2218 = vadd.f32 0.0, %v2217
      %v2219 = vpop.f32.mrf.mxu0
      %2220 = vmatprep.mubr.bf16.mxu0 0
      %2221 = vmatmul.mubr.bf16.gmra.mxu0 %v2057
      %v2222 = vpop.f32.mrf.mxu0
      %v2223 = vadd.f32 0.0, %v2222
      %v2224 = vpop.f32.mrf.mxu0
      %v2225 = vpop.f32.mrf.mxu0
      %v2226 = vadd.f32 0.0, %v2225
      %v2227 = vpop.f32.mrf.mxu0
      %2228 = vmatprep.mubr.bf16.mxu0 0
      %2229 = vmatmul.mubr.bf16.gmra.mxu0 %v2060
      %v2230 = vpop.f32.mrf.mxu0
      %v2231 = vadd.f32 0.0, %v2230
      %v2232 = vpop.f32.mrf.mxu0
      %v2233 = vpop.f32.mrf.mxu0
      %v2234 = vadd.f32 0.0, %v2233
      %v2235 = vpop.f32.mrf.mxu0
      %2236 = vmatprep.mubr.bf16.mxu0 0
      %2237 = vmatmul.mubr.bf16.gmra.mxu0 %v2063
      %v2238 = vpop.f32.mrf.mxu0
      %v2239 = vadd.f32 0.0, %v2238
      %v2240 = vpop.f32.mrf.mxu0
      %v2241 = vpop.f32.mrf.mxu0
      %v2242 = vadd.f32 0.0, %v2241
      %v2243 = vpop.f32.mrf.mxu0
      %2244 = vdwg.mxu0
      %v2245 = vadd.f32 %v1798, %v2103
      %v2246 = vadd.f32 %v1799, %v2106
      %v2247 = vadd.f32 %v1800, %v2111
      %v2248 = vadd.f32 %v1801, %v2114
      %v2249 = vadd.f32 %v1802, %v2119
      %v2250 = vadd.f32 %v1803, %v2122
      %v2251 = vadd.f32 %v1804, %v2127
      %v2252 = vadd.f32 %v1805, %v2130
      %v2253 = vadd.f32 %v1806, %v2135
      %v2254 = vadd.f32 %v1807, %v2138
      %v2255 = vadd.f32 %v1808, %v2143
      %v2256 = vadd.f32 %v1809, %v2146
      %v2257 = vadd.f32 %v1810, %v2151
      %v2258 = vadd.f32 %v1811, %v2154
      %v2259 = vadd.f32 %v1812, %v2159
      %v2260 = vadd.f32 %v1813, %v2162
      %v2261 = vadd.f32 %v1814, %v2167
      %v2262 = vadd.f32 %v1815, %v2170
      %v2263 = vadd.f32 %v1816, %v2175
      %v2264 = vadd.f32 %v1817, %v2178
      %v2265 = vadd.f32 %v1818, %v2183
      %v2266 = vadd.f32 %v1819, %v2186
      %v2267 = vadd.f32 %v1820, %v2191
      %v2268 = vadd.f32 %v1821, %v2194
      %v2269 = vadd.f32 %v1822, %v2199
      %v2270 = vadd.f32 %v1823, %v2202
      %v2271 = vadd.f32 %v1824, %v2207
      %v2272 = vadd.f32 %v1825, %v2210
      %v2273 = vadd.f32 %v1826, %v2215
      %v2274 = vadd.f32 %v1827, %v2218
      %v2275 = vadd.f32 %v1828, %v2223
      %v2276 = vadd.f32 %v1829, %v2226
      %v2277 = vadd.f32 %v1830, %v2231
      %v2278 = vadd.f32 %v1831, %v2234
      %v2279 = vadd.f32 %v1832, %v2239
      %v2280 = vadd.f32 %v1833, %v2242
      %v2281 = vld [vmem:[%s335 + $0x8] sm:$0xc]
      %s2282 = scalar_lea.vmem %s0, 10
      %v2283 = vld [vmem:[%s2282] sm:$0x3]
      %v2285 = vunpack.c.l.b16 %v2281
      %v2286 = vpack.c.b16 %v1472, %v2285
      %vm2287 = vcmask 1045504
      %v2288 = vrot.slane %v2286, 2
      %v2289 = vrot.slane %v1509, 2
      %v2290 = vsel %vm2287, %v2288, %v2289
      %v2291 = vrot.slane %v1510, 2
      %v2292 = vsel %vm2287, %v2289, %v2291
      %v2293 = vrot.slane %v1511, 2
      %v2294 = vsel %vm2287, %v2291, %v2293
      %v2295 = vrot.slane %v1512, 2
      %v2296 = vsel %vm2287, %v2293, %v2295
      %v2297 = vrot.slane %v1513, 2
      %v2298 = vsel %vm2287, %v2295, %v2297
      %v2299 = vrot.slane %v1514, 2
      %v2300 = vsel %vm2287, %v2297, %v2299
      %v2301 = vrot.slane %v1515, 2
      %v2302 = vsel %vm2287, %v2299, %v2301
      %v2303 = vrot.slane %v1516, 2
      %v2304 = vsel %vm2287, %v2301, %v2303
      %v2305 = vrot.slane %v1517, 2
      %v2306 = vsel %vm2287, %v2303, %v2305
      %v2307 = vrot.slane %v1518, 2
      %v2308 = vsel %vm2287, %v2305, %v2307
      %v2309 = vrot.slane %v1519, 2
      %v2310 = vsel %vm2287, %v2307, %v2309
      %v2311 = vrot.slane %v1520, 2
      %v2312 = vsel %vm2287, %v2309, %v2311
      %v2313 = vrot.slane %v1521, 2
      %v2314 = vsel %vm2287, %v2311, %v2313
      %v2315 = vrot.slane %v1522, 2
      %v2316 = vsel %vm2287, %v2313, %v2315
      %v2317 = vrot.slane %v1523, 2
      %v2318 = vsel %vm2287, %v2315, %v2317
      %v2319 = vrot.slane %v1524, 2
      %v2320 = vsel %vm2287, %v2317, %v2319
      %v2321 = vrot.slane %v1525, 2
      %v2322 = vsel %vm2287, %v2319, %v2321
      %v2323 = vrot.slane %v1839, 2
      %v2324 = vsel %vm2287, %v2321, %v2323
      %v2326 = vsel %vm629, %v2290, 0
      %v2329 = vsel %vm629, %v2292, 0
      %v2332 = vsel %vm629, %v2294, 0
      %v2335 = vsel %vm629, %v2296, 0
      %v2338 = vsel %vm629, %v2298, 0
      %v2341 = vsel %vm629, %v2300, 0
      %v2344 = vsel %vm629, %v2302, 0
      %v2347 = vsel %vm629, %v2304, 0
      %v2350 = vsel %vm629, %v2306, 0
      %v2353 = vsel %vm629, %v2308, 0
      %v2356 = vsel %vm629, %v2310, 0
      %v2359 = vsel %vm629, %v2312, 0
      %v2362 = vsel %vm629, %v2314, 0
      %v2365 = vsel %vm629, %v2316, 0
      %v2368 = vsel %vm629, %v2318, 0
      %v2371 = vsel %vm629, %v2320, 0
      %v2374 = vsel %vm629, %v2322, 0
      %v2377 = vsel %vm629, %v2324, 0
      %v2380 = vsel %vm684, %v2283, 0
      %2382 = vmatprep.subr.bf16.mxu0 0
      %2383 = vmatpush1.bf16.msra.mxu0 0
      %2384 = vmatprep.subr.bf16.mxu0 0
      %2385 = vmatpush1.bf16.msra.mxu0 0
      %2386 = vmatprep.subr.bf16.mxu0 0
      %2387 = vmatpush1.bf16.msra.mxu0 0
      %2388 = vmatprep.subr.bf16.mxu0 0
      %2389 = vmatpush1.bf16.msra.mxu0 0
      %2390 = vmatprep.subr.bf16.mxu0 0
      %2391 = vmatpush1.bf16.msra.mxu0 0
      %2392 = vmatprep.subr.bf16.mxu0 0
      %2393 = vmatpush1.bf16.msra.mxu0 0
      %2394 = vmatprep.subr.bf16.mxu0 0
      %2395 = vmatpush1.bf16.msra.mxu0 0
      %2396 = vmatprep.subr.bf16.mxu0 0
      %2397 = vmatpush1.bf16.msra.mxu0 %v2380
      %2398 = vmatprep.subr.bf16.mxu0 0
      %2399 = vmatpush2.bf16.msra.mxu0 0
      %2400 = vmatprep.subr.bf16.mxu0 0
      %2401 = vmatpush2.bf16.msra.mxu0 0
      %2402 = vmatprep.subr.bf16.mxu0 0
      %2403 = vmatpush2.bf16.msra.mxu0 0
      %2404 = vmatprep.subr.bf16.mxu0 0
      %2405 = vmatpush2.bf16.msra.mxu0 0
      %2406 = vmatprep.subr.bf16.mxu0 0
      %2407 = vmatpush2.bf16.msra.mxu0 0
      %2408 = vmatprep.subr.bf16.mxu0 0
      %2409 = vmatpush2.bf16.msra.mxu0 0
      %2410 = vmatprep.subr.bf16.mxu0 0
      %2411 = vmatpush2.bf16.msra.mxu0 0
      %2412 = vmatprep.subr.bf16.mxu0 0
      %2413 = vmatpush2.bf16.msra.mxu0 0
      %2414 = vmatprep.mubr.bf16.mxu0 0
      %2415 = vmatmul.mubr.bf16.gmra.mxu0 %v2326
      %v2416 = vpop.f32.mrf.mxu0
      %v2417 = vadd.f32 0.0, %v2416
      %v2418 = vpop.f32.mrf.mxu0
      %v2419 = vpop.f32.mrf.mxu0
      %v2420 = vadd.f32 0.0, %v2419
      %v2421 = vpop.f32.mrf.mxu0
      %2422 = vmatprep.mubr.bf16.mxu0 0
      %2423 = vmatmul.mubr.bf16.gmra.mxu0 %v2329
      %v2424 = vpop.f32.mrf.mxu0
      %v2425 = vadd.f32 0.0, %v2424
      %v2426 = vpop.f32.mrf.mxu0
      %v2427 = vpop.f32.mrf.mxu0
      %v2428 = vadd.f32 0.0, %v2427
      %v2429 = vpop.f32.mrf.mxu0
      %2430 = vmatprep.mubr.bf16.mxu0 0
      %2431 = vmatmul.mubr.bf16.gmra.mxu0 %v2332
      %v2432 = vpop.f32.mrf.mxu0
      %v2433 = vadd.f32 0.0, %v2432
      %v2434 = vpop.f32.mrf.mxu0
      %v2435 = vpop.f32.mrf.mxu0
      %v2436 = vadd.f32 0.0, %v2435
      %v2437 = vpop.f32.mrf.mxu0
      %2438 = vmatprep.mubr.bf16.mxu0 0
      %2439 = vmatmul.mubr.bf16.gmra.mxu0 %v2335
      %v2440 = vpop.f32.mrf.mxu0
      %v2441 = vadd.f32 0.0, %v2440
      %v2442 = vpop.f32.mrf.mxu0
      %v2443 = vpop.f32.mrf.mxu0
      %v2444 = vadd.f32 0.0, %v2443
      %v2445 = vpop.f32.mrf.mxu0
      %2446 = vmatprep.mubr.bf16.mxu0 0
      %2447 = vmatmul.mubr.bf16.gmra.mxu0 %v2338
      %v2448 = vpop.f32.mrf.mxu0
      %v2449 = vadd.f32 0.0, %v2448
      %v2450 = vpop.f32.mrf.mxu0
      %v2451 = vpop.f32.mrf.mxu0
      %v2452 = vadd.f32 0.0, %v2451
      %v2453 = vpop.f32.mrf.mxu0
      %2454 = vmatprep.mubr.bf16.mxu0 0
      %2455 = vmatmul.mubr.bf16.gmra.mxu0 %v2341
      %v2456 = vpop.f32.mrf.mxu0
      %v2457 = vadd.f32 0.0, %v2456
      %v2458 = vpop.f32.mrf.mxu0
      %v2459 = vpop.f32.mrf.mxu0
      %v2460 = vadd.f32 0.0, %v2459
      %v2461 = vpop.f32.mrf.mxu0
      %2462 = vmatprep.mubr.bf16.mxu0 0
      %2463 = vmatmul.mubr.bf16.gmra.mxu0 %v2344
      %v2464 = vpop.f32.mrf.mxu0
      %v2465 = vadd.f32 0.0, %v2464
      %v2466 = vpop.f32.mrf.mxu0
      %v2467 = vpop.f32.mrf.mxu0
      %v2468 = vadd.f32 0.0, %v2467
      %v2469 = vpop.f32.mrf.mxu0
      %2470 = vmatprep.mubr.bf16.mxu0 0
      %2471 = vmatmul.mubr.bf16.gmra.mxu0 %v2347
      %v2472 = vpop.f32.mrf.mxu0
      %v2473 = vadd.f32 0.0, %v2472
      %v2474 = vpop.f32.mrf.mxu0
      %v2475 = vpop.f32.mrf.mxu0
      %v2476 = vadd.f32 0.0, %v2475
      %v2477 = vpop.f32.mrf.mxu0
      %2478 = vmatprep.mubr.bf16.mxu0 0
      %2479 = vmatmul.mubr.bf16.gmra.mxu0 %v2350
      %v2480 = vpop.f32.mrf.mxu0
      %v2481 = vadd.f32 0.0, %v2480
      %v2482 = vpop.f32.mrf.mxu0
      %v2483 = vpop.f32.mrf.mxu0
      %v2484 = vadd.f32 0.0, %v2483
      %v2485 = vpop.f32.mrf.mxu0
      %2486 = vmatprep.mubr.bf16.mxu0 0
      %2487 = vmatmul.mubr.bf16.gmra.mxu0 %v2353
      %v2488 = vpop.f32.mrf.mxu0
      %v2489 = vadd.f32 0.0, %v2488
      %v2490 = vpop.f32.mrf.mxu0
      %v2491 = vpop.f32.mrf.mxu0
      %v2492 = vadd.f32 0.0, %v2491
      %v2493 = vpop.f32.mrf.mxu0
      %2494 = vmatprep.mubr.bf16.mxu0 0
      %2495 = vmatmul.mubr.bf16.gmra.mxu0 %v2356
      %v2496 = vpop.f32.mrf.mxu0
      %v2497 = vadd.f32 0.0, %v2496
      %v2498 = vpop.f32.mrf.mxu0
      %v2499 = vpop.f32.mrf.mxu0
      %v2500 = vadd.f32 0.0, %v2499
      %v2501 = vpop.f32.mrf.mxu0
      %2502 = vmatprep.mubr.bf16.mxu0 0
      %2503 = vmatmul.mubr.bf16.gmra.mxu0 %v2359
      %v2504 = vpop.f32.mrf.mxu0
      %v2505 = vadd.f32 0.0, %v2504
      %v2506 = vpop.f32.mrf.mxu0
      %v2507 = vpop.f32.mrf.mxu0
      %v2508 = vadd.f32 0.0, %v2507
      %v2509 = vpop.f32.mrf.mxu0
      %2510 = vmatprep.mubr.bf16.mxu0 0
      %2511 = vmatmul.mubr.bf16.gmra.mxu0 %v2362
      %v2512 = vpop.f32.mrf.mxu0
      %v2513 = vadd.f32 0.0, %v2512
      %v2514 = vpop.f32.mrf.mxu0
      %v2515 = vpop.f32.mrf.mxu0
      %v2516 = vadd.f32 0.0, %v2515
      %v2517 = vpop.f32.mrf.mxu0
      %2518 = vmatprep.mubr.bf16.mxu0 0
      %2519 = vmatmul.mubr.bf16.gmra.mxu0 %v2365
      %v2520 = vpop.f32.mrf.mxu0
      %v2521 = vadd.f32 0.0, %v2520
      %v2522 = vpop.f32.mrf.mxu0
      %v2523 = vpop.f32.mrf.mxu0
      %v2524 = vadd.f32 0.0, %v2523
      %v2525 = vpop.f32.mrf.mxu0
      %2526 = vmatprep.mubr.bf16.mxu0 0
      %2527 = vmatmul.mubr.bf16.gmra.mxu0 %v2368
      %v2528 = vpop.f32.mrf.mxu0
      %v2529 = vadd.f32 0.0, %v2528
      %v2530 = vpop.f32.mrf.mxu0
      %v2531 = vpop.f32.mrf.mxu0
      %v2532 = vadd.f32 0.0, %v2531
      %v2533 = vpop.f32.mrf.mxu0
      %2534 = vmatprep.mubr.bf16.mxu0 0
      %2535 = vmatmul.mubr.bf16.gmra.mxu0 %v2371
      %v2536 = vpop.f32.mrf.mxu0
      %v2537 = vadd.f32 0.0, %v2536
      %v2538 = vpop.f32.mrf.mxu0
      %v2539 = vpop.f32.mrf.mxu0
      %v2540 = vadd.f32 0.0, %v2539
      %v2541 = vpop.f32.mrf.mxu0
      %2542 = vmatprep.mubr.bf16.mxu0 0
      %2543 = vmatmul.mubr.bf16.gmra.mxu0 %v2374
      %v2544 = vpop.f32.mrf.mxu0
      %v2545 = vadd.f32 0.0, %v2544
      %v2546 = vpop.f32.mrf.mxu0
      %v2547 = vpop.f32.mrf.mxu0
      %v2548 = vadd.f32 0.0, %v2547
      %v2549 = vpop.f32.mrf.mxu0
      %2550 = vmatprep.mubr.bf16.mxu0 0
      %2551 = vmatmul.mubr.bf16.gmra.mxu0 %v2377
      %v2552 = vpop.f32.mrf.mxu0
      %v2553 = vadd.f32 0.0, %v2552
      %v2554 = vpop.f32.mrf.mxu0
      %v2555 = vpop.f32.mrf.mxu0
      %v2556 = vadd.f32 0.0, %v2555
      %v2557 = vpop.f32.mrf.mxu0
      %2558 = vdwg.mxu0
      %v2559 = vadd.f32 %v2245, %v2417
      %v2560 = vadd.f32 %v2246, %v2420
      %v2561 = vadd.f32 %v2247, %v2425
      %v2562 = vadd.f32 %v2248, %v2428
      %v2563 = vadd.f32 %v2249, %v2433
      %v2564 = vadd.f32 %v2250, %v2436
      %v2565 = vadd.f32 %v2251, %v2441
      %v2566 = vadd.f32 %v2252, %v2444
      %v2567 = vadd.f32 %v2253, %v2449
      %v2568 = vadd.f32 %v2254, %v2452
      %v2569 = vadd.f32 %v2255, %v2457
      %v2570 = vadd.f32 %v2256, %v2460
      %v2571 = vadd.f32 %v2257, %v2465
      %v2572 = vadd.f32 %v2258, %v2468
      %v2573 = vadd.f32 %v2259, %v2473
      %v2574 = vadd.f32 %v2260, %v2476
      %v2575 = vadd.f32 %v2261, %v2481
      %v2576 = vadd.f32 %v2262, %v2484
      %v2577 = vadd.f32 %v2263, %v2489
      %v2578 = vadd.f32 %v2264, %v2492
      %v2579 = vadd.f32 %v2265, %v2497
      %v2580 = vadd.f32 %v2266, %v2500
      %v2581 = vadd.f32 %v2267, %v2505
      %v2582 = vadd.f32 %v2268, %v2508
      %v2583 = vadd.f32 %v2269, %v2513
      %v2584 = vadd.f32 %v2270, %v2516
      %v2585 = vadd.f32 %v2271, %v2521
      %v2586 = vadd.f32 %v2272, %v2524
      %v2587 = vadd.f32 %v2273, %v2529
      %v2588 = vadd.f32 %v2274, %v2532
      %v2589 = vadd.f32 %v2275, %v2537
      %v2590 = vadd.f32 %v2276, %v2540
      %v2591 = vadd.f32 %v2277, %v2545
      %v2592 = vadd.f32 %v2278, %v2548
      %v2593 = vadd.f32 %v2279, %v2553
      %v2594 = vadd.f32 %v2280, %v2556
      %v2595 = vld [vmem:[%s335 + $0x10] sm:$0xc]
      %v2596 = vld [vmem:[%s335 + $0x14] sm:$0xf]
      %v2597 = vld [vmem:[%s335 + $0x18] sm:$0xf]
      %v2598 = vld [vmem:[%s335 + $0x1c] sm:$0xf]
      %v2599 = vld [vmem:[%s335 + $0x20] sm:$0xf]
      %v2600 = vld [vmem:[%s335 + $0x24] sm:$0xf]
      %v2601 = vld [vmem:[%s335 + $0x28] sm:$0xf]
      %v2602 = vld [vmem:[%s335 + $0x2c] sm:$0xf]
      %v2603 = vld [vmem:[%s335 + $0x30] sm:$0xf]
      %v2604 = vld [vmem:[%s335 + $0x34] sm:$0xf]
      %v2605 = vld [vmem:[%s335 + $0x38] sm:$0xf]
      %v2606 = vld [vmem:[%s335 + $0x3c] sm:$0xf]
      %v2607 = vld [vmem:[%s335 + $0x40] sm:$0xf]
      %v2608 = vld [vmem:[%s335 + $0x44] sm:$0xf]
      %v2609 = vld [vmem:[%s335 + $0x48] sm:$0xf]
      %v2610 = vld [vmem:[%s335 + $0x4c] sm:$0xf]
      %v2611 = vld [vmem:[%s335 + $0x50] sm:$0xf]
      %v2612 = vld [vmem:[%s335 + $0x54] sm:$0xf]
      %v2613 = vld [vmem:[%s335 + $0x58] sm:$0xf]
      %v2614 = vld [vmem:[%s335 + $0x5c] sm:$0xf]
      %v2615 = vld [vmem:[%s335 + $0x60] sm:$0xf]
      %v2616 = vld [vmem:[%s335 + $0x64] sm:$0xf]
      %v2617 = vld [vmem:[%s335 + $0x68] sm:$0xf]
      %v2618 = vld [vmem:[%s335 + $0x6c] sm:$0xf]
      %v2619 = vld [vmem:[%s335 + $0x70] sm:$0xf]
      %v2620 = vld [vmem:[%s335 + $0x74] sm:$0xf]
      %v2621 = vld [vmem:[%s335 + $0x78] sm:$0xf]
      %v2622 = vld [vmem:[%s335 + $0x7c] sm:$0xf]
      %v2623 = vld [vmem:[%s335 + $0x80] sm:$0xf]
      %v2624 = vld [vmem:[%s335 + $0x84] sm:$0xf]
      %v2625 = vld [vmem:[%s335 + $0x88] sm:$0xf]
      %v2626 = vld [vmem:[%s335 + $0x8c] sm:$0xf]
      %v2627 = vld [vmem:[%s335 + $0x90] sm:$0xf]
      %v2628 = vld [vmem:[%s335 + $0x94] sm:$0xf]
      %v2629 = vld [vmem:[%s335 + $0x98] sm:$0xf]
      %v2630 = vld [vmem:[%s335 + $0x9c] sm:$0xf]
      %v2631 = vld [vmem:[%s335 + $0xa0] sm:$0x3]
      %s2632 = scalar_lea.vmem %s0, 12
      %v2633 = vld [vmem:[%s2632] sm:$0x3]
      %v2671 = vunpack.c.l.b16 %v2595
      %v2672 = vunpack.c.l.b16 %v2596
      %v2673 = vunpack.c.l.b16 %v2597
      %v2674 = vunpack.c.l.b16 %v2598
      %v2675 = vunpack.c.l.b16 %v2599
      %v2676 = vunpack.c.l.b16 %v2600
      %v2677 = vunpack.c.l.b16 %v2601
      %v2678 = vunpack.c.l.b16 %v2602
      %v2679 = vunpack.c.l.b16 %v2603
      %v2680 = vunpack.c.l.b16 %v2604
      %v2681 = vunpack.c.l.b16 %v2605
      %v2682 = vunpack.c.l.b16 %v2606
      %v2683 = vunpack.c.l.b16 %v2607
      %v2684 = vunpack.c.l.b16 %v2608
      %v2685 = vunpack.c.l.b16 %v2609
      %v2686 = vunpack.c.l.b16 %v2610
      %v2687 = vunpack.c.l.b16 %v2611
      %v2688 = vunpack.c.l.b16 %v2612
      %v2689 = vunpack.c.l.b16 %v2613
      %v2690 = vunpack.c.l.b16 %v2614
      %v2691 = vunpack.c.l.b16 %v2615
      %v2692 = vunpack.c.l.b16 %v2616
      %v2693 = vunpack.c.l.b16 %v2617
      %v2694 = vunpack.c.l.b16 %v2618
      %v2695 = vunpack.c.l.b16 %v2619
      %v2696 = vunpack.c.l.b16 %v2620
      %v2697 = vunpack.c.l.b16 %v2621
      %v2698 = vunpack.c.l.b16 %v2622
      %v2699 = vunpack.c.l.b16 %v2623
      %v2700 = vunpack.c.l.b16 %v2624
      %v2701 = vunpack.c.l.b16 %v2625
      %v2702 = vunpack.c.l.b16 %v2626
      %v2703 = vunpack.c.l.b16 %v2627
      %v2704 = vunpack.c.l.b16 %v2628
      %v2705 = vunpack.c.l.b16 %v2629
      %v2706 = vunpack.c.l.b16 %v2630
      %v2707 = vunpack.c.l.b16 %v2631
      %v2708 = vpack.c.b16 %v2672, %v2671
      %v2709 = vpack.c.b16 %v2674, %v2673
      %v2710 = vpack.c.b16 %v2676, %v2675
      %v2711 = vpack.c.b16 %v2678, %v2677
      %v2712 = vpack.c.b16 %v2680, %v2679
      %v2713 = vpack.c.b16 %v2682, %v2681
      %v2714 = vpack.c.b16 %v2684, %v2683
      %v2715 = vpack.c.b16 %v2686, %v2685
      %v2716 = vpack.c.b16 %v2688, %v2687
      %v2717 = vpack.c.b16 %v2690, %v2689
      %v2718 = vpack.c.b16 %v2692, %v2691
      %v2719 = vpack.c.b16 %v2694, %v2693
      %v2720 = vpack.c.b16 %v2696, %v2695
      %v2721 = vpack.c.b16 %v2698, %v2697
      %v2722 = vpack.c.b16 %v2700, %v2699
      %v2723 = vpack.c.b16 %v2702, %v2701
      %v2724 = vpack.c.b16 %v2704, %v2703
      %v2725 = vpack.c.b16 %v2706, %v2705
      %v2726 = vpack.c.b16 %v2707, %v2707
      %v2727 = vrot.slane %v2708, 2
      %v2728 = vrot.slane %v2709, 2
      %v2729 = vsel %vm2287, %v2727, %v2728
      %v2730 = vrot.slane %v2710, 2
      %v2731 = vsel %vm2287, %v2728, %v2730
      %v2732 = vrot.slane %v2711, 2
      %v2733 = vsel %vm2287, %v2730, %v2732
      %v2734 = vrot.slane %v2712, 2
      %v2735 = vsel %vm2287, %v2732, %v2734
      %v2736 = vrot.slane %v2713, 2
      %v2737 = vsel %vm2287, %v2734, %v2736
      %v2738 = vrot.slane %v2714, 2
      %v2739 = vsel %vm2287, %v2736, %v2738
      %v2740 = vrot.slane %v2715, 2
      %v2741 = vsel %vm2287, %v2738, %v2740
      %v2742 = vrot.slane %v2716, 2
      %v2743 = vsel %vm2287, %v2740, %v2742
      %v2744 = vrot.slane %v2717, 2
      %v2745 = vsel %vm2287, %v2742, %v2744
      %v2746 = vrot.slane %v2718, 2
      %v2747 = vsel %vm2287, %v2744, %v2746
      %v2748 = vrot.slane %v2719, 2
      %v2749 = vsel %vm2287, %v2746, %v2748
      %v2750 = vrot.slane %v2720, 2
      %v2751 = vsel %vm2287, %v2748, %v2750
      %v2752 = vrot.slane %v2721, 2
      %v2753 = vsel %vm2287, %v2750, %v2752
      %v2754 = vrot.slane %v2722, 2
      %v2755 = vsel %vm2287, %v2752, %v2754
      %v2756 = vrot.slane %v2723, 2
      %v2757 = vsel %vm2287, %v2754, %v2756
      %v2758 = vrot.slane %v2724, 2
      %v2759 = vsel %vm2287, %v2756, %v2758
      %v2760 = vrot.slane %v2725, 2
      %v2761 = vsel %vm2287, %v2758, %v2760
      %v2762 = vrot.slane %v2726, 2
      %v2763 = vsel %vm2287, %v2760, %v2762
      %v2765 = vsel %vm629, %v2729, 0
      %v2768 = vsel %vm629, %v2731, 0
      %v2771 = vsel %vm629, %v2733, 0
      %v2774 = vsel %vm629, %v2735, 0
      %v2777 = vsel %vm629, %v2737, 0
      %v2780 = vsel %vm629, %v2739, 0
      %v2783 = vsel %vm629, %v2741, 0
      %v2786 = vsel %vm629, %v2743, 0
      %v2789 = vsel %vm629, %v2745, 0
      %v2792 = vsel %vm629, %v2747, 0
      %v2795 = vsel %vm629, %v2749, 0
      %v2798 = vsel %vm629, %v2751, 0
      %v2801 = vsel %vm629, %v2753, 0
      %v2804 = vsel %vm629, %v2755, 0
      %v2807 = vsel %vm629, %v2757, 0
      %v2810 = vsel %vm629, %v2759, 0
      %v2813 = vsel %vm629, %v2761, 0
      %v2816 = vsel %vm629, %v2763, 0
      %v2819 = vsel %vm684, %v2633, 0
      %2821 = vmatprep.subr.bf16.mxu0 0
      %2822 = vmatpush1.bf16.msra.mxu0 0
      %2823 = vmatprep.subr.bf16.mxu0 0
      %2824 = vmatpush1.bf16.msra.mxu0 0
      %2825 = vmatprep.subr.bf16.mxu0 0
      %2826 = vmatpush1.bf16.msra.mxu0 0
      %2827 = vmatprep.subr.bf16.mxu0 0
      %2828 = vmatpush1.bf16.msra.mxu0 0
      %2829 = vmatprep.subr.bf16.mxu0 0
      %2830 = vmatpush1.bf16.msra.mxu0 0
      %2831 = vmatprep.subr.bf16.mxu0 0
      %2832 = vmatpush1.bf16.msra.mxu0 0
      %2833 = vmatprep.subr.bf16.mxu0 0
      %2834 = vmatpush1.bf16.msra.mxu0 0
      %2835 = vmatprep.subr.bf16.mxu0 0
      %2836 = vmatpush1.bf16.msra.mxu0 %v2819
      %2837 = vmatprep.subr.bf16.mxu0 0
      %2838 = vmatpush2.bf16.msra.mxu0 0
      %2839 = vmatprep.subr.bf16.mxu0 0
      %2840 = vmatpush2.bf16.msra.mxu0 0
      %2841 = vmatprep.subr.bf16.mxu0 0
      %2842 = vmatpush2.bf16.msra.mxu0 0
      %2843 = vmatprep.subr.bf16.mxu0 0
      %2844 = vmatpush2.bf16.msra.mxu0 0
      %2845 = vmatprep.subr.bf16.mxu0 0
      %2846 = vmatpush2.bf16.msra.mxu0 0
      %2847 = vmatprep.subr.bf16.mxu0 0
      %2848 = vmatpush2.bf16.msra.mxu0 0
      %2849 = vmatprep.subr.bf16.mxu0 0
      %2850 = vmatpush2.bf16.msra.mxu0 0
      %2851 = vmatprep.subr.bf16.mxu0 0
      %2852 = vmatpush2.bf16.msra.mxu0 0
      %2853 = vmatprep.mubr.bf16.mxu0 0
      %2854 = vmatmul.mubr.bf16.gmra.mxu0 %v2765
      %v2855 = vpop.f32.mrf.mxu0
      %v2856 = vadd.f32 0.0, %v2855
      %v2857 = vpop.f32.mrf.mxu0
      %v2858 = vpop.f32.mrf.mxu0
      %v2859 = vadd.f32 0.0, %v2858
      %v2860 = vpop.f32.mrf.mxu0
      %2861 = vmatprep.mubr.bf16.mxu0 0
      %2862 = vmatmul.mubr.bf16.gmra.mxu0 %v2768
      %v2863 = vpop.f32.mrf.mxu0
      %v2864 = vadd.f32 0.0, %v2863
      %v2865 = vpop.f32.mrf.mxu0
      %v2866 = vpop.f32.mrf.mxu0
      %v2867 = vadd.f32 0.0, %v2866
      %v2868 = vpop.f32.mrf.mxu0
      %2869 = vmatprep.mubr.bf16.mxu0 0
      %2870 = vmatmul.mubr.bf16.gmra.mxu0 %v2771
      %v2871 = vpop.f32.mrf.mxu0
      %v2872 = vadd.f32 0.0, %v2871
      %v2873 = vpop.f32.mrf.mxu0
      %v2874 = vpop.f32.mrf.mxu0
      %v2875 = vadd.f32 0.0, %v2874
      %v2876 = vpop.f32.mrf.mxu0
      %2877 = vmatprep.mubr.bf16.mxu0 0
      %2878 = vmatmul.mubr.bf16.gmra.mxu0 %v2774
      %v2879 = vpop.f32.mrf.mxu0
      %v2880 = vadd.f32 0.0, %v2879
      %v2881 = vpop.f32.mrf.mxu0
      %v2882 = vpop.f32.mrf.mxu0
      %v2883 = vadd.f32 0.0, %v2882
      %v2884 = vpop.f32.mrf.mxu0
      %2885 = vmatprep.mubr.bf16.mxu0 0
      %2886 = vmatmul.mubr.bf16.gmra.mxu0 %v2777
      %v2887 = vpop.f32.mrf.mxu0
      %v2888 = vadd.f32 0.0, %v2887
      %v2889 = vpop.f32.mrf.mxu0
      %v2890 = vpop.f32.mrf.mxu0
      %v2891 = vadd.f32 0.0, %v2890
      %v2892 = vpop.f32.mrf.mxu0
      %2893 = vmatprep.mubr.bf16.mxu0 0
      %2894 = vmatmul.mubr.bf16.gmra.mxu0 %v2780
      %v2895 = vpop.f32.mrf.mxu0
      %v2896 = vadd.f32 0.0, %v2895
      %v2897 = vpop.f32.mrf.mxu0
      %v2898 = vpop.f32.mrf.mxu0
      %v2899 = vadd.f32 0.0, %v2898
      %v2900 = vpop.f32.mrf.mxu0
      %2901 = vmatprep.mubr.bf16.mxu0 0
      %2902 = vmatmul.mubr.bf16.gmra.mxu0 %v2783
      %v2903 = vpop.f32.mrf.mxu0
      %v2904 = vadd.f32 0.0, %v2903
      %v2905 = vpop.f32.mrf.mxu0
      %v2906 = vpop.f32.mrf.mxu0
      %v2907 = vadd.f32 0.0, %v2906
      %v2908 = vpop.f32.mrf.mxu0
      %2909 = vmatprep.mubr.bf16.mxu0 0
      %2910 = vmatmul.mubr.bf16.gmra.mxu0 %v2786
      %v2911 = vpop.f32.mrf.mxu0
      %v2912 = vadd.f32 0.0, %v2911
      %v2913 = vpop.f32.mrf.mxu0
      %v2914 = vpop.f32.mrf.mxu0
      %v2915 = vadd.f32 0.0, %v2914
      %v2916 = vpop.f32.mrf.mxu0
      %2917 = vmatprep.mubr.bf16.mxu0 0
      %2918 = vmatmul.mubr.bf16.gmra.mxu0 %v2789
      %v2919 = vpop.f32.mrf.mxu0
      %v2920 = vadd.f32 0.0, %v2919
      %v2921 = vpop.f32.mrf.mxu0
      %v2922 = vpop.f32.mrf.mxu0
      %v2923 = vadd.f32 0.0, %v2922
      %v2924 = vpop.f32.mrf.mxu0
      %2925 = vmatprep.mubr.bf16.mxu0 0
      %2926 = vmatmul.mubr.bf16.gmra.mxu0 %v2792
      %v2927 = vpop.f32.mrf.mxu0
      %v2928 = vadd.f32 0.0, %v2927
      %v2929 = vpop.f32.mrf.mxu0
      %v2930 = vpop.f32.mrf.mxu0
      %v2931 = vadd.f32 0.0, %v2930
      %v2932 = vpop.f32.mrf.mxu0
      %2933 = vmatprep.mubr.bf16.mxu0 0
      %2934 = vmatmul.mubr.bf16.gmra.mxu0 %v2795
      %v2935 = vpop.f32.mrf.mxu0
      %v2936 = vadd.f32 0.0, %v2935
      %v2937 = vpop.f32.mrf.mxu0
      %v2938 = vpop.f32.mrf.mxu0
      %v2939 = vadd.f32 0.0, %v2938
      %v2940 = vpop.f32.mrf.mxu0
      %2941 = vmatprep.mubr.bf16.mxu0 0
      %2942 = vmatmul.mubr.bf16.gmra.mxu0 %v2798
      %v2943 = vpop.f32.mrf.mxu0
      %v2944 = vadd.f32 0.0, %v2943
      %v2945 = vpop.f32.mrf.mxu0
      %v2946 = vpop.f32.mrf.mxu0
      %v2947 = vadd.f32 0.0, %v2946
      %v2948 = vpop.f32.mrf.mxu0
      %2949 = vmatprep.mubr.bf16.mxu0 0
      %2950 = vmatmul.mubr.bf16.gmra.mxu0 %v2801
      %v2951 = vpop.f32.mrf.mxu0
      %v2952 = vadd.f32 0.0, %v2951
      %v2953 = vpop.f32.mrf.mxu0
      %v2954 = vpop.f32.mrf.mxu0
      %v2955 = vadd.f32 0.0, %v2954
      %v2956 = vpop.f32.mrf.mxu0
      %2957 = vmatprep.mubr.bf16.mxu0 0
      %2958 = vmatmul.mubr.bf16.gmra.mxu0 %v2804
      %v2959 = vpop.f32.mrf.mxu0
      %v2960 = vadd.f32 0.0, %v2959
      %v2961 = vpop.f32.mrf.mxu0
      %v2962 = vpop.f32.mrf.mxu0
      %v2963 = vadd.f32 0.0, %v2962
      %v2964 = vpop.f32.mrf.mxu0
      %2965 = vmatprep.mubr.bf16.mxu0 0
      %2966 = vmatmul.mubr.bf16.gmra.mxu0 %v2807
      %v2967 = vpop.f32.mrf.mxu0
      %v2968 = vadd.f32 0.0, %v2967
      %v2969 = vpop.f32.mrf.mxu0
      %v2970 = vpop.f32.mrf.mxu0
      %v2971 = vadd.f32 0.0, %v2970
      %v2972 = vpop.f32.mrf.mxu0
      %2973 = vmatprep.mubr.bf16.mxu0 0
      %2974 = vmatmul.mubr.bf16.gmra.mxu0 %v2810
      %v2975 = vpop.f32.mrf.mxu0
      %v2976 = vadd.f32 0.0, %v2975
      %v2977 = vpop.f32.mrf.mxu0
      %v2978 = vpop.f32.mrf.mxu0
      %v2979 = vadd.f32 0.0, %v2978
      %v2980 = vpop.f32.mrf.mxu0
      %2981 = vmatprep.mubr.bf16.mxu0 0
      %2982 = vmatmul.mubr.bf16.gmra.mxu0 %v2813
      %v2983 = vpop.f32.mrf.mxu0
      %v2984 = vadd.f32 0.0, %v2983
      %v2985 = vpop.f32.mrf.mxu0
      %v2986 = vpop.f32.mrf.mxu0
      %v2987 = vadd.f32 0.0, %v2986
      %v2988 = vpop.f32.mrf.mxu0
      %2989 = vmatprep.mubr.bf16.mxu0 0
      %2990 = vmatmul.mubr.bf16.gmra.mxu0 %v2816
      %v2991 = vpop.f32.mrf.mxu0
      %v2992 = vadd.f32 0.0, %v2991
      %v2993 = vpop.f32.mrf.mxu0
      %v2994 = vpop.f32.mrf.mxu0
      %v2995 = vadd.f32 0.0, %v2994
      %v2996 = vpop.f32.mrf.mxu0
      %2997 = vdwg.mxu0
      %v2998 = vadd.f32 %v2559, %v2856
      %v2999 = vadd.f32 %v2560, %v2859
      %v3000 = vadd.f32 %v2561, %v2864
      %v3001 = vadd.f32 %v2562, %v2867
      %v3002 = vadd.f32 %v2563, %v2872
      %v3003 = vadd.f32 %v2564, %v2875
      %v3004 = vadd.f32 %v2565, %v2880
      %v3005 = vadd.f32 %v2566, %v2883
      %v3006 = vadd.f32 %v2567, %v2888
      %v3007 = vadd.f32 %v2568, %v2891
      %v3008 = vadd.f32 %v2569, %v2896
      %v3009 = vadd.f32 %v2570, %v2899
      %v3010 = vadd.f32 %v2571, %v2904
      %v3011 = vadd.f32 %v2572, %v2907
      %v3012 = vadd.f32 %v2573, %v2912
      %v3013 = vadd.f32 %v2574, %v2915
      %v3014 = vadd.f32 %v2575, %v2920
      %v3015 = vadd.f32 %v2576, %v2923
      %v3016 = vadd.f32 %v2577, %v2928
      %v3017 = vadd.f32 %v2578, %v2931
      %v3018 = vadd.f32 %v2579, %v2936
      %v3019 = vadd.f32 %v2580, %v2939
      %v3020 = vadd.f32 %v2581, %v2944
      %v3021 = vadd.f32 %v2582, %v2947
      %v3022 = vadd.f32 %v2583, %v2952
      %v3023 = vadd.f32 %v2584, %v2955
      %v3024 = vadd.f32 %v2585, %v2960
      %v3025 = vadd.f32 %v2586, %v2963
      %v3026 = vadd.f32 %v2587, %v2968
      %v3027 = vadd.f32 %v2588, %v2971
      %v3028 = vadd.f32 %v2589, %v2976
      %v3029 = vadd.f32 %v2590, %v2979
      %v3030 = vadd.f32 %v2591, %v2984
      %v3031 = vadd.f32 %v2592, %v2987
      %v3032 = vadd.f32 %v2593, %v2992
      %v3033 = vadd.f32 %v2594, %v2995
      %v3034 = vld [vmem:[%s335 + $0xa0] sm:$0x7]
      %s3035 = scalar_lea.vmem %s0, 14
      %v3036 = vld [vmem:[%s3035] sm:$0x3]
      %v3038 = vunpack.c.l.b16 %v3034
      %v3039 = vpack.c.b16 %v3038, %v3038
      %vm3040 = vsmask.f32 5376
      %v3042 = vshrl.u32 %v2708, 16
      %v3044 = vrot.slane %v3042, 2
      %v3045 = vshll.u32 %v2708, 16
      %v3047 = vrot.slane %v3045, 3
      %v3048 = vor.u32 %v3044, %v3047
      %v3050 = vshrl.u32 %v2709, 16
      %v3052 = vrot.slane %v3050, 2
      %v3053 = vshll.u32 %v2709, 16
      %v3055 = vrot.slane %v3053, 3
      %v3056 = vor.u32 %v3052, %v3055
      %v3057 = vsel %vm3040, %v3048, %v3056
      %v3059 = vshrl.u32 %v2710, 16
      %v3061 = vrot.slane %v3059, 2
      %v3062 = vshll.u32 %v2710, 16
      %v3064 = vrot.slane %v3062, 3
      %v3065 = vor.u32 %v3061, %v3064
      %v3066 = vsel %vm3040, %v3056, %v3065
      %v3068 = vshrl.u32 %v2711, 16
      %v3070 = vrot.slane %v3068, 2
      %v3071 = vshll.u32 %v2711, 16
      %v3073 = vrot.slane %v3071, 3
      %v3074 = vor.u32 %v3070, %v3073
      %v3075 = vsel %vm3040, %v3065, %v3074
      %v3077 = vshrl.u32 %v2712, 16
      %v3079 = vrot.slane %v3077, 2
      %v3080 = vshll.u32 %v2712, 16
      %v3082 = vrot.slane %v3080, 3
      %v3083 = vor.u32 %v3079, %v3082
      %v3084 = vsel %vm3040, %v3074, %v3083
      %v3086 = vshrl.u32 %v2713, 16
      %v3088 = vrot.slane %v3086, 2
      %v3089 = vshll.u32 %v2713, 16
      %v3091 = vrot.slane %v3089, 3
      %v3092 = vor.u32 %v3088, %v3091
      %v3093 = vsel %vm3040, %v3083, %v3092
      %v3095 = vshrl.u32 %v2714, 16
      %v3097 = vrot.slane %v3095, 2
      %v3098 = vshll.u32 %v2714, 16
      %v3100 = vrot.slane %v3098, 3
      %v3101 = vor.u32 %v3097, %v3100
      %v3102 = vsel %vm3040, %v3092, %v3101
      %v3104 = vshrl.u32 %v2715, 16
      %v3106 = vrot.slane %v3104, 2
      %v3107 = vshll.u32 %v2715, 16
      %v3109 = vrot.slane %v3107, 3
      %v3110 = vor.u32 %v3106, %v3109
      %v3111 = vsel %vm3040, %v3101, %v3110
      %v3113 = vshrl.u32 %v2716, 16
      %v3115 = vrot.slane %v3113, 2
      %v3116 = vshll.u32 %v2716, 16
      %v3118 = vrot.slane %v3116, 3
      %v3119 = vor.u32 %v3115, %v3118
      %v3120 = vsel %vm3040, %v3110, %v3119
      %v3122 = vshrl.u32 %v2717, 16
      %v3124 = vrot.slane %v3122, 2
      %v3125 = vshll.u32 %v2717, 16
      %v3127 = vrot.slane %v3125, 3
      %v3128 = vor.u32 %v3124, %v3127
      %v3129 = vsel %vm3040, %v3119, %v3128
      %v3131 = vshrl.u32 %v2718, 16
      %v3133 = vrot.slane %v3131, 2
      %v3134 = vshll.u32 %v2718, 16
      %v3136 = vrot.slane %v3134, 3
      %v3137 = vor.u32 %v3133, %v3136
      %v3138 = vsel %vm3040, %v3128, %v3137
      %v3140 = vshrl.u32 %v2719, 16
      %v3142 = vrot.slane %v3140, 2
      %v3143 = vshll.u32 %v2719, 16
      %v3145 = vrot.slane %v3143, 3
      %v3146 = vor.u32 %v3142, %v3145
      %v3147 = vsel %vm3040, %v3137, %v3146
      %v3149 = vshrl.u32 %v2720, 16
      %v3151 = vrot.slane %v3149, 2
      %v3152 = vshll.u32 %v2720, 16
      %v3154 = vrot.slane %v3152, 3
      %v3155 = vor.u32 %v3151, %v3154
      %v3156 = vsel %vm3040, %v3146, %v3155
      %v3158 = vshrl.u32 %v2721, 16
      %v3160 = vrot.slane %v3158, 2
      %v3161 = vshll.u32 %v2721, 16
      %v3163 = vrot.slane %v3161, 3
      %v3164 = vor.u32 %v3160, %v3163
      %v3165 = vsel %vm3040, %v3155, %v3164
      %v3167 = vshrl.u32 %v2722, 16
      %v3169 = vrot.slane %v3167, 2
      %v3170 = vshll.u32 %v2722, 16
      %v3172 = vrot.slane %v3170, 3
      %v3173 = vor.u32 %v3169, %v3172
      %v3174 = vsel %vm3040, %v3164, %v3173
      %v3176 = vshrl.u32 %v2723, 16
      %v3178 = vrot.slane %v3176, 2
      %v3179 = vshll.u32 %v2723, 16
      %v3181 = vrot.slane %v3179, 3
      %v3182 = vor.u32 %v3178, %v3181
      %v3183 = vsel %vm3040, %v3173, %v3182
      %v3185 = vshrl.u32 %v2724, 16
      %v3187 = vrot.slane %v3185, 2
      %v3188 = vshll.u32 %v2724, 16
      %v3190 = vrot.slane %v3188, 3
      %v3191 = vor.u32 %v3187, %v3190
      %v3192 = vsel %vm3040, %v3182, %v3191
      %v3194 = vshrl.u32 %v2725, 16
      %v3196 = vrot.slane %v3194, 2
      %v3197 = vshll.u32 %v2725, 16
      %v3199 = vrot.slane %v3197, 3
      %v3200 = vor.u32 %v3196, %v3199
      %v3201 = vsel %vm3040, %v3191, %v3200
      %v3203 = vshrl.u32 %v3039, 16
      %v3205 = vrot.slane %v3203, 2
      %v3206 = vshll.u32 %v3039, 16
      %v3208 = vrot.slane %v3206, 3
      %v3209 = vor.u32 %v3205, %v3208
      %v3210 = vsel %vm3040, %v3200, %v3209
      %v3212 = vsel %vm629, %v3057, 0
      %v3215 = vsel %vm629, %v3066, 0
      %v3218 = vsel %vm629, %v3075, 0
      %v3221 = vsel %vm629, %v3084, 0
      %v3224 = vsel %vm629, %v3093, 0
      %v3227 = vsel %vm629, %v3102, 0
      %v3230 = vsel %vm629, %v3111, 0
      %v3233 = vsel %vm629, %v3120, 0
      %v3236 = vsel %vm629, %v3129, 0
      %v3239 = vsel %vm629, %v3138, 0
      %v3242 = vsel %vm629, %v3147, 0
      %v3245 = vsel %vm629, %v3156, 0
      %v3248 = vsel %vm629, %v3165, 0
      %v3251 = vsel %vm629, %v3174, 0
      %v3254 = vsel %vm629, %v3183, 0
      %v3257 = vsel %vm629, %v3192, 0
      %v3260 = vsel %vm629, %v3201, 0
      %v3263 = vsel %vm629, %v3210, 0
      %v3266 = vsel %vm684, %v3036, 0
      %3268 = vmatprep.subr.bf16.mxu0 0
      %3269 = vmatpush1.bf16.msra.mxu0 0
      %3270 = vmatprep.subr.bf16.mxu0 0
      %3271 = vmatpush1.bf16.msra.mxu0 0
      %3272 = vmatprep.subr.bf16.mxu0 0
      %3273 = vmatpush1.bf16.msra.mxu0 0
      %3274 = vmatprep.subr.bf16.mxu0 0
      %3275 = vmatpush1.bf16.msra.mxu0 0
      %3276 = vmatprep.subr.bf16.mxu0 0
      %3277 = vmatpush1.bf16.msra.mxu0 0
      %3278 = vmatprep.subr.bf16.mxu0 0
      %3279 = vmatpush1.bf16.msra.mxu0 0
      %3280 = vmatprep.subr.bf16.mxu0 0
      %3281 = vmatpush1.bf16.msra.mxu0 0
      %3282 = vmatprep.subr.bf16.mxu0 0
      %3283 = vmatpush1.bf16.msra.mxu0 %v3266
      %3284 = vmatprep.subr.bf16.mxu0 0
      %3285 = vmatpush2.bf16.msra.mxu0 0
      %3286 = vmatprep.subr.bf16.mxu0 0
      %3287 = vmatpush2.bf16.msra.mxu0 0
      %3288 = vmatprep.subr.bf16.mxu0 0
      %3289 = vmatpush2.bf16.msra.mxu0 0
      %3290 = vmatprep.subr.bf16.mxu0 0
      %3291 = vmatpush2.bf16.msra.mxu0 0
      %3292 = vmatprep.subr.bf16.mxu0 0
      %3293 = vmatpush2.bf16.msra.mxu0 0
      %3294 = vmatprep.subr.bf16.mxu0 0
      %3295 = vmatpush2.bf16.msra.mxu0 0
      %3296 = vmatprep.subr.bf16.mxu0 0
      %3297 = vmatpush2.bf16.msra.mxu0 0
      %3298 = vmatprep.subr.bf16.mxu0 0
      %3299 = vmatpush2.bf16.msra.mxu0 0
      %3300 = vmatprep.mubr.bf16.mxu0 0
      %3301 = vmatmul.mubr.bf16.gmra.mxu0 %v3212
      %v3302 = vpop.f32.mrf.mxu0
      %v3303 = vadd.f32 0.0, %v3302
      %v3304 = vpop.f32.mrf.mxu0
      %v3305 = vpop.f32.mrf.mxu0
      %v3306 = vadd.f32 0.0, %v3305
      %v3307 = vpop.f32.mrf.mxu0
      %3308 = vmatprep.mubr.bf16.mxu0 0
      %3309 = vmatmul.mubr.bf16.gmra.mxu0 %v3215
      %v3310 = vpop.f32.mrf.mxu0
      %v3311 = vadd.f32 0.0, %v3310
      %v3312 = vpop.f32.mrf.mxu0
      %v3313 = vpop.f32.mrf.mxu0
      %v3314 = vadd.f32 0.0, %v3313
      %v3315 = vpop.f32.mrf.mxu0
      %3316 = vmatprep.mubr.bf16.mxu0 0
      %3317 = vmatmul.mubr.bf16.gmra.mxu0 %v3218
      %v3318 = vpop.f32.mrf.mxu0
      %v3319 = vadd.f32 0.0, %v3318
      %v3320 = vpop.f32.mrf.mxu0
      %v3321 = vpop.f32.mrf.mxu0
      %v3322 = vadd.f32 0.0, %v3321
      %v3323 = vpop.f32.mrf.mxu0
      %3324 = vmatprep.mubr.bf16.mxu0 0
      %3325 = vmatmul.mubr.bf16.gmra.mxu0 %v3221
      %v3326 = vpop.f32.mrf.mxu0
      %v3327 = vadd.f32 0.0, %v3326
      %v3328 = vpop.f32.mrf.mxu0
      %v3329 = vpop.f32.mrf.mxu0
      %v3330 = vadd.f32 0.0, %v3329
      %v3331 = vpop.f32.mrf.mxu0
      %3332 = vmatprep.mubr.bf16.mxu0 0
      %3333 = vmatmul.mubr.bf16.gmra.mxu0 %v3224
      %v3334 = vpop.f32.mrf.mxu0
      %v3335 = vadd.f32 0.0, %v3334
      %v3336 = vpop.f32.mrf.mxu0
      %v3337 = vpop.f32.mrf.mxu0
      %v3338 = vadd.f32 0.0, %v3337
      %v3339 = vpop.f32.mrf.mxu0
      %3340 = vmatprep.mubr.bf16.mxu0 0
      %3341 = vmatmul.mubr.bf16.gmra.mxu0 %v3227
      %v3342 = vpop.f32.mrf.mxu0
      %v3343 = vadd.f32 0.0, %v3342
      %v3344 = vpop.f32.mrf.mxu0
      %v3345 = vpop.f32.mrf.mxu0
      %v3346 = vadd.f32 0.0, %v3345
      %v3347 = vpop.f32.mrf.mxu0
      %3348 = vmatprep.mubr.bf16.mxu0 0
      %3349 = vmatmul.mubr.bf16.gmra.mxu0 %v3230
      %v3350 = vpop.f32.mrf.mxu0
      %v3351 = vadd.f32 0.0, %v3350
      %v3352 = vpop.f32.mrf.mxu0
      %v3353 = vpop.f32.mrf.mxu0
      %v3354 = vadd.f32 0.0, %v3353
      %v3355 = vpop.f32.mrf.mxu0
      %3356 = vmatprep.mubr.bf16.mxu0 0
      %3357 = vmatmul.mubr.bf16.gmra.mxu0 %v3233
      %v3358 = vpop.f32.mrf.mxu0
      %v3359 = vadd.f32 0.0, %v3358
      %v3360 = vpop.f32.mrf.mxu0
      %v3361 = vpop.f32.mrf.mxu0
      %v3362 = vadd.f32 0.0, %v3361
      %v3363 = vpop.f32.mrf.mxu0
      %3364 = vmatprep.mubr.bf16.mxu0 0
      %3365 = vmatmul.mubr.bf16.gmra.mxu0 %v3236
      %v3366 = vpop.f32.mrf.mxu0
      %v3367 = vadd.f32 0.0, %v3366
      %v3368 = vpop.f32.mrf.mxu0
      %v3369 = vpop.f32.mrf.mxu0
      %v3370 = vadd.f32 0.0, %v3369
      %v3371 = vpop.f32.mrf.mxu0
      %3372 = vmatprep.mubr.bf16.mxu0 0
      %3373 = vmatmul.mubr.bf16.gmra.mxu0 %v3239
      %v3374 = vpop.f32.mrf.mxu0
      %v3375 = vadd.f32 0.0, %v3374
      %v3376 = vpop.f32.mrf.mxu0
      %v3377 = vpop.f32.mrf.mxu0
      %v3378 = vadd.f32 0.0, %v3377
      %v3379 = vpop.f32.mrf.mxu0
      %3380 = vmatprep.mubr.bf16.mxu0 0
      %3381 = vmatmul.mubr.bf16.gmra.mxu0 %v3242
      %v3382 = vpop.f32.mrf.mxu0
      %v3383 = vadd.f32 0.0, %v3382
      %v3384 = vpop.f32.mrf.mxu0
      %v3385 = vpop.f32.mrf.mxu0
      %v3386 = vadd.f32 0.0, %v3385
      %v3387 = vpop.f32.mrf.mxu0
      %3388 = vmatprep.mubr.bf16.mxu0 0
      %3389 = vmatmul.mubr.bf16.gmra.mxu0 %v3245
      %v3390 = vpop.f32.mrf.mxu0
      %v3391 = vadd.f32 0.0, %v3390
      %v3392 = vpop.f32.mrf.mxu0
      %v3393 = vpop.f32.mrf.mxu0
      %v3394 = vadd.f32 0.0, %v3393
      %v3395 = vpop.f32.mrf.mxu0
      %3396 = vmatprep.mubr.bf16.mxu0 0
      %3397 = vmatmul.mubr.bf16.gmra.mxu0 %v3248
      %v3398 = vpop.f32.mrf.mxu0
      %v3399 = vadd.f32 0.0, %v3398
      %v3400 = vpop.f32.mrf.mxu0
      %v3401 = vpop.f32.mrf.mxu0
      %v3402 = vadd.f32 0.0, %v3401
      %v3403 = vpop.f32.mrf.mxu0
      %3404 = vmatprep.mubr.bf16.mxu0 0
      %3405 = vmatmul.mubr.bf16.gmra.mxu0 %v3251
      %v3406 = vpop.f32.mrf.mxu0
      %v3407 = vadd.f32 0.0, %v3406
      %v3408 = vpop.f32.mrf.mxu0
      %v3409 = vpop.f32.mrf.mxu0
      %v3410 = vadd.f32 0.0, %v3409
      %v3411 = vpop.f32.mrf.mxu0
      %3412 = vmatprep.mubr.bf16.mxu0 0
      %3413 = vmatmul.mubr.bf16.gmra.mxu0 %v3254
      %v3414 = vpop.f32.mrf.mxu0
      %v3415 = vadd.f32 0.0, %v3414
      %v3416 = vpop.f32.mrf.mxu0
      %v3417 = vpop.f32.mrf.mxu0
      %v3418 = vadd.f32 0.0, %v3417
      %v3419 = vpop.f32.mrf.mxu0
      %3420 = vmatprep.mubr.bf16.mxu0 0
      %3421 = vmatmul.mubr.bf16.gmra.mxu0 %v3257
      %v3422 = vpop.f32.mrf.mxu0
      %v3423 = vadd.f32 0.0, %v3422
      %v3424 = vpop.f32.mrf.mxu0
      %v3425 = vpop.f32.mrf.mxu0
      %v3426 = vadd.f32 0.0, %v3425
      %v3427 = vpop.f32.mrf.mxu0
      %3428 = vmatprep.mubr.bf16.mxu0 0
      %3429 = vmatmul.mubr.bf16.gmra.mxu0 %v3260
      %v3430 = vpop.f32.mrf.mxu0
      %v3431 = vadd.f32 0.0, %v3430
      %v3432 = vpop.f32.mrf.mxu0
      %v3433 = vpop.f32.mrf.mxu0
      %v3434 = vadd.f32 0.0, %v3433
      %v3435 = vpop.f32.mrf.mxu0
      %3436 = vmatprep.mubr.bf16.mxu0 0
      %3437 = vmatmul.mubr.bf16.gmra.mxu0 %v3263
      %v3438 = vpop.f32.mrf.mxu0
      %v3439 = vadd.f32 0.0, %v3438
      %v3440 = vpop.f32.mrf.mxu0
      %v3441 = vpop.f32.mrf.mxu0
      %v3442 = vadd.f32 0.0, %v3441
      %v3443 = vpop.f32.mrf.mxu0
      %3444 = vdwg.mxu0
      %v3445 = vadd.f32 %v2998, %v3303
      %v3446 = vadd.f32 %v2999, %v3306
      %v3447 = vadd.f32 %v3000, %v3311
      %v3448 = vadd.f32 %v3001, %v3314
      %v3449 = vadd.f32 %v3002, %v3319
      %v3450 = vadd.f32 %v3003, %v3322
      %v3451 = vadd.f32 %v3004, %v3327
      %v3452 = vadd.f32 %v3005, %v3330
      %v3453 = vadd.f32 %v3006, %v3335
      %v3454 = vadd.f32 %v3007, %v3338
      %v3455 = vadd.f32 %v3008, %v3343
      %v3456 = vadd.f32 %v3009, %v3346
      %v3457 = vadd.f32 %v3010, %v3351
      %v3458 = vadd.f32 %v3011, %v3354
      %v3459 = vadd.f32 %v3012, %v3359
      %v3460 = vadd.f32 %v3013, %v3362
      %v3461 = vadd.f32 %v3014, %v3367
      %v3462 = vadd.f32 %v3015, %v3370
      %v3463 = vadd.f32 %v3016, %v3375
      %v3464 = vadd.f32 %v3017, %v3378
      %v3465 = vadd.f32 %v3018, %v3383
      %v3466 = vadd.f32 %v3019, %v3386
      %v3467 = vadd.f32 %v3020, %v3391
      %v3468 = vadd.f32 %v3021, %v3394
      %v3469 = vadd.f32 %v3022, %v3399
      %v3470 = vadd.f32 %v3023, %v3402
      %v3471 = vadd.f32 %v3024, %v3407
      %v3472 = vadd.f32 %v3025, %v3410
      %v3473 = vadd.f32 %v3026, %v3415
      %v3474 = vadd.f32 %v3027, %v3418
      %v3475 = vadd.f32 %v3028, %v3423
      %v3476 = vadd.f32 %v3029, %v3426
      %v3477 = vadd.f32 %v3030, %v3431
      %v3478 = vadd.f32 %v3031, %v3434
      %v3479 = vadd.f32 %v3032, %v3439
      %v3480 = vadd.f32 %v3033, %v3442
      %v3481 = vld [vmem:[%s335 + $0x10] sm:$0x8]
      %s3482 = scalar_lea.vmem %s0, 16
      %v3483 = vld [vmem:[%s3482] sm:$0x3]
      %v3485 = vunpack.c.l.b16 %v3481
      %v3486 = vpack.c.b16 %v2672, %v3485
      %vm3487 = vcmask 1044480
      %v3488 = vrot.slane %v3486, 3
      %v3489 = vrot.slane %v2709, 3
      %v3490 = vsel %vm3487, %v3488, %v3489
      %v3491 = vrot.slane %v2710, 3
      %v3492 = vsel %vm3487, %v3489, %v3491
      %v3493 = vrot.slane %v2711, 3
      %v3494 = vsel %vm3487, %v3491, %v3493
      %v3495 = vrot.slane %v2712, 3
      %v3496 = vsel %vm3487, %v3493, %v3495
      %v3497 = vrot.slane %v2713, 3
      %v3498 = vsel %vm3487, %v3495, %v3497
      %v3499 = vrot.slane %v2714, 3
      %v3500 = vsel %vm3487, %v3497, %v3499
      %v3501 = vrot.slane %v2715, 3
      %v3502 = vsel %vm3487, %v3499, %v3501
      %v3503 = vrot.slane %v2716, 3
      %v3504 = vsel %vm3487, %v3501, %v3503
      %v3505 = vrot.slane %v2717, 3
      %v3506 = vsel %vm3487, %v3503, %v3505
      %v3507 = vrot.slane %v2718, 3
      %v3508 = vsel %vm3487, %v3505, %v3507
      %v3509 = vrot.slane %v2719, 3
      %v3510 = vsel %vm3487, %v3507, %v3509
      %v3511 = vrot.slane %v2720, 3
      %v3512 = vsel %vm3487, %v3509, %v3511
      %v3513 = vrot.slane %v2721, 3
      %v3514 = vsel %vm3487, %v3511, %v3513
      %v3515 = vrot.slane %v2722, 3
      %v3516 = vsel %vm3487, %v3513, %v3515
      %v3517 = vrot.slane %v2723, 3
      %v3518 = vsel %vm3487, %v3515, %v3517
      %v3519 = vrot.slane %v2724, 3
      %v3520 = vsel %vm3487, %v3517, %v3519
      %v3521 = vrot.slane %v2725, 3
      %v3522 = vsel %vm3487, %v3519, %v3521
      %v3523 = vrot.slane %v3039, 3
      %v3524 = vsel %vm3487, %v3521, %v3523
      %v3526 = vsel %vm629, %v3490, 0
      %v3529 = vsel %vm629, %v3492, 0
      %v3532 = vsel %vm629, %v3494, 0
      %v3535 = vsel %vm629, %v3496, 0
      %v3538 = vsel %vm629, %v3498, 0
      %v3541 = vsel %vm629, %v3500, 0
      %v3544 = vsel %vm629, %v3502, 0
      %v3547 = vsel %vm629, %v3504, 0
      %v3550 = vsel %vm629, %v3506, 0
      %v3553 = vsel %vm629, %v3508, 0
      %v3556 = vsel %vm629, %v3510, 0
      %v3559 = vsel %vm629, %v3512, 0
      %v3562 = vsel %vm629, %v3514, 0
      %v3565 = vsel %vm629, %v3516, 0
      %v3568 = vsel %vm629, %v3518, 0
      %v3571 = vsel %vm629, %v3520, 0
      %v3574 = vsel %vm629, %v3522, 0
      %v3577 = vsel %vm629, %v3524, 0
      %v3580 = vsel %vm684, %v3483, 0
      %3582 = vmatprep.subr.bf16.mxu0 0
      %3583 = vmatpush1.bf16.msra.mxu0 0
      %3584 = vmatprep.subr.bf16.mxu0 0
      %3585 = vmatpush1.bf16.msra.mxu0 0
      %3586 = vmatprep.subr.bf16.mxu0 0
      %3587 = vmatpush1.bf16.msra.mxu0 0
      %3588 = vmatprep.subr.bf16.mxu0 0
      %3589 = vmatpush1.bf16.msra.mxu0 0
      %3590 = vmatprep.subr.bf16.mxu0 0
      %3591 = vmatpush1.bf16.msra.mxu0 0
      %3592 = vmatprep.subr.bf16.mxu0 0
      %3593 = vmatpush1.bf16.msra.mxu0 0
      %3594 = vmatprep.subr.bf16.mxu0 0
      %3595 = vmatpush1.bf16.msra.mxu0 0
      %3596 = vmatprep.subr.bf16.mxu0 0
      %3597 = vmatpush1.bf16.msra.mxu0 %v3580
      %3598 = vmatprep.subr.bf16.mxu0 0
      %3599 = vmatpush2.bf16.msra.mxu0 0
      %3600 = vmatprep.subr.bf16.mxu0 0
      %3601 = vmatpush2.bf16.msra.mxu0 0
      %3602 = vmatprep.subr.bf16.mxu0 0
      %3603 = vmatpush2.bf16.msra.mxu0 0
      %3604 = vmatprep.subr.bf16.mxu0 0
      %3605 = vmatpush2.bf16.msra.mxu0 0
      %3606 = vmatprep.subr.bf16.mxu0 0
      %3607 = vmatpush2.bf16.msra.mxu0 0
      %3608 = vmatprep.subr.bf16.mxu0 0
      %3609 = vmatpush2.bf16.msra.mxu0 0
      %3610 = vmatprep.subr.bf16.mxu0 0
      %3611 = vmatpush2.bf16.msra.mxu0 0
      %3612 = vmatprep.subr.bf16.mxu0 0
      %3613 = vmatpush2.bf16.msra.mxu0 0
      %3614 = vmatprep.mubr.bf16.mxu0 0
      %3615 = vmatmul.mubr.bf16.gmra.mxu0 %v3526
      %v3616 = vpop.f32.mrf.mxu0
      %v3617 = vadd.f32 0.0, %v3616
      %v3618 = vpop.f32.mrf.mxu0
      %v3619 = vpop.f32.mrf.mxu0
      %v3620 = vadd.f32 0.0, %v3619
      %v3621 = vpop.f32.mrf.mxu0
      %3622 = vmatprep.mubr.bf16.mxu0 0
      %3623 = vmatmul.mubr.bf16.gmra.mxu0 %v3529
      %v3624 = vpop.f32.mrf.mxu0
      %v3625 = vadd.f32 0.0, %v3624
      %v3626 = vpop.f32.mrf.mxu0
      %v3627 = vpop.f32.mrf.mxu0
      %v3628 = vadd.f32 0.0, %v3627
      %v3629 = vpop.f32.mrf.mxu0
      %3630 = vmatprep.mubr.bf16.mxu0 0
      %3631 = vmatmul.mubr.bf16.gmra.mxu0 %v3532
      %v3632 = vpop.f32.mrf.mxu0
      %v3633 = vadd.f32 0.0, %v3632
      %v3634 = vpop.f32.mrf.mxu0
      %v3635 = vpop.f32.mrf.mxu0
      %v3636 = vadd.f32 0.0, %v3635
      %v3637 = vpop.f32.mrf.mxu0
      %3638 = vmatprep.mubr.bf16.mxu0 0
      %3639 = vmatmul.mubr.bf16.gmra.mxu0 %v3535
      %v3640 = vpop.f32.mrf.mxu0
      %v3641 = vadd.f32 0.0, %v3640
      %v3642 = vpop.f32.mrf.mxu0
      %v3643 = vpop.f32.mrf.mxu0
      %v3644 = vadd.f32 0.0, %v3643
      %v3645 = vpop.f32.mrf.mxu0
      %3646 = vmatprep.mubr.bf16.mxu0 0
      %3647 = vmatmul.mubr.bf16.gmra.mxu0 %v3538
      %v3648 = vpop.f32.mrf.mxu0
      %v3649 = vadd.f32 0.0, %v3648
      %v3650 = vpop.f32.mrf.mxu0
      %v3651 = vpop.f32.mrf.mxu0
      %v3652 = vadd.f32 0.0, %v3651
      %v3653 = vpop.f32.mrf.mxu0
      %3654 = vmatprep.mubr.bf16.mxu0 0
      %3655 = vmatmul.mubr.bf16.gmra.mxu0 %v3541
      %v3656 = vpop.f32.mrf.mxu0
      %v3657 = vadd.f32 0.0, %v3656
      %v3658 = vpop.f32.mrf.mxu0
      %v3659 = vpop.f32.mrf.mxu0
      %v3660 = vadd.f32 0.0, %v3659
      %v3661 = vpop.f32.mrf.mxu0
      %3662 = vmatprep.mubr.bf16.mxu0 0
      %3663 = vmatmul.mubr.bf16.gmra.mxu0 %v3544
      %v3664 = vpop.f32.mrf.mxu0
      %v3665 = vadd.f32 0.0, %v3664
      %v3666 = vpop.f32.mrf.mxu0
      %v3667 = vpop.f32.mrf.mxu0
      %v3668 = vadd.f32 0.0, %v3667
      %v3669 = vpop.f32.mrf.mxu0
      %3670 = vmatprep.mubr.bf16.mxu0 0
      %3671 = vmatmul.mubr.bf16.gmra.mxu0 %v3547
      %v3672 = vpop.f32.mrf.mxu0
      %v3673 = vadd.f32 0.0, %v3672
      %v3674 = vpop.f32.mrf.mxu0
      %v3675 = vpop.f32.mrf.mxu0
      %v3676 = vadd.f32 0.0, %v3675
      %v3677 = vpop.f32.mrf.mxu0
      %3678 = vmatprep.mubr.bf16.mxu0 0
      %3679 = vmatmul.mubr.bf16.gmra.mxu0 %v3550
      %v3680 = vpop.f32.mrf.mxu0
      %v3681 = vadd.f32 0.0, %v3680
      %v3682 = vpop.f32.mrf.mxu0
      %v3683 = vpop.f32.mrf.mxu0
      %v3684 = vadd.f32 0.0, %v3683
      %v3685 = vpop.f32.mrf.mxu0
      %3686 = vmatprep.mubr.bf16.mxu0 0
      %3687 = vmatmul.mubr.bf16.gmra.mxu0 %v3553
      %v3688 = vpop.f32.mrf.mxu0
      %v3689 = vadd.f32 0.0, %v3688
      %v3690 = vpop.f32.mrf.mxu0
      %v3691 = vpop.f32.mrf.mxu0
      %v3692 = vadd.f32 0.0, %v3691
      %v3693 = vpop.f32.mrf.mxu0
      %3694 = vmatprep.mubr.bf16.mxu0 0
      %3695 = vmatmul.mubr.bf16.gmra.mxu0 %v3556
      %v3696 = vpop.f32.mrf.mxu0
      %v3697 = vadd.f32 0.0, %v3696
      %v3698 = vpop.f32.mrf.mxu0
      %v3699 = vpop.f32.mrf.mxu0
      %v3700 = vadd.f32 0.0, %v3699
      %v3701 = vpop.f32.mrf.mxu0
      %3702 = vmatprep.mubr.bf16.mxu0 0
      %3703 = vmatmul.mubr.bf16.gmra.mxu0 %v3559
      %v3704 = vpop.f32.mrf.mxu0
      %v3705 = vadd.f32 0.0, %v3704
      %v3706 = vpop.f32.mrf.mxu0
      %v3707 = vpop.f32.mrf.mxu0
      %v3708 = vadd.f32 0.0, %v3707
      %v3709 = vpop.f32.mrf.mxu0
      %3710 = vmatprep.mubr.bf16.mxu0 0
      %3711 = vmatmul.mubr.bf16.gmra.mxu0 %v3562
      %v3712 = vpop.f32.mrf.mxu0
      %v3713 = vadd.f32 0.0, %v3712
      %v3714 = vpop.f32.mrf.mxu0
      %v3715 = vpop.f32.mrf.mxu0
      %v3716 = vadd.f32 0.0, %v3715
      %v3717 = vpop.f32.mrf.mxu0
      %3718 = vmatprep.mubr.bf16.mxu0 0
      %3719 = vmatmul.mubr.bf16.gmra.mxu0 %v3565
      %v3720 = vpop.f32.mrf.mxu0
      %v3721 = vadd.f32 0.0, %v3720
      %v3722 = vpop.f32.mrf.mxu0
      %v3723 = vpop.f32.mrf.mxu0
      %v3724 = vadd.f32 0.0, %v3723
      %v3725 = vpop.f32.mrf.mxu0
      %3726 = vmatprep.mubr.bf16.mxu0 0
      %3727 = vmatmul.mubr.bf16.gmra.mxu0 %v3568
      %v3728 = vpop.f32.mrf.mxu0
      %v3729 = vadd.f32 0.0, %v3728
      %v3730 = vpop.f32.mrf.mxu0
      %v3731 = vpop.f32.mrf.mxu0
      %v3732 = vadd.f32 0.0, %v3731
      %v3733 = vpop.f32.mrf.mxu0
      %3734 = vmatprep.mubr.bf16.mxu0 0
      %3735 = vmatmul.mubr.bf16.gmra.mxu0 %v3571
      %v3736 = vpop.f32.mrf.mxu0
      %v3737 = vadd.f32 0.0, %v3736
      %v3738 = vpop.f32.mrf.mxu0
      %v3739 = vpop.f32.mrf.mxu0
      %v3740 = vadd.f32 0.0, %v3739
      %v3741 = vpop.f32.mrf.mxu0
      %3742 = vmatprep.mubr.bf16.mxu0 0
      %3743 = vmatmul.mubr.bf16.gmra.mxu0 %v3574
      %v3744 = vpop.f32.mrf.mxu0
      %v3745 = vadd.f32 0.0, %v3744
      %v3746 = vpop.f32.mrf.mxu0
      %v3747 = vpop.f32.mrf.mxu0
      %v3748 = vadd.f32 0.0, %v3747
      %v3749 = vpop.f32.mrf.mxu0
      %3750 = vmatprep.mubr.bf16.mxu0 0
      %3751 = vmatmul.mubr.bf16.gmra.mxu0 %v3577
      %v3752 = vpop.f32.mrf.mxu0
      %v3753 = vadd.f32 0.0, %v3752
      %v3754 = vpop.f32.mrf.mxu0
      %v3755 = vpop.f32.mrf.mxu0
      %v3756 = vadd.f32 0.0, %v3755
      %v3757 = vpop.f32.mrf.mxu0
      %3758 = vdwg.mxu0
      %v3759 = vadd.f32 %v3445, %v3617
      %v3760 = vadd.f32 %v3446, %v3620
      %v3761 = vadd.f32 %v3447, %v3625
      %v3762 = vadd.f32 %v3448, %v3628
      %v3763 = vadd.f32 %v3449, %v3633
      %v3764 = vadd.f32 %v3450, %v3636
      %v3765 = vadd.f32 %v3451, %v3641
      %v3766 = vadd.f32 %v3452, %v3644
      %v3767 = vadd.f32 %v3453, %v3649
      %v3768 = vadd.f32 %v3454, %v3652
      %v3769 = vadd.f32 %v3455, %v3657
      %v3770 = vadd.f32 %v3456, %v3660
      %v3771 = vadd.f32 %v3457, %v3665
      %v3772 = vadd.f32 %v3458, %v3668
      %v3773 = vadd.f32 %v3459, %v3673
      %v3774 = vadd.f32 %v3460, %v3676
      %v3775 = vadd.f32 %v3461, %v3681
      %v3776 = vadd.f32 %v3462, %v3684
      %v3777 = vadd.f32 %v3463, %v3689
      %v3778 = vadd.f32 %v3464, %v3692
      %v3779 = vadd.f32 %v3465, %v3697
      %v3780 = vadd.f32 %v3466, %v3700
      %v3781 = vadd.f32 %v3467, %v3705
      %v3782 = vadd.f32 %v3468, %v3708
      %v3783 = vadd.f32 %v3469, %v3713
      %v3784 = vadd.f32 %v3470, %v3716
      %v3785 = vadd.f32 %v3471, %v3721
      %v3786 = vadd.f32 %v3472, %v3724
      %v3787 = vadd.f32 %v3473, %v3729
      %v3788 = vadd.f32 %v3474, %v3732
      %v3789 = vadd.f32 %v3475, %v3737
      %v3790 = vadd.f32 %v3476, %v3740
      %v3791 = vadd.f32 %v3477, %v3745
      %v3792 = vadd.f32 %v3478, %v3748
      %v3793 = vadd.f32 %v3479, %v3753
      %v3794 = vadd.f32 %v3480, %v3756
      %v3795 = vld [vmem:[%s1] sm:$0x1]
      %v3797 = vlaneseq
      %v3798 = vshrl.u32 %v3797, 7
      %v3799 = vsub.s32 0, %v3798
      %v3800 = vrot.slane %v3795, %v3799
      %v3802 = vmul.f32 %v3759, %v3800
      %v3803 = vmul.f32 %v3760, %v3800
      %v3804 = vmul.f32 %v3761, %v3800
      %v3805 = vmul.f32 %v3762, %v3800
      %v3806 = vmul.f32 %v3763, %v3800
      %v3807 = vmul.f32 %v3764, %v3800
      %v3808 = vmul.f32 %v3765, %v3800
      %v3809 = vmul.f32 %v3766, %v3800
      %v3810 = vmul.f32 %v3767, %v3800
      %v3811 = vmul.f32 %v3768, %v3800
      %v3812 = vmul.f32 %v3769, %v3800
      %v3813 = vmul.f32 %v3770, %v3800
      %v3814 = vmul.f32 %v3771, %v3800
      %v3815 = vmul.f32 %v3772, %v3800
      %v3816 = vmul.f32 %v3773, %v3800
      %v3817 = vmul.f32 %v3774, %v3800
      %v3818 = vmul.f32 %v3775, %v3800
      %v3819 = vmul.f32 %v3776, %v3800
      %v3820 = vmul.f32 %v3777, %v3800
      %v3821 = vmul.f32 %v3778, %v3800
      %v3822 = vmul.f32 %v3779, %v3800
      %v3823 = vmul.f32 %v3780, %v3800
      %v3824 = vmul.f32 %v3781, %v3800
      %v3825 = vmul.f32 %v3782, %v3800
      %v3826 = vmul.f32 %v3783, %v3800
      %v3827 = vmul.f32 %v3784, %v3800
      %v3828 = vmul.f32 %v3785, %v3800
      %v3829 = vmul.f32 %v3786, %v3800
      %v3830 = vmul.f32 %v3787, %v3800
      %v3831 = vmul.f32 %v3788, %v3800
      %v3832 = vmul.f32 %v3789, %v3800
      %v3833 = vmul.f32 %v3790, %v3800
      %v3834 = vmul.f32 %v3791, %v3800
      %v3835 = vmul.f32 %v3792, %v3800
      %v3836 = vmul.f32 %v3793, %v3800
      %v3837 = vmul.f32 %v3794, %v3800
      %v3838 = vld [vmem:[%s2] sm:$0x1]
      %v3840 = vlaneseq
      %v3841 = vshrl.u32 %v3840, 7
      %v3842 = vsub.s32 0, %v3841
      %v3843 = vrot.slane %v3838, %v3842
      %v3845 = vadd.f32 %v3802, %v3843
      %v3846 = vadd.f32 %v3803, %v3843
      %v3847 = vadd.f32 %v3804, %v3843
      %v3848 = vadd.f32 %v3805, %v3843
      %v3849 = vadd.f32 %v3806, %v3843
      %v3850 = vadd.f32 %v3807, %v3843
      %v3851 = vadd.f32 %v3808, %v3843
      %v3852 = vadd.f32 %v3809, %v3843
      %v3853 = vadd.f32 %v3810, %v3843
      %v3854 = vadd.f32 %v3811, %v3843
      %v3855 = vadd.f32 %v3812, %v3843
      %v3856 = vadd.f32 %v3813, %v3843
      %v3857 = vadd.f32 %v3814, %v3843
      %v3858 = vadd.f32 %v3815, %v3843
      %v3859 = vadd.f32 %v3816, %v3843
      %v3860 = vadd.f32 %v3817, %v3843
      %v3861 = vadd.f32 %v3818, %v3843
      %v3862 = vadd.f32 %v3819, %v3843
      %v3863 = vadd.f32 %v3820, %v3843
      %v3864 = vadd.f32 %v3821, %v3843
      %v3865 = vadd.f32 %v3822, %v3843
      %v3866 = vadd.f32 %v3823, %v3843
      %v3867 = vadd.f32 %v3824, %v3843
      %v3868 = vadd.f32 %v3825, %v3843
      %v3869 = vadd.f32 %v3826, %v3843
      %v3870 = vadd.f32 %v3827, %v3843
      %v3871 = vadd.f32 %v3828, %v3843
      %v3872 = vadd.f32 %v3829, %v3843
      %v3873 = vadd.f32 %v3830, %v3843
      %v3874 = vadd.f32 %v3831, %v3843
      %v3875 = vadd.f32 %v3832, %v3843
      %v3876 = vadd.f32 %v3833, %v3843
      %v3877 = vadd.f32 %v3834, %v3843
      %v3878 = vadd.f32 %v3835, %v3843
      %v3879 = vadd.f32 %v3836, %v3843
      %v3880 = vadd.f32 %v3837, %v3843
      %vm3881 = vcmp.ge.f32.partialorder %v3845, 0.0
      %vm3882 = vcmp.ge.f32.partialorder %v3846, 0.0
      %vm3883 = vcmp.ge.f32.partialorder %v3847, 0.0
      %vm3884 = vcmp.ge.f32.partialorder %v3848, 0.0
      %vm3885 = vcmp.ge.f32.partialorder %v3849, 0.0
      %vm3886 = vcmp.ge.f32.partialorder %v3850, 0.0
      %vm3887 = vcmp.ge.f32.partialorder %v3851, 0.0
      %vm3888 = vcmp.ge.f32.partialorder %v3852, 0.0
      %vm3889 = vcmp.ge.f32.partialorder %v3853, 0.0
      %vm3890 = vcmp.ge.f32.partialorder %v3854, 0.0
      %vm3891 = vcmp.ge.f32.partialorder %v3855, 0.0
      %vm3892 = vcmp.ge.f32.partialorder %v3856, 0.0
      %vm3893 = vcmp.ge.f32.partialorder %v3857, 0.0
      %vm3894 = vcmp.ge.f32.partialorder %v3858, 0.0
      %vm3895 = vcmp.ge.f32.partialorder %v3859, 0.0
      %vm3896 = vcmp.ge.f32.partialorder %v3860, 0.0
      %vm3897 = vcmp.ge.f32.partialorder %v3861, 0.0
      %vm3898 = vcmp.ge.f32.partialorder %v3862, 0.0
      %vm3899 = vcmp.ge.f32.partialorder %v3863, 0.0
      %vm3900 = vcmp.ge.f32.partialorder %v3864, 0.0
      %vm3901 = vcmp.ge.f32.partialorder %v3865, 0.0
      %vm3902 = vcmp.ge.f32.partialorder %v3866, 0.0
      %vm3903 = vcmp.ge.f32.partialorder %v3867, 0.0
      %vm3904 = vcmp.ge.f32.partialorder %v3868, 0.0
      %vm3905 = vcmp.ge.f32.partialorder %v3869, 0.0
      %vm3906 = vcmp.ge.f32.partialorder %v3870, 0.0
      %vm3907 = vcmp.ge.f32.partialorder %v3871, 0.0
      %vm3908 = vcmp.ge.f32.partialorder %v3872, 0.0
      %vm3909 = vcmp.ge.f32.partialorder %v3873, 0.0
      %vm3910 = vcmp.ge.f32.partialorder %v3874, 0.0
      %vm3911 = vcmp.ge.f32.partialorder %v3875, 0.0
      %vm3912 = vcmp.ge.f32.partialorder %v3876, 0.0
      %vm3913 = vcmp.ge.f32.partialorder %v3877, 0.0
      %vm3914 = vcmp.ge.f32.partialorder %v3878, 0.0
      %vm3915 = vcmp.ge.f32.partialorder %v3879, 0.0
      %vm3916 = vcmp.ge.f32.partialorder %v3880, 0.0
      %v3917 = vmul.f32 %v3845, 0.01
      %v3918 = vmul.f32 %v3846, 0.01
      %v3919 = vmul.f32 %v3847, 0.01
      %v3920 = vmul.f32 %v3848, 0.01
      %v3921 = vmul.f32 %v3849, 0.01
      %v3922 = vmul.f32 %v3850, 0.01
      %v3923 = vmul.f32 %v3851, 0.01
      %v3924 = vmul.f32 %v3852, 0.01
      %v3925 = vmul.f32 %v3853, 0.01
      %v3926 = vmul.f32 %v3854, 0.01
      %v3927 = vmul.f32 %v3855, 0.01
      %v3928 = vmul.f32 %v3856, 0.01
      %v3929 = vmul.f32 %v3857, 0.01
      %v3930 = vmul.f32 %v3858, 0.01
      %v3931 = vmul.f32 %v3859, 0.01
      %v3932 = vmul.f32 %v3860, 0.01
      %v3933 = vmul.f32 %v3861, 0.01
      %v3934 = vmul.f32 %v3862, 0.01
      %v3935 = vmul.f32 %v3863, 0.01
      %v3936 = vmul.f32 %v3864, 0.01
      %v3937 = vmul.f32 %v3865, 0.01
      %v3938 = vmul.f32 %v3866, 0.01
      %v3939 = vmul.f32 %v3867, 0.01
      %v3940 = vmul.f32 %v3868, 0.01
      %v3941 = vmul.f32 %v3869, 0.01
      %v3942 = vmul.f32 %v3870, 0.01
      %v3943 = vmul.f32 %v3871, 0.01
      %v3944 = vmul.f32 %v3872, 0.01
      %v3945 = vmul.f32 %v3873, 0.01
      %v3946 = vmul.f32 %v3874, 0.01
      %v3947 = vmul.f32 %v3875, 0.01
      %v3948 = vmul.f32 %v3876, 0.01
      %v3949 = vmul.f32 %v3877, 0.01
      %v3950 = vmul.f32 %v3878, 0.01
      %v3951 = vmul.f32 %v3879, 0.01
      %v3952 = vmul.f32 %v3880, 0.01
      %v3953 = vsel %vm3881, %v3845, %v3917
      %v3954 = vsel %vm3882, %v3846, %v3918
      %v3955 = vsel %vm3883, %v3847, %v3919
      %v3956 = vsel %vm3884, %v3848, %v3920
      %v3957 = vsel %vm3885, %v3849, %v3921
      %v3958 = vsel %vm3886, %v3850, %v3922
      %v3959 = vsel %vm3887, %v3851, %v3923
      %v3960 = vsel %vm3888, %v3852, %v3924
      %v3961 = vsel %vm3889, %v3853, %v3925
      %v3962 = vsel %vm3890, %v3854, %v3926
      %v3963 = vsel %vm3891, %v3855, %v3927
      %v3964 = vsel %vm3892, %v3856, %v3928
      %v3965 = vsel %vm3893, %v3857, %v3929
      %v3966 = vsel %vm3894, %v3858, %v3930
      %v3967 = vsel %vm3895, %v3859, %v3931
      %v3968 = vsel %vm3896, %v3860, %v3932
      %v3969 = vsel %vm3897, %v3861, %v3933
      %v3970 = vsel %vm3898, %v3862, %v3934
      %v3971 = vsel %vm3899, %v3863, %v3935
      %v3972 = vsel %vm3900, %v3864, %v3936
      %v3973 = vsel %vm3901, %v3865, %v3937
      %v3974 = vsel %vm3902, %v3866, %v3938
      %v3975 = vsel %vm3903, %v3867, %v3939
      %v3976 = vsel %vm3904, %v3868, %v3940
      %v3977 = vsel %vm3905, %v3869, %v3941
      %v3978 = vsel %vm3906, %v3870, %v3942
      %v3979 = vsel %vm3907, %v3871, %v3943
      %v3980 = vsel %vm3908, %v3872, %v3944
      %v3981 = vsel %vm3909, %v3873, %v3945
      %v3982 = vsel %vm3910, %v3874, %v3946
      %v3983 = vsel %vm3911, %v3875, %v3947
      %v3984 = vsel %vm3912, %v3876, %v3948
      %v3985 = vsel %vm3913, %v3877, %v3949
      %v3986 = vsel %vm3914, %v3878, %v3950
      %v3987 = vsel %vm3915, %v3879, %v3951
      %v3988 = vsel %vm3916, %v3880, %v3952
      %vm3989 = vcmask 64512
      %3990 = vst.msk [vmem:[#allocation2] sm:$0xff] %vm3989, 0.0
      %3991 = vst.msk [vmem:[#allocation2 + $0x8] sm:$0xff] %vm3989, 0.0
      %3992 = vst.msk [vmem:[#allocation2 + $0x10] sm:$0xff] %vm3989, 0.0
      %3993 = vst.msk [vmem:[#allocation2 + $0x18] sm:$0xff] %vm3989, 0.0
      %3994 = vst.msk [vmem:[#allocation2 + $0x20] sm:$0xff] %vm3989, 0.0
      %3995 = vst.msk [vmem:[#allocation2 + $0x28] sm:$0xff] %vm3989, 0.0
      %3996 = vst.msk [vmem:[#allocation2 + $0x30] sm:$0xff] %vm3989, 0.0
      %3997 = vst.msk [vmem:[#allocation2 + $0x38] sm:$0xff] %vm3989, 0.0
      %3998 = vst.msk [vmem:[#allocation2 + $0x40] sm:$0xff] %vm3989, 0.0
      %3999 = vst.msk [vmem:[#allocation2 + $0x48] sm:$0xff] %vm3989, 0.0
      %4000 = vst.msk [vmem:[#allocation2 + $0x50] sm:$0xff] %vm3989, 0.0
      %4001 = vst.msk [vmem:[#allocation2 + $0x58] sm:$0xff] %vm3989, 0.0
      %4002 = vst.msk [vmem:[#allocation2 + $0x60] sm:$0xff] %vm3989, 0.0
      %4003 = vst.msk [vmem:[#allocation2 + $0x68] sm:$0xff] %vm3989, 0.0
      %4004 = vst.msk [vmem:[#allocation2 + $0x70] sm:$0xff] %vm3989, 0.0
      %4005 = vst.msk [vmem:[#allocation2 + $0x78] sm:$0xff] %vm3989, 0.0
      %4006 = vst.msk [vmem:[#allocation2 + $0x80] sm:$0xff] %vm3989, 0.0
      %4007 = vst.msk [vmem:[#allocation2 + $0x88] sm:$0xff] %vm3989, 0.0
      %4008 = vst.msk [vmem:[#allocation2 + $0x90] sm:$0xff] %vm3989, 0.0
      %4009 = vst.msk [vmem:[#allocation2 + $0x98] sm:$0xff] %vm3989, 0.0
      %4010 = vst.msk [vmem:[#allocation2 + $0xa0] sm:$0xff] %vm3989, 0.0
      %4011 = vst.msk [vmem:[#allocation2 + $0xa8] sm:$0xff] %vm3989, 0.0
      %4012 = vst.msk [vmem:[#allocation2 + $0xb0] sm:$0xff] %vm3989, 0.0
      %4013 = vst.msk [vmem:[#allocation2 + $0xb8] sm:$0xff] %vm3989, 0.0
      %4014 = vst.msk [vmem:[#allocation2 + $0xc0] sm:$0xff] %vm3989, 0.0
      %4015 = vst.msk [vmem:[#allocation2 + $0xc8] sm:$0xff] %vm3989, 0.0
      %4016 = vst.msk [vmem:[#allocation2 + $0xd0] sm:$0xff] %vm3989, 0.0
      %4017 = vst.msk [vmem:[#allocation2 + $0xd8] sm:$0xff] %vm3989, 0.0
      %4018 = vst.msk [vmem:[#allocation2 + $0xe0] sm:$0xff] %vm3989, 0.0
      %4019 = vst.msk [vmem:[#allocation2 + $0xe8] sm:$0xff] %vm3989, 0.0
      %4020 = vst.msk [vmem:[#allocation2 + $0xf0] sm:$0xff] %vm3989, 0.0
      %4021 = vst.msk [vmem:[#allocation2 + $0xf8] sm:$0xff] %vm3989, 0.0
      %4022 = vst.msk [vmem:[#allocation2 + $0x100] sm:$0xff] %vm3989, 0.0
      %4023 = vst.msk [vmem:[#allocation2 + $0x108] sm:$0xff] %vm3989, 0.0
      %4024 = vst.msk [vmem:[#allocation2 + $0x110] sm:$0xff] %vm3989, 0.0
      %4025 = vst.msk [vmem:[#allocation2 + $0x118] sm:$0xff] %vm3989, 0.0
      %4026 = vst.msk [vmem:[#allocation2 + $0x120] sm:$0xff] %vm3989, 0.0
      %4027 = vst.msk [vmem:[#allocation2 + $0x128] sm:$0xff] %vm3989, 0.0
      %4028 = vst.msk [vmem:[#allocation2 + $0x130] sm:$0xff] %vm3989, 0.0
      %4029 = vst.msk [vmem:[#allocation2 + $0x138] sm:$0xff] %vm3989, 0.0
      %4030 = vst.msk [vmem:[#allocation2 + $0x140] sm:$0xff] %vm3989, 0.0
      %4031 = vst.msk [vmem:[#allocation2 + $0x148] sm:$0xff] %vm3989, 0.0
      %vm4032 = vcmask 62464
      %4033 = vst.msk [vmem:[#allocation2 + $0x150] sm:$0x3f] %vm4032, 0.0
      %v4034 = vld [vmem:[%s6] sm:$0xff]
      %v4035 = vld [vmem:[%s6 + $0x8] sm:$0xff]
      %v4036 = vld [vmem:[%s6 + $0x10] sm:$0xff]
      %v4037 = vld [vmem:[%s6 + $0x18] sm:$0xff]
      %v4038 = vld [vmem:[%s6 + $0x20] sm:$0xff]
      %v4039 = vld [vmem:[%s6 + $0x28] sm:$0xff]
      %v4040 = vld [vmem:[%s6 + $0x30] sm:$0xff]
      %v4041 = vld [vmem:[%s6 + $0x38] sm:$0xff]
      %v4042 = vld [vmem:[%s6 + $0x40] sm:$0xff]
      %v4043 = vld [vmem:[%s6 + $0x48] sm:$0xff]
      %v4044 = vld [vmem:[%s6 + $0x50] sm:$0xff]
      %v4045 = vld [vmem:[%s6 + $0x58] sm:$0xff]
      %v4046 = vld [vmem:[%s6 + $0x60] sm:$0xff]
      %v4047 = vld [vmem:[%s6 + $0x68] sm:$0xff]
      %v4048 = vld [vmem:[%s6 + $0x70] sm:$0xff]
      %v4049 = vld [vmem:[%s6 + $0x78] sm:$0xff]
      %v4050 = vld [vmem:[%s6 + $0x80] sm:$0xff]
      %v4051 = vld [vmem:[%s6 + $0x88] sm:$0xff]
      %v4052 = vld [vmem:[%s6 + $0x90] sm:$0xff]
      %v4053 = vld [vmem:[%s6 + $0x98] sm:$0xff]
      %v4054 = vld [vmem:[%s6 + $0xa0] sm:$0xff]
      %v4055 = vld [vmem:[%s6 + $0xa8] sm:$0xff]
      %v4056 = vld [vmem:[%s6 + $0xb0] sm:$0xff]
      %v4057 = vld [vmem:[%s6 + $0xb8] sm:$0xff]
      %v4058 = vld [vmem:[%s6 + $0xc0] sm:$0xff]
      %v4059 = vld [vmem:[%s6 + $0xc8] sm:$0xff]
      %v4060 = vld [vmem:[%s6 + $0xd0] sm:$0xff]
      %v4061 = vld [vmem:[%s6 + $0xd8] sm:$0xff]
      %v4062 = vld [vmem:[%s6 + $0xe0] sm:$0xff]
      %v4063 = vld [vmem:[%s6 + $0xe8] sm:$0xff]
      %v4064 = vld [vmem:[%s6 + $0xf0] sm:$0xff]
      %v4065 = vld [vmem:[%s6 + $0xf8] sm:$0xff]
      %v4066 = vld [vmem:[%s6 + $0x100] sm:$0xff]
      %v4067 = vld [vmem:[%s6 + $0x108] sm:$0xff]
      %v4068 = vld [vmem:[%s6 + $0x110] sm:$0xff]
      %v4069 = vld [vmem:[%s6 + $0x118] sm:$0xff]
      %4071 = vset.pattern.permute.xlu0 0
      %4072 = vperm.xlu0 %4071, %v4034
      %v4073 = vpop.permute.xlu0 %4072
      %4076 = vset.pattern.permute.xlu0 0
      %4077 = vperm.xlu0 %4076, %v4035
      %v4078 = vpop.permute.xlu0 %4077
      %4081 = vset.pattern.permute.xlu0 0
      %4082 = vperm.xlu0 %4081, %v4036
      %v4083 = vpop.permute.xlu0 %4082
      %4086 = vset.pattern.permute.xlu0 0
      %4087 = vperm.xlu0 %4086, %v4037
      %v4088 = vpop.permute.xlu0 %4087
      %4091 = vset.pattern.permute.xlu0 0
      %4092 = vperm.xlu0 %4091, %v4038
      %v4093 = vpop.permute.xlu0 %4092
      %4096 = vset.pattern.permute.xlu0 0
      %4097 = vperm.xlu0 %4096, %v4039
      %v4098 = vpop.permute.xlu0 %4097
      %4101 = vset.pattern.permute.xlu0 0
      %4102 = vperm.xlu0 %4101, %v4040
      %v4103 = vpop.permute.xlu0 %4102
      %4106 = vset.pattern.permute.xlu0 0
      %4107 = vperm.xlu0 %4106, %v4041
      %v4108 = vpop.permute.xlu0 %4107
      %4111 = vset.pattern.permute.xlu0 0
      %4112 = vperm.xlu0 %4111, %v4042
      %v4113 = vpop.permute.xlu0 %4112
      %4116 = vset.pattern.permute.xlu0 0
      %4117 = vperm.xlu0 %4116, %v4043
      %v4118 = vpop.permute.xlu0 %4117
      %4121 = vset.pattern.permute.xlu0 0
      %4122 = vperm.xlu0 %4121, %v4044
      %v4123 = vpop.permute.xlu0 %4122
      %4126 = vset.pattern.permute.xlu0 0
      %4127 = vperm.xlu0 %4126, %v4045
      %v4128 = vpop.permute.xlu0 %4127
      %4131 = vset.pattern.permute.xlu0 0
      %4132 = vperm.xlu0 %4131, %v4046
      %v4133 = vpop.permute.xlu0 %4132
      %4136 = vset.pattern.permute.xlu0 0
      %4137 = vperm.xlu0 %4136, %v4047
      %v4138 = vpop.permute.xlu0 %4137
      %4141 = vset.pattern.permute.xlu0 0
      %4142 = vperm.xlu0 %4141, %v4048
      %v4143 = vpop.permute.xlu0 %4142
      %4146 = vset.pattern.permute.xlu0 0
      %4147 = vperm.xlu0 %4146, %v4049
      %v4148 = vpop.permute.xlu0 %4147
      %4151 = vset.pattern.permute.xlu0 0
      %4152 = vperm.xlu0 %4151, %v4050
      %v4153 = vpop.permute.xlu0 %4152
      %4156 = vset.pattern.permute.xlu0 0
      %4157 = vperm.xlu0 %4156, %v4051
      %v4158 = vpop.permute.xlu0 %4157
      %4161 = vset.pattern.permute.xlu0 0
      %4162 = vperm.xlu0 %4161, %v4052
      %v4163 = vpop.permute.xlu0 %4162
      %4166 = vset.pattern.permute.xlu0 0
      %4167 = vperm.xlu0 %4166, %v4053
      %v4168 = vpop.permute.xlu0 %4167
      %4171 = vset.pattern.permute.xlu0 0
      %4172 = vperm.xlu0 %4171, %v4054
      %v4173 = vpop.permute.xlu0 %4172
      %4176 = vset.pattern.permute.xlu0 0
      %4177 = vperm.xlu0 %4176, %v4055
      %v4178 = vpop.permute.xlu0 %4177
      %4181 = vset.pattern.permute.xlu0 0
      %4182 = vperm.xlu0 %4181, %v4056
      %v4183 = vpop.permute.xlu0 %4182
      %4186 = vset.pattern.permute.xlu0 0
      %4187 = vperm.xlu0 %4186, %v4057
      %v4188 = vpop.permute.xlu0 %4187
      %4191 = vset.pattern.permute.xlu0 0
      %4192 = vperm.xlu0 %4191, %v4058
      %v4193 = vpop.permute.xlu0 %4192
      %4196 = vset.pattern.permute.xlu0 0
      %4197 = vperm.xlu0 %4196, %v4059
      %v4198 = vpop.permute.xlu0 %4197
      %4201 = vset.pattern.permute.xlu0 0
      %4202 = vperm.xlu0 %4201, %v4060
      %v4203 = vpop.permute.xlu0 %4202
      %4206 = vset.pattern.permute.xlu0 0
      %4207 = vperm.xlu0 %4206, %v4061
      %v4208 = vpop.permute.xlu0 %4207
      %4211 = vset.pattern.permute.xlu0 0
      %4212 = vperm.xlu0 %4211, %v4062
      %v4213 = vpop.permute.xlu0 %4212
      %4216 = vset.pattern.permute.xlu0 0
      %4217 = vperm.xlu0 %4216, %v4063
      %v4218 = vpop.permute.xlu0 %4217
      %4221 = vset.pattern.permute.xlu0 0
      %4222 = vperm.xlu0 %4221, %v4064
      %v4223 = vpop.permute.xlu0 %4222
      %4226 = vset.pattern.permute.xlu0 0
      %4227 = vperm.xlu0 %4226, %v4065
      %v4228 = vpop.permute.xlu0 %4227
      %4231 = vset.pattern.permute.xlu0 0
      %4232 = vperm.xlu0 %4231, %v4066
      %v4233 = vpop.permute.xlu0 %4232
      %4236 = vset.pattern.permute.xlu0 0
      %4237 = vperm.xlu0 %4236, %v4067
      %v4238 = vpop.permute.xlu0 %4237
      %4241 = vset.pattern.permute.xlu0 0
      %4242 = vperm.xlu0 %4241, %v4068
      %v4243 = vpop.permute.xlu0 %4242
      %4246 = vset.pattern.permute.xlu0 0
      %4247 = vperm.xlu0 %4246, %v4069
      %v4248 = vpop.permute.xlu0 %4247
      %v4250 = vmul.f32 %v3953, %v4073
      %v4251 = vmul.f32 %v3954, %v4078
      %v4252 = vmul.f32 %v3955, %v4083
      %v4253 = vmul.f32 %v3956, %v4088
      %v4254 = vmul.f32 %v3957, %v4093
      %v4255 = vmul.f32 %v3958, %v4098
      %v4256 = vmul.f32 %v3959, %v4103
      %v4257 = vmul.f32 %v3960, %v4108
      %v4258 = vmul.f32 %v3961, %v4113
      %v4259 = vmul.f32 %v3962, %v4118
      %v4260 = vmul.f32 %v3963, %v4123
      %v4261 = vmul.f32 %v3964, %v4128
      %v4262 = vmul.f32 %v3965, %v4133
      %v4263 = vmul.f32 %v3966, %v4138
      %v4264 = vmul.f32 %v3967, %v4143
      %v4265 = vmul.f32 %v3968, %v4148
      %v4266 = vmul.f32 %v3969, %v4153
      %v4267 = vmul.f32 %v3970, %v4158
      %v4268 = vmul.f32 %v3971, %v4163
      %v4269 = vmul.f32 %v3972, %v4168
      %v4270 = vmul.f32 %v3973, %v4173
      %v4271 = vmul.f32 %v3974, %v4178
      %v4272 = vmul.f32 %v3975, %v4183
      %v4273 = vmul.f32 %v3976, %v4188
      %v4274 = vmul.f32 %v3977, %v4193
      %v4275 = vmul.f32 %v3978, %v4198
      %v4276 = vmul.f32 %v3979, %v4203
      %v4277 = vmul.f32 %v3980, %v4208
      %v4278 = vmul.f32 %v3981, %v4213
      %v4279 = vmul.f32 %v3982, %v4218
      %v4280 = vmul.f32 %v3983, %v4223
      %v4281 = vmul.f32 %v3984, %v4228
      %v4282 = vmul.f32 %v3985, %v4233
      %v4283 = vmul.f32 %v3986, %v4238
      %v4284 = vmul.f32 %v3987, %v4243
      %v4285 = vmul.f32 %v3988, %v4248
      %4286 = vst.msk [vmem:[#allocation2 + $0x13] sm:$0xff] %vm3989, %v4250
      %4287 = vst.msk [vmem:[#allocation2 + $0x1b] sm:$0xff] %vm3989, %v4251
      %4288 = vst.msk [vmem:[#allocation2 + $0x23] sm:$0xff] %vm3989, %v4252
      %4289 = vst.msk [vmem:[#allocation2 + $0x2b] sm:$0xff] %vm3989, %v4253
      %4290 = vst.msk [vmem:[#allocation2 + $0x33] sm:$0xff] %vm3989, %v4254
      %4291 = vst.msk [vmem:[#allocation2 + $0x3b] sm:$0xff] %vm3989, %v4255
      %4292 = vst.msk [vmem:[#allocation2 + $0x43] sm:$0xff] %vm3989, %v4256
      %4293 = vst.msk [vmem:[#allocation2 + $0x4b] sm:$0xff] %vm3989, %v4257
      %4294 = vst.msk [vmem:[#allocation2 + $0x53] sm:$0xff] %vm3989, %v4258
      %4295 = vst.msk [vmem:[#allocation2 + $0x5b] sm:$0xff] %vm3989, %v4259
      %4296 = vst.msk [vmem:[#allocation2 + $0x63] sm:$0xff] %vm3989, %v4260
      %4297 = vst.msk [vmem:[#allocation2 + $0x6b] sm:$0xff] %vm3989, %v4261
      %4298 = vst.msk [vmem:[#allocation2 + $0x73] sm:$0xff] %vm3989, %v4262
      %4299 = vst.msk [vmem:[#allocation2 + $0x7b] sm:$0xff] %vm3989, %v4263
      %4300 = vst.msk [vmem:[#allocation2 + $0x83] sm:$0xff] %vm3989, %v4264
      %4301 = vst.msk [vmem:[#allocation2 + $0x8b] sm:$0xff] %vm3989, %v4265
      %4302 = vst.msk [vmem:[#allocation2 + $0x93] sm:$0xff] %vm3989, %v4266
      %4303 = vst.msk [vmem:[#allocation2 + $0x9b] sm:$0xff] %vm3989, %v4267
      %4304 = vst.msk [vmem:[#allocation2 + $0xa3] sm:$0xff] %vm3989, %v4268
      %4305 = vst.msk [vmem:[#allocation2 + $0xab] sm:$0xff] %vm3989, %v4269
      %4306 = vst.msk [vmem:[#allocation2 + $0xb3] sm:$0xff] %vm3989, %v4270
      %4307 = vst.msk [vmem:[#allocation2 + $0xbb] sm:$0xff] %vm3989, %v4271
      %4308 = vst.msk [vmem:[#allocation2 + $0xc3] sm:$0xff] %vm3989, %v4272
      %4309 = vst.msk [vmem:[#allocation2 + $0xcb] sm:$0xff] %vm3989, %v4273
      %4310 = vst.msk [vmem:[#allocation2 + $0xd3] sm:$0xff] %vm3989, %v4274
      %4311 = vst.msk [vmem:[#allocation2 + $0xdb] sm:$0xff] %vm3989, %v4275
      %4312 = vst.msk [vmem:[#allocation2 + $0xe3] sm:$0xff] %vm3989, %v4276
      %4313 = vst.msk [vmem:[#allocation2 + $0xeb] sm:$0xff] %vm3989, %v4277
      %4314 = vst.msk [vmem:[#allocation2 + $0xf3] sm:$0xff] %vm3989, %v4278
      %4315 = vst.msk [vmem:[#allocation2 + $0xfb] sm:$0xff] %vm3989, %v4279
      %4316 = vst.msk [vmem:[#allocation2 + $0x103] sm:$0xff] %vm3989, %v4280
      %4317 = vst.msk [vmem:[#allocation2 + $0x10b] sm:$0xff] %vm3989, %v4281
      %4318 = vst.msk [vmem:[#allocation2 + $0x113] sm:$0xff] %vm3989, %v4282
      %4319 = vst.msk [vmem:[#allocation2 + $0x11b] sm:$0xff] %vm3989, %v4283
      %4320 = vst.msk [vmem:[#allocation2 + $0x123] sm:$0xff] %vm3989, %v4284
      %4321 = vst.msk [vmem:[#allocation2 + $0x12b] sm:$0xff] %vm3989, %v4285
      %v4322 = vld [vmem:[#allocation2] sm:$0xff]
      %v4323 = vld [vmem:[#allocation2 + $0x8] sm:$0xff]
      %v4324 = vld [vmem:[#allocation2 + $0x10] sm:$0xff]
      %v4325 = vld [vmem:[#allocation2 + $0x18] sm:$0xff]
      %v4326 = vld [vmem:[#allocation2 + $0x20] sm:$0xff]
      %v4327 = vld [vmem:[#allocation2 + $0x28] sm:$0xff]
      %v4328 = vld [vmem:[#allocation2 + $0x30] sm:$0xff]
      %v4329 = vld [vmem:[#allocation2 + $0x38] sm:$0xff]
      %v4330 = vld [vmem:[#allocation2 + $0x40] sm:$0xff]
      %v4331 = vld [vmem:[#allocation2 + $0x48] sm:$0xff]
      %v4332 = vld [vmem:[#allocation2 + $0x50] sm:$0xff]
      %v4333 = vld [vmem:[#allocation2 + $0x58] sm:$0xff]
      %v4334 = vld [vmem:[#allocation2 + $0x60] sm:$0xff]
      %v4335 = vld [vmem:[#allocation2 + $0x68] sm:$0xff]
      %v4336 = vld [vmem:[#allocation2 + $0x70] sm:$0xff]
      %v4337 = vld [vmem:[#allocation2 + $0x78] sm:$0xff]
      %v4338 = vld [vmem:[#allocation2 + $0x80] sm:$0xff]
      %v4339 = vld [vmem:[#allocation2 + $0x88] sm:$0xff]
      %v4340 = vld [vmem:[#allocation2 + $0x90] sm:$0xff]
      %v4341 = vld [vmem:[#allocation2 + $0x98] sm:$0xff]
      %v4342 = vld [vmem:[#allocation2 + $0xa0] sm:$0xff]
      %v4343 = vld [vmem:[#allocation2 + $0xa8] sm:$0xff]
      %v4344 = vld [vmem:[#allocation2 + $0xb0] sm:$0xff]
      %v4345 = vld [vmem:[#allocation2 + $0xb8] sm:$0xff]
      %v4346 = vld [vmem:[#allocation2 + $0xc0] sm:$0xff]
      %v4347 = vld [vmem:[#allocation2 + $0xc8] sm:$0xff]
      %v4348 = vld [vmem:[#allocation2 + $0xd0] sm:$0xff]
      %v4349 = vld [vmem:[#allocation2 + $0xd8] sm:$0xff]
      %v4350 = vld [vmem:[#allocation2 + $0xe0] sm:$0xff]
      %v4351 = vld [vmem:[#allocation2 + $0xe8] sm:$0xff]
      %v4352 = vld [vmem:[#allocation2 + $0xf0] sm:$0xff]
      %v4353 = vld [vmem:[#allocation2 + $0xf8] sm:$0xff]
      %v4354 = vld [vmem:[#allocation2 + $0x100] sm:$0xff]
      %v4355 = vld [vmem:[#allocation2 + $0x108] sm:$0xff]
      %v4356 = vld [vmem:[#allocation2 + $0x110] sm:$0xff]
      %v4357 = vld [vmem:[#allocation2 + $0x118] sm:$0xff]
      %v4358 = vpack.c.bf16 %v4323, %v4322
      %v4359 = vpack.c.bf16 %v4325, %v4324
      %v4360 = vpack.c.bf16 %v4327, %v4326
      %v4361 = vpack.c.bf16 %v4329, %v4328
      %v4362 = vpack.c.bf16 %v4331, %v4330
      %v4363 = vpack.c.bf16 %v4333, %v4332
      %v4364 = vpack.c.bf16 %v4335, %v4334
      %v4365 = vpack.c.bf16 %v4337, %v4336
      %v4366 = vpack.c.bf16 %v4339, %v4338
      %v4367 = vpack.c.bf16 %v4341, %v4340
      %v4368 = vpack.c.bf16 %v4343, %v4342
      %v4369 = vpack.c.bf16 %v4345, %v4344
      %v4370 = vpack.c.bf16 %v4347, %v4346
      %v4371 = vpack.c.bf16 %v4349, %v4348
      %v4372 = vpack.c.bf16 %v4351, %v4350
      %v4373 = vpack.c.bf16 %v4353, %v4352
      %v4374 = vpack.c.bf16 %v4355, %v4354
      %v4375 = vpack.c.bf16 %v4357, %v4356
      %v4376 = vld [vmem:[%s3] sm:$0xf]
      %v4377 = vld [vmem:[#allocation2 + $0x1] sm:$0xff]
      %v4378 = vld [vmem:[#allocation2 + $0x9] sm:$0xff]
      %v4379 = vld [vmem:[#allocation2 + $0x11] sm:$0xff]
      %v4380 = vld [vmem:[#allocation2 + $0x19] sm:$0xff]
      %v4381 = vld [vmem:[#allocation2 + $0x21] sm:$0xff]
      %v4382 = vld [vmem:[#allocation2 + $0x29] sm:$0xff]
      %v4383 = vld [vmem:[#allocation2 + $0x31] sm:$0xff]
      %v4384 = vld [vmem:[#allocation2 + $0x39] sm:$0xff]
      %v4385 = vld [vmem:[#allocation2 + $0x41] sm:$0xff]
      %v4386 = vld [vmem:[#allocation2 + $0x49] sm:$0xff]
      %v4387 = vld [vmem:[#allocation2 + $0x51] sm:$0xff]
      %v4388 = vld [vmem:[#allocation2 + $0x59] sm:$0xff]
      %v4389 = vld [vmem:[#allocation2 + $0x61] sm:$0xff]
      %v4390 = vld [vmem:[#allocation2 + $0x69] sm:$0xff]
      %v4391 = vld [vmem:[#allocation2 + $0x71] sm:$0xff]
      %v4392 = vld [vmem:[#allocation2 + $0x79] sm:$0xff]
      %v4393 = vld [vmem:[#allocation2 + $0x81] sm:$0xff]
      %v4394 = vld [vmem:[#allocation2 + $0x89] sm:$0xff]
      %v4395 = vld [vmem:[#allocation2 + $0x91] sm:$0xff]
      %v4396 = vld [vmem:[#allocation2 + $0x99] sm:$0xff]
      %v4397 = vld [vmem:[#allocation2 + $0xa1] sm:$0xff]
      %v4398 = vld [vmem:[#allocation2 + $0xa9] sm:$0xff]
      %v4399 = vld [vmem:[#allocation2 + $0xb1] sm:$0xff]
      %v4400 = vld [vmem:[#allocation2 + $0xb9] sm:$0xff]
      %v4401 = vld [vmem:[#allocation2 + $0xc1] sm:$0xff]
      %v4402 = vld [vmem:[#allocation2 + $0xc9] sm:$0xff]
      %v4403 = vld [vmem:[#allocation2 + $0xd1] sm:$0xff]
      %v4404 = vld [vmem:[#allocation2 + $0xd9] sm:$0xff]
      %v4405 = vld [vmem:[#allocation2 + $0xe1] sm:$0xff]
      %v4406 = vld [vmem:[#allocation2 + $0xe9] sm:$0xff]
      %v4407 = vld [vmem:[#allocation2 + $0xf1] sm:$0xff]
      %v4408 = vld [vmem:[#allocation2 + $0xf9] sm:$0xff]
      %v4409 = vld [vmem:[#allocation2 + $0x101] sm:$0xff]
      %v4410 = vld [vmem:[#allocation2 + $0x109] sm:$0xff]
      %v4411 = vld [vmem:[#allocation2 + $0x111] sm:$0xff]
      %v4412 = vld [vmem:[#allocation2 + $0x119] sm:$0xff]
      %v4413 = vpack.c.bf16 %v4378, %v4377
      %v4414 = vpack.c.bf16 %v4380, %v4379
      %v4415 = vpack.c.bf16 %v4382, %v4381
      %v4416 = vpack.c.bf16 %v4384, %v4383
      %v4417 = vpack.c.bf16 %v4386, %v4385
      %v4418 = vpack.c.bf16 %v4388, %v4387
      %v4419 = vpack.c.bf16 %v4390, %v4389
      %v4420 = vpack.c.bf16 %v4392, %v4391
      %v4421 = vpack.c.bf16 %v4394, %v4393
      %v4422 = vpack.c.bf16 %v4396, %v4395
      %v4423 = vpack.c.bf16 %v4398, %v4397
      %v4424 = vpack.c.bf16 %v4400, %v4399
      %v4425 = vpack.c.bf16 %v4402, %v4401
      %v4426 = vpack.c.bf16 %v4404, %v4403
      %v4427 = vpack.c.bf16 %v4406, %v4405
      %v4428 = vpack.c.bf16 %v4408, %v4407
      %v4429 = vpack.c.bf16 %v4410, %v4409
      %v4430 = vpack.c.bf16 %v4412, %v4411
      %s4431 = scalar_lea.vmem %s3, 4
      %v4432 = vld [vmem:[%s4431] sm:$0xf]
      %v4434 = vsel %vm3989, %v4413, 0
      %v4437 = vsel %vm3989, %v4414, 0
      %v4440 = vsel %vm3989, %v4415, 0
      %v4443 = vsel %vm3989, %v4416, 0
      %v4446 = vsel %vm3989, %v4417, 0
      %v4449 = vsel %vm3989, %v4418, 0
      %v4452 = vsel %vm3989, %v4419, 0
      %v4455 = vsel %vm3989, %v4420, 0
      %v4458 = vsel %vm3989, %v4421, 0
      %v4461 = vsel %vm3989, %v4422, 0
      %v4464 = vsel %vm3989, %v4423, 0
      %v4467 = vsel %vm3989, %v4424, 0
      %v4470 = vsel %vm3989, %v4425, 0
      %v4473 = vsel %vm3989, %v4426, 0
      %v4476 = vsel %vm3989, %v4427, 0
      %v4479 = vsel %vm3989, %v4428, 0
      %v4482 = vsel %vm3989, %v4429, 0
      %v4485 = vsel %vm3989, %v4430, 0
      %vm4487 = vcmask 1043456
      %v4489 = vsel %vm4487, %v4432, 0
      %4491 = vmatprep.subr.bf16.mxu0 0
      %4492 = vmatpush1.bf16.msra.mxu0 0
      %4493 = vmatprep.subr.bf16.mxu0 0
      %4494 = vmatpush1.bf16.msra.mxu0 0
      %4495 = vmatprep.subr.bf16.mxu0 0
      %4496 = vmatpush1.bf16.msra.mxu0 0
      %4497 = vmatprep.subr.bf16.mxu0 0
      %4498 = vmatpush1.bf16.msra.mxu0 0
      %4499 = vmatprep.subr.bf16.mxu0 0
      %4500 = vmatpush1.bf16.msra.mxu0 0
      %4501 = vmatprep.subr.bf16.mxu0 0
      %4502 = vmatpush1.bf16.msra.mxu0 0
      %4503 = vmatprep.subr.bf16.mxu0 0
      %4504 = vmatpush1.bf16.msra.mxu0 0
      %4505 = vmatprep.subr.bf16.mxu0 0
      %4506 = vmatpush1.bf16.msra.mxu0 %v4489
      %4507 = vmatprep.subr.bf16.mxu0 0
      %4508 = vmatpush2.bf16.msra.mxu0 0
      %4509 = vmatprep.subr.bf16.mxu0 0
      %4510 = vmatpush2.bf16.msra.mxu0 0
      %4511 = vmatprep.subr.bf16.mxu0 0
      %4512 = vmatpush2.bf16.msra.mxu0 0
      %4513 = vmatprep.subr.bf16.mxu0 0
      %4514 = vmatpush2.bf16.msra.mxu0 0
      %4515 = vmatprep.subr.bf16.mxu0 0
      %4516 = vmatpush2.bf16.msra.mxu0 0
      %4517 = vmatprep.subr.bf16.mxu0 0
      %4518 = vmatpush2.bf16.msra.mxu0 0
      %4519 = vmatprep.subr.bf16.mxu0 0
      %4520 = vmatpush2.bf16.msra.mxu0 0
      %4521 = vmatprep.subr.bf16.mxu0 0
      %4522 = vmatpush2.bf16.msra.mxu0 0
      %4523 = vmatprep.mubr.bf16.mxu0 0
      %4524 = vmatmul.mubr.bf16.gmra.mxu0 %v4434
      %v4525 = vpop.f32.mrf.mxu0
      %v4526 = vadd.f32 0.0, %v4525
      %v4527 = vpop.f32.mrf.mxu0
      %v4528 = vpop.f32.mrf.mxu0
      %v4529 = vadd.f32 0.0, %v4528
      %v4530 = vpop.f32.mrf.mxu0
      %4531 = vmatprep.mubr.bf16.mxu0 0
      %4532 = vmatmul.mubr.bf16.gmra.mxu0 %v4437
      %v4533 = vpop.f32.mrf.mxu0
      %v4534 = vadd.f32 0.0, %v4533
      %v4535 = vpop.f32.mrf.mxu0
      %v4536 = vpop.f32.mrf.mxu0
      %v4537 = vadd.f32 0.0, %v4536
      %v4538 = vpop.f32.mrf.mxu0
      %4539 = vmatprep.mubr.bf16.mxu0 0
      %4540 = vmatmul.mubr.bf16.gmra.mxu0 %v4440
      %v4541 = vpop.f32.mrf.mxu0
      %v4542 = vadd.f32 0.0, %v4541
      %v4543 = vpop.f32.mrf.mxu0
      %v4544 = vpop.f32.mrf.mxu0
      %v4545 = vadd.f32 0.0, %v4544
      %v4546 = vpop.f32.mrf.mxu0
      %4547 = vmatprep.mubr.bf16.mxu0 0
      %4548 = vmatmul.mubr.bf16.gmra.mxu0 %v4443
      %v4549 = vpop.f32.mrf.mxu0
      %v4550 = vadd.f32 0.0, %v4549
      %v4551 = vpop.f32.mrf.mxu0
      %v4552 = vpop.f32.mrf.mxu0
      %v4553 = vadd.f32 0.0, %v4552
      %v4554 = vpop.f32.mrf.mxu0
      %4555 = vmatprep.mubr.bf16.mxu0 0
      %4556 = vmatmul.mubr.bf16.gmra.mxu0 %v4446
      %v4557 = vpop.f32.mrf.mxu0
      %v4558 = vadd.f32 0.0, %v4557
      %v4559 = vpop.f32.mrf.mxu0
      %v4560 = vpop.f32.mrf.mxu0
      %v4561 = vadd.f32 0.0, %v4560
      %v4562 = vpop.f32.mrf.mxu0
      %4563 = vmatprep.mubr.bf16.mxu0 0
      %4564 = vmatmul.mubr.bf16.gmra.mxu0 %v4449
      %v4565 = vpop.f32.mrf.mxu0
      %v4566 = vadd.f32 0.0, %v4565
      %v4567 = vpop.f32.mrf.mxu0
      %v4568 = vpop.f32.mrf.mxu0
      %v4569 = vadd.f32 0.0, %v4568
      %v4570 = vpop.f32.mrf.mxu0
      %4571 = vmatprep.mubr.bf16.mxu0 0
      %4572 = vmatmul.mubr.bf16.gmra.mxu0 %v4452
      %v4573 = vpop.f32.mrf.mxu0
      %v4574 = vadd.f32 0.0, %v4573
      %v4575 = vpop.f32.mrf.mxu0
      %v4576 = vpop.f32.mrf.mxu0
      %v4577 = vadd.f32 0.0, %v4576
      %v4578 = vpop.f32.mrf.mxu0
      %4579 = vmatprep.mubr.bf16.mxu0 0
      %4580 = vmatmul.mubr.bf16.gmra.mxu0 %v4455
      %v4581 = vpop.f32.mrf.mxu0
      %v4582 = vadd.f32 0.0, %v4581
      %v4583 = vpop.f32.mrf.mxu0
      %v4584 = vpop.f32.mrf.mxu0
      %v4585 = vadd.f32 0.0, %v4584
      %v4586 = vpop.f32.mrf.mxu0
      %4587 = vmatprep.mubr.bf16.mxu0 0
      %4588 = vmatmul.mubr.bf16.gmra.mxu0 %v4458
      %v4589 = vpop.f32.mrf.mxu0
      %v4590 = vadd.f32 0.0, %v4589
      %v4591 = vpop.f32.mrf.mxu0
      %v4592 = vpop.f32.mrf.mxu0
      %v4593 = vadd.f32 0.0, %v4592
      %v4594 = vpop.f32.mrf.mxu0
      %4595 = vmatprep.mubr.bf16.mxu0 0
      %4596 = vmatmul.mubr.bf16.gmra.mxu0 %v4461
      %v4597 = vpop.f32.mrf.mxu0
      %v4598 = vadd.f32 0.0, %v4597
      %v4599 = vpop.f32.mrf.mxu0
      %v4600 = vpop.f32.mrf.mxu0
      %v4601 = vadd.f32 0.0, %v4600
      %v4602 = vpop.f32.mrf.mxu0
      %4603 = vmatprep.mubr.bf16.mxu0 0
      %4604 = vmatmul.mubr.bf16.gmra.mxu0 %v4464
      %v4605 = vpop.f32.mrf.mxu0
      %v4606 = vadd.f32 0.0, %v4605
      %v4607 = vpop.f32.mrf.mxu0
      %v4608 = vpop.f32.mrf.mxu0
      %v4609 = vadd.f32 0.0, %v4608
      %v4610 = vpop.f32.mrf.mxu0
      %4611 = vmatprep.mubr.bf16.mxu0 0
      %4612 = vmatmul.mubr.bf16.gmra.mxu0 %v4467
      %v4613 = vpop.f32.mrf.mxu0
      %v4614 = vadd.f32 0.0, %v4613
      %v4615 = vpop.f32.mrf.mxu0
      %v4616 = vpop.f32.mrf.mxu0
      %v4617 = vadd.f32 0.0, %v4616
      %v4618 = vpop.f32.mrf.mxu0
      %4619 = vmatprep.mubr.bf16.mxu0 0
      %4620 = vmatmul.mubr.bf16.gmra.mxu0 %v4470
      %v4621 = vpop.f32.mrf.mxu0
      %v4622 = vadd.f32 0.0, %v4621
      %v4623 = vpop.f32.mrf.mxu0
      %v4624 = vpop.f32.mrf.mxu0
      %v4625 = vadd.f32 0.0, %v4624
      %v4626 = vpop.f32.mrf.mxu0
      %4627 = vmatprep.mubr.bf16.mxu0 0
      %4628 = vmatmul.mubr.bf16.gmra.mxu0 %v4473
      %v4629 = vpop.f32.mrf.mxu0
      %v4630 = vadd.f32 0.0, %v4629
      %v4631 = vpop.f32.mrf.mxu0
      %v4632 = vpop.f32.mrf.mxu0
      %v4633 = vadd.f32 0.0, %v4632
      %v4634 = vpop.f32.mrf.mxu0
      %4635 = vmatprep.mubr.bf16.mxu0 0
      %4636 = vmatmul.mubr.bf16.gmra.mxu0 %v4476
      %v4637 = vpop.f32.mrf.mxu0
      %v4638 = vadd.f32 0.0, %v4637
      %v4639 = vpop.f32.mrf.mxu0
      %v4640 = vpop.f32.mrf.mxu0
      %v4641 = vadd.f32 0.0, %v4640
      %v4642 = vpop.f32.mrf.mxu0
      %4643 = vmatprep.mubr.bf16.mxu0 0
      %4644 = vmatmul.mubr.bf16.gmra.mxu0 %v4479
      %v4645 = vpop.f32.mrf.mxu0
      %v4646 = vadd.f32 0.0, %v4645
      %v4647 = vpop.f32.mrf.mxu0
      %v4648 = vpop.f32.mrf.mxu0
      %v4649 = vadd.f32 0.0, %v4648
      %v4650 = vpop.f32.mrf.mxu0
      %4651 = vmatprep.mubr.bf16.mxu0 0
      %4652 = vmatmul.mubr.bf16.gmra.mxu0 %v4482
      %v4653 = vpop.f32.mrf.mxu0
      %v4654 = vadd.f32 0.0, %v4653
      %v4655 = vpop.f32.mrf.mxu0
      %v4656 = vpop.f32.mrf.mxu0
      %v4657 = vadd.f32 0.0, %v4656
      %v4658 = vpop.f32.mrf.mxu0
      %4659 = vmatprep.mubr.bf16.mxu0 0
      %4660 = vmatmul.mubr.bf16.gmra.mxu0 %v4485
      %v4661 = vpop.f32.mrf.mxu0
      %v4662 = vadd.f32 0.0, %v4661
      %v4663 = vpop.f32.mrf.mxu0
      %v4664 = vpop.f32.mrf.mxu0
      %v4665 = vadd.f32 0.0, %v4664
      %v4666 = vpop.f32.mrf.mxu0
      %4667 = vdwg.mxu0
      %v4669 = vsel %vm3989, %v4358, 0
      %v4672 = vsel %vm3989, %v4359, 0
      %v4675 = vsel %vm3989, %v4360, 0
      %v4678 = vsel %vm3989, %v4361, 0
      %v4681 = vsel %vm3989, %v4362, 0
      %v4684 = vsel %vm3989, %v4363, 0
      %v4687 = vsel %vm3989, %v4364, 0
      %v4690 = vsel %vm3989, %v4365, 0
      %v4693 = vsel %vm3989, %v4366, 0
      %v4696 = vsel %vm3989, %v4367, 0
      %v4699 = vsel %vm3989, %v4368, 0
      %v4702 = vsel %vm3989, %v4369, 0
      %v4705 = vsel %vm3989, %v4370, 0
      %v4708 = vsel %vm3989, %v4371, 0
      %v4711 = vsel %vm3989, %v4372, 0
      %v4714 = vsel %vm3989, %v4373, 0
      %v4717 = vsel %vm3989, %v4374, 0
      %v4720 = vsel %vm3989, %v4375, 0
      %v4723 = vsel %vm4487, %v4376, 0
      %4725 = vmatprep.subr.bf16.mxu0 0
      %4726 = vmatpush1.bf16.msra.mxu0 0
      %4727 = vmatprep.subr.bf16.mxu0 0
      %4728 = vmatpush1.bf16.msra.mxu0 0
      %4729 = vmatprep.subr.bf16.mxu0 0
      %4730 = vmatpush1.bf16.msra.mxu0 0
      %4731 = vmatprep.subr.bf16.mxu0 0
      %4732 = vmatpush1.bf16.msra.mxu0 0
      %4733 = vmatprep.subr.bf16.mxu0 0
      %4734 = vmatpush1.bf16.msra.mxu0 0
      %4735 = vmatprep.subr.bf16.mxu0 0
      %4736 = vmatpush1.bf16.msra.mxu0 0
      %4737 = vmatprep.subr.bf16.mxu0 0
      %4738 = vmatpush1.bf16.msra.mxu0 0
      %4739 = vmatprep.subr.bf16.mxu0 0
      %4740 = vmatpush1.bf16.msra.mxu0 %v4723
      %4741 = vmatprep.subr.bf16.mxu0 0
      %4742 = vmatpush2.bf16.msra.mxu0 0
      %4743 = vmatprep.subr.bf16.mxu0 0
      %4744 = vmatpush2.bf16.msra.mxu0 0
      %4745 = vmatprep.subr.bf16.mxu0 0
      %4746 = vmatpush2.bf16.msra.mxu0 0
      %4747 = vmatprep.subr.bf16.mxu0 0
      %4748 = vmatpush2.bf16.msra.mxu0 0
      %4749 = vmatprep.subr.bf16.mxu0 0
      %4750 = vmatpush2.bf16.msra.mxu0 0
      %4751 = vmatprep.subr.bf16.mxu0 0
      %4752 = vmatpush2.bf16.msra.mxu0 0
      %4753 = vmatprep.subr.bf16.mxu0 0
      %4754 = vmatpush2.bf16.msra.mxu0 0
      %4755 = vmatprep.subr.bf16.mxu0 0
      %4756 = vmatpush2.bf16.msra.mxu0 0
      %4757 = vmatprep.mubr.bf16.mxu0 0
      %4758 = vmatmul.mubr.bf16.gmra.mxu0 %v4669
      %v4759 = vpop.f32.mrf.mxu0
      %v4760 = vadd.f32 %v4526, %v4759
      %v4761 = vpop.f32.mrf.mxu0
      %v4762 = vpop.f32.mrf.mxu0
      %v4763 = vadd.f32 %v4529, %v4762
      %v4764 = vpop.f32.mrf.mxu0
      %4765 = vmatprep.mubr.bf16.mxu0 0
      %4766 = vmatmul.mubr.bf16.gmra.mxu0 %v4672
      %v4767 = vpop.f32.mrf.mxu0
      %v4768 = vadd.f32 %v4534, %v4767
      %v4769 = vpop.f32.mrf.mxu0
      %v4770 = vpop.f32.mrf.mxu0
      %v4771 = vadd.f32 %v4537, %v4770
      %v4772 = vpop.f32.mrf.mxu0
      %4773 = vmatprep.mubr.bf16.mxu0 0
      %4774 = vmatmul.mubr.bf16.gmra.mxu0 %v4675
      %v4775 = vpop.f32.mrf.mxu0
      %v4776 = vadd.f32 %v4542, %v4775
      %v4777 = vpop.f32.mrf.mxu0
      %v4778 = vpop.f32.mrf.mxu0
      %v4779 = vadd.f32 %v4545, %v4778
      %v4780 = vpop.f32.mrf.mxu0
      %4781 = vmatprep.mubr.bf16.mxu0 0
      %4782 = vmatmul.mubr.bf16.gmra.mxu0 %v4678
      %v4783 = vpop.f32.mrf.mxu0
      %v4784 = vadd.f32 %v4550, %v4783
      %v4785 = vpop.f32.mrf.mxu0
      %v4786 = vpop.f32.mrf.mxu0
      %v4787 = vadd.f32 %v4553, %v4786
      %v4788 = vpop.f32.mrf.mxu0
      %4789 = vmatprep.mubr.bf16.mxu0 0
      %4790 = vmatmul.mubr.bf16.gmra.mxu0 %v4681
      %v4791 = vpop.f32.mrf.mxu0
      %v4792 = vadd.f32 %v4558, %v4791
      %v4793 = vpop.f32.mrf.mxu0
      %v4794 = vpop.f32.mrf.mxu0
      %v4795 = vadd.f32 %v4561, %v4794
      %v4796 = vpop.f32.mrf.mxu0
      %4797 = vmatprep.mubr.bf16.mxu0 0
      %4798 = vmatmul.mubr.bf16.gmra.mxu0 %v4684
      %v4799 = vpop.f32.mrf.mxu0
      %v4800 = vadd.f32 %v4566, %v4799
      %v4801 = vpop.f32.mrf.mxu0
      %v4802 = vpop.f32.mrf.mxu0
      %v4803 = vadd.f32 %v4569, %v4802
      %v4804 = vpop.f32.mrf.mxu0
      %4805 = vmatprep.mubr.bf16.mxu0 0
      %4806 = vmatmul.mubr.bf16.gmra.mxu0 %v4687
      %v4807 = vpop.f32.mrf.mxu0
      %v4808 = vadd.f32 %v4574, %v4807
      %v4809 = vpop.f32.mrf.mxu0
      %v4810 = vpop.f32.mrf.mxu0
      %v4811 = vadd.f32 %v4577, %v4810
      %v4812 = vpop.f32.mrf.mxu0
      %4813 = vmatprep.mubr.bf16.mxu0 0
      %4814 = vmatmul.mubr.bf16.gmra.mxu0 %v4690
      %v4815 = vpop.f32.mrf.mxu0
      %v4816 = vadd.f32 %v4582, %v4815
      %v4817 = vpop.f32.mrf.mxu0
      %v4818 = vpop.f32.mrf.mxu0
      %v4819 = vadd.f32 %v4585, %v4818
      %v4820 = vpop.f32.mrf.mxu0
      %4821 = vmatprep.mubr.bf16.mxu0 0
      %4822 = vmatmul.mubr.bf16.gmra.mxu0 %v4693
      %v4823 = vpop.f32.mrf.mxu0
      %v4824 = vadd.f32 %v4590, %v4823
      %v4825 = vpop.f32.mrf.mxu0
      %v4826 = vpop.f32.mrf.mxu0
      %v4827 = vadd.f32 %v4593, %v4826
      %v4828 = vpop.f32.mrf.mxu0
      %4829 = vmatprep.mubr.bf16.mxu0 0
      %4830 = vmatmul.mubr.bf16.gmra.mxu0 %v4696
      %v4831 = vpop.f32.mrf.mxu0
      %v4832 = vadd.f32 %v4598, %v4831
      %v4833 = vpop.f32.mrf.mxu0
      %v4834 = vpop.f32.mrf.mxu0
      %v4835 = vadd.f32 %v4601, %v4834
      %v4836 = vpop.f32.mrf.mxu0
      %4837 = vmatprep.mubr.bf16.mxu0 0
      %4838 = vmatmul.mubr.bf16.gmra.mxu0 %v4699
      %v4839 = vpop.f32.mrf.mxu0
      %v4840 = vadd.f32 %v4606, %v4839
      %v4841 = vpop.f32.mrf.mxu0
      %v4842 = vpop.f32.mrf.mxu0
      %v4843 = vadd.f32 %v4609, %v4842
      %v4844 = vpop.f32.mrf.mxu0
      %4845 = vmatprep.mubr.bf16.mxu0 0
      %4846 = vmatmul.mubr.bf16.gmra.mxu0 %v4702
      %v4847 = vpop.f32.mrf.mxu0
      %v4848 = vadd.f32 %v4614, %v4847
      %v4849 = vpop.f32.mrf.mxu0
      %v4850 = vpop.f32.mrf.mxu0
      %v4851 = vadd.f32 %v4617, %v4850
      %v4852 = vpop.f32.mrf.mxu0
      %4853 = vmatprep.mubr.bf16.mxu0 0
      %4854 = vmatmul.mubr.bf16.gmra.mxu0 %v4705
      %v4855 = vpop.f32.mrf.mxu0
      %v4856 = vadd.f32 %v4622, %v4855
      %v4857 = vpop.f32.mrf.mxu0
      %v4858 = vpop.f32.mrf.mxu0
      %v4859 = vadd.f32 %v4625, %v4858
      %v4860 = vpop.f32.mrf.mxu0
      %4861 = vmatprep.mubr.bf16.mxu0 0
      %4862 = vmatmul.mubr.bf16.gmra.mxu0 %v4708
      %v4863 = vpop.f32.mrf.mxu0
      %v4864 = vadd.f32 %v4630, %v4863
      %v4865 = vpop.f32.mrf.mxu0
      %v4866 = vpop.f32.mrf.mxu0
      %v4867 = vadd.f32 %v4633, %v4866
      %v4868 = vpop.f32.mrf.mxu0
      %4869 = vmatprep.mubr.bf16.mxu0 0
      %4870 = vmatmul.mubr.bf16.gmra.mxu0 %v4711
      %v4871 = vpop.f32.mrf.mxu0
      %v4872 = vadd.f32 %v4638, %v4871
      %v4873 = vpop.f32.mrf.mxu0
      %v4874 = vpop.f32.mrf.mxu0
      %v4875 = vadd.f32 %v4641, %v4874
      %v4876 = vpop.f32.mrf.mxu0
      %4877 = vmatprep.mubr.bf16.mxu0 0
      %4878 = vmatmul.mubr.bf16.gmra.mxu0 %v4714
      %v4879 = vpop.f32.mrf.mxu0
      %v4880 = vadd.f32 %v4646, %v4879
      %v4881 = vpop.f32.mrf.mxu0
      %v4882 = vpop.f32.mrf.mxu0
      %v4883 = vadd.f32 %v4649, %v4882
      %v4884 = vpop.f32.mrf.mxu0
      %4885 = vmatprep.mubr.bf16.mxu0 0
      %4886 = vmatmul.mubr.bf16.gmra.mxu0 %v4717
      %v4887 = vpop.f32.mrf.mxu0
      %v4888 = vadd.f32 %v4654, %v4887
      %v4889 = vpop.f32.mrf.mxu0
      %v4890 = vpop.f32.mrf.mxu0
      %v4891 = vadd.f32 %v4657, %v4890
      %v4892 = vpop.f32.mrf.mxu0
      %4893 = vmatprep.mubr.bf16.mxu0 0
      %4894 = vmatmul.mubr.bf16.gmra.mxu0 %v4720
      %v4895 = vpop.f32.mrf.mxu0
      %v4896 = vadd.f32 %v4662, %v4895
      %v4897 = vpop.f32.mrf.mxu0
      %v4898 = vpop.f32.mrf.mxu0
      %v4899 = vadd.f32 %v4665, %v4898
      %v4900 = vpop.f32.mrf.mxu0
      %4901 = vdwg.mxu0
      %v4902 = vld [vmem:[#allocation2 + $0x2] sm:$0xff]
      %v4903 = vld [vmem:[#allocation2 + $0xa] sm:$0xff]
      %v4904 = vld [vmem:[#allocation2 + $0x12] sm:$0xff]
      %v4905 = vld [vmem:[#allocation2 + $0x1a] sm:$0xff]
      %v4906 = vld [vmem:[#allocation2 + $0x22] sm:$0xff]
      %v4907 = vld [vmem:[#allocation2 + $0x2a] sm:$0xff]
      %v4908 = vld [vmem:[#allocation2 + $0x32] sm:$0xff]
      %v4909 = vld [vmem:[#allocation2 + $0x3a] sm:$0xff]
      %v4910 = vld [vmem:[#allocation2 + $0x42] sm:$0xff]
      %v4911 = vld [vmem:[#allocation2 + $0x4a] sm:$0xff]
      %v4912 = vld [vmem:[#allocation2 + $0x52] sm:$0xff]
      %v4913 = vld [vmem:[#allocation2 + $0x5a] sm:$0xff]
      %v4914 = vld [vmem:[#allocation2 + $0x62] sm:$0xff]
      %v4915 = vld [vmem:[#allocation2 + $0x6a] sm:$0xff]
      %v4916 = vld [vmem:[#allocation2 + $0x72] sm:$0xff]
      %v4917 = vld [vmem:[#allocation2 + $0x7a] sm:$0xff]
      %v4918 = vld [vmem:[#allocation2 + $0x82] sm:$0xff]
      %v4919 = vld [vmem:[#allocation2 + $0x8a] sm:$0xff]
      %v4920 = vld [vmem:[#allocation2 + $0x92] sm:$0xff]
      %v4921 = vld [vmem:[#allocation2 + $0x9a] sm:$0xff]
      %v4922 = vld [vmem:[#allocation2 + $0xa2] sm:$0xff]
      %v4923 = vld [vmem:[#allocation2 + $0xaa] sm:$0xff]
      %v4924 = vld [vmem:[#allocation2 + $0xb2] sm:$0xff]
      %v4925 = vld [vmem:[#allocation2 + $0xba] sm:$0xff]
      %v4926 = vld [vmem:[#allocation2 + $0xc2] sm:$0xff]
      %v4927 = vld [vmem:[#allocation2 + $0xca] sm:$0xff]
      %v4928 = vld [vmem:[#allocation2 + $0xd2] sm:$0xff]
      %v4929 = vld [vmem:[#allocation2 + $0xda] sm:$0xff]
      %v4930 = vld [vmem:[#allocation2 + $0xe2] sm:$0xff]
      %v4931 = vld [vmem:[#allocation2 + $0xea] sm:$0xff]
      %v4932 = vld [vmem:[#allocation2 + $0xf2] sm:$0xff]
      %v4933 = vld [vmem:[#allocation2 + $0xfa] sm:$0xff]
      %v4934 = vld [vmem:[#allocation2 + $0x102] sm:$0xff]
      %v4935 = vld [vmem:[#allocation2 + $0x10a] sm:$0xff]
      %v4936 = vld [vmem:[#allocation2 + $0x112] sm:$0xff]
      %v4937 = vld [vmem:[#allocation2 + $0x11a] sm:$0xff]
      %v4938 = vpack.c.bf16 %v4903, %v4902
      %v4939 = vpack.c.bf16 %v4905, %v4904
      %v4940 = vpack.c.bf16 %v4907, %v4906
      %v4941 = vpack.c.bf16 %v4909, %v4908
      %v4942 = vpack.c.bf16 %v4911, %v4910
      %v4943 = vpack.c.bf16 %v4913, %v4912
      %v4944 = vpack.c.bf16 %v4915, %v4914
      %v4945 = vpack.c.bf16 %v4917, %v4916
      %v4946 = vpack.c.bf16 %v4919, %v4918
      %v4947 = vpack.c.bf16 %v4921, %v4920
      %v4948 = vpack.c.bf16 %v4923, %v4922
      %v4949 = vpack.c.bf16 %v4925, %v4924
      %v4950 = vpack.c.bf16 %v4927, %v4926
      %v4951 = vpack.c.bf16 %v4929, %v4928
      %v4952 = vpack.c.bf16 %v4931, %v4930
      %v4953 = vpack.c.bf16 %v4933, %v4932
      %v4954 = vpack.c.bf16 %v4935, %v4934
      %v4955 = vpack.c.bf16 %v4937, %v4936
      %s4956 = scalar_lea.vmem %s3, 8
      %v4957 = vld [vmem:[%s4956] sm:$0xf]
      %v4959 = vsel %vm3989, %v4938, 0
      %v4962 = vsel %vm3989, %v4939, 0
      %v4965 = vsel %vm3989, %v4940, 0
      %v4968 = vsel %vm3989, %v4941, 0
      %v4971 = vsel %vm3989, %v4942, 0
      %v4974 = vsel %vm3989, %v4943, 0
      %v4977 = vsel %vm3989, %v4944, 0
      %v4980 = vsel %vm3989, %v4945, 0
      %v4983 = vsel %vm3989, %v4946, 0
      %v4986 = vsel %vm3989, %v4947, 0
      %v4989 = vsel %vm3989, %v4948, 0
      %v4992 = vsel %vm3989, %v4949, 0
      %v4995 = vsel %vm3989, %v4950, 0
      %v4998 = vsel %vm3989, %v4951, 0
      %v5001 = vsel %vm3989, %v4952, 0
      %v5004 = vsel %vm3989, %v4953, 0
      %v5007 = vsel %vm3989, %v4954, 0
      %v5010 = vsel %vm3989, %v4955, 0
      %v5013 = vsel %vm4487, %v4957, 0
      %5015 = vmatprep.subr.bf16.mxu0 0
      %5016 = vmatpush1.bf16.msra.mxu0 0
      %5017 = vmatprep.subr.bf16.mxu0 0
      %5018 = vmatpush1.bf16.msra.mxu0 0
      %5019 = vmatprep.subr.bf16.mxu0 0
      %5020 = vmatpush1.bf16.msra.mxu0 0
      %5021 = vmatprep.subr.bf16.mxu0 0
      %5022 = vmatpush1.bf16.msra.mxu0 0
      %5023 = vmatprep.subr.bf16.mxu0 0
      %5024 = vmatpush1.bf16.msra.mxu0 0
      %5025 = vmatprep.subr.bf16.mxu0 0
      %5026 = vmatpush1.bf16.msra.mxu0 0
      %5027 = vmatprep.subr.bf16.mxu0 0
      %5028 = vmatpush1.bf16.msra.mxu0 0
      %5029 = vmatprep.subr.bf16.mxu0 0
      %5030 = vmatpush1.bf16.msra.mxu0 %v5013
      %5031 = vmatprep.subr.bf16.mxu0 0
      %5032 = vmatpush2.bf16.msra.mxu0 0
      %5033 = vmatprep.subr.bf16.mxu0 0
      %5034 = vmatpush2.bf16.msra.mxu0 0
      %5035 = vmatprep.subr.bf16.mxu0 0
      %5036 = vmatpush2.bf16.msra.mxu0 0
      %5037 = vmatprep.subr.bf16.mxu0 0
      %5038 = vmatpush2.bf16.msra.mxu0 0
      %5039 = vmatprep.subr.bf16.mxu0 0
      %5040 = vmatpush2.bf16.msra.mxu0 0
      %5041 = vmatprep.subr.bf16.mxu0 0
      %5042 = vmatpush2.bf16.msra.mxu0 0
      %5043 = vmatprep.subr.bf16.mxu0 0
      %5044 = vmatpush2.bf16.msra.mxu0 0
      %5045 = vmatprep.subr.bf16.mxu0 0
      %5046 = vmatpush2.bf16.msra.mxu0 0
      %5047 = vmatprep.mubr.bf16.mxu0 0
      %5048 = vmatmul.mubr.bf16.gmra.mxu0 %v4959
      %v5049 = vpop.f32.mrf.mxu0
      %v5050 = vadd.f32 0.0, %v5049
      %v5051 = vpop.f32.mrf.mxu0
      %v5052 = vpop.f32.mrf.mxu0
      %v5053 = vadd.f32 0.0, %v5052
      %v5054 = vpop.f32.mrf.mxu0
      %5055 = vmatprep.mubr.bf16.mxu0 0
      %5056 = vmatmul.mubr.bf16.gmra.mxu0 %v4962
      %v5057 = vpop.f32.mrf.mxu0
      %v5058 = vadd.f32 0.0, %v5057
      %v5059 = vpop.f32.mrf.mxu0
      %v5060 = vpop.f32.mrf.mxu0
      %v5061 = vadd.f32 0.0, %v5060
      %v5062 = vpop.f32.mrf.mxu0
      %5063 = vmatprep.mubr.bf16.mxu0 0
      %5064 = vmatmul.mubr.bf16.gmra.mxu0 %v4965
      %v5065 = vpop.f32.mrf.mxu0
      %v5066 = vadd.f32 0.0, %v5065
      %v5067 = vpop.f32.mrf.mxu0
      %v5068 = vpop.f32.mrf.mxu0
      %v5069 = vadd.f32 0.0, %v5068
      %v5070 = vpop.f32.mrf.mxu0
      %5071 = vmatprep.mubr.bf16.mxu0 0
      %5072 = vmatmul.mubr.bf16.gmra.mxu0 %v4968
      %v5073 = vpop.f32.mrf.mxu0
      %v5074 = vadd.f32 0.0, %v5073
      %v5075 = vpop.f32.mrf.mxu0
      %v5076 = vpop.f32.mrf.mxu0
      %v5077 = vadd.f32 0.0, %v5076
      %v5078 = vpop.f32.mrf.mxu0
      %5079 = vmatprep.mubr.bf16.mxu0 0
      %5080 = vmatmul.mubr.bf16.gmra.mxu0 %v4971
      %v5081 = vpop.f32.mrf.mxu0
      %v5082 = vadd.f32 0.0, %v5081
      %v5083 = vpop.f32.mrf.mxu0
      %v5084 = vpop.f32.mrf.mxu0
      %v5085 = vadd.f32 0.0, %v5084
      %v5086 = vpop.f32.mrf.mxu0
      %5087 = vmatprep.mubr.bf16.mxu0 0
      %5088 = vmatmul.mubr.bf16.gmra.mxu0 %v4974
      %v5089 = vpop.f32.mrf.mxu0
      %v5090 = vadd.f32 0.0, %v5089
      %v5091 = vpop.f32.mrf.mxu0
      %v5092 = vpop.f32.mrf.mxu0
      %v5093 = vadd.f32 0.0, %v5092
      %v5094 = vpop.f32.mrf.mxu0
      %5095 = vmatprep.mubr.bf16.mxu0 0
      %5096 = vmatmul.mubr.bf16.gmra.mxu0 %v4977
      %v5097 = vpop.f32.mrf.mxu0
      %v5098 = vadd.f32 0.0, %v5097
      %v5099 = vpop.f32.mrf.mxu0
      %v5100 = vpop.f32.mrf.mxu0
      %v5101 = vadd.f32 0.0, %v5100
      %v5102 = vpop.f32.mrf.mxu0
      %5103 = vmatprep.mubr.bf16.mxu0 0
      %5104 = vmatmul.mubr.bf16.gmra.mxu0 %v4980
      %v5105 = vpop.f32.mrf.mxu0
      %v5106 = vadd.f32 0.0, %v5105
      %v5107 = vpop.f32.mrf.mxu0
      %v5108 = vpop.f32.mrf.mxu0
      %v5109 = vadd.f32 0.0, %v5108
      %v5110 = vpop.f32.mrf.mxu0
      %5111 = vmatprep.mubr.bf16.mxu0 0
      %5112 = vmatmul.mubr.bf16.gmra.mxu0 %v4983
      %v5113 = vpop.f32.mrf.mxu0
      %v5114 = vadd.f32 0.0, %v5113
      %v5115 = vpop.f32.mrf.mxu0
      %v5116 = vpop.f32.mrf.mxu0
      %v5117 = vadd.f32 0.0, %v5116
      %v5118 = vpop.f32.mrf.mxu0
      %5119 = vmatprep.mubr.bf16.mxu0 0
      %5120 = vmatmul.mubr.bf16.gmra.mxu0 %v4986
      %v5121 = vpop.f32.mrf.mxu0
      %v5122 = vadd.f32 0.0, %v5121
      %v5123 = vpop.f32.mrf.mxu0
      %v5124 = vpop.f32.mrf.mxu0
      %v5125 = vadd.f32 0.0, %v5124
      %v5126 = vpop.f32.mrf.mxu0
      %5127 = vmatprep.mubr.bf16.mxu0 0
      %5128 = vmatmul.mubr.bf16.gmra.mxu0 %v4989
      %v5129 = vpop.f32.mrf.mxu0
      %v5130 = vadd.f32 0.0, %v5129
      %v5131 = vpop.f32.mrf.mxu0
      %v5132 = vpop.f32.mrf.mxu0
      %v5133 = vadd.f32 0.0, %v5132
      %v5134 = vpop.f32.mrf.mxu0
      %5135 = vmatprep.mubr.bf16.mxu0 0
      %5136 = vmatmul.mubr.bf16.gmra.mxu0 %v4992
      %v5137 = vpop.f32.mrf.mxu0
      %v5138 = vadd.f32 0.0, %v5137
      %v5139 = vpop.f32.mrf.mxu0
      %v5140 = vpop.f32.mrf.mxu0
      %v5141 = vadd.f32 0.0, %v5140
      %v5142 = vpop.f32.mrf.mxu0
      %5143 = vmatprep.mubr.bf16.mxu0 0
      %5144 = vmatmul.mubr.bf16.gmra.mxu0 %v4995
      %v5145 = vpop.f32.mrf.mxu0
      %v5146 = vadd.f32 0.0, %v5145
      %v5147 = vpop.f32.mrf.mxu0
      %v5148 = vpop.f32.mrf.mxu0
      %v5149 = vadd.f32 0.0, %v5148
      %v5150 = vpop.f32.mrf.mxu0
      %5151 = vmatprep.mubr.bf16.mxu0 0
      %5152 = vmatmul.mubr.bf16.gmra.mxu0 %v4998
      %v5153 = vpop.f32.mrf.mxu0
      %v5154 = vadd.f32 0.0, %v5153
      %v5155 = vpop.f32.mrf.mxu0
      %v5156 = vpop.f32.mrf.mxu0
      %v5157 = vadd.f32 0.0, %v5156
      %v5158 = vpop.f32.mrf.mxu0
      %5159 = vmatprep.mubr.bf16.mxu0 0
      %5160 = vmatmul.mubr.bf16.gmra.mxu0 %v5001
      %v5161 = vpop.f32.mrf.mxu0
      %v5162 = vadd.f32 0.0, %v5161
      %v5163 = vpop.f32.mrf.mxu0
      %v5164 = vpop.f32.mrf.mxu0
      %v5165 = vadd.f32 0.0, %v5164
      %v5166 = vpop.f32.mrf.mxu0
      %5167 = vmatprep.mubr.bf16.mxu0 0
      %5168 = vmatmul.mubr.bf16.gmra.mxu0 %v5004
      %v5169 = vpop.f32.mrf.mxu0
      %v5170 = vadd.f32 0.0, %v5169
      %v5171 = vpop.f32.mrf.mxu0
      %v5172 = vpop.f32.mrf.mxu0
      %v5173 = vadd.f32 0.0, %v5172
      %v5174 = vpop.f32.mrf.mxu0
      %5175 = vmatprep.mubr.bf16.mxu0 0
      %5176 = vmatmul.mubr.bf16.gmra.mxu0 %v5007
      %v5177 = vpop.f32.mrf.mxu0
      %v5178 = vadd.f32 0.0, %v5177
      %v5179 = vpop.f32.mrf.mxu0
      %v5180 = vpop.f32.mrf.mxu0
      %v5181 = vadd.f32 0.0, %v5180
      %v5182 = vpop.f32.mrf.mxu0
      %5183 = vmatprep.mubr.bf16.mxu0 0
      %5184 = vmatmul.mubr.bf16.gmra.mxu0 %v5010
      %v5185 = vpop.f32.mrf.mxu0
      %v5186 = vadd.f32 0.0, %v5185
      %v5187 = vpop.f32.mrf.mxu0
      %v5188 = vpop.f32.mrf.mxu0
      %v5189 = vadd.f32 0.0, %v5188
      %v5190 = vpop.f32.mrf.mxu0
      %5191 = vdwg.mxu0
      %v5192 = vadd.f32 %v4760, %v5050
      %v5193 = vadd.f32 %v4763, %v5053
      %v5194 = vadd.f32 %v4768, %v5058
      %v5195 = vadd.f32 %v4771, %v5061
      %v5196 = vadd.f32 %v4776, %v5066
      %v5197 = vadd.f32 %v4779, %v5069
      %v5198 = vadd.f32 %v4784, %v5074
      %v5199 = vadd.f32 %v4787, %v5077
      %v5200 = vadd.f32 %v4792, %v5082
      %v5201 = vadd.f32 %v4795, %v5085
      %v5202 = vadd.f32 %v4800, %v5090
      %v5203 = vadd.f32 %v4803, %v5093
      %v5204 = vadd.f32 %v4808, %v5098
      %v5205 = vadd.f32 %v4811, %v5101
      %v5206 = vadd.f32 %v4816, %v5106
      %v5207 = vadd.f32 %v4819, %v5109
      %v5208 = vadd.f32 %v4824, %v5114
      %v5209 = vadd.f32 %v4827, %v5117
      %v5210 = vadd.f32 %v4832, %v5122
      %v5211 = vadd.f32 %v4835, %v5125
      %v5212 = vadd.f32 %v4840, %v5130
      %v5213 = vadd.f32 %v4843, %v5133
      %v5214 = vadd.f32 %v4848, %v5138
      %v5215 = vadd.f32 %v4851, %v5141
      %v5216 = vadd.f32 %v4856, %v5146
      %v5217 = vadd.f32 %v4859, %v5149
      %v5218 = vadd.f32 %v4864, %v5154
      %v5219 = vadd.f32 %v4867, %v5157
      %v5220 = vadd.f32 %v4872, %v5162
      %v5221 = vadd.f32 %v4875, %v5165
      %v5222 = vadd.f32 %v4880, %v5170
      %v5223 = vadd.f32 %v4883, %v5173
      %v5224 = vadd.f32 %v4888, %v5178
      %v5225 = vadd.f32 %v4891, %v5181
      %v5226 = vadd.f32 %v4896, %v5186
      %v5227 = vadd.f32 %v4899, %v5189
      %v5228 = vld [vmem:[#allocation2 + $0x12] sm:$0xff]
      %v5229 = vld [vmem:[#allocation2 + $0x1a] sm:$0xff]
      %v5230 = vld [vmem:[#allocation2 + $0x22] sm:$0xff]
      %v5231 = vld [vmem:[#allocation2 + $0x2a] sm:$0xff]
      %v5232 = vld [vmem:[#allocation2 + $0x32] sm:$0xff]
      %v5233 = vld [vmem:[#allocation2 + $0x3a] sm:$0xff]
      %v5234 = vld [vmem:[#allocation2 + $0x42] sm:$0xff]
      %v5235 = vld [vmem:[#allocation2 + $0x4a] sm:$0xff]
      %v5236 = vld [vmem:[#allocation2 + $0x52] sm:$0xff]
      %v5237 = vld [vmem:[#allocation2 + $0x5a] sm:$0xff]
      %v5238 = vld [vmem:[#allocation2 + $0x62] sm:$0xff]
      %v5239 = vld [vmem:[#allocation2 + $0x6a] sm:$0xff]
      %v5240 = vld [vmem:[#allocation2 + $0x72] sm:$0xff]
      %v5241 = vld [vmem:[#allocation2 + $0x7a] sm:$0xff]
      %v5242 = vld [vmem:[#allocation2 + $0x82] sm:$0xff]
      %v5243 = vld [vmem:[#allocation2 + $0x8a] sm:$0xff]
      %v5244 = vld [vmem:[#allocation2 + $0x92] sm:$0xff]
      %v5245 = vld [vmem:[#allocation2 + $0x9a] sm:$0xff]
      %v5246 = vld [vmem:[#allocation2 + $0xa2] sm:$0xff]
      %v5247 = vld [vmem:[#allocation2 + $0xaa] sm:$0xff]
      %v5248 = vld [vmem:[#allocation2 + $0xb2] sm:$0xff]
      %v5249 = vld [vmem:[#allocation2 + $0xba] sm:$0xff]
      %v5250 = vld [vmem:[#allocation2 + $0xc2] sm:$0xff]
      %v5251 = vld [vmem:[#allocation2 + $0xca] sm:$0xff]
      %v5252 = vld [vmem:[#allocation2 + $0xd2] sm:$0xff]
      %v5253 = vld [vmem:[#allocation2 + $0xda] sm:$0xff]
      %v5254 = vld [vmem:[#allocation2 + $0xe2] sm:$0xff]
      %v5255 = vld [vmem:[#allocation2 + $0xea] sm:$0xff]
      %v5256 = vld [vmem:[#allocation2 + $0xf2] sm:$0xff]
      %v5257 = vld [vmem:[#allocation2 + $0xfa] sm:$0xff]
      %v5258 = vld [vmem:[#allocation2 + $0x102] sm:$0xff]
      %v5259 = vld [vmem:[#allocation2 + $0x10a] sm:$0xff]
      %v5260 = vld [vmem:[#allocation2 + $0x112] sm:$0xff]
      %v5261 = vld [vmem:[#allocation2 + $0x11a] sm:$0xff]
      %v5262 = vld [vmem:[#allocation2 + $0x122] sm:$0xff]
      %v5263 = vld [vmem:[#allocation2 + $0x12a] sm:$0xff]
      %v5264 = vpack.c.bf16 %v5229, %v5228
      %v5265 = vpack.c.bf16 %v5231, %v5230
      %v5266 = vpack.c.bf16 %v5233, %v5232
      %v5267 = vpack.c.bf16 %v5235, %v5234
      %v5268 = vpack.c.bf16 %v5237, %v5236
      %v5269 = vpack.c.bf16 %v5239, %v5238
      %v5270 = vpack.c.bf16 %v5241, %v5240
      %v5271 = vpack.c.bf16 %v5243, %v5242
      %v5272 = vpack.c.bf16 %v5245, %v5244
      %v5273 = vpack.c.bf16 %v5247, %v5246
      %v5274 = vpack.c.bf16 %v5249, %v5248
      %v5275 = vpack.c.bf16 %v5251, %v5250
      %v5276 = vpack.c.bf16 %v5253, %v5252
      %v5277 = vpack.c.bf16 %v5255, %v5254
      %v5278 = vpack.c.bf16 %v5257, %v5256
      %v5279 = vpack.c.bf16 %v5259, %v5258
      %v5280 = vpack.c.bf16 %v5261, %v5260
      %v5281 = vpack.c.bf16 %v5263, %v5262
      %s5282 = scalar_lea.vmem %s3, 12
      %v5283 = vld [vmem:[%s5282] sm:$0xf]
      %v5285 = vsel %vm3989, %v5264, 0
      %v5288 = vsel %vm3989, %v5265, 0
      %v5291 = vsel %vm3989, %v5266, 0
      %v5294 = vsel %vm3989, %v5267, 0
      %v5297 = vsel %vm3989, %v5268, 0
      %v5300 = vsel %vm3989, %v5269, 0
      %v5303 = vsel %vm3989, %v5270, 0
      %v5306 = vsel %vm3989, %v5271, 0
      %v5309 = vsel %vm3989, %v5272, 0
      %v5312 = vsel %vm3989, %v5273, 0
      %v5315 = vsel %vm3989, %v5274, 0
      %v5318 = vsel %vm3989, %v5275, 0
      %v5321 = vsel %vm3989, %v5276, 0
      %v5324 = vsel %vm3989, %v5277, 0
      %v5327 = vsel %vm3989, %v5278, 0
      %v5330 = vsel %vm3989, %v5279, 0
      %v5333 = vsel %vm3989, %v5280, 0
      %v5336 = vsel %vm3989, %v5281, 0
      %v5339 = vsel %vm4487, %v5283, 0
      %5341 = vmatprep.subr.bf16.mxu0 0
      %5342 = vmatpush1.bf16.msra.mxu0 0
      %5343 = vmatprep.subr.bf16.mxu0 0
      %5344 = vmatpush1.bf16.msra.mxu0 0
      %5345 = vmatprep.subr.bf16.mxu0 0
      %5346 = vmatpush1.bf16.msra.mxu0 0
      %5347 = vmatprep.subr.bf16.mxu0 0
      %5348 = vmatpush1.bf16.msra.mxu0 0
      %5349 = vmatprep.subr.bf16.mxu0 0
      %5350 = vmatpush1.bf16.msra.mxu0 0
      %5351 = vmatprep.subr.bf16.mxu0 0
      %5352 = vmatpush1.bf16.msra.mxu0 0
      %5353 = vmatprep.subr.bf16.mxu0 0
      %5354 = vmatpush1.bf16.msra.mxu0 0
      %5355 = vmatprep.subr.bf16.mxu0 0
      %5356 = vmatpush1.bf16.msra.mxu0 %v5339
      %5357 = vmatprep.subr.bf16.mxu0 0
      %5358 = vmatpush2.bf16.msra.mxu0 0
      %5359 = vmatprep.subr.bf16.mxu0 0
      %5360 = vmatpush2.bf16.msra.mxu0 0
      %5361 = vmatprep.subr.bf16.mxu0 0
      %5362 = vmatpush2.bf16.msra.mxu0 0
      %5363 = vmatprep.subr.bf16.mxu0 0
      %5364 = vmatpush2.bf16.msra.mxu0 0
      %5365 = vmatprep.subr.bf16.mxu0 0
      %5366 = vmatpush2.bf16.msra.mxu0 0
      %5367 = vmatprep.subr.bf16.mxu0 0
      %5368 = vmatpush2.bf16.msra.mxu0 0
      %5369 = vmatprep.subr.bf16.mxu0 0
      %5370 = vmatpush2.bf16.msra.mxu0 0
      %5371 = vmatprep.subr.bf16.mxu0 0
      %5372 = vmatpush2.bf16.msra.mxu0 0
      %5373 = vmatprep.mubr.bf16.mxu0 0
      %5374 = vmatmul.mubr.bf16.gmra.mxu0 %v5285
      %v5375 = vpop.f32.mrf.mxu0
      %v5376 = vadd.f32 0.0, %v5375
      %v5377 = vpop.f32.mrf.mxu0
      %v5378 = vpop.f32.mrf.mxu0
      %v5379 = vadd.f32 0.0, %v5378
      %v5380 = vpop.f32.mrf.mxu0
      %5381 = vmatprep.mubr.bf16.mxu0 0
      %5382 = vmatmul.mubr.bf16.gmra.mxu0 %v5288
      %v5383 = vpop.f32.mrf.mxu0
      %v5384 = vadd.f32 0.0, %v5383
      %v5385 = vpop.f32.mrf.mxu0
      %v5386 = vpop.f32.mrf.mxu0
      %v5387 = vadd.f32 0.0, %v5386
      %v5388 = vpop.f32.mrf.mxu0
      %5389 = vmatprep.mubr.bf16.mxu0 0
      %5390 = vmatmul.mubr.bf16.gmra.mxu0 %v5291
      %v5391 = vpop.f32.mrf.mxu0
      %v5392 = vadd.f32 0.0, %v5391
      %v5393 = vpop.f32.mrf.mxu0
      %v5394 = vpop.f32.mrf.mxu0
      %v5395 = vadd.f32 0.0, %v5394
      %v5396 = vpop.f32.mrf.mxu0
      %5397 = vmatprep.mubr.bf16.mxu0 0
      %5398 = vmatmul.mubr.bf16.gmra.mxu0 %v5294
      %v5399 = vpop.f32.mrf.mxu0
      %v5400 = vadd.f32 0.0, %v5399
      %v5401 = vpop.f32.mrf.mxu0
      %v5402 = vpop.f32.mrf.mxu0
      %v5403 = vadd.f32 0.0, %v5402
      %v5404 = vpop.f32.mrf.mxu0
      %5405 = vmatprep.mubr.bf16.mxu0 0
      %5406 = vmatmul.mubr.bf16.gmra.mxu0 %v5297
      %v5407 = vpop.f32.mrf.mxu0
      %v5408 = vadd.f32 0.0, %v5407
      %v5409 = vpop.f32.mrf.mxu0
      %v5410 = vpop.f32.mrf.mxu0
      %v5411 = vadd.f32 0.0, %v5410
      %v5412 = vpop.f32.mrf.mxu0
      %5413 = vmatprep.mubr.bf16.mxu0 0
      %5414 = vmatmul.mubr.bf16.gmra.mxu0 %v5300
      %v5415 = vpop.f32.mrf.mxu0
      %v5416 = vadd.f32 0.0, %v5415
      %v5417 = vpop.f32.mrf.mxu0
      %v5418 = vpop.f32.mrf.mxu0
      %v5419 = vadd.f32 0.0, %v5418
      %v5420 = vpop.f32.mrf.mxu0
      %5421 = vmatprep.mubr.bf16.mxu0 0
      %5422 = vmatmul.mubr.bf16.gmra.mxu0 %v5303
      %v5423 = vpop.f32.mrf.mxu0
      %v5424 = vadd.f32 0.0, %v5423
      %v5425 = vpop.f32.mrf.mxu0
      %v5426 = vpop.f32.mrf.mxu0
      %v5427 = vadd.f32 0.0, %v5426
      %v5428 = vpop.f32.mrf.mxu0
      %5429 = vmatprep.mubr.bf16.mxu0 0
      %5430 = vmatmul.mubr.bf16.gmra.mxu0 %v5306
      %v5431 = vpop.f32.mrf.mxu0
      %v5432 = vadd.f32 0.0, %v5431
      %v5433 = vpop.f32.mrf.mxu0
      %v5434 = vpop.f32.mrf.mxu0
      %v5435 = vadd.f32 0.0, %v5434
      %v5436 = vpop.f32.mrf.mxu0
      %5437 = vmatprep.mubr.bf16.mxu0 0
      %5438 = vmatmul.mubr.bf16.gmra.mxu0 %v5309
      %v5439 = vpop.f32.mrf.mxu0
      %v5440 = vadd.f32 0.0, %v5439
      %v5441 = vpop.f32.mrf.mxu0
      %v5442 = vpop.f32.mrf.mxu0
      %v5443 = vadd.f32 0.0, %v5442
      %v5444 = vpop.f32.mrf.mxu0
      %5445 = vmatprep.mubr.bf16.mxu0 0
      %5446 = vmatmul.mubr.bf16.gmra.mxu0 %v5312
      %v5447 = vpop.f32.mrf.mxu0
      %v5448 = vadd.f32 0.0, %v5447
      %v5449 = vpop.f32.mrf.mxu0
      %v5450 = vpop.f32.mrf.mxu0
      %v5451 = vadd.f32 0.0, %v5450
      %v5452 = vpop.f32.mrf.mxu0
      %5453 = vmatprep.mubr.bf16.mxu0 0
      %5454 = vmatmul.mubr.bf16.gmra.mxu0 %v5315
      %v5455 = vpop.f32.mrf.mxu0
      %v5456 = vadd.f32 0.0, %v5455
      %v5457 = vpop.f32.mrf.mxu0
      %v5458 = vpop.f32.mrf.mxu0
      %v5459 = vadd.f32 0.0, %v5458
      %v5460 = vpop.f32.mrf.mxu0
      %5461 = vmatprep.mubr.bf16.mxu0 0
      %5462 = vmatmul.mubr.bf16.gmra.mxu0 %v5318
      %v5463 = vpop.f32.mrf.mxu0
      %v5464 = vadd.f32 0.0, %v5463
      %v5465 = vpop.f32.mrf.mxu0
      %v5466 = vpop.f32.mrf.mxu0
      %v5467 = vadd.f32 0.0, %v5466
      %v5468 = vpop.f32.mrf.mxu0
      %5469 = vmatprep.mubr.bf16.mxu0 0
      %5470 = vmatmul.mubr.bf16.gmra.mxu0 %v5321
      %v5471 = vpop.f32.mrf.mxu0
      %v5472 = vadd.f32 0.0, %v5471
      %v5473 = vpop.f32.mrf.mxu0
      %v5474 = vpop.f32.mrf.mxu0
      %v5475 = vadd.f32 0.0, %v5474
      %v5476 = vpop.f32.mrf.mxu0
      %5477 = vmatprep.mubr.bf16.mxu0 0
      %5478 = vmatmul.mubr.bf16.gmra.mxu0 %v5324
      %v5479 = vpop.f32.mrf.mxu0
      %v5480 = vadd.f32 0.0, %v5479
      %v5481 = vpop.f32.mrf.mxu0
      %v5482 = vpop.f32.mrf.mxu0
      %v5483 = vadd.f32 0.0, %v5482
      %v5484 = vpop.f32.mrf.mxu0
      %5485 = vmatprep.mubr.bf16.mxu0 0
      %5486 = vmatmul.mubr.bf16.gmra.mxu0 %v5327
      %v5487 = vpop.f32.mrf.mxu0
      %v5488 = vadd.f32 0.0, %v5487
      %v5489 = vpop.f32.mrf.mxu0
      %v5490 = vpop.f32.mrf.mxu0
      %v5491 = vadd.f32 0.0, %v5490
      %v5492 = vpop.f32.mrf.mxu0
      %5493 = vmatprep.mubr.bf16.mxu0 0
      %5494 = vmatmul.mubr.bf16.gmra.mxu0 %v5330
      %v5495 = vpop.f32.mrf.mxu0
      %v5496 = vadd.f32 0.0, %v5495
      %v5497 = vpop.f32.mrf.mxu0
      %v5498 = vpop.f32.mrf.mxu0
      %v5499 = vadd.f32 0.0, %v5498
      %v5500 = vpop.f32.mrf.mxu0
      %5501 = vmatprep.mubr.bf16.mxu0 0
      %5502 = vmatmul.mubr.bf16.gmra.mxu0 %v5333
      %v5503 = vpop.f32.mrf.mxu0
      %v5504 = vadd.f32 0.0, %v5503
      %v5505 = vpop.f32.mrf.mxu0
      %v5506 = vpop.f32.mrf.mxu0
      %v5507 = vadd.f32 0.0, %v5506
      %v5508 = vpop.f32.mrf.mxu0
      %5509 = vmatprep.mubr.bf16.mxu0 0
      %5510 = vmatmul.mubr.bf16.gmra.mxu0 %v5336
      %v5511 = vpop.f32.mrf.mxu0
      %v5512 = vadd.f32 0.0, %v5511
      %v5513 = vpop.f32.mrf.mxu0
      %v5514 = vpop.f32.mrf.mxu0
      %v5515 = vadd.f32 0.0, %v5514
      %v5516 = vpop.f32.mrf.mxu0
      %5517 = vdwg.mxu0
      %v5518 = vadd.f32 %v5192, %v5376
      %v5519 = vadd.f32 %v5193, %v5379
      %v5520 = vadd.f32 %v5194, %v5384
      %v5521 = vadd.f32 %v5195, %v5387
      %v5522 = vadd.f32 %v5196, %v5392
      %v5523 = vadd.f32 %v5197, %v5395
      %v5524 = vadd.f32 %v5198, %v5400
      %v5525 = vadd.f32 %v5199, %v5403
      %v5526 = vadd.f32 %v5200, %v5408
      %v5527 = vadd.f32 %v5201, %v5411
      %v5528 = vadd.f32 %v5202, %v5416
      %v5529 = vadd.f32 %v5203, %v5419
      %v5530 = vadd.f32 %v5204, %v5424
      %v5531 = vadd.f32 %v5205, %v5427
      %v5532 = vadd.f32 %v5206, %v5432
      %v5533 = vadd.f32 %v5207, %v5435
      %v5534 = vadd.f32 %v5208, %v5440
      %v5535 = vadd.f32 %v5209, %v5443
      %v5536 = vadd.f32 %v5210, %v5448
      %v5537 = vadd.f32 %v5211, %v5451
      %v5538 = vadd.f32 %v5212, %v5456
      %v5539 = vadd.f32 %v5213, %v5459
      %v5540 = vadd.f32 %v5214, %v5464
      %v5541 = vadd.f32 %v5215, %v5467
      %v5542 = vadd.f32 %v5216, %v5472
      %v5543 = vadd.f32 %v5217, %v5475
      %v5544 = vadd.f32 %v5218, %v5480
      %v5545 = vadd.f32 %v5219, %v5483
      %v5546 = vadd.f32 %v5220, %v5488
      %v5547 = vadd.f32 %v5221, %v5491
      %v5548 = vadd.f32 %v5222, %v5496
      %v5549 = vadd.f32 %v5223, %v5499
      %v5550 = vadd.f32 %v5224, %v5504
      %v5551 = vadd.f32 %v5225, %v5507
      %v5552 = vadd.f32 %v5226, %v5512
      %v5553 = vadd.f32 %v5227, %v5515
      %v5554 = vld [vmem:[#allocation2 + $0x13] sm:$0xff]
      %v5555 = vld [vmem:[#allocation2 + $0x1b] sm:$0xff]
      %v5556 = vld [vmem:[#allocation2 + $0x23] sm:$0xff]
      %v5557 = vld [vmem:[#allocation2 + $0x2b] sm:$0xff]
      %v5558 = vld [vmem:[#allocation2 + $0x33] sm:$0xff]
      %v5559 = vld [vmem:[#allocation2 + $0x3b] sm:$0xff]
      %v5560 = vld [vmem:[#allocation2 + $0x43] sm:$0xff]
      %v5561 = vld [vmem:[#allocation2 + $0x4b] sm:$0xff]
      %v5562 = vld [vmem:[#allocation2 + $0x53] sm:$0xff]
      %v5563 = vld [vmem:[#allocation2 + $0x5b] sm:$0xff]
      %v5564 = vld [vmem:[#allocation2 + $0x63] sm:$0xff]
      %v5565 = vld [vmem:[#allocation2 + $0x6b] sm:$0xff]
      %v5566 = vld [vmem:[#allocation2 + $0x73] sm:$0xff]
      %v5567 = vld [vmem:[#allocation2 + $0x7b] sm:$0xff]
      %v5568 = vld [vmem:[#allocation2 + $0x83] sm:$0xff]
      %v5569 = vld [vmem:[#allocation2 + $0x8b] sm:$0xff]
      %v5570 = vld [vmem:[#allocation2 + $0x93] sm:$0xff]
      %v5571 = vld [vmem:[#allocation2 + $0x9b] sm:$0xff]
      %v5572 = vld [vmem:[#allocation2 + $0xa3] sm:$0xff]
      %v5573 = vld [vmem:[#allocation2 + $0xab] sm:$0xff]
      %v5574 = vld [vmem:[#allocation2 + $0xb3] sm:$0xff]
      %v5575 = vld [vmem:[#allocation2 + $0xbb] sm:$0xff]
      %v5576 = vld [vmem:[#allocation2 + $0xc3] sm:$0xff]
      %v5577 = vld [vmem:[#allocation2 + $0xcb] sm:$0xff]
      %v5578 = vld [vmem:[#allocation2 + $0xd3] sm:$0xff]
      %v5579 = vld [vmem:[#allocation2 + $0xdb] sm:$0xff]
      %v5580 = vld [vmem:[#allocation2 + $0xe3] sm:$0xff]
      %v5581 = vld [vmem:[#allocation2 + $0xeb] sm:$0xff]
      %v5582 = vld [vmem:[#allocation2 + $0xf3] sm:$0xff]
      %v5583 = vld [vmem:[#allocation2 + $0xfb] sm:$0xff]
      %v5584 = vld [vmem:[#allocation2 + $0x103] sm:$0xff]
      %v5585 = vld [vmem:[#allocation2 + $0x10b] sm:$0xff]
      %v5586 = vld [vmem:[#allocation2 + $0x113] sm:$0xff]
      %v5587 = vld [vmem:[#allocation2 + $0x11b] sm:$0xff]
      %v5588 = vld [vmem:[#allocation2 + $0x123] sm:$0xff]
      %v5589 = vld [vmem:[#allocation2 + $0x12b] sm:$0xff]
      %v5590 = vpack.c.bf16 %v5555, %v5554
      %v5591 = vpack.c.bf16 %v5557, %v5556
      %v5592 = vpack.c.bf16 %v5559, %v5558
      %v5593 = vpack.c.bf16 %v5561, %v5560
      %v5594 = vpack.c.bf16 %v5563, %v5562
      %v5595 = vpack.c.bf16 %v5565, %v5564
      %v5596 = vpack.c.bf16 %v5567, %v5566
      %v5597 = vpack.c.bf16 %v5569, %v5568
      %v5598 = vpack.c.bf16 %v5571, %v5570
      %v5599 = vpack.c.bf16 %v5573, %v5572
      %v5600 = vpack.c.bf16 %v5575, %v5574
      %v5601 = vpack.c.bf16 %v5577, %v5576
      %v5602 = vpack.c.bf16 %v5579, %v5578
      %v5603 = vpack.c.bf16 %v5581, %v5580
      %v5604 = vpack.c.bf16 %v5583, %v5582
      %v5605 = vpack.c.bf16 %v5585, %v5584
      %v5606 = vpack.c.bf16 %v5587, %v5586
      %v5607 = vpack.c.bf16 %v5589, %v5588
      %s5608 = scalar_lea.vmem %s3, 16
      %v5609 = vld [vmem:[%s5608] sm:$0xf]
      %v5611 = vsel %vm3989, %v5590, 0
      %v5614 = vsel %vm3989, %v5591, 0
      %v5617 = vsel %vm3989, %v5592, 0
      %v5620 = vsel %vm3989, %v5593, 0
      %v5623 = vsel %vm3989, %v5594, 0
      %v5626 = vsel %vm3989, %v5595, 0
      %v5629 = vsel %vm3989, %v5596, 0
      %v5632 = vsel %vm3989, %v5597, 0
      %v5635 = vsel %vm3989, %v5598, 0
      %v5638 = vsel %vm3989, %v5599, 0
      %v5641 = vsel %vm3989, %v5600, 0
      %v5644 = vsel %vm3989, %v5601, 0
      %v5647 = vsel %vm3989, %v5602, 0
      %v5650 = vsel %vm3989, %v5603, 0
      %v5653 = vsel %vm3989, %v5604, 0
      %v5656 = vsel %vm3989, %v5605, 0
      %v5659 = vsel %vm3989, %v5606, 0
      %v5662 = vsel %vm3989, %v5607, 0
      %v5665 = vsel %vm4487, %v5609, 0
      %5667 = vmatprep.subr.bf16.mxu0 0
      %5668 = vmatpush1.bf16.msra.mxu0 0
      %5669 = vmatprep.subr.bf16.mxu0 0
      %5670 = vmatpush1.bf16.msra.mxu0 0
      %5671 = vmatprep.subr.bf16.mxu0 0
      %5672 = vmatpush1.bf16.msra.mxu0 0
      %5673 = vmatprep.subr.bf16.mxu0 0
      %5674 = vmatpush1.bf16.msra.mxu0 0
      %5675 = vmatprep.subr.bf16.mxu0 0
      %5676 = vmatpush1.bf16.msra.mxu0 0
      %5677 = vmatprep.subr.bf16.mxu0 0
      %5678 = vmatpush1.bf16.msra.mxu0 0
      %5679 = vmatprep.subr.bf16.mxu0 0
      %5680 = vmatpush1.bf16.msra.mxu0 0
      %5681 = vmatprep.subr.bf16.mxu0 0
      %5682 = vmatpush1.bf16.msra.mxu0 %v5665
      %5683 = vmatprep.subr.bf16.mxu0 0
      %5684 = vmatpush2.bf16.msra.mxu0 0
      %5685 = vmatprep.subr.bf16.mxu0 0
      %5686 = vmatpush2.bf16.msra.mxu0 0
      %5687 = vmatprep.subr.bf16.mxu0 0
      %5688 = vmatpush2.bf16.msra.mxu0 0
      %5689 = vmatprep.subr.bf16.mxu0 0
      %5690 = vmatpush2.bf16.msra.mxu0 0
      %5691 = vmatprep.subr.bf16.mxu0 0
      %5692 = vmatpush2.bf16.msra.mxu0 0
      %5693 = vmatprep.subr.bf16.mxu0 0
      %5694 = vmatpush2.bf16.msra.mxu0 0
      %5695 = vmatprep.subr.bf16.mxu0 0
      %5696 = vmatpush2.bf16.msra.mxu0 0
      %5697 = vmatprep.subr.bf16.mxu0 0
      %5698 = vmatpush2.bf16.msra.mxu0 0
      %5699 = vmatprep.mubr.bf16.mxu0 0
      %5700 = vmatmul.mubr.bf16.gmra.mxu0 %v5611
      %v5701 = vpop.f32.mrf.mxu0
      %v5702 = vadd.f32 0.0, %v5701
      %v5703 = vpop.f32.mrf.mxu0
      %v5704 = vpop.f32.mrf.mxu0
      %v5705 = vadd.f32 0.0, %v5704
      %v5706 = vpop.f32.mrf.mxu0
      %5707 = vmatprep.mubr.bf16.mxu0 0
      %5708 = vmatmul.mubr.bf16.gmra.mxu0 %v5614
      %v5709 = vpop.f32.mrf.mxu0
      %v5710 = vadd.f32 0.0, %v5709
      %v5711 = vpop.f32.mrf.mxu0
      %v5712 = vpop.f32.mrf.mxu0
      %v5713 = vadd.f32 0.0, %v5712
      %v5714 = vpop.f32.mrf.mxu0
      %5715 = vmatprep.mubr.bf16.mxu0 0
      %5716 = vmatmul.mubr.bf16.gmra.mxu0 %v5617
      %v5717 = vpop.f32.mrf.mxu0
      %v5718 = vadd.f32 0.0, %v5717
      %v5719 = vpop.f32.mrf.mxu0
      %v5720 = vpop.f32.mrf.mxu0
      %v5721 = vadd.f32 0.0, %v5720
      %v5722 = vpop.f32.mrf.mxu0
      %5723 = vmatprep.mubr.bf16.mxu0 0
      %5724 = vmatmul.mubr.bf16.gmra.mxu0 %v5620
      %v5725 = vpop.f32.mrf.mxu0
      %v5726 = vadd.f32 0.0, %v5725
      %v5727 = vpop.f32.mrf.mxu0
      %v5728 = vpop.f32.mrf.mxu0
      %v5729 = vadd.f32 0.0, %v5728
      %v5730 = vpop.f32.mrf.mxu0
      %5731 = vmatprep.mubr.bf16.mxu0 0
      %5732 = vmatmul.mubr.bf16.gmra.mxu0 %v5623
      %v5733 = vpop.f32.mrf.mxu0
      %v5734 = vadd.f32 0.0, %v5733
      %v5735 = vpop.f32.mrf.mxu0
      %v5736 = vpop.f32.mrf.mxu0
      %v5737 = vadd.f32 0.0, %v5736
      %v5738 = vpop.f32.mrf.mxu0
      %5739 = vmatprep.mubr.bf16.mxu0 0
      %5740 = vmatmul.mubr.bf16.gmra.mxu0 %v5626
      %v5741 = vpop.f32.mrf.mxu0
      %v5742 = vadd.f32 0.0, %v5741
      %v5743 = vpop.f32.mrf.mxu0
      %v5744 = vpop.f32.mrf.mxu0
      %v5745 = vadd.f32 0.0, %v5744
      %v5746 = vpop.f32.mrf.mxu0
      %5747 = vmatprep.mubr.bf16.mxu0 0
      %5748 = vmatmul.mubr.bf16.gmra.mxu0 %v5629
      %v5749 = vpop.f32.mrf.mxu0
      %v5750 = vadd.f32 0.0, %v5749
      %v5751 = vpop.f32.mrf.mxu0
      %v5752 = vpop.f32.mrf.mxu0
      %v5753 = vadd.f32 0.0, %v5752
      %v5754 = vpop.f32.mrf.mxu0
      %5755 = vmatprep.mubr.bf16.mxu0 0
      %5756 = vmatmul.mubr.bf16.gmra.mxu0 %v5632
      %v5757 = vpop.f32.mrf.mxu0
      %v5758 = vadd.f32 0.0, %v5757
      %v5759 = vpop.f32.mrf.mxu0
      %v5760 = vpop.f32.mrf.mxu0
      %v5761 = vadd.f32 0.0, %v5760
      %v5762 = vpop.f32.mrf.mxu0
      %5763 = vmatprep.mubr.bf16.mxu0 0
      %5764 = vmatmul.mubr.bf16.gmra.mxu0 %v5635
      %v5765 = vpop.f32.mrf.mxu0
      %v5766 = vadd.f32 0.0, %v5765
      %v5767 = vpop.f32.mrf.mxu0
      %v5768 = vpop.f32.mrf.mxu0
      %v5769 = vadd.f32 0.0, %v5768
      %v5770 = vpop.f32.mrf.mxu0
      %5771 = vmatprep.mubr.bf16.mxu0 0
      %5772 = vmatmul.mubr.bf16.gmra.mxu0 %v5638
      %v5773 = vpop.f32.mrf.mxu0
      %v5774 = vadd.f32 0.0, %v5773
      %v5775 = vpop.f32.mrf.mxu0
      %v5776 = vpop.f32.mrf.mxu0
      %v5777 = vadd.f32 0.0, %v5776
      %v5778 = vpop.f32.mrf.mxu0
      %5779 = vmatprep.mubr.bf16.mxu0 0
      %5780 = vmatmul.mubr.bf16.gmra.mxu0 %v5641
      %v5781 = vpop.f32.mrf.mxu0
      %v5782 = vadd.f32 0.0, %v5781
      %v5783 = vpop.f32.mrf.mxu0
      %v5784 = vpop.f32.mrf.mxu0
      %v5785 = vadd.f32 0.0, %v5784
      %v5786 = vpop.f32.mrf.mxu0
      %5787 = vmatprep.mubr.bf16.mxu0 0
      %5788 = vmatmul.mubr.bf16.gmra.mxu0 %v5644
      %v5789 = vpop.f32.mrf.mxu0
      %v5790 = vadd.f32 0.0, %v5789
      %v5791 = vpop.f32.mrf.mxu0
      %v5792 = vpop.f32.mrf.mxu0
      %v5793 = vadd.f32 0.0, %v5792
      %v5794 = vpop.f32.mrf.mxu0
      %5795 = vmatprep.mubr.bf16.mxu0 0
      %5796 = vmatmul.mubr.bf16.gmra.mxu0 %v5647
      %v5797 = vpop.f32.mrf.mxu0
      %v5798 = vadd.f32 0.0, %v5797
      %v5799 = vpop.f32.mrf.mxu0
      %v5800 = vpop.f32.mrf.mxu0
      %v5801 = vadd.f32 0.0, %v5800
      %v5802 = vpop.f32.mrf.mxu0
      %5803 = vmatprep.mubr.bf16.mxu0 0
      %5804 = vmatmul.mubr.bf16.gmra.mxu0 %v5650
      %v5805 = vpop.f32.mrf.mxu0
      %v5806 = vadd.f32 0.0, %v5805
      %v5807 = vpop.f32.mrf.mxu0
      %v5808 = vpop.f32.mrf.mxu0
      %v5809 = vadd.f32 0.0, %v5808
      %v5810 = vpop.f32.mrf.mxu0
      %5811 = vmatprep.mubr.bf16.mxu0 0
      %5812 = vmatmul.mubr.bf16.gmra.mxu0 %v5653
      %v5813 = vpop.f32.mrf.mxu0
      %v5814 = vadd.f32 0.0, %v5813
      %v5815 = vpop.f32.mrf.mxu0
      %v5816 = vpop.f32.mrf.mxu0
      %v5817 = vadd.f32 0.0, %v5816
      %v5818 = vpop.f32.mrf.mxu0
      %5819 = vmatprep.mubr.bf16.mxu0 0
      %5820 = vmatmul.mubr.bf16.gmra.mxu0 %v5656
      %v5821 = vpop.f32.mrf.mxu0
      %v5822 = vadd.f32 0.0, %v5821
      %v5823 = vpop.f32.mrf.mxu0
      %v5824 = vpop.f32.mrf.mxu0
      %v5825 = vadd.f32 0.0, %v5824
      %v5826 = vpop.f32.mrf.mxu0
      %5827 = vmatprep.mubr.bf16.mxu0 0
      %5828 = vmatmul.mubr.bf16.gmra.mxu0 %v5659
      %v5829 = vpop.f32.mrf.mxu0
      %v5830 = vadd.f32 0.0, %v5829
      %v5831 = vpop.f32.mrf.mxu0
      %v5832 = vpop.f32.mrf.mxu0
      %v5833 = vadd.f32 0.0, %v5832
      %v5834 = vpop.f32.mrf.mxu0
      %5835 = vmatprep.mubr.bf16.mxu0 0
      %5836 = vmatmul.mubr.bf16.gmra.mxu0 %v5662
      %v5837 = vpop.f32.mrf.mxu0
      %v5838 = vadd.f32 0.0, %v5837
      %v5839 = vpop.f32.mrf.mxu0
      %v5840 = vpop.f32.mrf.mxu0
      %v5841 = vadd.f32 0.0, %v5840
      %v5842 = vpop.f32.mrf.mxu0
      %5843 = vdwg.mxu0
      %v5844 = vadd.f32 %v5518, %v5702
      %v5845 = vadd.f32 %v5519, %v5705
      %v5846 = vadd.f32 %v5520, %v5710
      %v5847 = vadd.f32 %v5521, %v5713
      %v5848 = vadd.f32 %v5522, %v5718
      %v5849 = vadd.f32 %v5523, %v5721
      %v5850 = vadd.f32 %v5524, %v5726
      %v5851 = vadd.f32 %v5525, %v5729
      %v5852 = vadd.f32 %v5526, %v5734
      %v5853 = vadd.f32 %v5527, %v5737
      %v5854 = vadd.f32 %v5528, %v5742
      %v5855 = vadd.f32 %v5529, %v5745
      %v5856 = vadd.f32 %v5530, %v5750
      %v5857 = vadd.f32 %v5531, %v5753
      %v5858 = vadd.f32 %v5532, %v5758
      %v5859 = vadd.f32 %v5533, %v5761
      %v5860 = vadd.f32 %v5534, %v5766
      %v5861 = vadd.f32 %v5535, %v5769
      %v5862 = vadd.f32 %v5536, %v5774
      %v5863 = vadd.f32 %v5537, %v5777
      %v5864 = vadd.f32 %v5538, %v5782
      %v5865 = vadd.f32 %v5539, %v5785
      %v5866 = vadd.f32 %v5540, %v5790
      %v5867 = vadd.f32 %v5541, %v5793
      %v5868 = vadd.f32 %v5542, %v5798
      %v5869 = vadd.f32 %v5543, %v5801
      %v5870 = vadd.f32 %v5544, %v5806
      %v5871 = vadd.f32 %v5545, %v5809
      %v5872 = vadd.f32 %v5546, %v5814
      %v5873 = vadd.f32 %v5547, %v5817
      %v5874 = vadd.f32 %v5548, %v5822
      %v5875 = vadd.f32 %v5549, %v5825
      %v5876 = vadd.f32 %v5550, %v5830
      %v5877 = vadd.f32 %v5551, %v5833
      %v5878 = vadd.f32 %v5552, %v5838
      %v5879 = vadd.f32 %v5553, %v5841
      %v5880 = vld [vmem:[#allocation2 + $0x14] sm:$0xff]
      %v5881 = vld [vmem:[#allocation2 + $0x1c] sm:$0xff]
      %v5882 = vld [vmem:[#allocation2 + $0x24] sm:$0xff]
      %v5883 = vld [vmem:[#allocation2 + $0x2c] sm:$0xff]
      %v5884 = vld [vmem:[#allocation2 + $0x34] sm:$0xff]
      %v5885 = vld [vmem:[#allocation2 + $0x3c] sm:$0xff]
      %v5886 = vld [vmem:[#allocation2 + $0x44] sm:$0xff]
      %v5887 = vld [vmem:[#allocation2 + $0x4c] sm:$0xff]
      %v5888 = vld [vmem:[#allocation2 + $0x54] sm:$0xff]
      %v5889 = vld [vmem:[#allocation2 + $0x5c] sm:$0xff]
      %v5890 = vld [vmem:[#allocation2 + $0x64] sm:$0xff]
      %v5891 = vld [vmem:[#allocation2 + $0x6c] sm:$0xff]
      %v5892 = vld [vmem:[#allocation2 + $0x74] sm:$0xff]
      %v5893 = vld [vmem:[#allocation2 + $0x7c] sm:$0xff]
      %v5894 = vld [vmem:[#allocation2 + $0x84] sm:$0xff]
      %v5895 = vld [vmem:[#allocation2 + $0x8c] sm:$0xff]
      %v5896 = vld [vmem:[#allocation2 + $0x94] sm:$0xff]
      %v5897 = vld [vmem:[#allocation2 + $0x9c] sm:$0xff]
      %v5898 = vld [vmem:[#allocation2 + $0xa4] sm:$0xff]
      %v5899 = vld [vmem:[#allocation2 + $0xac] sm:$0xff]
      %v5900 = vld [vmem:[#allocation2 + $0xb4] sm:$0xff]
      %v5901 = vld [vmem:[#allocation2 + $0xbc] sm:$0xff]
      %v5902 = vld [vmem:[#allocation2 + $0xc4] sm:$0xff]
      %v5903 = vld [vmem:[#allocation2 + $0xcc] sm:$0xff]
      %v5904 = vld [vmem:[#allocation2 + $0xd4] sm:$0xff]
      %v5905 = vld [vmem:[#allocation2 + $0xdc] sm:$0xff]
      %v5906 = vld [vmem:[#allocation2 + $0xe4] sm:$0xff]
      %v5907 = vld [vmem:[#allocation2 + $0xec] sm:$0xff]
      %v5908 = vld [vmem:[#allocation2 + $0xf4] sm:$0xff]
      %v5909 = vld [vmem:[#allocation2 + $0xfc] sm:$0xff]
      %v5910 = vld [vmem:[#allocation2 + $0x104] sm:$0xff]
      %v5911 = vld [vmem:[#allocation2 + $0x10c] sm:$0xff]
      %v5912 = vld [vmem:[#allocation2 + $0x114] sm:$0xff]
      %v5913 = vld [vmem:[#allocation2 + $0x11c] sm:$0xff]
      %v5914 = vld [vmem:[#allocation2 + $0x124] sm:$0xff]
      %v5915 = vld [vmem:[#allocation2 + $0x12c] sm:$0xff]
      %v5916 = vpack.c.bf16 %v5881, %v5880
      %v5917 = vpack.c.bf16 %v5883, %v5882
      %v5918 = vpack.c.bf16 %v5885, %v5884
      %v5919 = vpack.c.bf16 %v5887, %v5886
      %v5920 = vpack.c.bf16 %v5889, %v5888
      %v5921 = vpack.c.bf16 %v5891, %v5890
      %v5922 = vpack.c.bf16 %v5893, %v5892
      %v5923 = vpack.c.bf16 %v5895, %v5894
      %v5924 = vpack.c.bf16 %v5897, %v5896
      %v5925 = vpack.c.bf16 %v5899, %v5898
      %v5926 = vpack.c.bf16 %v5901, %v5900
      %v5927 = vpack.c.bf16 %v5903, %v5902
      %v5928 = vpack.c.bf16 %v5905, %v5904
      %v5929 = vpack.c.bf16 %v5907, %v5906
      %v5930 = vpack.c.bf16 %v5909, %v5908
      %v5931 = vpack.c.bf16 %v5911, %v5910
      %v5932 = vpack.c.bf16 %v5913, %v5912
      %v5933 = vpack.c.bf16 %v5915, %v5914
      %s5934 = scalar_lea.vmem %s3, 20
      %v5935 = vld [vmem:[%s5934] sm:$0xf]
      %v5937 = vsel %vm3989, %v5916, 0
      %v5940 = vsel %vm3989, %v5917, 0
      %v5943 = vsel %vm3989, %v5918, 0
      %v5946 = vsel %vm3989, %v5919, 0
      %v5949 = vsel %vm3989, %v5920, 0
      %v5952 = vsel %vm3989, %v5921, 0
      %v5955 = vsel %vm3989, %v5922, 0
      %v5958 = vsel %vm3989, %v5923, 0
      %v5961 = vsel %vm3989, %v5924, 0
      %v5964 = vsel %vm3989, %v5925, 0
      %v5967 = vsel %vm3989, %v5926, 0
      %v5970 = vsel %vm3989, %v5927, 0
      %v5973 = vsel %vm3989, %v5928, 0
      %v5976 = vsel %vm3989, %v5929, 0
      %v5979 = vsel %vm3989, %v5930, 0
      %v5982 = vsel %vm3989, %v5931, 0
      %v5985 = vsel %vm3989, %v5932, 0
      %v5988 = vsel %vm3989, %v5933, 0
      %v5991 = vsel %vm4487, %v5935, 0
      %5993 = vmatprep.subr.bf16.mxu0 0
      %5994 = vmatpush1.bf16.msra.mxu0 0
      %5995 = vmatprep.subr.bf16.mxu0 0
      %5996 = vmatpush1.bf16.msra.mxu0 0
      %5997 = vmatprep.subr.bf16.mxu0 0
      %5998 = vmatpush1.bf16.msra.mxu0 0
      %5999 = vmatprep.subr.bf16.mxu0 0
      %6000 = vmatpush1.bf16.msra.mxu0 0
      %6001 = vmatprep.subr.bf16.mxu0 0
      %6002 = vmatpush1.bf16.msra.mxu0 0
      %6003 = vmatprep.subr.bf16.mxu0 0
      %6004 = vmatpush1.bf16.msra.mxu0 0
      %6005 = vmatprep.subr.bf16.mxu0 0
      %6006 = vmatpush1.bf16.msra.mxu0 0
      %6007 = vmatprep.subr.bf16.mxu0 0
      %6008 = vmatpush1.bf16.msra.mxu0 %v5991
      %6009 = vmatprep.subr.bf16.mxu0 0
      %6010 = vmatpush2.bf16.msra.mxu0 0
      %6011 = vmatprep.subr.bf16.mxu0 0
      %6012 = vmatpush2.bf16.msra.mxu0 0
      %6013 = vmatprep.subr.bf16.mxu0 0
      %6014 = vmatpush2.bf16.msra.mxu0 0
      %6015 = vmatprep.subr.bf16.mxu0 0
      %6016 = vmatpush2.bf16.msra.mxu0 0
      %6017 = vmatprep.subr.bf16.mxu0 0
      %6018 = vmatpush2.bf16.msra.mxu0 0
      %6019 = vmatprep.subr.bf16.mxu0 0
      %6020 = vmatpush2.bf16.msra.mxu0 0
      %6021 = vmatprep.subr.bf16.mxu0 0
      %6022 = vmatpush2.bf16.msra.mxu0 0
      %6023 = vmatprep.subr.bf16.mxu0 0
      %6024 = vmatpush2.bf16.msra.mxu0 0
      %6025 = vmatprep.mubr.bf16.mxu0 0
      %6026 = vmatmul.mubr.bf16.gmra.mxu0 %v5937
      %v6027 = vpop.f32.mrf.mxu0
      %v6028 = vadd.f32 0.0, %v6027
      %v6029 = vpop.f32.mrf.mxu0
      %v6030 = vpop.f32.mrf.mxu0
      %v6031 = vadd.f32 0.0, %v6030
      %v6032 = vpop.f32.mrf.mxu0
      %6033 = vmatprep.mubr.bf16.mxu0 0
      %6034 = vmatmul.mubr.bf16.gmra.mxu0 %v5940
      %v6035 = vpop.f32.mrf.mxu0
      %v6036 = vadd.f32 0.0, %v6035
      %v6037 = vpop.f32.mrf.mxu0
      %v6038 = vpop.f32.mrf.mxu0
      %v6039 = vadd.f32 0.0, %v6038
      %v6040 = vpop.f32.mrf.mxu0
      %6041 = vmatprep.mubr.bf16.mxu0 0
      %6042 = vmatmul.mubr.bf16.gmra.mxu0 %v5943
      %v6043 = vpop.f32.mrf.mxu0
      %v6044 = vadd.f32 0.0, %v6043
      %v6045 = vpop.f32.mrf.mxu0
      %v6046 = vpop.f32.mrf.mxu0
      %v6047 = vadd.f32 0.0, %v6046
      %v6048 = vpop.f32.mrf.mxu0
      %6049 = vmatprep.mubr.bf16.mxu0 0
      %6050 = vmatmul.mubr.bf16.gmra.mxu0 %v5946
      %v6051 = vpop.f32.mrf.mxu0
      %v6052 = vadd.f32 0.0, %v6051
      %v6053 = vpop.f32.mrf.mxu0
      %v6054 = vpop.f32.mrf.mxu0
      %v6055 = vadd.f32 0.0, %v6054
      %v6056 = vpop.f32.mrf.mxu0
      %6057 = vmatprep.mubr.bf16.mxu0 0
      %6058 = vmatmul.mubr.bf16.gmra.mxu0 %v5949
      %v6059 = vpop.f32.mrf.mxu0
      %v6060 = vadd.f32 0.0, %v6059
      %v6061 = vpop.f32.mrf.mxu0
      %v6062 = vpop.f32.mrf.mxu0
      %v6063 = vadd.f32 0.0, %v6062
      %v6064 = vpop.f32.mrf.mxu0
      %6065 = vmatprep.mubr.bf16.mxu0 0
      %6066 = vmatmul.mubr.bf16.gmra.mxu0 %v5952
      %v6067 = vpop.f32.mrf.mxu0
      %v6068 = vadd.f32 0.0, %v6067
      %v6069 = vpop.f32.mrf.mxu0
      %v6070 = vpop.f32.mrf.mxu0
      %v6071 = vadd.f32 0.0, %v6070
      %v6072 = vpop.f32.mrf.mxu0
      %6073 = vmatprep.mubr.bf16.mxu0 0
      %6074 = vmatmul.mubr.bf16.gmra.mxu0 %v5955
      %v6075 = vpop.f32.mrf.mxu0
      %v6076 = vadd.f32 0.0, %v6075
      %v6077 = vpop.f32.mrf.mxu0
      %v6078 = vpop.f32.mrf.mxu0
      %v6079 = vadd.f32 0.0, %v6078
      %v6080 = vpop.f32.mrf.mxu0
      %6081 = vmatprep.mubr.bf16.mxu0 0
      %6082 = vmatmul.mubr.bf16.gmra.mxu0 %v5958
      %v6083 = vpop.f32.mrf.mxu0
      %v6084 = vadd.f32 0.0, %v6083
      %v6085 = vpop.f32.mrf.mxu0
      %v6086 = vpop.f32.mrf.mxu0
      %v6087 = vadd.f32 0.0, %v6086
      %v6088 = vpop.f32.mrf.mxu0
      %6089 = vmatprep.mubr.bf16.mxu0 0
      %6090 = vmatmul.mubr.bf16.gmra.mxu0 %v5961
      %v6091 = vpop.f32.mrf.mxu0
      %v6092 = vadd.f32 0.0, %v6091
      %v6093 = vpop.f32.mrf.mxu0
      %v6094 = vpop.f32.mrf.mxu0
      %v6095 = vadd.f32 0.0, %v6094
      %v6096 = vpop.f32.mrf.mxu0
      %6097 = vmatprep.mubr.bf16.mxu0 0
      %6098 = vmatmul.mubr.bf16.gmra.mxu0 %v5964
      %v6099 = vpop.f32.mrf.mxu0
      %v6100 = vadd.f32 0.0, %v6099
      %v6101 = vpop.f32.mrf.mxu0
      %v6102 = vpop.f32.mrf.mxu0
      %v6103 = vadd.f32 0.0, %v6102
      %v6104 = vpop.f32.mrf.mxu0
      %6105 = vmatprep.mubr.bf16.mxu0 0
      %6106 = vmatmul.mubr.bf16.gmra.mxu0 %v5967
      %v6107 = vpop.f32.mrf.mxu0
      %v6108 = vadd.f32 0.0, %v6107
      %v6109 = vpop.f32.mrf.mxu0
      %v6110 = vpop.f32.mrf.mxu0
      %v6111 = vadd.f32 0.0, %v6110
      %v6112 = vpop.f32.mrf.mxu0
      %6113 = vmatprep.mubr.bf16.mxu0 0
      %6114 = vmatmul.mubr.bf16.gmra.mxu0 %v5970
      %v6115 = vpop.f32.mrf.mxu0
      %v6116 = vadd.f32 0.0, %v6115
      %v6117 = vpop.f32.mrf.mxu0
      %v6118 = vpop.f32.mrf.mxu0
      %v6119 = vadd.f32 0.0, %v6118
      %v6120 = vpop.f32.mrf.mxu0
      %6121 = vmatprep.mubr.bf16.mxu0 0
      %6122 = vmatmul.mubr.bf16.gmra.mxu0 %v5973
      %v6123 = vpop.f32.mrf.mxu0
      %v6124 = vadd.f32 0.0, %v6123
      %v6125 = vpop.f32.mrf.mxu0
      %v6126 = vpop.f32.mrf.mxu0
      %v6127 = vadd.f32 0.0, %v6126
      %v6128 = vpop.f32.mrf.mxu0
      %6129 = vmatprep.mubr.bf16.mxu0 0
      %6130 = vmatmul.mubr.bf16.gmra.mxu0 %v5976
      %v6131 = vpop.f32.mrf.mxu0
      %v6132 = vadd.f32 0.0, %v6131
      %v6133 = vpop.f32.mrf.mxu0
      %v6134 = vpop.f32.mrf.mxu0
      %v6135 = vadd.f32 0.0, %v6134
      %v6136 = vpop.f32.mrf.mxu0
      %6137 = vmatprep.mubr.bf16.mxu0 0
      %6138 = vmatmul.mubr.bf16.gmra.mxu0 %v5979
      %v6139 = vpop.f32.mrf.mxu0
      %v6140 = vadd.f32 0.0, %v6139
      %v6141 = vpop.f32.mrf.mxu0
      %v6142 = vpop.f32.mrf.mxu0
      %v6143 = vadd.f32 0.0, %v6142
      %v6144 = vpop.f32.mrf.mxu0
      %6145 = vmatprep.mubr.bf16.mxu0 0
      %6146 = vmatmul.mubr.bf16.gmra.mxu0 %v5982
      %v6147 = vpop.f32.mrf.mxu0
      %v6148 = vadd.f32 0.0, %v6147
      %v6149 = vpop.f32.mrf.mxu0
      %v6150 = vpop.f32.mrf.mxu0
      %v6151 = vadd.f32 0.0, %v6150
      %v6152 = vpop.f32.mrf.mxu0
      %6153 = vmatprep.mubr.bf16.mxu0 0
      %6154 = vmatmul.mubr.bf16.gmra.mxu0 %v5985
      %v6155 = vpop.f32.mrf.mxu0
      %v6156 = vadd.f32 0.0, %v6155
      %v6157 = vpop.f32.mrf.mxu0
      %v6158 = vpop.f32.mrf.mxu0
      %v6159 = vadd.f32 0.0, %v6158
      %v6160 = vpop.f32.mrf.mxu0
      %6161 = vmatprep.mubr.bf16.mxu0 0
      %6162 = vmatmul.mubr.bf16.gmra.mxu0 %v5988
      %v6163 = vpop.f32.mrf.mxu0
      %v6164 = vadd.f32 0.0, %v6163
      %v6165 = vpop.f32.mrf.mxu0
      %v6166 = vpop.f32.mrf.mxu0
      %v6167 = vadd.f32 0.0, %v6166
      %v6168 = vpop.f32.mrf.mxu0
      %6169 = vdwg.mxu0
      %v6170 = vadd.f32 %v5844, %v6028
      %v6171 = vadd.f32 %v5845, %v6031
      %v6172 = vadd.f32 %v5846, %v6036
      %v6173 = vadd.f32 %v5847, %v6039
      %v6174 = vadd.f32 %v5848, %v6044
      %v6175 = vadd.f32 %v5849, %v6047
      %v6176 = vadd.f32 %v5850, %v6052
      %v6177 = vadd.f32 %v5851, %v6055
      %v6178 = vadd.f32 %v5852, %v6060
      %v6179 = vadd.f32 %v5853, %v6063
      %v6180 = vadd.f32 %v5854, %v6068
      %v6181 = vadd.f32 %v5855, %v6071
      %v6182 = vadd.f32 %v5856, %v6076
      %v6183 = vadd.f32 %v5857, %v6079
      %v6184 = vadd.f32 %v5858, %v6084
      %v6185 = vadd.f32 %v5859, %v6087
      %v6186 = vadd.f32 %v5860, %v6092
      %v6187 = vadd.f32 %v5861, %v6095
      %v6188 = vadd.f32 %v5862, %v6100
      %v6189 = vadd.f32 %v5863, %v6103
      %v6190 = vadd.f32 %v5864, %v6108
      %v6191 = vadd.f32 %v5865, %v6111
      %v6192 = vadd.f32 %v5866, %v6116
      %v6193 = vadd.f32 %v5867, %v6119
      %v6194 = vadd.f32 %v5868, %v6124
      %v6195 = vadd.f32 %v5869, %v6127
      %v6196 = vadd.f32 %v5870, %v6132
      %v6197 = vadd.f32 %v5871, %v6135
      %v6198 = vadd.f32 %v5872, %v6140
      %v6199 = vadd.f32 %v5873, %v6143
      %v6200 = vadd.f32 %v5874, %v6148
      %v6201 = vadd.f32 %v5875, %v6151
      %v6202 = vadd.f32 %v5876, %v6156
      %v6203 = vadd.f32 %v5877, %v6159
      %v6204 = vadd.f32 %v5878, %v6164
      %v6205 = vadd.f32 %v5879, %v6167
      %v6206 = vld [vmem:[#allocation2 + $0x24] sm:$0xff]
      %v6207 = vld [vmem:[#allocation2 + $0x2c] sm:$0xff]
      %v6208 = vld [vmem:[#allocation2 + $0x34] sm:$0xff]
      %v6209 = vld [vmem:[#allocation2 + $0x3c] sm:$0xff]
      %v6210 = vld [vmem:[#allocation2 + $0x44] sm:$0xff]
      %v6211 = vld [vmem:[#allocation2 + $0x4c] sm:$0xff]
      %v6212 = vld [vmem:[#allocation2 + $0x54] sm:$0xff]
      %v6213 = vld [vmem:[#allocation2 + $0x5c] sm:$0xff]
      %v6214 = vld [vmem:[#allocation2 + $0x64] sm:$0xff]
      %v6215 = vld [vmem:[#allocation2 + $0x6c] sm:$0xff]
      %v6216 = vld [vmem:[#allocation2 + $0x74] sm:$0xff]
      %v6217 = vld [vmem:[#allocation2 + $0x7c] sm:$0xff]
      %v6218 = vld [vmem:[#allocation2 + $0x84] sm:$0xff]
      %v6219 = vld [vmem:[#allocation2 + $0x8c] sm:$0xff]
      %v6220 = vld [vmem:[#allocation2 + $0x94] sm:$0xff]
      %v6221 = vld [vmem:[#allocation2 + $0x9c] sm:$0xff]
      %v6222 = vld [vmem:[#allocation2 + $0xa4] sm:$0xff]
      %v6223 = vld [vmem:[#allocation2 + $0xac] sm:$0xff]
      %v6224 = vld [vmem:[#allocation2 + $0xb4] sm:$0xff]
      %v6225 = vld [vmem:[#allocation2 + $0xbc] sm:$0xff]
      %v6226 = vld [vmem:[#allocation2 + $0xc4] sm:$0xff]
      %v6227 = vld [vmem:[#allocation2 + $0xcc] sm:$0xff]
      %v6228 = vld [vmem:[#allocation2 + $0xd4] sm:$0xff]
      %v6229 = vld [vmem:[#allocation2 + $0xdc] sm:$0xff]
      %v6230 = vld [vmem:[#allocation2 + $0xe4] sm:$0xff]
      %v6231 = vld [vmem:[#allocation2 + $0xec] sm:$0xff]
      %v6232 = vld [vmem:[#allocation2 + $0xf4] sm:$0xff]
      %v6233 = vld [vmem:[#allocation2 + $0xfc] sm:$0xff]
      %v6234 = vld [vmem:[#allocation2 + $0x104] sm:$0xff]
      %v6235 = vld [vmem:[#allocation2 + $0x10c] sm:$0xff]
      %v6236 = vld [vmem:[#allocation2 + $0x114] sm:$0xff]
      %v6237 = vld [vmem:[#allocation2 + $0x11c] sm:$0xff]
      %v6238 = vld [vmem:[#allocation2 + $0x124] sm:$0xff]
      %v6239 = vld [vmem:[#allocation2 + $0x12c] sm:$0xff]
      %v6240 = vld [vmem:[#allocation2 + $0x134] sm:$0xff]
      %v6241 = vld [vmem:[#allocation2 + $0x13c] sm:$0xff]
      %v6242 = vpack.c.bf16 %v6207, %v6206
      %v6243 = vpack.c.bf16 %v6209, %v6208
      %v6244 = vpack.c.bf16 %v6211, %v6210
      %v6245 = vpack.c.bf16 %v6213, %v6212
      %v6246 = vpack.c.bf16 %v6215, %v6214
      %v6247 = vpack.c.bf16 %v6217, %v6216
      %v6248 = vpack.c.bf16 %v6219, %v6218
      %v6249 = vpack.c.bf16 %v6221, %v6220
      %v6250 = vpack.c.bf16 %v6223, %v6222
      %v6251 = vpack.c.bf16 %v6225, %v6224
      %v6252 = vpack.c.bf16 %v6227, %v6226
      %v6253 = vpack.c.bf16 %v6229, %v6228
      %v6254 = vpack.c.bf16 %v6231, %v6230
      %v6255 = vpack.c.bf16 %v6233, %v6232
      %v6256 = vpack.c.bf16 %v6235, %v6234
      %v6257 = vpack.c.bf16 %v6237, %v6236
      %v6258 = vpack.c.bf16 %v6239, %v6238
      %v6259 = vpack.c.bf16 %v6241, %v6240
      %s6260 = scalar_lea.vmem %s3, 24
      %v6261 = vld [vmem:[%s6260] sm:$0xf]
      %v6263 = vsel %vm3989, %v6242, 0
      %v6266 = vsel %vm3989, %v6243, 0
      %v6269 = vsel %vm3989, %v6244, 0
      %v6272 = vsel %vm3989, %v6245, 0
      %v6275 = vsel %vm3989, %v6246, 0
      %v6278 = vsel %vm3989, %v6247, 0
      %v6281 = vsel %vm3989, %v6248, 0
      %v6284 = vsel %vm3989, %v6249, 0
      %v6287 = vsel %vm3989, %v6250, 0
      %v6290 = vsel %vm3989, %v6251, 0
      %v6293 = vsel %vm3989, %v6252, 0
      %v6296 = vsel %vm3989, %v6253, 0
      %v6299 = vsel %vm3989, %v6254, 0
      %v6302 = vsel %vm3989, %v6255, 0
      %v6305 = vsel %vm3989, %v6256, 0
      %v6308 = vsel %vm3989, %v6257, 0
      %v6311 = vsel %vm3989, %v6258, 0
      %v6314 = vsel %vm3989, %v6259, 0
      %v6317 = vsel %vm4487, %v6261, 0
      %6319 = vmatprep.subr.bf16.mxu0 0
      %6320 = vmatpush1.bf16.msra.mxu0 0
      %6321 = vmatprep.subr.bf16.mxu0 0
      %6322 = vmatpush1.bf16.msra.mxu0 0
      %6323 = vmatprep.subr.bf16.mxu0 0
      %6324 = vmatpush1.bf16.msra.mxu0 0
      %6325 = vmatprep.subr.bf16.mxu0 0
      %6326 = vmatpush1.bf16.msra.mxu0 0
      %6327 = vmatprep.subr.bf16.mxu0 0
      %6328 = vmatpush1.bf16.msra.mxu0 0
      %6329 = vmatprep.subr.bf16.mxu0 0
      %6330 = vmatpush1.bf16.msra.mxu0 0
      %6331 = vmatprep.subr.bf16.mxu0 0
      %6332 = vmatpush1.bf16.msra.mxu0 0
      %6333 = vmatprep.subr.bf16.mxu0 0
      %6334 = vmatpush1.bf16.msra.mxu0 %v6317
      %6335 = vmatprep.subr.bf16.mxu0 0
      %6336 = vmatpush2.bf16.msra.mxu0 0
      %6337 = vmatprep.subr.bf16.mxu0 0
      %6338 = vmatpush2.bf16.msra.mxu0 0
      %6339 = vmatprep.subr.bf16.mxu0 0
      %6340 = vmatpush2.bf16.msra.mxu0 0
      %6341 = vmatprep.subr.bf16.mxu0 0
      %6342 = vmatpush2.bf16.msra.mxu0 0
      %6343 = vmatprep.subr.bf16.mxu0 0
      %6344 = vmatpush2.bf16.msra.mxu0 0
      %6345 = vmatprep.subr.bf16.mxu0 0
      %6346 = vmatpush2.bf16.msra.mxu0 0
      %6347 = vmatprep.subr.bf16.mxu0 0
      %6348 = vmatpush2.bf16.msra.mxu0 0
      %6349 = vmatprep.subr.bf16.mxu0 0
      %6350 = vmatpush2.bf16.msra.mxu0 0
      %6351 = vmatprep.mubr.bf16.mxu0 0
      %6352 = vmatmul.mubr.bf16.gmra.mxu0 %v6263
      %v6353 = vpop.f32.mrf.mxu0
      %v6354 = vadd.f32 0.0, %v6353
      %v6355 = vpop.f32.mrf.mxu0
      %v6356 = vpop.f32.mrf.mxu0
      %v6357 = vadd.f32 0.0, %v6356
      %v6358 = vpop.f32.mrf.mxu0
      %6359 = vmatprep.mubr.bf16.mxu0 0
      %6360 = vmatmul.mubr.bf16.gmra.mxu0 %v6266
      %v6361 = vpop.f32.mrf.mxu0
      %v6362 = vadd.f32 0.0, %v6361
      %v6363 = vpop.f32.mrf.mxu0
      %v6364 = vpop.f32.mrf.mxu0
      %v6365 = vadd.f32 0.0, %v6364
      %v6366 = vpop.f32.mrf.mxu0
      %6367 = vmatprep.mubr.bf16.mxu0 0
      %6368 = vmatmul.mubr.bf16.gmra.mxu0 %v6269
      %v6369 = vpop.f32.mrf.mxu0
      %v6370 = vadd.f32 0.0, %v6369
      %v6371 = vpop.f32.mrf.mxu0
      %v6372 = vpop.f32.mrf.mxu0
      %v6373 = vadd.f32 0.0, %v6372
      %v6374 = vpop.f32.mrf.mxu0
      %6375 = vmatprep.mubr.bf16.mxu0 0
      %6376 = vmatmul.mubr.bf16.gmra.mxu0 %v6272
      %v6377 = vpop.f32.mrf.mxu0
      %v6378 = vadd.f32 0.0, %v6377
      %v6379 = vpop.f32.mrf.mxu0
      %v6380 = vpop.f32.mrf.mxu0
      %v6381 = vadd.f32 0.0, %v6380
      %v6382 = vpop.f32.mrf.mxu0
      %6383 = vmatprep.mubr.bf16.mxu0 0
      %6384 = vmatmul.mubr.bf16.gmra.mxu0 %v6275
      %v6385 = vpop.f32.mrf.mxu0
      %v6386 = vadd.f32 0.0, %v6385
      %v6387 = vpop.f32.mrf.mxu0
      %v6388 = vpop.f32.mrf.mxu0
      %v6389 = vadd.f32 0.0, %v6388
      %v6390 = vpop.f32.mrf.mxu0
      %6391 = vmatprep.mubr.bf16.mxu0 0
      %6392 = vmatmul.mubr.bf16.gmra.mxu0 %v6278
      %v6393 = vpop.f32.mrf.mxu0
      %v6394 = vadd.f32 0.0, %v6393
      %v6395 = vpop.f32.mrf.mxu0
      %v6396 = vpop.f32.mrf.mxu0
      %v6397 = vadd.f32 0.0, %v6396
      %v6398 = vpop.f32.mrf.mxu0
      %6399 = vmatprep.mubr.bf16.mxu0 0
      %6400 = vmatmul.mubr.bf16.gmra.mxu0 %v6281
      %v6401 = vpop.f32.mrf.mxu0
      %v6402 = vadd.f32 0.0, %v6401
      %v6403 = vpop.f32.mrf.mxu0
      %v6404 = vpop.f32.mrf.mxu0
      %v6405 = vadd.f32 0.0, %v6404
      %v6406 = vpop.f32.mrf.mxu0
      %6407 = vmatprep.mubr.bf16.mxu0 0
      %6408 = vmatmul.mubr.bf16.gmra.mxu0 %v6284
      %v6409 = vpop.f32.mrf.mxu0
      %v6410 = vadd.f32 0.0, %v6409
      %v6411 = vpop.f32.mrf.mxu0
      %v6412 = vpop.f32.mrf.mxu0
      %v6413 = vadd.f32 0.0, %v6412
      %v6414 = vpop.f32.mrf.mxu0
      %6415 = vmatprep.mubr.bf16.mxu0 0
      %6416 = vmatmul.mubr.bf16.gmra.mxu0 %v6287
      %v6417 = vpop.f32.mrf.mxu0
      %v6418 = vadd.f32 0.0, %v6417
      %v6419 = vpop.f32.mrf.mxu0
      %v6420 = vpop.f32.mrf.mxu0
      %v6421 = vadd.f32 0.0, %v6420
      %v6422 = vpop.f32.mrf.mxu0
      %6423 = vmatprep.mubr.bf16.mxu0 0
      %6424 = vmatmul.mubr.bf16.gmra.mxu0 %v6290
      %v6425 = vpop.f32.mrf.mxu0
      %v6426 = vadd.f32 0.0, %v6425
      %v6427 = vpop.f32.mrf.mxu0
      %v6428 = vpop.f32.mrf.mxu0
      %v6429 = vadd.f32 0.0, %v6428
      %v6430 = vpop.f32.mrf.mxu0
      %6431 = vmatprep.mubr.bf16.mxu0 0
      %6432 = vmatmul.mubr.bf16.gmra.mxu0 %v6293
      %v6433 = vpop.f32.mrf.mxu0
      %v6434 = vadd.f32 0.0, %v6433
      %v6435 = vpop.f32.mrf.mxu0
      %v6436 = vpop.f32.mrf.mxu0
      %v6437 = vadd.f32 0.0, %v6436
      %v6438 = vpop.f32.mrf.mxu0
      %6439 = vmatprep.mubr.bf16.mxu0 0
      %6440 = vmatmul.mubr.bf16.gmra.mxu0 %v6296
      %v6441 = vpop.f32.mrf.mxu0
      %v6442 = vadd.f32 0.0, %v6441
      %v6443 = vpop.f32.mrf.mxu0
      %v6444 = vpop.f32.mrf.mxu0
      %v6445 = vadd.f32 0.0, %v6444
      %v6446 = vpop.f32.mrf.mxu0
      %6447 = vmatprep.mubr.bf16.mxu0 0
      %6448 = vmatmul.mubr.bf16.gmra.mxu0 %v6299
      %v6449 = vpop.f32.mrf.mxu0
      %v6450 = vadd.f32 0.0, %v6449
      %v6451 = vpop.f32.mrf.mxu0
      %v6452 = vpop.f32.mrf.mxu0
      %v6453 = vadd.f32 0.0, %v6452
      %v6454 = vpop.f32.mrf.mxu0
      %6455 = vmatprep.mubr.bf16.mxu0 0
      %6456 = vmatmul.mubr.bf16.gmra.mxu0 %v6302
      %v6457 = vpop.f32.mrf.mxu0
      %v6458 = vadd.f32 0.0, %v6457
      %v6459 = vpop.f32.mrf.mxu0
      %v6460 = vpop.f32.mrf.mxu0
      %v6461 = vadd.f32 0.0, %v6460
      %v6462 = vpop.f32.mrf.mxu0
      %6463 = vmatprep.mubr.bf16.mxu0 0
      %6464 = vmatmul.mubr.bf16.gmra.mxu0 %v6305
      %v6465 = vpop.f32.mrf.mxu0
      %v6466 = vadd.f32 0.0, %v6465
      %v6467 = vpop.f32.mrf.mxu0
      %v6468 = vpop.f32.mrf.mxu0
      %v6469 = vadd.f32 0.0, %v6468
      %v6470 = vpop.f32.mrf.mxu0
      %6471 = vmatprep.mubr.bf16.mxu0 0
      %6472 = vmatmul.mubr.bf16.gmra.mxu0 %v6308
      %v6473 = vpop.f32.mrf.mxu0
      %v6474 = vadd.f32 0.0, %v6473
      %v6475 = vpop.f32.mrf.mxu0
      %v6476 = vpop.f32.mrf.mxu0
      %v6477 = vadd.f32 0.0, %v6476
      %v6478 = vpop.f32.mrf.mxu0
      %6479 = vmatprep.mubr.bf16.mxu0 0
      %6480 = vmatmul.mubr.bf16.gmra.mxu0 %v6311
      %v6481 = vpop.f32.mrf.mxu0
      %v6482 = vadd.f32 0.0, %v6481
      %v6483 = vpop.f32.mrf.mxu0
      %v6484 = vpop.f32.mrf.mxu0
      %v6485 = vadd.f32 0.0, %v6484
      %v6486 = vpop.f32.mrf.mxu0
      %6487 = vmatprep.mubr.bf16.mxu0 0
      %6488 = vmatmul.mubr.bf16.gmra.mxu0 %v6314
      %v6489 = vpop.f32.mrf.mxu0
      %v6490 = vadd.f32 0.0, %v6489
      %v6491 = vpop.f32.mrf.mxu0
      %v6492 = vpop.f32.mrf.mxu0
      %v6493 = vadd.f32 0.0, %v6492
      %v6494 = vpop.f32.mrf.mxu0
      %6495 = vdwg.mxu0
      %v6496 = vadd.f32 %v6170, %v6354
      %v6497 = vadd.f32 %v6171, %v6357
      %v6498 = vadd.f32 %v6172, %v6362
      %v6499 = vadd.f32 %v6173, %v6365
      %v6500 = vadd.f32 %v6174, %v6370
      %v6501 = vadd.f32 %v6175, %v6373
      %v6502 = vadd.f32 %v6176, %v6378
      %v6503 = vadd.f32 %v6177, %v6381
      %v6504 = vadd.f32 %v6178, %v6386
      %v6505 = vadd.f32 %v6179, %v6389
      %v6506 = vadd.f32 %v6180, %v6394
      %v6507 = vadd.f32 %v6181, %v6397
      %v6508 = vadd.f32 %v6182, %v6402
      %v6509 = vadd.f32 %v6183, %v6405
      %v6510 = vadd.f32 %v6184, %v6410
      %v6511 = vadd.f32 %v6185, %v6413
      %v6512 = vadd.f32 %v6186, %v6418
      %v6513 = vadd.f32 %v6187, %v6421
      %v6514 = vadd.f32 %v6188, %v6426
      %v6515 = vadd.f32 %v6189, %v6429
      %v6516 = vadd.f32 %v6190, %v6434
      %v6517 = vadd.f32 %v6191, %v6437
      %v6518 = vadd.f32 %v6192, %v6442
      %v6519 = vadd.f32 %v6193, %v6445
      %v6520 = vadd.f32 %v6194, %v6450
      %v6521 = vadd.f32 %v6195, %v6453
      %v6522 = vadd.f32 %v6196, %v6458
      %v6523 = vadd.f32 %v6197, %v6461
      %v6524 = vadd.f32 %v6198, %v6466
      %v6525 = vadd.f32 %v6199, %v6469
      %v6526 = vadd.f32 %v6200, %v6474
      %v6527 = vadd.f32 %v6201, %v6477
      %v6528 = vadd.f32 %v6202, %v6482
      %v6529 = vadd.f32 %v6203, %v6485
      %v6530 = vadd.f32 %v6204, %v6490
      %v6531 = vadd.f32 %v6205, %v6493
      %v6532 = vld [vmem:[#allocation2 + $0x25] sm:$0xff]
      %v6533 = vld [vmem:[#allocation2 + $0x2d] sm:$0xff]
      %v6534 = vld [vmem:[#allocation2 + $0x35] sm:$0xff]
      %v6535 = vld [vmem:[#allocation2 + $0x3d] sm:$0xff]
      %v6536 = vld [vmem:[#allocation2 + $0x45] sm:$0xff]
      %v6537 = vld [vmem:[#allocation2 + $0x4d] sm:$0xff]
      %v6538 = vld [vmem:[#allocation2 + $0x55] sm:$0xff]
      %v6539 = vld [vmem:[#allocation2 + $0x5d] sm:$0xff]
      %v6540 = vld [vmem:[#allocation2 + $0x65] sm:$0xff]
      %v6541 = vld [vmem:[#allocation2 + $0x6d] sm:$0xff]
      %v6542 = vld [vmem:[#allocation2 + $0x75] sm:$0xff]
      %v6543 = vld [vmem:[#allocation2 + $0x7d] sm:$0xff]
      %v6544 = vld [vmem:[#allocation2 + $0x85] sm:$0xff]
      %v6545 = vld [vmem:[#allocation2 + $0x8d] sm:$0xff]
      %v6546 = vld [vmem:[#allocation2 + $0x95] sm:$0xff]
      %v6547 = vld [vmem:[#allocation2 + $0x9d] sm:$0xff]
      %v6548 = vld [vmem:[#allocation2 + $0xa5] sm:$0xff]
      %v6549 = vld [vmem:[#allocation2 + $0xad] sm:$0xff]
      %v6550 = vld [vmem:[#allocation2 + $0xb5] sm:$0xff]
      %v6551 = vld [vmem:[#allocation2 + $0xbd] sm:$0xff]
      %v6552 = vld [vmem:[#allocation2 + $0xc5] sm:$0xff]
      %v6553 = vld [vmem:[#allocation2 + $0xcd] sm:$0xff]
      %v6554 = vld [vmem:[#allocation2 + $0xd5] sm:$0xff]
      %v6555 = vld [vmem:[#allocation2 + $0xdd] sm:$0xff]
      %v6556 = vld [vmem:[#allocation2 + $0xe5] sm:$0xff]
      %v6557 = vld [vmem:[#allocation2 + $0xed] sm:$0xff]
      %v6558 = vld [vmem:[#allocation2 + $0xf5] sm:$0xff]
      %v6559 = vld [vmem:[#allocation2 + $0xfd] sm:$0xff]
      %v6560 = vld [vmem:[#allocation2 + $0x105] sm:$0xff]
      %v6561 = vld [vmem:[#allocation2 + $0x10d] sm:$0xff]
      %v6562 = vld [vmem:[#allocation2 + $0x115] sm:$0xff]
      %v6563 = vld [vmem:[#allocation2 + $0x11d] sm:$0xff]
      %v6564 = vld [vmem:[#allocation2 + $0x125] sm:$0xff]
      %v6565 = vld [vmem:[#allocation2 + $0x12d] sm:$0xff]
      %v6566 = vld [vmem:[#allocation2 + $0x135] sm:$0xff]
      %v6567 = vld [vmem:[#allocation2 + $0x13d] sm:$0xff]
      %v6568 = vpack.c.bf16 %v6533, %v6532
      %v6569 = vpack.c.bf16 %v6535, %v6534
      %v6570 = vpack.c.bf16 %v6537, %v6536
      %v6571 = vpack.c.bf16 %v6539, %v6538
      %v6572 = vpack.c.bf16 %v6541, %v6540
      %v6573 = vpack.c.bf16 %v6543, %v6542
      %v6574 = vpack.c.bf16 %v6545, %v6544
      %v6575 = vpack.c.bf16 %v6547, %v6546
      %v6576 = vpack.c.bf16 %v6549, %v6548
      %v6577 = vpack.c.bf16 %v6551, %v6550
      %v6578 = vpack.c.bf16 %v6553, %v6552
      %v6579 = vpack.c.bf16 %v6555, %v6554
      %v6580 = vpack.c.bf16 %v6557, %v6556
      %v6581 = vpack.c.bf16 %v6559, %v6558
      %v6582 = vpack.c.bf16 %v6561, %v6560
      %v6583 = vpack.c.bf16 %v6563, %v6562
      %v6584 = vpack.c.bf16 %v6565, %v6564
      %v6585 = vpack.c.bf16 %v6567, %v6566
      %s6586 = scalar_lea.vmem %s3, 28
      %v6587 = vld [vmem:[%s6586] sm:$0xf]
      %v6589 = vsel %vm3989, %v6568, 0
      %v6592 = vsel %vm3989, %v6569, 0
      %v6595 = vsel %vm3989, %v6570, 0
      %v6598 = vsel %vm3989, %v6571, 0
      %v6601 = vsel %vm3989, %v6572, 0
      %v6604 = vsel %vm3989, %v6573, 0
      %v6607 = vsel %vm3989, %v6574, 0
      %v6610 = vsel %vm3989, %v6575, 0
      %v6613 = vsel %vm3989, %v6576, 0
      %v6616 = vsel %vm3989, %v6577, 0
      %v6619 = vsel %vm3989, %v6578, 0
      %v6622 = vsel %vm3989, %v6579, 0
      %v6625 = vsel %vm3989, %v6580, 0
      %v6628 = vsel %vm3989, %v6581, 0
      %v6631 = vsel %vm3989, %v6582, 0
      %v6634 = vsel %vm3989, %v6583, 0
      %v6637 = vsel %vm3989, %v6584, 0
      %v6640 = vsel %vm3989, %v6585, 0
      %v6643 = vsel %vm4487, %v6587, 0
      %6645 = vmatprep.subr.bf16.mxu0 0
      %6646 = vmatpush1.bf16.msra.mxu0 0
      %6647 = vmatprep.subr.bf16.mxu0 0
      %6648 = vmatpush1.bf16.msra.mxu0 0
      %6649 = vmatprep.subr.bf16.mxu0 0
      %6650 = vmatpush1.bf16.msra.mxu0 0
      %6651 = vmatprep.subr.bf16.mxu0 0
      %6652 = vmatpush1.bf16.msra.mxu0 0
      %6653 = vmatprep.subr.bf16.mxu0 0
      %6654 = vmatpush1.bf16.msra.mxu0 0
      %6655 = vmatprep.subr.bf16.mxu0 0
      %6656 = vmatpush1.bf16.msra.mxu0 0
      %6657 = vmatprep.subr.bf16.mxu0 0
      %6658 = vmatpush1.bf16.msra.mxu0 0
      %6659 = vmatprep.subr.bf16.mxu0 0
      %6660 = vmatpush1.bf16.msra.mxu0 %v6643
      %6661 = vmatprep.subr.bf16.mxu0 0
      %6662 = vmatpush2.bf16.msra.mxu0 0
      %6663 = vmatprep.subr.bf16.mxu0 0
      %6664 = vmatpush2.bf16.msra.mxu0 0
      %6665 = vmatprep.subr.bf16.mxu0 0
      %6666 = vmatpush2.bf16.msra.mxu0 0
      %6667 = vmatprep.subr.bf16.mxu0 0
      %6668 = vmatpush2.bf16.msra.mxu0 0
      %6669 = vmatprep.subr.bf16.mxu0 0
      %6670 = vmatpush2.bf16.msra.mxu0 0
      %6671 = vmatprep.subr.bf16.mxu0 0
      %6672 = vmatpush2.bf16.msra.mxu0 0
      %6673 = vmatprep.subr.bf16.mxu0 0
      %6674 = vmatpush2.bf16.msra.mxu0 0
      %6675 = vmatprep.subr.bf16.mxu0 0
      %6676 = vmatpush2.bf16.msra.mxu0 0
      %6677 = vmatprep.mubr.bf16.mxu0 0
      %6678 = vmatmul.mubr.bf16.gmra.mxu0 %v6589
      %v6679 = vpop.f32.mrf.mxu0
      %v6680 = vadd.f32 0.0, %v6679
      %v6681 = vpop.f32.mrf.mxu0
      %v6682 = vpop.f32.mrf.mxu0
      %v6683 = vadd.f32 0.0, %v6682
      %v6684 = vpop.f32.mrf.mxu0
      %6685 = vmatprep.mubr.bf16.mxu0 0
      %6686 = vmatmul.mubr.bf16.gmra.mxu0 %v6592
      %v6687 = vpop.f32.mrf.mxu0
      %v6688 = vadd.f32 0.0, %v6687
      %v6689 = vpop.f32.mrf.mxu0
      %v6690 = vpop.f32.mrf.mxu0
      %v6691 = vadd.f32 0.0, %v6690
      %v6692 = vpop.f32.mrf.mxu0
      %6693 = vmatprep.mubr.bf16.mxu0 0
      %6694 = vmatmul.mubr.bf16.gmra.mxu0 %v6595
      %v6695 = vpop.f32.mrf.mxu0
      %v6696 = vadd.f32 0.0, %v6695
      %v6697 = vpop.f32.mrf.mxu0
      %v6698 = vpop.f32.mrf.mxu0
      %v6699 = vadd.f32 0.0, %v6698
      %v6700 = vpop.f32.mrf.mxu0
      %6701 = vmatprep.mubr.bf16.mxu0 0
      %6702 = vmatmul.mubr.bf16.gmra.mxu0 %v6598
      %v6703 = vpop.f32.mrf.mxu0
      %v6704 = vadd.f32 0.0, %v6703
      %v6705 = vpop.f32.mrf.mxu0
      %v6706 = vpop.f32.mrf.mxu0
      %v6707 = vadd.f32 0.0, %v6706
      %v6708 = vpop.f32.mrf.mxu0
      %6709 = vmatprep.mubr.bf16.mxu0 0
      %6710 = vmatmul.mubr.bf16.gmra.mxu0 %v6601
      %v6711 = vpop.f32.mrf.mxu0
      %v6712 = vadd.f32 0.0, %v6711
      %v6713 = vpop.f32.mrf.mxu0
      %v6714 = vpop.f32.mrf.mxu0
      %v6715 = vadd.f32 0.0, %v6714
      %v6716 = vpop.f32.mrf.mxu0
      %6717 = vmatprep.mubr.bf16.mxu0 0
      %6718 = vmatmul.mubr.bf16.gmra.mxu0 %v6604
      %v6719 = vpop.f32.mrf.mxu0
      %v6720 = vadd.f32 0.0, %v6719
      %v6721 = vpop.f32.mrf.mxu0
      %v6722 = vpop.f32.mrf.mxu0
      %v6723 = vadd.f32 0.0, %v6722
      %v6724 = vpop.f32.mrf.mxu0
      %6725 = vmatprep.mubr.bf16.mxu0 0
      %6726 = vmatmul.mubr.bf16.gmra.mxu0 %v6607
      %v6727 = vpop.f32.mrf.mxu0
      %v6728 = vadd.f32 0.0, %v6727
      %v6729 = vpop.f32.mrf.mxu0
      %v6730 = vpop.f32.mrf.mxu0
      %v6731 = vadd.f32 0.0, %v6730
      %v6732 = vpop.f32.mrf.mxu0
      %6733 = vmatprep.mubr.bf16.mxu0 0
      %6734 = vmatmul.mubr.bf16.gmra.mxu0 %v6610
      %v6735 = vpop.f32.mrf.mxu0
      %v6736 = vadd.f32 0.0, %v6735
      %v6737 = vpop.f32.mrf.mxu0
      %v6738 = vpop.f32.mrf.mxu0
      %v6739 = vadd.f32 0.0, %v6738
      %v6740 = vpop.f32.mrf.mxu0
      %6741 = vmatprep.mubr.bf16.mxu0 0
      %6742 = vmatmul.mubr.bf16.gmra.mxu0 %v6613
      %v6743 = vpop.f32.mrf.mxu0
      %v6744 = vadd.f32 0.0, %v6743
      %v6745 = vpop.f32.mrf.mxu0
      %v6746 = vpop.f32.mrf.mxu0
      %v6747 = vadd.f32 0.0, %v6746
      %v6748 = vpop.f32.mrf.mxu0
      %6749 = vmatprep.mubr.bf16.mxu0 0
      %6750 = vmatmul.mubr.bf16.gmra.mxu0 %v6616
      %v6751 = vpop.f32.mrf.mxu0
      %v6752 = vadd.f32 0.0, %v6751
      %v6753 = vpop.f32.mrf.mxu0
      %v6754 = vpop.f32.mrf.mxu0
      %v6755 = vadd.f32 0.0, %v6754
      %v6756 = vpop.f32.mrf.mxu0
      %6757 = vmatprep.mubr.bf16.mxu0 0
      %6758 = vmatmul.mubr.bf16.gmra.mxu0 %v6619
      %v6759 = vpop.f32.mrf.mxu0
      %v6760 = vadd.f32 0.0, %v6759
      %v6761 = vpop.f32.mrf.mxu0
      %v6762 = vpop.f32.mrf.mxu0
      %v6763 = vadd.f32 0.0, %v6762
      %v6764 = vpop.f32.mrf.mxu0
      %6765 = vmatprep.mubr.bf16.mxu0 0
      %6766 = vmatmul.mubr.bf16.gmra.mxu0 %v6622
      %v6767 = vpop.f32.mrf.mxu0
      %v6768 = vadd.f32 0.0, %v6767
      %v6769 = vpop.f32.mrf.mxu0
      %v6770 = vpop.f32.mrf.mxu0
      %v6771 = vadd.f32 0.0, %v6770
      %v6772 = vpop.f32.mrf.mxu0
      %6773 = vmatprep.mubr.bf16.mxu0 0
      %6774 = vmatmul.mubr.bf16.gmra.mxu0 %v6625
      %v6775 = vpop.f32.mrf.mxu0
      %v6776 = vadd.f32 0.0, %v6775
      %v6777 = vpop.f32.mrf.mxu0
      %v6778 = vpop.f32.mrf.mxu0
      %v6779 = vadd.f32 0.0, %v6778
      %v6780 = vpop.f32.mrf.mxu0
      %6781 = vmatprep.mubr.bf16.mxu0 0
      %6782 = vmatmul.mubr.bf16.gmra.mxu0 %v6628
      %v6783 = vpop.f32.mrf.mxu0
      %v6784 = vadd.f32 0.0, %v6783
      %v6785 = vpop.f32.mrf.mxu0
      %v6786 = vpop.f32.mrf.mxu0
      %v6787 = vadd.f32 0.0, %v6786
      %v6788 = vpop.f32.mrf.mxu0
      %6789 = vmatprep.mubr.bf16.mxu0 0
      %6790 = vmatmul.mubr.bf16.gmra.mxu0 %v6631
      %v6791 = vpop.f32.mrf.mxu0
      %v6792 = vadd.f32 0.0, %v6791
      %v6793 = vpop.f32.mrf.mxu0
      %v6794 = vpop.f32.mrf.mxu0
      %v6795 = vadd.f32 0.0, %v6794
      %v6796 = vpop.f32.mrf.mxu0
      %6797 = vmatprep.mubr.bf16.mxu0 0
      %6798 = vmatmul.mubr.bf16.gmra.mxu0 %v6634
      %v6799 = vpop.f32.mrf.mxu0
      %v6800 = vadd.f32 0.0, %v6799
      %v6801 = vpop.f32.mrf.mxu0
      %v6802 = vpop.f32.mrf.mxu0
      %v6803 = vadd.f32 0.0, %v6802
      %v6804 = vpop.f32.mrf.mxu0
      %6805 = vmatprep.mubr.bf16.mxu0 0
      %6806 = vmatmul.mubr.bf16.gmra.mxu0 %v6637
      %v6807 = vpop.f32.mrf.mxu0
      %v6808 = vadd.f32 0.0, %v6807
      %v6809 = vpop.f32.mrf.mxu0
      %v6810 = vpop.f32.mrf.mxu0
      %v6811 = vadd.f32 0.0, %v6810
      %v6812 = vpop.f32.mrf.mxu0
      %6813 = vmatprep.mubr.bf16.mxu0 0
      %6814 = vmatmul.mubr.bf16.gmra.mxu0 %v6640
      %v6815 = vpop.f32.mrf.mxu0
      %v6816 = vadd.f32 0.0, %v6815
      %v6817 = vpop.f32.mrf.mxu0
      %v6818 = vpop.f32.mrf.mxu0
      %v6819 = vadd.f32 0.0, %v6818
      %v6820 = vpop.f32.mrf.mxu0
      %6821 = vdwg.mxu0
      %v6822 = vadd.f32 %v6496, %v6680
      %v6823 = vadd.f32 %v6497, %v6683
      %v6824 = vadd.f32 %v6498, %v6688
      %v6825 = vadd.f32 %v6499, %v6691
      %v6826 = vadd.f32 %v6500, %v6696
      %v6827 = vadd.f32 %v6501, %v6699
      %v6828 = vadd.f32 %v6502, %v6704
      %v6829 = vadd.f32 %v6503, %v6707
      %v6830 = vadd.f32 %v6504, %v6712
      %v6831 = vadd.f32 %v6505, %v6715
      %v6832 = vadd.f32 %v6506, %v6720
      %v6833 = vadd.f32 %v6507, %v6723
      %v6834 = vadd.f32 %v6508, %v6728
      %v6835 = vadd.f32 %v6509, %v6731
      %v6836 = vadd.f32 %v6510, %v6736
      %v6837 = vadd.f32 %v6511, %v6739
      %v6838 = vadd.f32 %v6512, %v6744
      %v6839 = vadd.f32 %v6513, %v6747
      %v6840 = vadd.f32 %v6514, %v6752
      %v6841 = vadd.f32 %v6515, %v6755
      %v6842 = vadd.f32 %v6516, %v6760
      %v6843 = vadd.f32 %v6517, %v6763
      %v6844 = vadd.f32 %v6518, %v6768
      %v6845 = vadd.f32 %v6519, %v6771
      %v6846 = vadd.f32 %v6520, %v6776
      %v6847 = vadd.f32 %v6521, %v6779
      %v6848 = vadd.f32 %v6522, %v6784
      %v6849 = vadd.f32 %v6523, %v6787
      %v6850 = vadd.f32 %v6524, %v6792
      %v6851 = vadd.f32 %v6525, %v6795
      %v6852 = vadd.f32 %v6526, %v6800
      %v6853 = vadd.f32 %v6527, %v6803
      %v6854 = vadd.f32 %v6528, %v6808
      %v6855 = vadd.f32 %v6529, %v6811
      %v6856 = vadd.f32 %v6530, %v6816
      %v6857 = vadd.f32 %v6531, %v6819
      %v6858 = vld [vmem:[#allocation2 + $0x26] sm:$0xff]
      %v6859 = vld [vmem:[#allocation2 + $0x2e] sm:$0xff]
      %v6860 = vld [vmem:[#allocation2 + $0x36] sm:$0xff]
      %v6861 = vld [vmem:[#allocation2 + $0x3e] sm:$0xff]
      %v6862 = vld [vmem:[#allocation2 + $0x46] sm:$0xff]
      %v6863 = vld [vmem:[#allocation2 + $0x4e] sm:$0xff]
      %v6864 = vld [vmem:[#allocation2 + $0x56] sm:$0xff]
      %v6865 = vld [vmem:[#allocation2 + $0x5e] sm:$0xff]
      %v6866 = vld [vmem:[#allocation2 + $0x66] sm:$0xff]
      %v6867 = vld [vmem:[#allocation2 + $0x6e] sm:$0xff]
      %v6868 = vld [vmem:[#allocation2 + $0x76] sm:$0xff]
      %v6869 = vld [vmem:[#allocation2 + $0x7e] sm:$0xff]
      %v6870 = vld [vmem:[#allocation2 + $0x86] sm:$0xff]
      %v6871 = vld [vmem:[#allocation2 + $0x8e] sm:$0xff]
      %v6872 = vld [vmem:[#allocation2 + $0x96] sm:$0xff]
      %v6873 = vld [vmem:[#allocation2 + $0x9e] sm:$0xff]
      %v6874 = vld [vmem:[#allocation2 + $0xa6] sm:$0xff]
      %v6875 = vld [vmem:[#allocation2 + $0xae] sm:$0xff]
      %v6876 = vld [vmem:[#allocation2 + $0xb6] sm:$0xff]
      %v6877 = vld [vmem:[#allocation2 + $0xbe] sm:$0xff]
      %v6878 = vld [vmem:[#allocation2 + $0xc6] sm:$0xff]
      %v6879 = vld [vmem:[#allocation2 + $0xce] sm:$0xff]
      %v6880 = vld [vmem:[#allocation2 + $0xd6] sm:$0xff]
      %v6881 = vld [vmem:[#allocation2 + $0xde] sm:$0xff]
      %v6882 = vld [vmem:[#allocation2 + $0xe6] sm:$0xff]
      %v6883 = vld [vmem:[#allocation2 + $0xee] sm:$0xff]
      %v6884 = vld [vmem:[#allocation2 + $0xf6] sm:$0xff]
      %v6885 = vld [vmem:[#allocation2 + $0xfe] sm:$0xff]
      %v6886 = vld [vmem:[#allocation2 + $0x106] sm:$0xff]
      %v6887 = vld [vmem:[#allocation2 + $0x10e] sm:$0xff]
      %v6888 = vld [vmem:[#allocation2 + $0x116] sm:$0xff]
      %v6889 = vld [vmem:[#allocation2 + $0x11e] sm:$0xff]
      %v6890 = vld [vmem:[#allocation2 + $0x126] sm:$0xff]
      %v6891 = vld [vmem:[#allocation2 + $0x12e] sm:$0xff]
      %v6892 = vld [vmem:[#allocation2 + $0x136] sm:$0xff]
      %v6893 = vld [vmem:[#allocation2 + $0x13e] sm:$0xff]
      %v6894 = vpack.c.bf16 %v6859, %v6858
      %v6895 = vpack.c.bf16 %v6861, %v6860
      %v6896 = vpack.c.bf16 %v6863, %v6862
      %v6897 = vpack.c.bf16 %v6865, %v6864
      %v6898 = vpack.c.bf16 %v6867, %v6866
      %v6899 = vpack.c.bf16 %v6869, %v6868
      %v6900 = vpack.c.bf16 %v6871, %v6870
      %v6901 = vpack.c.bf16 %v6873, %v6872
      %v6902 = vpack.c.bf16 %v6875, %v6874
      %v6903 = vpack.c.bf16 %v6877, %v6876
      %v6904 = vpack.c.bf16 %v6879, %v6878
      %v6905 = vpack.c.bf16 %v6881, %v6880
      %v6906 = vpack.c.bf16 %v6883, %v6882
      %v6907 = vpack.c.bf16 %v6885, %v6884
      %v6908 = vpack.c.bf16 %v6887, %v6886
      %v6909 = vpack.c.bf16 %v6889, %v6888
      %v6910 = vpack.c.bf16 %v6891, %v6890
      %v6911 = vpack.c.bf16 %v6893, %v6892
      %s6912 = scalar_lea.vmem %s3, 32
      %v6913 = vld [vmem:[%s6912] sm:$0xf]
      %v6915 = vsel %vm3989, %v6894, 0
      %v6918 = vsel %vm3989, %v6895, 0
      %v6921 = vsel %vm3989, %v6896, 0
      %v6924 = vsel %vm3989, %v6897, 0
      %v6927 = vsel %vm3989, %v6898, 0
      %v6930 = vsel %vm3989, %v6899, 0
      %v6933 = vsel %vm3989, %v6900, 0
      %v6936 = vsel %vm3989, %v6901, 0
      %v6939 = vsel %vm3989, %v6902, 0
      %v6942 = vsel %vm3989, %v6903, 0
      %v6945 = vsel %vm3989, %v6904, 0
      %v6948 = vsel %vm3989, %v6905, 0
      %v6951 = vsel %vm3989, %v6906, 0
      %v6954 = vsel %vm3989, %v6907, 0
      %v6957 = vsel %vm3989, %v6908, 0
      %v6960 = vsel %vm3989, %v6909, 0
      %v6963 = vsel %vm3989, %v6910, 0
      %v6966 = vsel %vm3989, %v6911, 0
      %v6969 = vsel %vm4487, %v6913, 0
      %6971 = vmatprep.subr.bf16.mxu0 0
      %6972 = vmatpush1.bf16.msra.mxu0 0
      %6973 = vmatprep.subr.bf16.mxu0 0
      %6974 = vmatpush1.bf16.msra.mxu0 0
      %6975 = vmatprep.subr.bf16.mxu0 0
      %6976 = vmatpush1.bf16.msra.mxu0 0
      %6977 = vmatprep.subr.bf16.mxu0 0
      %6978 = vmatpush1.bf16.msra.mxu0 0
      %6979 = vmatprep.subr.bf16.mxu0 0
      %6980 = vmatpush1.bf16.msra.mxu0 0
      %6981 = vmatprep.subr.bf16.mxu0 0
      %6982 = vmatpush1.bf16.msra.mxu0 0
      %6983 = vmatprep.subr.bf16.mxu0 0
      %6984 = vmatpush1.bf16.msra.mxu0 0
      %6985 = vmatprep.subr.bf16.mxu0 0
      %6986 = vmatpush1.bf16.msra.mxu0 %v6969
      %6987 = vmatprep.subr.bf16.mxu0 0
      %6988 = vmatpush2.bf16.msra.mxu0 0
      %6989 = vmatprep.subr.bf16.mxu0 0
      %6990 = vmatpush2.bf16.msra.mxu0 0
      %6991 = vmatprep.subr.bf16.mxu0 0
      %6992 = vmatpush2.bf16.msra.mxu0 0
      %6993 = vmatprep.subr.bf16.mxu0 0
      %6994 = vmatpush2.bf16.msra.mxu0 0
      %6995 = vmatprep.subr.bf16.mxu0 0
      %6996 = vmatpush2.bf16.msra.mxu0 0
      %6997 = vmatprep.subr.bf16.mxu0 0
      %6998 = vmatpush2.bf16.msra.mxu0 0
      %6999 = vmatprep.subr.bf16.mxu0 0
      %7000 = vmatpush2.bf16.msra.mxu0 0
      %7001 = vmatprep.subr.bf16.mxu0 0
      %7002 = vmatpush2.bf16.msra.mxu0 0
      %7003 = vmatprep.mubr.bf16.mxu0 0
      %7004 = vmatmul.mubr.bf16.gmra.mxu0 %v6915
      %v7005 = vpop.f32.mrf.mxu0
      %v7006 = vadd.f32 0.0, %v7005
      %v7007 = vpop.f32.mrf.mxu0
      %v7008 = vpop.f32.mrf.mxu0
      %v7009 = vadd.f32 0.0, %v7008
      %v7010 = vpop.f32.mrf.mxu0
      %7011 = vmatprep.mubr.bf16.mxu0 0
      %7012 = vmatmul.mubr.bf16.gmra.mxu0 %v6918
      %v7013 = vpop.f32.mrf.mxu0
      %v7014 = vadd.f32 0.0, %v7013
      %v7015 = vpop.f32.mrf.mxu0
      %v7016 = vpop.f32.mrf.mxu0
      %v7017 = vadd.f32 0.0, %v7016
      %v7018 = vpop.f32.mrf.mxu0
      %7019 = vmatprep.mubr.bf16.mxu0 0
      %7020 = vmatmul.mubr.bf16.gmra.mxu0 %v6921
      %v7021 = vpop.f32.mrf.mxu0
      %v7022 = vadd.f32 0.0, %v7021
      %v7023 = vpop.f32.mrf.mxu0
      %v7024 = vpop.f32.mrf.mxu0
      %v7025 = vadd.f32 0.0, %v7024
      %v7026 = vpop.f32.mrf.mxu0
      %7027 = vmatprep.mubr.bf16.mxu0 0
      %7028 = vmatmul.mubr.bf16.gmra.mxu0 %v6924
      %v7029 = vpop.f32.mrf.mxu0
      %v7030 = vadd.f32 0.0, %v7029
      %v7031 = vpop.f32.mrf.mxu0
      %v7032 = vpop.f32.mrf.mxu0
      %v7033 = vadd.f32 0.0, %v7032
      %v7034 = vpop.f32.mrf.mxu0
      %7035 = vmatprep.mubr.bf16.mxu0 0
      %7036 = vmatmul.mubr.bf16.gmra.mxu0 %v6927
      %v7037 = vpop.f32.mrf.mxu0
      %v7038 = vadd.f32 0.0, %v7037
      %v7039 = vpop.f32.mrf.mxu0
      %v7040 = vpop.f32.mrf.mxu0
      %v7041 = vadd.f32 0.0, %v7040
      %v7042 = vpop.f32.mrf.mxu0
      %7043 = vmatprep.mubr.bf16.mxu0 0
      %7044 = vmatmul.mubr.bf16.gmra.mxu0 %v6930
      %v7045 = vpop.f32.mrf.mxu0
      %v7046 = vadd.f32 0.0, %v7045
      %v7047 = vpop.f32.mrf.mxu0
      %v7048 = vpop.f32.mrf.mxu0
      %v7049 = vadd.f32 0.0, %v7048
      %v7050 = vpop.f32.mrf.mxu0
      %7051 = vmatprep.mubr.bf16.mxu0 0
      %7052 = vmatmul.mubr.bf16.gmra.mxu0 %v6933
      %v7053 = vpop.f32.mrf.mxu0
      %v7054 = vadd.f32 0.0, %v7053
      %v7055 = vpop.f32.mrf.mxu0
      %v7056 = vpop.f32.mrf.mxu0
      %v7057 = vadd.f32 0.0, %v7056
      %v7058 = vpop.f32.mrf.mxu0
      %7059 = vmatprep.mubr.bf16.mxu0 0
      %7060 = vmatmul.mubr.bf16.gmra.mxu0 %v6936
      %v7061 = vpop.f32.mrf.mxu0
      %v7062 = vadd.f32 0.0, %v7061
      %v7063 = vpop.f32.mrf.mxu0
      %v7064 = vpop.f32.mrf.mxu0
      %v7065 = vadd.f32 0.0, %v7064
      %v7066 = vpop.f32.mrf.mxu0
      %7067 = vmatprep.mubr.bf16.mxu0 0
      %7068 = vmatmul.mubr.bf16.gmra.mxu0 %v6939
      %v7069 = vpop.f32.mrf.mxu0
      %v7070 = vadd.f32 0.0, %v7069
      %v7071 = vpop.f32.mrf.mxu0
      %v7072 = vpop.f32.mrf.mxu0
      %v7073 = vadd.f32 0.0, %v7072
      %v7074 = vpop.f32.mrf.mxu0
      %7075 = vmatprep.mubr.bf16.mxu0 0
      %7076 = vmatmul.mubr.bf16.gmra.mxu0 %v6942
      %v7077 = vpop.f32.mrf.mxu0
      %v7078 = vadd.f32 0.0, %v7077
      %v7079 = vpop.f32.mrf.mxu0
      %v7080 = vpop.f32.mrf.mxu0
      %v7081 = vadd.f32 0.0, %v7080
      %v7082 = vpop.f32.mrf.mxu0
      %7083 = vmatprep.mubr.bf16.mxu0 0
      %7084 = vmatmul.mubr.bf16.gmra.mxu0 %v6945
      %v7085 = vpop.f32.mrf.mxu0
      %v7086 = vadd.f32 0.0, %v7085
      %v7087 = vpop.f32.mrf.mxu0
      %v7088 = vpop.f32.mrf.mxu0
      %v7089 = vadd.f32 0.0, %v7088
      %v7090 = vpop.f32.mrf.mxu0
      %7091 = vmatprep.mubr.bf16.mxu0 0
      %7092 = vmatmul.mubr.bf16.gmra.mxu0 %v6948
      %v7093 = vpop.f32.mrf.mxu0
      %v7094 = vadd.f32 0.0, %v7093
      %v7095 = vpop.f32.mrf.mxu0
      %v7096 = vpop.f32.mrf.mxu0
      %v7097 = vadd.f32 0.0, %v7096
      %v7098 = vpop.f32.mrf.mxu0
      %7099 = vmatprep.mubr.bf16.mxu0 0
      %7100 = vmatmul.mubr.bf16.gmra.mxu0 %v6951
      %v7101 = vpop.f32.mrf.mxu0
      %v7102 = vadd.f32 0.0, %v7101
      %v7103 = vpop.f32.mrf.mxu0
      %v7104 = vpop.f32.mrf.mxu0
      %v7105 = vadd.f32 0.0, %v7104
      %v7106 = vpop.f32.mrf.mxu0
      %7107 = vmatprep.mubr.bf16.mxu0 0
      %7108 = vmatmul.mubr.bf16.gmra.mxu0 %v6954
      %v7109 = vpop.f32.mrf.mxu0
      %v7110 = vadd.f32 0.0, %v7109
      %v7111 = vpop.f32.mrf.mxu0
      %v7112 = vpop.f32.mrf.mxu0
      %v7113 = vadd.f32 0.0, %v7112
      %v7114 = vpop.f32.mrf.mxu0
      %7115 = vmatprep.mubr.bf16.mxu0 0
      %7116 = vmatmul.mubr.bf16.gmra.mxu0 %v6957
      %v7117 = vpop.f32.mrf.mxu0
      %v7118 = vadd.f32 0.0, %v7117
      %v7119 = vpop.f32.mrf.mxu0
      %v7120 = vpop.f32.mrf.mxu0
      %v7121 = vadd.f32 0.0, %v7120
      %v7122 = vpop.f32.mrf.mxu0
      %7123 = vmatprep.mubr.bf16.mxu0 0
      %7124 = vmatmul.mubr.bf16.gmra.mxu0 %v6960
      %v7125 = vpop.f32.mrf.mxu0
      %v7126 = vadd.f32 0.0, %v7125
      %v7127 = vpop.f32.mrf.mxu0
      %v7128 = vpop.f32.mrf.mxu0
      %v7129 = vadd.f32 0.0, %v7128
      %v7130 = vpop.f32.mrf.mxu0
      %7131 = vmatprep.mubr.bf16.mxu0 0
      %7132 = vmatmul.mubr.bf16.gmra.mxu0 %v6963
      %v7133 = vpop.f32.mrf.mxu0
      %v7134 = vadd.f32 0.0, %v7133
      %v7135 = vpop.f32.mrf.mxu0
      %v7136 = vpop.f32.mrf.mxu0
      %v7137 = vadd.f32 0.0, %v7136
      %v7138 = vpop.f32.mrf.mxu0
      %7139 = vmatprep.mubr.bf16.mxu0 0
      %7140 = vmatmul.mubr.bf16.gmra.mxu0 %v6966
      %v7141 = vpop.f32.mrf.mxu0
      %v7142 = vadd.f32 0.0, %v7141
      %v7143 = vpop.f32.mrf.mxu0
      %v7144 = vpop.f32.mrf.mxu0
      %v7145 = vadd.f32 0.0, %v7144
      %v7146 = vpop.f32.mrf.mxu0
      %7147 = vdwg.mxu0
      %v7148 = vadd.f32 %v6822, %v7006
      %v7149 = vadd.f32 %v6823, %v7009
      %v7150 = vadd.f32 %v6824, %v7014
      %v7151 = vadd.f32 %v6825, %v7017
      %v7152 = vadd.f32 %v6826, %v7022
      %v7153 = vadd.f32 %v6827, %v7025
      %v7154 = vadd.f32 %v6828, %v7030
      %v7155 = vadd.f32 %v6829, %v7033
      %v7156 = vadd.f32 %v6830, %v7038
      %v7157 = vadd.f32 %v6831, %v7041
      %v7158 = vadd.f32 %v6832, %v7046
      %v7159 = vadd.f32 %v6833, %v7049
      %v7160 = vadd.f32 %v6834, %v7054
      %v7161 = vadd.f32 %v6835, %v7057
      %v7162 = vadd.f32 %v6836, %v7062
      %v7163 = vadd.f32 %v6837, %v7065
      %v7164 = vadd.f32 %v6838, %v7070
      %v7165 = vadd.f32 %v6839, %v7073
      %v7166 = vadd.f32 %v6840, %v7078
      %v7167 = vadd.f32 %v6841, %v7081
      %v7168 = vadd.f32 %v6842, %v7086
      %v7169 = vadd.f32 %v6843, %v7089
      %v7170 = vadd.f32 %v6844, %v7094
      %v7171 = vadd.f32 %v6845, %v7097
      %v7172 = vadd.f32 %v6846, %v7102
      %v7173 = vadd.f32 %v6847, %v7105
      %v7174 = vadd.f32 %v6848, %v7110
      %v7175 = vadd.f32 %v6849, %v7113
      %v7176 = vadd.f32 %v6850, %v7118
      %v7177 = vadd.f32 %v6851, %v7121
      %v7178 = vadd.f32 %v6852, %v7126
      %v7179 = vadd.f32 %v6853, %v7129
      %v7180 = vadd.f32 %v6854, %v7134
      %v7181 = vadd.f32 %v6855, %v7137
      %v7182 = vadd.f32 %v6856, %v7142
      %v7183 = vadd.f32 %v6857, %v7145
      %v7184 = vld [vmem:[%s4] sm:$0x1]
      %v7186 = vlaneseq
      %v7187 = vshrl.u32 %v7186, 7
      %v7188 = vsub.s32 0, %v7187
      %v7189 = vrot.slane %v7184, %v7188
      %v7191 = vmul.f32 %v7148, %v7189
      %v7192 = vmul.f32 %v7149, %v7189
      %v7193 = vmul.f32 %v7150, %v7189
      %v7194 = vmul.f32 %v7151, %v7189
      %v7195 = vmul.f32 %v7152, %v7189
      %v7196 = vmul.f32 %v7153, %v7189
      %v7197 = vmul.f32 %v7154, %v7189
      %v7198 = vmul.f32 %v7155, %v7189
      %v7199 = vmul.f32 %v7156, %v7189
      %v7200 = vmul.f32 %v7157, %v7189
      %v7201 = vmul.f32 %v7158, %v7189
      %v7202 = vmul.f32 %v7159, %v7189
      %v7203 = vmul.f32 %v7160, %v7189
      %v7204 = vmul.f32 %v7161, %v7189
      %v7205 = vmul.f32 %v7162, %v7189
      %v7206 = vmul.f32 %v7163, %v7189
      %v7207 = vmul.f32 %v7164, %v7189
      %v7208 = vmul.f32 %v7165, %v7189
      %v7209 = vmul.f32 %v7166, %v7189
      %v7210 = vmul.f32 %v7167, %v7189
      %v7211 = vmul.f32 %v7168, %v7189
      %v7212 = vmul.f32 %v7169, %v7189
      %v7213 = vmul.f32 %v7170, %v7189
      %v7214 = vmul.f32 %v7171, %v7189
      %v7215 = vmul.f32 %v7172, %v7189
      %v7216 = vmul.f32 %v7173, %v7189
      %v7217 = vmul.f32 %v7174, %v7189
      %v7218 = vmul.f32 %v7175, %v7189
      %v7219 = vmul.f32 %v7176, %v7189
      %v7220 = vmul.f32 %v7177, %v7189
      %v7221 = vmul.f32 %v7178, %v7189
      %v7222 = vmul.f32 %v7179, %v7189
      %v7223 = vmul.f32 %v7180, %v7189
      %v7224 = vmul.f32 %v7181, %v7189
      %v7225 = vmul.f32 %v7182, %v7189
      %v7226 = vmul.f32 %v7183, %v7189
      %v7227 = vld [vmem:[%s5] sm:$0x1]
      %v7229 = vlaneseq
      %v7230 = vshrl.u32 %v7229, 7
      %v7231 = vsub.s32 0, %v7230
      %v7232 = vrot.slane %v7227, %v7231
      %v7234 = vadd.f32 %v7191, %v7232
      %v7235 = vadd.f32 %v7192, %v7232
      %v7236 = vadd.f32 %v7193, %v7232
      %v7237 = vadd.f32 %v7194, %v7232
      %v7238 = vadd.f32 %v7195, %v7232
      %v7239 = vadd.f32 %v7196, %v7232
      %v7240 = vadd.f32 %v7197, %v7232
      %v7241 = vadd.f32 %v7198, %v7232
      %v7242 = vadd.f32 %v7199, %v7232
      %v7243 = vadd.f32 %v7200, %v7232
      %v7244 = vadd.f32 %v7201, %v7232
      %v7245 = vadd.f32 %v7202, %v7232
      %v7246 = vadd.f32 %v7203, %v7232
      %v7247 = vadd.f32 %v7204, %v7232
      %v7248 = vadd.f32 %v7205, %v7232
      %v7249 = vadd.f32 %v7206, %v7232
      %v7250 = vadd.f32 %v7207, %v7232
      %v7251 = vadd.f32 %v7208, %v7232
      %v7252 = vadd.f32 %v7209, %v7232
      %v7253 = vadd.f32 %v7210, %v7232
      %v7254 = vadd.f32 %v7211, %v7232
      %v7255 = vadd.f32 %v7212, %v7232
      %v7256 = vadd.f32 %v7213, %v7232
      %v7257 = vadd.f32 %v7214, %v7232
      %v7258 = vadd.f32 %v7215, %v7232
      %v7259 = vadd.f32 %v7216, %v7232
      %v7260 = vadd.f32 %v7217, %v7232
      %v7261 = vadd.f32 %v7218, %v7232
      %v7262 = vadd.f32 %v7219, %v7232
      %v7263 = vadd.f32 %v7220, %v7232
      %v7264 = vadd.f32 %v7221, %v7232
      %v7265 = vadd.f32 %v7222, %v7232
      %v7266 = vadd.f32 %v7223, %v7232
      %v7267 = vadd.f32 %v7224, %v7232
      %v7268 = vadd.f32 %v7225, %v7232
      %v7269 = vadd.f32 %v7226, %v7232
      %vm7270 = vcmp.ge.f32.partialorder %v7234, 0.0
      %vm7271 = vcmp.ge.f32.partialorder %v7235, 0.0
      %vm7272 = vcmp.ge.f32.partialorder %v7236, 0.0
      %vm7273 = vcmp.ge.f32.partialorder %v7237, 0.0
      %vm7274 = vcmp.ge.f32.partialorder %v7238, 0.0
      %vm7275 = vcmp.ge.f32.partialorder %v7239, 0.0
      %vm7276 = vcmp.ge.f32.partialorder %v7240, 0.0
      %vm7277 = vcmp.ge.f32.partialorder %v7241, 0.0
      %vm7278 = vcmp.ge.f32.partialorder %v7242, 0.0
      %vm7279 = vcmp.ge.f32.partialorder %v7243, 0.0
      %vm7280 = vcmp.ge.f32.partialorder %v7244, 0.0
      %vm7281 = vcmp.ge.f32.partialorder %v7245, 0.0
      %vm7282 = vcmp.ge.f32.partialorder %v7246, 0.0
      %vm7283 = vcmp.ge.f32.partialorder %v7247, 0.0
      %vm7284 = vcmp.ge.f32.partialorder %v7248, 0.0
      %vm7285 = vcmp.ge.f32.partialorder %v7249, 0.0
      %vm7286 = vcmp.ge.f32.partialorder %v7250, 0.0
      %vm7287 = vcmp.ge.f32.partialorder %v7251, 0.0
      %vm7288 = vcmp.ge.f32.partialorder %v7252, 0.0
      %vm7289 = vcmp.ge.f32.partialorder %v7253, 0.0
      %vm7290 = vcmp.ge.f32.partialorder %v7254, 0.0
      %vm7291 = vcmp.ge.f32.partialorder %v7255, 0.0
      %vm7292 = vcmp.ge.f32.partialorder %v7256, 0.0
      %vm7293 = vcmp.ge.f32.partialorder %v7257, 0.0
      %vm7294 = vcmp.ge.f32.partialorder %v7258, 0.0
      %vm7295 = vcmp.ge.f32.partialorder %v7259, 0.0
      %vm7296 = vcmp.ge.f32.partialorder %v7260, 0.0
      %vm7297 = vcmp.ge.f32.partialorder %v7261, 0.0
      %vm7298 = vcmp.ge.f32.partialorder %v7262, 0.0
      %vm7299 = vcmp.ge.f32.partialorder %v7263, 0.0
      %vm7300 = vcmp.ge.f32.partialorder %v7264, 0.0
      %vm7301 = vcmp.ge.f32.partialorder %v7265, 0.0
      %vm7302 = vcmp.ge.f32.partialorder %v7266, 0.0
      %vm7303 = vcmp.ge.f32.partialorder %v7267, 0.0
      %vm7304 = vcmp.ge.f32.partialorder %v7268, 0.0
      %vm7305 = vcmp.ge.f32.partialorder %v7269, 0.0
      %v7306 = vmul.f32 %v7234, 0.01
      %v7307 = vmul.f32 %v7235, 0.01
      %v7308 = vmul.f32 %v7236, 0.01
      %v7309 = vmul.f32 %v7237, 0.01
      %v7310 = vmul.f32 %v7238, 0.01
      %v7311 = vmul.f32 %v7239, 0.01
      %v7312 = vmul.f32 %v7240, 0.01
      %v7313 = vmul.f32 %v7241, 0.01
      %v7314 = vmul.f32 %v7242, 0.01
      %v7315 = vmul.f32 %v7243, 0.01
      %v7316 = vmul.f32 %v7244, 0.01
      %v7317 = vmul.f32 %v7245, 0.01
      %v7318 = vmul.f32 %v7246, 0.01
      %v7319 = vmul.f32 %v7247, 0.01
      %v7320 = vmul.f32 %v7248, 0.01
      %v7321 = vmul.f32 %v7249, 0.01
      %v7322 = vmul.f32 %v7250, 0.01
      %v7323 = vmul.f32 %v7251, 0.01
      %v7324 = vmul.f32 %v7252, 0.01
      %v7325 = vmul.f32 %v7253, 0.01
      %v7326 = vmul.f32 %v7254, 0.01
      %v7327 = vmul.f32 %v7255, 0.01
      %v7328 = vmul.f32 %v7256, 0.01
      %v7329 = vmul.f32 %v7257, 0.01
      %v7330 = vmul.f32 %v7258, 0.01
      %v7331 = vmul.f32 %v7259, 0.01
      %v7332 = vmul.f32 %v7260, 0.01
      %v7333 = vmul.f32 %v7261, 0.01
      %v7334 = vmul.f32 %v7262, 0.01
      %v7335 = vmul.f32 %v7263, 0.01
      %v7336 = vmul.f32 %v7264, 0.01
      %v7337 = vmul.f32 %v7265, 0.01
      %v7338 = vmul.f32 %v7266, 0.01
      %v7339 = vmul.f32 %v7267, 0.01
      %v7340 = vmul.f32 %v7268, 0.01
      %v7341 = vmul.f32 %v7269, 0.01
      %v7342 = vsel %vm7270, %v7234, %v7306
      %v7343 = vsel %vm7271, %v7235, %v7307
      %v7344 = vsel %vm7272, %v7236, %v7308
      %v7345 = vsel %vm7273, %v7237, %v7309
      %v7346 = vsel %vm7274, %v7238, %v7310
      %v7347 = vsel %vm7275, %v7239, %v7311
      %v7348 = vsel %vm7276, %v7240, %v7312
      %v7349 = vsel %vm7277, %v7241, %v7313
      %v7350 = vsel %vm7278, %v7242, %v7314
      %v7351 = vsel %vm7279, %v7243, %v7315
      %v7352 = vsel %vm7280, %v7244, %v7316
      %v7353 = vsel %vm7281, %v7245, %v7317
      %v7354 = vsel %vm7282, %v7246, %v7318
      %v7355 = vsel %vm7283, %v7247, %v7319
      %v7356 = vsel %vm7284, %v7248, %v7320
      %v7357 = vsel %vm7285, %v7249, %v7321
      %v7358 = vsel %vm7286, %v7250, %v7322
      %v7359 = vsel %vm7287, %v7251, %v7323
      %v7360 = vsel %vm7288, %v7252, %v7324
      %v7361 = vsel %vm7289, %v7253, %v7325
      %v7362 = vsel %vm7290, %v7254, %v7326
      %v7363 = vsel %vm7291, %v7255, %v7327
      %v7364 = vsel %vm7292, %v7256, %v7328
      %v7365 = vsel %vm7293, %v7257, %v7329
      %v7366 = vsel %vm7294, %v7258, %v7330
      %v7367 = vsel %vm7295, %v7259, %v7331
      %v7368 = vsel %vm7296, %v7260, %v7332
      %v7369 = vsel %vm7297, %v7261, %v7333
      %v7370 = vsel %vm7298, %v7262, %v7334
      %v7371 = vsel %vm7299, %v7263, %v7335
      %v7372 = vsel %vm7300, %v7264, %v7336
      %v7373 = vsel %vm7301, %v7265, %v7337
      %v7374 = vsel %vm7302, %v7266, %v7338
      %v7375 = vsel %vm7303, %v7267, %v7339
      %v7376 = vsel %vm7304, %v7268, %v7340
      %v7377 = vsel %vm7305, %v7269, %v7341
      %7378 = vst.msk [vmem:[%s340] sm:$0xff] %vm3989, %v7342
      %7379 = vst.msk [vmem:[%s340 + $0x8] sm:$0xff] %vm3989, %v7343
      %7380 = vst.msk [vmem:[%s340 + $0x10] sm:$0xff] %vm3989, %v7344
      %7381 = vst.msk [vmem:[%s340 + $0x18] sm:$0xff] %vm3989, %v7345
      %7382 = vst.msk [vmem:[%s340 + $0x20] sm:$0xff] %vm3989, %v7346
      %7383 = vst.msk [vmem:[%s340 + $0x28] sm:$0xff] %vm3989, %v7347
      %7384 = vst.msk [vmem:[%s340 + $0x30] sm:$0xff] %vm3989, %v7348
      %7385 = vst.msk [vmem:[%s340 + $0x38] sm:$0xff] %vm3989, %v7349
      %7386 = vst.msk [vmem:[%s340 + $0x40] sm:$0xff] %vm3989, %v7350
      %7387 = vst.msk [vmem:[%s340 + $0x48] sm:$0xff] %vm3989, %v7351
      %7388 = vst.msk [vmem:[%s340 + $0x50] sm:$0xff] %vm3989, %v7352
      %7389 = vst.msk [vmem:[%s340 + $0x58] sm:$0xff] %vm3989, %v7353
      %7390 = vst.msk [vmem:[%s340 + $0x60] sm:$0xff] %vm3989, %v7354
      %7391 = vst.msk [vmem:[%s340 + $0x68] sm:$0xff] %vm3989, %v7355
      %7392 = vst.msk [vmem:[%s340 + $0x70] sm:$0xff] %vm3989, %v7356
      %7393 = vst.msk [vmem:[%s340 + $0x78] sm:$0xff] %vm3989, %v7357
      %7394 = vst.msk [vmem:[%s340 + $0x80] sm:$0xff] %vm3989, %v7358
      %7395 = vst.msk [vmem:[%s340 + $0x88] sm:$0xff] %vm3989, %v7359
      %7396 = vst.msk [vmem:[%s340 + $0x90] sm:$0xff] %vm3989, %v7360
      %7397 = vst.msk [vmem:[%s340 + $0x98] sm:$0xff] %vm3989, %v7361
      %7398 = vst.msk [vmem:[%s340 + $0xa0] sm:$0xff] %vm3989, %v7362
      %7399 = vst.msk [vmem:[%s340 + $0xa8] sm:$0xff] %vm3989, %v7363
      %7400 = vst.msk [vmem:[%s340 + $0xb0] sm:$0xff] %vm3989, %v7364
      %7401 = vst.msk [vmem:[%s340 + $0xb8] sm:$0xff] %vm3989, %v7365
      %7402 = vst.msk [vmem:[%s340 + $0xc0] sm:$0xff] %vm3989, %v7366
      %7403 = vst.msk [vmem:[%s340 + $0xc8] sm:$0xff] %vm3989, %v7367
      %7404 = vst.msk [vmem:[%s340 + $0xd0] sm:$0xff] %vm3989, %v7368
      %7405 = vst.msk [vmem:[%s340 + $0xd8] sm:$0xff] %vm3989, %v7369
      %7406 = vst.msk [vmem:[%s340 + $0xe0] sm:$0xff] %vm3989, %v7370
      %7407 = vst.msk [vmem:[%s340 + $0xe8] sm:$0xff] %vm3989, %v7371
      %7408 = vst.msk [vmem:[%s340 + $0xf0] sm:$0xff] %vm3989, %v7372
      %7409 = vst.msk [vmem:[%s340 + $0xf8] sm:$0xff] %vm3989, %v7373
      %7410 = vst.msk [vmem:[%s340 + $0x100] sm:$0xff] %vm3989, %v7374
      %7411 = vst.msk [vmem:[%s340 + $0x108] sm:$0xff] %vm3989, %v7375
      %7412 = vst.msk [vmem:[%s340 + $0x110] sm:$0xff] %vm3989, %v7376
      %7413 = vst.msk [vmem:[%s340 + $0x118] sm:$0xff] %vm3989, %v7377
      loop: start=0, step=1, limit=8
      $region53: #{unet_block_forward.1} parent=51 // loop_pre_header
        _
      $region54: #{unet_block_forward.1} parent=51 // loop_header
        %s7415 = sphi 0, %s7419
        %p7416 = scmp.ge.s32.totalorder %s7415, 8
      $region55: #{unet_block_forward.1} parent=51 // loop_header_branch
        %7418 = sbr.rel (%p7416) target = $region59
      $region56: #{unet_block_forward.1} parent=51 // loop_body
        %s7420 = smul.u32 %s7415, 36
        %s7421 = scalar_lea.vmem %s340, %s7420
        %v7422 = vld [vmem:[%s7421] sm:$0xff]
        %v7423 = vld [vmem:[%s7421 + $0x8] sm:$0xff]
        %s7424 = sadd.s32 %s7420, 1
        %s7425 = scalar_lea.vmem %s340, %s7424
        %v7426 = vld [vmem:[%s7425] sm:$0xff]
        %v7427 = vld [vmem:[%s7425 + $0x8] sm:$0xff]
        %s7428 = sadd.s32 %s7420, 18
        %s7429 = scalar_lea.vmem %s340, %s7428
        %v7430 = vld [vmem:[%s7429] sm:$0xff]
        %v7431 = vld [vmem:[%s7429 + $0x8] sm:$0xff]
        %s7432 = sadd.s32 %s7420, 19
        %s7433 = scalar_lea.vmem %s340, %s7432
        %v7434 = vld [vmem:[%s7433] sm:$0xff]
        %v7435 = vld [vmem:[%s7433 + $0x8] sm:$0xff]
        %v7436 = vmax.f32 %v7422, %v7426
        %v7437 = vmax.f32 %v7423, %v7427
        %v7438 = vmax.f32 %v7430, %v7434
        %v7439 = vmax.f32 %v7431, %v7435
        %v7440 = vmax.f32 %v7436, %v7438
        %v7441 = vmax.f32 %v7437, %v7439
        %s7442 = smul.u32 %s7415, 16
        %s7443 = scalar_lea.vmem %s345, %s7442
        %7444 = vst.msk [vmem:[%s7443] sm:$0xff] %vm3989, %v7440
        %7445 = vst.msk [vmem:[%s7443 + $0x8] sm:$0xff] %vm3989, %v7441
      $region57: #{unet_block_forward.1} parent=51 // loop_footer
        %s7419 = sadd.s32 1, %s7415
      $region58: #{unet_block_forward.1} parent=51 // loop_footer_branch
        %7414 = sbr.rel target = $region54
      $region59: #{unet_block_forward.1} parent=51 // loop_exit
        _
      %p7446 = scmp.lt.s32.totalorder %s21, 7
      %s7447 = scalar_select %p7446, %s21, 7
      %s7448 = smul.addr %s7447, 36
      %s7449 = smul.addr %s7448, 8
      %s7450 = scalar_lea.vmem %s8, %s7449
      %p7451 = scmp.lt.s32.totalorder %s21, 7
      %s7452 = scalar_select %p7451, %s21, 7
      %s7453 = smul.addr %s7452, 16
      %s7454 = smul.addr %s7453, 8
      %s7455 = scalar_lea.vmem %s9, %s7454
      // Predicated region
      $region60: #{unet_block_forward.1} parent=51 // pred_check
        %p7456 = pneg %p212
      $region61: #{unet_block_forward.1} parent=51 // pred_check_branch
        %7458 = sbr.rel (%p7456) target = $region63
      $region62: #{unet_block_forward.1} parent=51 // pred_region
        _
      $region63: #{unet_block_forward.1} parent=51 // pred_fallthru
        _
      // Predicated region
      $region64: #{unet_block_forward.1} parent=51 // pred_check
        %p7459 = pneg %p238
      $region65: #{unet_block_forward.1} parent=51 // pred_check_branch
        %7461 = sbr.rel (%p7459) target = $region67
      $region66: #{unet_block_forward.1} parent=51 // pred_region
        _
      $region67: #{unet_block_forward.1} parent=51 // pred_fallthru
        _
    $region52: #{unet_block_forward.1} parent=5 // pred_fallthru
      _
    %p7462 = scmp.le.s32.totalorder 2, %s16
    // Predicated region
    $region68: #{unet_block_forward.1} parent=5 // pred_check
      %p7463 = pneg %p7462
    $region69: #{unet_block_forward.1} parent=5 // pred_check_branch
      %7465 = sbr.rel (%p7463) target = $region71
    $region70: #{unet_block_forward.1} parent=5 // pred_region
      %s7466 = ssub.s32 %s16, 2
      // Predicated region
      $region72: #{unet_block_forward.1} parent=70 // pred_check
        %p7467 = pneg %p218
      $region73: #{unet_block_forward.1} parent=70 // pred_check_branch
        %7469 = sbr.rel (%p7467) target = $region75
      $region74: #{unet_block_forward.1} parent=70 // pred_region
        %p7470 = scmp.lt.s32.totalorder %s22, 7
        %s7471 = scalar_select %p7470, %s22, 7
        %s7472 = smul.addr %s7471, 36
        %s7473 = smul.addr %s7472, 8
        %s7474 = scalar_lea.vmem %s8, %s7473
      $region75: #{unet_block_forward.1} parent=70 // pred_fallthru
        _
      // Predicated region
      $region76: #{unet_block_forward.1} parent=70 // pred_check
        %p7475 = pneg %p244
      $region77: #{unet_block_forward.1} parent=70 // pred_check_branch
        %7477 = sbr.rel (%p7475) target = $region79
      $region78: #{unet_block_forward.1} parent=70 // pred_region
        %p7478 = scmp.lt.s32.totalorder %s22, 7
        %s7479 = scalar_select %p7478, %s22, 7
        %s7480 = smul.addr %s7479, 16
        %s7481 = smul.addr %s7480, 8
        %s7482 = scalar_lea.vmem %s9, %s7481
      $region79: #{unet_block_forward.1} parent=70 // pred_fallthru
        _
    $region71: #{unet_block_forward.1} parent=5 // pred_fallthru
      _
  $region6: #{unet_block_forward.1} parent=0 // loop_footer
    %s20 = sadd.s32 1, %s16
  $region7: #{unet_block_forward.1} parent=0 // loop_footer_branch
    %15 = sbr.rel target = $region3
  $region8: #{unet_block_forward.1} parent=0 // loop_exit
    _

</llo_original>
